<compile_context>
chip_gen: v7x
topology: tpu7x:2x2x1
jax: 0.10.0
libtpu: 0.0.40
codegen_flags: <defaults>
</compile_context>

<pallas_src>
import jax
import jax.numpy as jnp
from jax import lax
from jax.experimental import pallas as pl
from jax.experimental.pallas import tpu as pltpu

INPLANES = 4     # in_planes of the first conv (small, per instructions)
CHANNEL = 32     # "channel" of the module (256 in the original, small here)
OUTPUT_SZ = 16   # spatial size, hardcoded to 16 in the PyTorch module
H = W = OUTPUT_SZ
HW = H * W
C2 = 2 * CHANNEL  # merged box+conf channel count


# ---------------------------------------------------------------------------
# Fused Pallas kernel
# ---------------------------------------------------------------------------
def _conv3x3_im2col(z, w, b):
    """3x3 'SAME' conv as one im2col matmul.

    z: (H, W, C) f32 activation
    w: (9*C, Cout) f32 weight (rows ordered (dy, dx, cin))
    b: (1, Cout) f32 bias (BN folded in)
    returns (H*W, Cout) pre-activation.
    """
    c = z.shape[-1]
    zero_col = jnp.zeros((H, 1, c), jnp.float32)
    zero_row = jnp.zeros((1, W + 2, c), jnp.float32)
    xp = jnp.concatenate(
        [zero_row, jnp.concatenate([zero_col, z, zero_col], axis=1), zero_row],
        axis=0)                                                  # (H+2, W+2, C)
    cols = [xp[dy:dy + H, dx:dx + W, :].reshape(HW, c)
            for dy in range(3) for dx in range(3)]
    patches = jnp.concatenate(cols, axis=-1)                     # (HW, 9C) lane-dense
    return jnp.dot(patches, w, preferred_element_type=jnp.float32) + b


def _rpn_fused_kernel(x_ref, w1_ref, b1_ref, w2_ref, b2_ref, w3_ref, b3_ref,
                      w4_ref, b4_ref, w5_ref, b5_ref, out_ref):
    # ---- merged towers: layer 1 (Cin=4 -> 64), layers 2-4 block-diagonal 64->64
    a = jnp.maximum(_conv3x3_im2col(x_ref[0], w1_ref[...], b1_ref[...]), 0.0)
    for w_ref, b_ref in ((w2_ref, b2_ref), (w3_ref, b3_ref), (w4_ref, b4_ref)):
        a = jnp.maximum(
            _conv3x3_im2col(a.reshape(H, W, C2), w_ref[...], b_ref[...]), 0.0)

    # ---- merged 1x1 heads: columns 0..3 = box, column 4 = conf (no ReLU)
    y = jnp.dot(a, w5_ref[...], preferred_element_type=jnp.float32) + b5_ref[...]
    boxes = y[:, 0:4]                                            # (HW, 4)
    conf = y[:, 4:5]                                             # (HW, 1)

    # ---- argmax over H*W (first-max tie-breaking), gather box, add grid coords
    iota_f = lax.broadcasted_iota(jnp.int32, (HW, 1), 0).astype(jnp.float32)
    maxv = jnp.max(conf, axis=0, keepdims=True)                  # (1, 1)
    keep = jnp.min(jnp.where(conf == maxv, iota_f, jnp.float32(HW)),
                   axis=0, keepdims=True)                        # (1, 1)
    onehot = (iota_f == keep).astype(jnp.float32)                # (HW, 1)
    sel = jnp.sum(boxes * onehot, axis=0, keepdims=True)         # (1, 4)

    hy = jnp.floor(iota_f * (1.0 / W))                           # row index  (exact)
    wx = iota_f - W * hy                                         # col index  (exact)
    cx = jnp.sum((16.0 * wx) * onehot, axis=0, keepdims=True)    # (1, 1)
    cy = jnp.sum((16.0 * hy) * onehot, axis=0, keepdims=True)    # (1, 1)

    # torch: cat([x1x2[:,0], y1y2[:,0], x1x2[:,1], y1y2[:,1]], -1)
    out_ref[0] = jnp.concatenate(
        [sel[:, 0:1] + cx, sel[:, 2:3] + cy,
         sel[:, 1:2] + cx, sel[:, 3:4] + cy], axis=-1)           # (1, 4)


# ---------------------------------------------------------------------------
# Parameters (deterministic synthetic init; conv + eval-mode BN folded)
# ---------------------------------------------------------------------------
def init_conv_bn_folded(key, cin, cout, k=3, eps=1e-5):
    kw, kb, kg, kbe, km, kv = jax.random.split(key, 6)
    fan_in = cin * k * k
    w = jax.random.normal(kw, (k, k, cin, cout), jnp.float32) * jnp.sqrt(2.0 / fan_in)
    b = 0.01 * jax.random.normal(kb, (cout,), jnp.float32)
    gamma = 1.0 + 0.1 * jax.random.normal(kg, (cout,), jnp.float32)
    beta = 0.1 * jax.random.normal(kbe, (cout,), jnp.float32)
    mean = 0.05 * jax.random.normal(km, (cout,), jnp.float32)
    var = 1.0 + 0.1 * jax.random.uniform(kv, (cout,), jnp.float32)
    scale = gamma / jnp.sqrt(var + eps)        # fold eval-mode BN into conv
    return (w * scale, ((b - mean) * scale + beta).reshape(1, cout))


def init_conv(key, cin, cout, k=1):
    kw, kb = jax.random.split(key)
    fan_in = cin * k * k
    w = jax.random.normal(kw, (k, k, cin, cout), jnp.float32) * jnp.sqrt(1.0 / fan_in)
    b = 0.01 * jax.random.normal(kb, (cout,), jnp.float32)
    return (w, b.reshape(1, cout))


def init_params(key):
    ks = jax.random.split(key, 10)
    return {
        "box": [init_conv_bn_folded(ks[0], INPLANES, CHANNEL),
                init_conv_bn_folded(ks[1], CHANNEL, CHANNEL),
                init_conv_bn_folded(ks[2], CHANNEL, CHANNEL),
                init_conv_bn_folded(ks[3], CHANNEL, CHANNEL)],
        "box5": init_conv(ks[4], CHANNEL, 4, k=1),
        "conf": [init_conv_bn_folded(ks[5], INPLANES, CHANNEL),
                 init_conv_bn_folded(ks[6], CHANNEL, CHANNEL),
                 init_conv_bn_folded(ks[7], CHANNEL, CHANNEL),
                 init_conv_bn_folded(ks[8], CHANNEL, CHANNEL)],
        "conf5": init_conv(ks[9], CHANNEL, 1, k=1),
    }


def _merge_params(params):
    """Merge box/conf towers channel-wise into single (im2col-ready) matrices."""
    def kkio_to_mat(w):
        k, _, cin, cout = w.shape
        return w.reshape(k * k * cin, cout)   # rows ordered (dy, dx, cin)

    (w1b, b1b), (w2b, b2b), (w3b, b3b), (w4b, b4b) = params["box"]
    (w1c, b1c), (w2c, b2c), (w3c, b3c), (w4c, b4c) = params["conf"]
    w5b, b5b = params["box5"]
    w5c, b5c = params["conf5"]

    # layer 1: shared input, side-by-side output channels (Cout = 64)
    w1 = jnp.concatenate([w1b, w1c], axis=-1)                 # (3,3,4,64)
    b1 = jnp.concatenate([b1b, b1c], axis=-1)                 # (1,64)

    def blockdiag(wb, wc):                                    # (3,3,64,64)
        z = jnp.zeros((3, 3, CHANNEL, CHANNEL), jnp.float32)
        top = jnp.concatenate([wb, z], axis=-1)
        bot = jnp.concatenate([z, wc], axis=-1)
        return jnp.concatenate([top, bot], axis=2)

    w2 = blockdiag(w2b, w2c); b2 = jnp.concatenate([b2b, b2c], axis=-1)
    w3 = blockdiag(w3b, w3c); b3 = jnp.concatenate([b3b, b3c], axis=-1)
    w4 = blockdiag(w4b, w4c); b4 = jnp.concatenate([b4b, b4c], axis=-1)

    # merged 1x1 heads: (64, 5) with box weights in cols 0..3, conf in col 4
    w5bm = w5b.reshape(CHANNEL, 4)
    w5cm = w5c.reshape(CHANNEL, 1)
    w5 = jnp.concatenate(
        [jnp.concatenate([w5bm, jnp.zeros((CHANNEL, 1), jnp.float32)], axis=-1),
         jnp.concatenate([jnp.zeros((CHANNEL, 4), jnp.float32), w5cm], axis=-1)],
        axis=0)                                               # (64, 5)
    b5 = jnp.concatenate([b5b, b5c], axis=-1)                 # (1, 5)

    return (kkio_to_mat(w1), b1, kkio_to_mat(w2), b2,
            kkio_to_mat(w3), b3, kkio_to_mat(w4), b4, w5, b5)


# ---------------------------------------------------------------------------
# Forward pass: one fused pallas_call (grid over batch, parallel for v7x)
# ---------------------------------------------------------------------------
def rpn_head_forward(x_nchw, params):
    B = x_nchw.shape[0]
    x = jnp.transpose(x_nchw, (0, 2, 3, 1)).astype(jnp.float32)   # NCHW -> NHWC
    w1, b1, w2, b2, w3, b3, w4, b4, w5, b5 = _merge_params(params)

    def full(shape):
        return pl.BlockSpec(shape, lambda bi: (0,) * len(shape))

    out = pl.pallas_call(
        _rpn_fused_kernel,
        out_shape=jax.ShapeDtypeStruct((B, 1, 4), jnp.float32),
        grid=(B,),
        in_specs=[
            pl.BlockSpec((1, H, W, INPLANES), lambda bi: (bi, 0, 0, 0)),
            full(w1.shape), full(b1.shape),
            full(w2.shape), full(b2.shape),
            full(w3.shape), full(b3.shape),
            full(w4.shape), full(b4.shape),
            full(w5.shape), full(b5.shape),
        ],
        out_specs=pl.BlockSpec((1, 1, 4), lambda bi: (bi, 0, 0)),
        compiler_params=pltpu.CompilerParams(
            dimension_semantics=("parallel",)),
    )(x, w1, b1, w2, b2, w3, b3, w4, b4, w5, b5)
    return out.reshape(B, 4)


# ---------------------------------------------------------------------------
# Pure-JAX reference (for correctness check)
# ---------------------------------------------------------------------------
def _ref_forward(x_nchw, params):
    def apply(z, w, b, relu):
        wk = jnp.transpose(w, (3, 2, 0, 1))                    # KKIO -> OIHW
        pad = "SAME" if w.shape[0] == 3 else "VALID"
        y = lax.conv_general_dilated(
            z, wk, (1, 1), pad,
            dimension_numbers=("NCHW", "OIHW", "NCHW"),
            precision=lax.Precision.HIGHEST)
        y = y + b.reshape(1, -1, 1, 1)
        return jnp.maximum(y, 0.0) if relu else y

    def tower(z, blocks, head):
        for (w, b) in blocks:
            z = apply(z, w, b, True)
        return apply(z, head[0], head[1], False)

    boxes = tower(x_nchw, params["box"], params["box5"])
    confs = tower(x_nchw, params["conf"], params["conf5"])
    B, _, h, w = x_nchw.shape
    hw = h * w
    confs_f = confs.reshape(B, hw)
    boxes_f = boxes.reshape(B, 4, hw)
    keep = jnp.argmax(confs_f, axis=-1)
    idx = jnp.arange(hw)
    coord_x = (16.0 * (idx % OUTPUT_SZ)).astype(jnp.float32)
    coord_y = (16.0 * (idx // OUTPUT_SZ)).astype(jnp.float32)
    cx, cy = coord_x[keep], coord_y[keep]
    bsel = boxes_f[jnp.arange(B)[:, None], jnp.arange(4)[None, :], keep[:, None]]
    return jnp.stack([bsel[:, 0] + cx, bsel[:, 2] + cy,
                      bsel[:, 1] + cx, bsel[:, 3] + cy], axis=-1)


if __name__ == "__main__":
    key = jax.random.PRNGKey(0)
    kx, kp = jax.random.split(key)
    x = jax.random.normal(kx, (2, INPLANES, OUTPUT_SZ, OUTPUT_SZ), jnp.float32)
    params = init_params(kp)

    out = jax.jit(rpn_head_forward)(x, params)
    out = jax.block_until_ready(out)
    assert out.shape == (2, 4)

    ref = _ref_forward(x, params)
    err = float(jnp.max(jnp.abs(out - ref)))
    assert err < 5e-2, f"max abs err vs reference = {err}"
    print("KERNEL_OK")
</pallas_src>

<mosaic_0001>
module attributes {stable_mosaic.version = 11 : i64} {
  func.func @_rpn_fused_kernel(%arg0: i32, %arg1: memref<1x16x16x4xf32, #tpu.memory_space<vmem>>, %arg2: memref<36x64xf32, #tpu.memory_space<vmem>>, %arg3: memref<1x64xf32, #tpu.memory_space<vmem>>, %arg4: memref<576x64xf32, #tpu.memory_space<vmem>>, %arg5: memref<1x64xf32, #tpu.memory_space<vmem>>, %arg6: memref<576x64xf32, #tpu.memory_space<vmem>>, %arg7: memref<1x64xf32, #tpu.memory_space<vmem>>, %arg8: memref<576x64xf32, #tpu.memory_space<vmem>>, %arg9: memref<1x64xf32, #tpu.memory_space<vmem>>, %arg10: memref<64x5xf32, #tpu.memory_space<vmem>>, %arg11: memref<1x5xf32, #tpu.memory_space<vmem>>, %arg12: memref<1x1x4xf32, #tpu.memory_space<vmem>>) attributes {dimension_semantics = [#tpu.dimension_semantics<parallel>], iteration_bounds = array<i64: 2>, scalar_prefetch = 0 : i64, scratch_operands = 0 : i64, tpu.core_type = #tpu.core_type<tc>, window_params = [{transform_indices = @transform_0, window_bounds = array<i64: 1, 16, 16, 4>}, {pipeline_mode = #tpu.pipeline_mode<synchronous>, transform_indices = @transform_1, window_bounds = array<i64: 36, 64>}, {pipeline_mode = #tpu.pipeline_mode<synchronous>, transform_indices = @transform_2, window_bounds = array<i64: 1, 64>}, {pipeline_mode = #tpu.pipeline_mode<synchronous>, transform_indices = @transform_3, window_bounds = array<i64: 576, 64>}, {pipeline_mode = #tpu.pipeline_mode<synchronous>, transform_indices = @transform_4, window_bounds = array<i64: 1, 64>}, {pipeline_mode = #tpu.pipeline_mode<synchronous>, transform_indices = @transform_5, window_bounds = array<i64: 576, 64>}, {pipeline_mode = #tpu.pipeline_mode<synchronous>, transform_indices = @transform_6, window_bounds = array<i64: 1, 64>}, {pipeline_mode = #tpu.pipeline_mode<synchronous>, transform_indices = @transform_7, window_bounds = array<i64: 576, 64>}, {pipeline_mode = #tpu.pipeline_mode<synchronous>, transform_indices = @transform_8, window_bounds = array<i64: 1, 64>}, {pipeline_mode = #tpu.pipeline_mode<synchronous>, transform_indices = @transform_9, window_bounds = array<i64: 64, 5>}, {pipeline_mode = #tpu.pipeline_mode<synchronous>, transform_indices = @transform_10, window_bounds = array<i64: 1, 5>}, {transform_indices = @transform_11, window_bounds = array<i64: 1, 1, 4>}]} {
    %c0 = arith.constant 0 : index
    %c0_0 = arith.constant 0 : index
    %c0_1 = arith.constant 0 : index
    %c0_2 = arith.constant 0 : index
    %0 = vector.load %arg1[%c0, %c0_0, %c0_1, %c0_2] : memref<1x16x16x4xf32, #tpu.memory_space<vmem>>, vector<1x16x16x4xf32>
    %1 = vector.shape_cast %0 : vector<1x16x16x4xf32> to vector<16x16x4xf32>
    %c0_3 = arith.constant 0 : index
    %c0_4 = arith.constant 0 : index
    %2 = vector.load %arg2[%c0_3, %c0_4] : memref<36x64xf32, #tpu.memory_space<vmem>>, vector<36x64xf32>
    %c0_5 = arith.constant 0 : index
    %c0_6 = arith.constant 0 : index
    %3 = vector.load %arg3[%c0_5, %c0_6] : memref<1x64xf32, #tpu.memory_space<vmem>>, vector<1x64xf32>
    %cst = arith.constant 0.000000e+00 : f32
    %4 = vector.broadcast %cst : f32 to vector<16x1x4xf32>
    %cst_7 = arith.constant 0.000000e+00 : f32
    %5 = vector.broadcast %cst_7 : f32 to vector<1x18x4xf32>
    %6 = tpu.concatenate %4, %1, %4 in 1 : vector<16x1x4xf32>, vector<16x16x4xf32>, vector<16x1x4xf32> -> vector<16x18x4xf32>
    %7 = tpu.concatenate %5, %6, %5 in 0 : vector<1x18x4xf32>, vector<16x18x4xf32>, vector<1x18x4xf32> -> vector<18x18x4xf32>
    %8 = vector.extract_strided_slice %7 {offsets = [0, 0, 0], sizes = [16, 16, 4], strides = [1, 1, 1]} : vector<18x18x4xf32> to vector<16x16x4xf32>
    %9 = vector.shape_cast %8 : vector<16x16x4xf32> to vector<256x4xf32>
    %10 = vector.extract_strided_slice %7 {offsets = [0, 1, 0], sizes = [16, 16, 4], strides = [1, 1, 1]} : vector<18x18x4xf32> to vector<16x16x4xf32>
    %11 = vector.shape_cast %10 : vector<16x16x4xf32> to vector<256x4xf32>
    %12 = vector.extract_strided_slice %7 {offsets = [0, 2, 0], sizes = [16, 16, 4], strides = [1, 1, 1]} : vector<18x18x4xf32> to vector<16x16x4xf32>
    %13 = vector.shape_cast %12 : vector<16x16x4xf32> to vector<256x4xf32>
    %14 = vector.extract_strided_slice %7 {offsets = [1, 0, 0], sizes = [16, 16, 4], strides = [1, 1, 1]} : vector<18x18x4xf32> to vector<16x16x4xf32>
    %15 = vector.shape_cast %14 : vector<16x16x4xf32> to vector<256x4xf32>
    %16 = vector.extract_strided_slice %7 {offsets = [1, 1, 0], sizes = [16, 16, 4], strides = [1, 1, 1]} : vector<18x18x4xf32> to vector<16x16x4xf32>
    %17 = vector.shape_cast %16 : vector<16x16x4xf32> to vector<256x4xf32>
    %18 = vector.extract_strided_slice %7 {offsets = [1, 2, 0], sizes = [16, 16, 4], strides = [1, 1, 1]} : vector<18x18x4xf32> to vector<16x16x4xf32>
    %19 = vector.shape_cast %18 : vector<16x16x4xf32> to vector<256x4xf32>
    %20 = vector.extract_strided_slice %7 {offsets = [2, 0, 0], sizes = [16, 16, 4], strides = [1, 1, 1]} : vector<18x18x4xf32> to vector<16x16x4xf32>
    %21 = vector.shape_cast %20 : vector<16x16x4xf32> to vector<256x4xf32>
    %22 = vector.extract_strided_slice %7 {offsets = [2, 1, 0], sizes = [16, 16, 4], strides = [1, 1, 1]} : vector<18x18x4xf32> to vector<16x16x4xf32>
    %23 = vector.shape_cast %22 : vector<16x16x4xf32> to vector<256x4xf32>
    %24 = vector.extract_strided_slice %7 {offsets = [2, 2, 0], sizes = [16, 16, 4], strides = [1, 1, 1]} : vector<18x18x4xf32> to vector<16x16x4xf32>
    %25 = vector.shape_cast %24 : vector<16x16x4xf32> to vector<256x4xf32>
    %26 = tpu.concatenate %9, %11, %13, %15, %17, %19, %21, %23, %25 in 1 : vector<256x4xf32>, vector<256x4xf32>, vector<256x4xf32>, vector<256x4xf32>, vector<256x4xf32>, vector<256x4xf32>, vector<256x4xf32>, vector<256x4xf32>, vector<256x4xf32> -> vector<256x36xf32>
    %cst_8 = arith.constant dense<0.000000e+00> : vector<256x64xf32>
    %27 = tpu.matmul %26, %2, %cst_8 {dimension_numbers = #tpu.dot_dimension_numbers<[1], [0], [0], [1], [0, 0, 1, 1], [], []>} : vector<256x36xf32>, vector<36x64xf32>, vector<256x64xf32> -> vector<256x64xf32>
    %28 = vector.broadcast %3 : vector<1x64xf32> to vector<256x64xf32>
    %29 = arith.addf %27, %28 : vector<256x64xf32>
    %cst_9 = arith.constant 0.000000e+00 : f32
    %30 = vector.broadcast %cst_9 : f32 to vector<256x64xf32>
    %31 = arith.maximumf %29, %30 : vector<256x64xf32>
    %32 = vector.shape_cast %31 : vector<256x64xf32> to vector<16x16x64xf32>
    %c0_10 = arith.constant 0 : index
    %c0_11 = arith.constant 0 : index
    %33 = vector.load %arg4[%c0_10, %c0_11] : memref<576x64xf32, #tpu.memory_space<vmem>>, vector<576x64xf32>
    %c0_12 = arith.constant 0 : index
    %c0_13 = arith.constant 0 : index
    %34 = vector.load %arg5[%c0_12, %c0_13] : memref<1x64xf32, #tpu.memory_space<vmem>>, vector<1x64xf32>
    %cst_14 = arith.constant 0.000000e+00 : f32
    %35 = vector.broadcast %cst_14 : f32 to vector<16x1x64xf32>
    %cst_15 = arith.constant 0.000000e+00 : f32
    %36 = vector.broadcast %cst_15 : f32 to vector<1x18x64xf32>
    %37 = tpu.concatenate %35, %32, %35 in 1 : vector<16x1x64xf32>, vector<16x16x64xf32>, vector<16x1x64xf32> -> vector<16x18x64xf32>
    %38 = tpu.concatenate %36, %37, %36 in 0 : vector<1x18x64xf32>, vector<16x18x64xf32>, vector<1x18x64xf32> -> vector<18x18x64xf32>
    %39 = vector.extract_strided_slice %38 {offsets = [0, 0, 0], sizes = [16, 16, 64], strides = [1, 1, 1]} : vector<18x18x64xf32> to vector<16x16x64xf32>
    %40 = vector.shape_cast %39 : vector<16x16x64xf32> to vector<256x64xf32>
    %41 = vector.extract_strided_slice %38 {offsets = [0, 1, 0], sizes = [16, 16, 64], strides = [1, 1, 1]} : vector<18x18x64xf32> to vector<16x16x64xf32>
    %42 = vector.shape_cast %41 : vector<16x16x64xf32> to vector<256x64xf32>
    %43 = vector.extract_strided_slice %38 {offsets = [0, 2, 0], sizes = [16, 16, 64], strides = [1, 1, 1]} : vector<18x18x64xf32> to vector<16x16x64xf32>
    %44 = vector.shape_cast %43 : vector<16x16x64xf32> to vector<256x64xf32>
    %45 = vector.extract_strided_slice %38 {offsets = [1, 0, 0], sizes = [16, 16, 64], strides = [1, 1, 1]} : vector<18x18x64xf32> to vector<16x16x64xf32>
    %46 = vector.shape_cast %45 : vector<16x16x64xf32> to vector<256x64xf32>
    %47 = vector.extract_strided_slice %38 {offsets = [1, 1, 0], sizes = [16, 16, 64], strides = [1, 1, 1]} : vector<18x18x64xf32> to vector<16x16x64xf32>
    %48 = vector.shape_cast %47 : vector<16x16x64xf32> to vector<256x64xf32>
    %49 = vector.extract_strided_slice %38 {offsets = [1, 2, 0], sizes = [16, 16, 64], strides = [1, 1, 1]} : vector<18x18x64xf32> to vector<16x16x64xf32>
    %50 = vector.shape_cast %49 : vector<16x16x64xf32> to vector<256x64xf32>
    %51 = vector.extract_strided_slice %38 {offsets = [2, 0, 0], sizes = [16, 16, 64], strides = [1, 1, 1]} : vector<18x18x64xf32> to vector<16x16x64xf32>
    %52 = vector.shape_cast %51 : vector<16x16x64xf32> to vector<256x64xf32>
    %53 = vector.extract_strided_slice %38 {offsets = [2, 1, 0], sizes = [16, 16, 64], strides = [1, 1, 1]} : vector<18x18x64xf32> to vector<16x16x64xf32>
    %54 = vector.shape_cast %53 : vector<16x16x64xf32> to vector<256x64xf32>
    %55 = vector.extract_strided_slice %38 {offsets = [2, 2, 0], sizes = [16, 16, 64], strides = [1, 1, 1]} : vector<18x18x64xf32> to vector<16x16x64xf32>
    %56 = vector.shape_cast %55 : vector<16x16x64xf32> to vector<256x64xf32>
    %57 = tpu.concatenate %40, %42, %44, %46, %48, %50, %52, %54, %56 in 1 : vector<256x64xf32>, vector<256x64xf32>, vector<256x64xf32>, vector<256x64xf32>, vector<256x64xf32>, vector<256x64xf32>, vector<256x64xf32>, vector<256x64xf32>, vector<256x64xf32> -> vector<256x576xf32>
    %cst_16 = arith.constant dense<0.000000e+00> : vector<256x64xf32>
    %58 = tpu.matmul %57, %33, %cst_16 {dimension_numbers = #tpu.dot_dimension_numbers<[1], [0], [0], [1], [0, 0, 1, 1], [], []>} : vector<256x576xf32>, vector<576x64xf32>, vector<256x64xf32> -> vector<256x64xf32>
    %59 = vector.broadcast %34 : vector<1x64xf32> to vector<256x64xf32>
    %60 = arith.addf %58, %59 : vector<256x64xf32>
    %cst_17 = arith.constant 0.000000e+00 : f32
    %61 = vector.broadcast %cst_17 : f32 to vector<256x64xf32>
    %62 = arith.maximumf %60, %61 : vector<256x64xf32>
    %63 = vector.shape_cast %62 : vector<256x64xf32> to vector<16x16x64xf32>
    %c0_18 = arith.constant 0 : index
    %c0_19 = arith.constant 0 : index
    %64 = vector.load %arg6[%c0_18, %c0_19] : memref<576x64xf32, #tpu.memory_space<vmem>>, vector<576x64xf32>
    %c0_20 = arith.constant 0 : index
    %c0_21 = arith.constant 0 : index
    %65 = vector.load %arg7[%c0_20, %c0_21] : memref<1x64xf32, #tpu.memory_space<vmem>>, vector<1x64xf32>
    %cst_22 = arith.constant 0.000000e+00 : f32
    %66 = vector.broadcast %cst_22 : f32 to vector<16x1x64xf32>
    %cst_23 = arith.constant 0.000000e+00 : f32
    %67 = vector.broadcast %cst_23 : f32 to vector<1x18x64xf32>
    %68 = tpu.concatenate %66, %63, %66 in 1 : vector<16x1x64xf32>, vector<16x16x64xf32>, vector<16x1x64xf32> -> vector<16x18x64xf32>
    %69 = tpu.concatenate %67, %68, %67 in 0 : vector<1x18x64xf32>, vector<16x18x64xf32>, vector<1x18x64xf32> -> vector<18x18x64xf32>
    %70 = vector.extract_strided_slice %69 {offsets = [0, 0, 0], sizes = [16, 16, 64], strides = [1, 1, 1]} : vector<18x18x64xf32> to vector<16x16x64xf32>
    %71 = vector.shape_cast %70 : vector<16x16x64xf32> to vector<256x64xf32>
    %72 = vector.extract_strided_slice %69 {offsets = [0, 1, 0], sizes = [16, 16, 64], strides = [1, 1, 1]} : vector<18x18x64xf32> to vector<16x16x64xf32>
    %73 = vector.shape_cast %72 : vector<16x16x64xf32> to vector<256x64xf32>
    %74 = vector.extract_strided_slice %69 {offsets = [0, 2, 0], sizes = [16, 16, 64], strides = [1, 1, 1]} : vector<18x18x64xf32> to vector<16x16x64xf32>
    %75 = vector.shape_cast %74 : vector<16x16x64xf32> to vector<256x64xf32>
    %76 = vector.extract_strided_slice %69 {offsets = [1, 0, 0], sizes = [16, 16, 64], strides = [1, 1, 1]} : vector<18x18x64xf32> to vector<16x16x64xf32>
    %77 = vector.shape_cast %76 : vector<16x16x64xf32> to vector<256x64xf32>
    %78 = vector.extract_strided_slice %69 {offsets = [1, 1, 0], sizes = [16, 16, 64], strides = [1, 1, 1]} : vector<18x18x64xf32> to vector<16x16x64xf32>
    %79 = vector.shape_cast %78 : vector<16x16x64xf32> to vector<256x64xf32>
    %80 = vector.extract_strided_slice %69 {offsets = [1, 2, 0], sizes = [16, 16, 64], strides = [1, 1, 1]} : vector<18x18x64xf32> to vector<16x16x64xf32>
    %81 = vector.shape_cast %80 : vector<16x16x64xf32> to vector<256x64xf32>
    %82 = vector.extract_strided_slice %69 {offsets = [2, 0, 0], sizes = [16, 16, 64], strides = [1, 1, 1]} : vector<18x18x64xf32> to vector<16x16x64xf32>
    %83 = vector.shape_cast %82 : vector<16x16x64xf32> to vector<256x64xf32>
    %84 = vector.extract_strided_slice %69 {offsets = [2, 1, 0], sizes = [16, 16, 64], strides = [1, 1, 1]} : vector<18x18x64xf32> to vector<16x16x64xf32>
    %85 = vector.shape_cast %84 : vector<16x16x64xf32> to vector<256x64xf32>
    %86 = vector.extract_strided_slice %69 {offsets = [2, 2, 0], sizes = [16, 16, 64], strides = [1, 1, 1]} : vector<18x18x64xf32> to vector<16x16x64xf32>
    %87 = vector.shape_cast %86 : vector<16x16x64xf32> to vector<256x64xf32>
    %88 = tpu.concatenate %71, %73, %75, %77, %79, %81, %83, %85, %87 in 1 : vector<256x64xf32>, vector<256x64xf32>, vector<256x64xf32>, vector<256x64xf32>, vector<256x64xf32>, vector<256x64xf32>, vector<256x64xf32>, vector<256x64xf32>, vector<256x64xf32> -> vector<256x576xf32>
    %cst_24 = arith.constant dense<0.000000e+00> : vector<256x64xf32>
    %89 = tpu.matmul %88, %64, %cst_24 {dimension_numbers = #tpu.dot_dimension_numbers<[1], [0], [0], [1], [0, 0, 1, 1], [], []>} : vector<256x576xf32>, vector<576x64xf32>, vector<256x64xf32> -> vector<256x64xf32>
    %90 = vector.broadcast %65 : vector<1x64xf32> to vector<256x64xf32>
    %91 = arith.addf %89, %90 : vector<256x64xf32>
    %cst_25 = arith.constant 0.000000e+00 : f32
    %92 = vector.broadcast %cst_25 : f32 to vector<256x64xf32>
    %93 = arith.maximumf %91, %92 : vector<256x64xf32>
    %94 = vector.shape_cast %93 : vector<256x64xf32> to vector<16x16x64xf32>
    %c0_26 = arith.constant 0 : index
    %c0_27 = arith.constant 0 : index
    %95 = vector.load %arg8[%c0_26, %c0_27] : memref<576x64xf32, #tpu.memory_space<vmem>>, vector<576x64xf32>
    %c0_28 = arith.constant 0 : index
    %c0_29 = arith.constant 0 : index
    %96 = vector.load %arg9[%c0_28, %c0_29] : memref<1x64xf32, #tpu.memory_space<vmem>>, vector<1x64xf32>
    %cst_30 = arith.constant 0.000000e+00 : f32
    %97 = vector.broadcast %cst_30 : f32 to vector<16x1x64xf32>
    %cst_31 = arith.constant 0.000000e+00 : f32
    %98 = vector.broadcast %cst_31 : f32 to vector<1x18x64xf32>
    %99 = tpu.concatenate %97, %94, %97 in 1 : vector<16x1x64xf32>, vector<16x16x64xf32>, vector<16x1x64xf32> -> vector<16x18x64xf32>
    %100 = tpu.concatenate %98, %99, %98 in 0 : vector<1x18x64xf32>, vector<16x18x64xf32>, vector<1x18x64xf32> -> vector<18x18x64xf32>
    %101 = vector.extract_strided_slice %100 {offsets = [0, 0, 0], sizes = [16, 16, 64], strides = [1, 1, 1]} : vector<18x18x64xf32> to vector<16x16x64xf32>
    %102 = vector.shape_cast %101 : vector<16x16x64xf32> to vector<256x64xf32>
    %103 = vector.extract_strided_slice %100 {offsets = [0, 1, 0], sizes = [16, 16, 64], strides = [1, 1, 1]} : vector<18x18x64xf32> to vector<16x16x64xf32>
    %104 = vector.shape_cast %103 : vector<16x16x64xf32> to vector<256x64xf32>
    %105 = vector.extract_strided_slice %100 {offsets = [0, 2, 0], sizes = [16, 16, 64], strides = [1, 1, 1]} : vector<18x18x64xf32> to vector<16x16x64xf32>
    %106 = vector.shape_cast %105 : vector<16x16x64xf32> to vector<256x64xf32>
    %107 = vector.extract_strided_slice %100 {offsets = [1, 0, 0], sizes = [16, 16, 64], strides = [1, 1, 1]} : vector<18x18x64xf32> to vector<16x16x64xf32>
    %108 = vector.shape_cast %107 : vector<16x16x64xf32> to vector<256x64xf32>
    %109 = vector.extract_strided_slice %100 {offsets = [1, 1, 0], sizes = [16, 16, 64], strides = [1, 1, 1]} : vector<18x18x64xf32> to vector<16x16x64xf32>
    %110 = vector.shape_cast %109 : vector<16x16x64xf32> to vector<256x64xf32>
    %111 = vector.extract_strided_slice %100 {offsets = [1, 2, 0], sizes = [16, 16, 64], strides = [1, 1, 1]} : vector<18x18x64xf32> to vector<16x16x64xf32>
    %112 = vector.shape_cast %111 : vector<16x16x64xf32> to vector<256x64xf32>
    %113 = vector.extract_strided_slice %100 {offsets = [2, 0, 0], sizes = [16, 16, 64], strides = [1, 1, 1]} : vector<18x18x64xf32> to vector<16x16x64xf32>
    %114 = vector.shape_cast %113 : vector<16x16x64xf32> to vector<256x64xf32>
    %115 = vector.extract_strided_slice %100 {offsets = [2, 1, 0], sizes = [16, 16, 64], strides = [1, 1, 1]} : vector<18x18x64xf32> to vector<16x16x64xf32>
    %116 = vector.shape_cast %115 : vector<16x16x64xf32> to vector<256x64xf32>
    %117 = vector.extract_strided_slice %100 {offsets = [2, 2, 0], sizes = [16, 16, 64], strides = [1, 1, 1]} : vector<18x18x64xf32> to vector<16x16x64xf32>
    %118 = vector.shape_cast %117 : vector<16x16x64xf32> to vector<256x64xf32>
    %119 = tpu.concatenate %102, %104, %106, %108, %110, %112, %114, %116, %118 in 1 : vector<256x64xf32>, vector<256x64xf32>, vector<256x64xf32>, vector<256x64xf32>, vector<256x64xf32>, vector<256x64xf32>, vector<256x64xf32>, vector<256x64xf32>, vector<256x64xf32> -> vector<256x576xf32>
    %cst_32 = arith.constant dense<0.000000e+00> : vector<256x64xf32>
    %120 = tpu.matmul %119, %95, %cst_32 {dimension_numbers = #tpu.dot_dimension_numbers<[1], [0], [0], [1], [0, 0, 1, 1], [], []>} : vector<256x576xf32>, vector<576x64xf32>, vector<256x64xf32> -> vector<256x64xf32>
    %121 = vector.broadcast %96 : vector<1x64xf32> to vector<256x64xf32>
    %122 = arith.addf %120, %121 : vector<256x64xf32>
    %cst_33 = arith.constant 0.000000e+00 : f32
    %123 = vector.broadcast %cst_33 : f32 to vector<256x64xf32>
    %124 = arith.maximumf %122, %123 : vector<256x64xf32>
    %c0_34 = arith.constant 0 : index
    %c0_35 = arith.constant 0 : index
    %125 = vector.load %arg10[%c0_34, %c0_35] : memref<64x5xf32, #tpu.memory_space<vmem>>, vector<64x5xf32>
    %cst_36 = arith.constant dense<0.000000e+00> : vector<256x5xf32>
    %126 = tpu.matmul %124, %125, %cst_36 {dimension_numbers = #tpu.dot_dimension_numbers<[1], [0], [0], [1], [0, 0, 1, 1], [], []>} : vector<256x64xf32>, vector<64x5xf32>, vector<256x5xf32> -> vector<256x5xf32>
    %c0_37 = arith.constant 0 : index
    %c0_38 = arith.constant 0 : index
    %127 = vector.load %arg11[%c0_37, %c0_38] : memref<1x5xf32, #tpu.memory_space<vmem>>, vector<1x5xf32>
    %128 = vector.broadcast %127 : vector<1x5xf32> to vector<256x5xf32>
    %129 = arith.addf %126, %128 : vector<256x5xf32>
    %130 = vector.extract_strided_slice %129 {offsets = [0, 0], sizes = [256, 4], strides = [1, 1]} : vector<256x5xf32> to vector<256x4xf32>
    %131 = vector.extract_strided_slice %129 {offsets = [0, 4], sizes = [256, 1], strides = [1, 1]} : vector<256x5xf32> to vector<256x1xf32>
    %132 = tpu.iota {dimensions = array<i32: 0>} : vector<256x1xi32>
    %133 = arith.sitofp %132 : vector<256x1xi32> to vector<256x1xf32>
    %cst_39 = arith.constant dense<0xFF800000> : vector<1xf32>
    %134 = vector.multi_reduction <maximumf>, %131, %cst_39 [0] : vector<256x1xf32> to vector<1xf32>
    %135 = vector.shape_cast %134 : vector<1xf32> to vector<1x1xf32>
    %136 = vector.broadcast %135 : vector<1x1xf32> to vector<256x1xf32>
    %137 = arith.cmpf oeq, %131, %136 : vector<256x1xf32>
    %cst_40 = arith.constant 2.560000e+02 : f32
    %138 = vector.broadcast %cst_40 : f32 to vector<256x1xf32>
    %139 = arith.select %137, %133, %138 : vector<256x1xi1>, vector<256x1xf32>
    %cst_41 = arith.constant dense<0x7F800000> : vector<1xf32>
    %140 = vector.multi_reduction <minimumf>, %139, %cst_41 [0] : vector<256x1xf32> to vector<1xf32>
    %141 = vector.shape_cast %140 : vector<1xf32> to vector<1x1xf32>
    %142 = vector.broadcast %141 : vector<1x1xf32> to vector<256x1xf32>
    %143 = arith.cmpf oeq, %133, %142 : vector<256x1xf32>
    %144 = arith.extui %143 : vector<256x1xi1> to vector<256x1xi32>
    %145 = arith.sitofp %144 : vector<256x1xi32> to vector<256x1xf32>
    %146 = vector.broadcast %145 : vector<256x1xf32> to vector<256x4xf32>
    %147 = arith.mulf %130, %146 : vector<256x4xf32>
    %cst_42 = arith.constant dense<0.000000e+00> : vector<4xf32>
    %148 = vector.multi_reduction <add>, %147, %cst_42 [0] : vector<256x4xf32> to vector<4xf32>
    %149 = vector.shape_cast %148 : vector<4xf32> to vector<1x4xf32>
    %cst_43 = arith.constant 6.250000e-02 : f32
    %150 = vector.broadcast %cst_43 : f32 to vector<256x1xf32>
    %151 = arith.mulf %133, %150 : vector<256x1xf32>
    %152 = math.floor %151 : vector<256x1xf32>
    %cst_44 = arith.constant 1.600000e+01 : f32
    %153 = vector.broadcast %cst_44 : f32 to vector<256x1xf32>
    %154 = arith.mulf %153, %152 : vector<256x1xf32>
    %155 = arith.subf %133, %154 : vector<256x1xf32>
    %cst_45 = arith.constant 1.600000e+01 : f32
    %156 = vector.broadcast %cst_45 : f32 to vector<256x1xf32>
    %157 = arith.mulf %156, %155 : vector<256x1xf32>
    %158 = arith.mulf %157, %145 : vector<256x1xf32>
    %cst_46 = arith.constant dense<0.000000e+00> : vector<1xf32>
    %159 = vector.multi_reduction <add>, %158, %cst_46 [0] : vector<256x1xf32> to vector<1xf32>
    %160 = vector.shape_cast %159 : vector<1xf32> to vector<1x1xf32>
    %cst_47 = arith.constant 1.600000e+01 : f32
    %161 = vector.broadcast %cst_47 : f32 to vector<256x1xf32>
    %162 = arith.mulf %161, %152 : vector<256x1xf32>
    %163 = arith.mulf %162, %145 : vector<256x1xf32>
    %cst_48 = arith.constant dense<0.000000e+00> : vector<1xf32>
    %164 = vector.multi_reduction <add>, %163, %cst_48 [0] : vector<256x1xf32> to vector<1xf32>
    %165 = vector.shape_cast %164 : vector<1xf32> to vector<1x1xf32>
    %166 = vector.extract_strided_slice %149 {offsets = [0, 0], sizes = [1, 1], strides = [1, 1]} : vector<1x4xf32> to vector<1x1xf32>
    %167 = arith.addf %166, %160 : vector<1x1xf32>
    %168 = vector.extract_strided_slice %149 {offsets = [0, 2], sizes = [1, 1], strides = [1, 1]} : vector<1x4xf32> to vector<1x1xf32>
    %169 = arith.addf %168, %165 : vector<1x1xf32>
    %170 = vector.extract_strided_slice %149 {offsets = [0, 1], sizes = [1, 1], strides = [1, 1]} : vector<1x4xf32> to vector<1x1xf32>
    %171 = arith.addf %170, %160 : vector<1x1xf32>
    %172 = vector.extract_strided_slice %149 {offsets = [0, 3], sizes = [1, 1], strides = [1, 1]} : vector<1x4xf32> to vector<1x1xf32>
    %173 = arith.addf %172, %165 : vector<1x1xf32>
    %174 = tpu.concatenate %167, %169, %171, %173 in 1 : vector<1x1xf32>, vector<1x1xf32>, vector<1x1xf32>, vector<1x1xf32> -> vector<1x4xf32>
    %c0_49 = arith.constant 0 : index
    %c0_50 = arith.constant 0 : index
    %c0_51 = arith.constant 0 : index
    %175 = vector.load %arg12[%c0_49, %c0_50, %c0_51] : memref<1x1x4xf32, #tpu.memory_space<vmem>>, vector<1x1x4xf32>
    %176 = vector.shape_cast %175 : vector<1x1x4xf32> to vector<1x4xf32>
    %177 = vector.shape_cast %174 : vector<1x4xf32> to vector<1x1x4xf32>
    tpu.vector_store %arg12[%c0_49, %c0_50, %c0_51], %177 {strides = array<i32>} : memref<1x1x4xf32, #tpu.memory_space<vmem>>, vector<1x1x4xf32>,
    return
  }
  func.func @transform_0(%arg0: i32) -> (i32, i32, i32, i32) {
    %c0_i32 = arith.constant 0 : i32
    %c0_i32_0 = arith.constant 0 : i32
    %c0_i32_1 = arith.constant 0 : i32
    %c0_i32_2 = arith.constant 0 : i32
    return %arg0, %c0_i32, %c0_i32_0, %c0_i32_1 : i32, i32, i32, i32
  }
  func.func @transform_1(%arg0: i32) -> (i32, i32) {
    %c0_i32 = arith.constant 0 : i32
    %c0_i32_0 = arith.constant 0 : i32
    %c0_i32_1 = arith.constant 0 : i32
    return %c0_i32, %c0_i32_0 : i32, i32
  }
  func.func @transform_2(%arg0: i32) -> (i32, i32) {
    %c0_i32 = arith.constant 0 : i32
    %c0_i32_0 = arith.constant 0 : i32
    %c0_i32_1 = arith.constant 0 : i32
    return %c0_i32, %c0_i32_0 : i32, i32
  }
  func.func @transform_3(%arg0: i32) -> (i32, i32) {
    %c0_i32 = arith.constant 0 : i32
    %c0_i32_0 = arith.constant 0 : i32
    %c0_i32_1 = arith.constant 0 : i32
    return %c0_i32, %c0_i32_0 : i32, i32
  }
  func.func @transform_4(%arg0: i32) -> (i32, i32) {
    %c0_i32 = arith.constant 0 : i32
    %c0_i32_0 = arith.constant 0 : i32
    %c0_i32_1 = arith.constant 0 : i32
    return %c0_i32, %c0_i32_0 : i32, i32
  }
  func.func @transform_5(%arg0: i32) -> (i32, i32) {
    %c0_i32 = arith.constant 0 : i32
    %c0_i32_0 = arith.constant 0 : i32
    %c0_i32_1 = arith.constant 0 : i32
    return %c0_i32, %c0_i32_0 : i32, i32
  }
  func.func @transform_6(%arg0: i32) -> (i32, i32) {
    %c0_i32 = arith.constant 0 : i32
    %c0_i32_0 = arith.constant 0 : i32
    %c0_i32_1 = arith.constant 0 : i32
    return %c0_i32, %c0_i32_0 : i32, i32
  }
  func.func @transform_7(%arg0: i32) -> (i32, i32) {
    %c0_i32 = arith.constant 0 : i32
    %c0_i32_0 = arith.constant 0 : i32
    %c0_i32_1 = arith.constant 0 : i32
    return %c0_i32, %c0_i32_0 : i32, i32
  }
  func.func @transform_8(%arg0: i32) -> (i32, i32) {
    %c0_i32 = arith.constant 0 : i32
    %c0_i32_0 = arith.constant 0 : i32
    %c0_i32_1 = arith.constant 0 : i32
    return %c0_i32, %c0_i32_0 : i32, i32
  }
  func.func @transform_9(%arg0: i32) -> (i32, i32) {
    %c0_i32 = arith.constant 0 : i32
    %c0_i32_0 = arith.constant 0 : i32
    %c0_i32_1 = arith.constant 0 : i32
    return %c0_i32, %c0_i32_0 : i32, i32
  }
  func.func @transform_10(%arg0: i32) -> (i32, i32) {
    %c0_i32 = arith.constant 0 : i32
    %c0_i32_0 = arith.constant 0 : i32
    %c0_i32_1 = arith.constant 0 : i32
    return %c0_i32, %c0_i32_0 : i32, i32
  }
  func.func @transform_11(%arg0: i32) -> (i32, i32, i32) {
    %c0_i32 = arith.constant 0 : i32
    %c0_i32_0 = arith.constant 0 : i32
    %c0_i32_1 = arith.constant 0 : i32
    return %arg0, %c0_i32, %c0_i32_0 : i32, i32, i32
  }
}

</mosaic_0001>

<llo_original>
// kernel: rpn_head_forward.1
$region0: #{rpn_head_forward.1}
  #allocation0 [shape = 'u32[]', space=smem, size = 0x4, offset = 0x4, fixed_abs, tag = 'smem constant byte address 0x4 - core index']
  #allocation1 [shape = 'u32[144,128]{1,0:T(1,128)}', space=vmem, size = 0x12000, scoped, tag = 'internal scratch']
  %s0 = inlined_call_operand.vmem [shape: f32[2,16,16,4], index: 0, kind: input, shape index: {}]
  %s1 = inlined_call_operand.vmem [shape: f32[36,64], index: 1, kind: input, shape index: {}]
  %s2 = inlined_call_operand.vmem [shape: f32[1,64], index: 2, kind: input, shape index: {}]
  %s3 = inlined_call_operand.vmem [shape: f32[576,64], index: 3, kind: input, shape index: {}]
  %s4 = inlined_call_operand.vmem [shape: f32[1,64], index: 4, kind: input, shape index: {}]
  %s5 = inlined_call_operand.vmem [shape: f32[576,64], index: 5, kind: input, shape index: {}]
  %s6 = inlined_call_operand.vmem [shape: f32[1,64], index: 6, kind: input, shape index: {}]
  %s7 = inlined_call_operand.vmem [shape: f32[576,64], index: 7, kind: input, shape index: {}]
  %s8 = inlined_call_operand.vmem [shape: f32[1,64], index: 8, kind: input, shape index: {}]
  %s9 = inlined_call_operand.vmem [shape: f32[64,5], index: 9, kind: input, shape index: {}]
  %s10 = inlined_call_operand.vmem [shape: f32[1,5], index: 10, kind: input, shape index: {}]
  %s11 = inlined_call_operand.hbm [shape: f32[2,1,4], index: 11, kind: output, shape index: {}]
  %s12 = sld [smem:[#allocation0]]
  $region77: #{rpn_head_forward.1} parent=0
    _
  %s14 = ssub.s32 1, %s12
  %s15 = scalar_select 0, %s14, %s12
  $region1: #{rpn_head_forward.1} parent=0
    #allocation2 [shape = 'u8[1024]{0}', space=vmem, size = 0x400, scoped, tag = 'output window, operand 0']
    #allocation3 [shape = 's32[2]{0}', space=sflag, size = 0x8, scoped, tag = 'scoped memory for rpn_head_forward.1']
    %16 = vsyncpa [#allocation3], 0
    %s17 = scalar_lea.sflag [#allocation3], 1
    %18 = vsyncpa %s17, 0
    loop: start=0, step=1, limit=4
    $region2: #{rpn_head_forward.1} parent=1 // loop_pre_header
      _
    $region3: #{rpn_head_forward.1} parent=1 // loop_header
      %s20 = sphi 0, %s24
      %p21 = scmp.ge.s32.totalorder %s20, 4
      %s30 = sphi 0, %s32
      %s33 = sphi 0, %s30
      %s34 = sphi 0, %s33
      %s50 = sphi 0, %s34
      %s54 = sphi 0, %s54
      %s56 = sphi 0, %s54
      %s57 = sphi 0, %s56
      %s71 = sphi 0, %s57
      %s75 = sphi 0, %s75
      %s77 = sphi 0, %s75
      %s78 = sphi 0, %s77
      %s92 = sphi 0, %s78
      %s96 = sphi 0, %s96
      %s98 = sphi 0, %s96
      %s99 = sphi 0, %s98
      %s113 = sphi 0, %s99
      %s117 = sphi 0, %s117
      %s119 = sphi 0, %s117
      %s120 = sphi 0, %s119
      %s134 = sphi 0, %s120
      %s138 = sphi 0, %s138
      %s140 = sphi 0, %s138
      %s141 = sphi 0, %s140
      %s155 = sphi 0, %s141
      %s159 = sphi 0, %s159
      %s161 = sphi 0, %s159
      %s162 = sphi 0, %s161
      %s176 = sphi 0, %s162
      %s180 = sphi 0, %s180
      %s182 = sphi 0, %s180
      %s183 = sphi 0, %s182
      %s197 = sphi 0, %s183
      %s201 = sphi 0, %s201
      %s203 = sphi 0, %s201
      %s204 = sphi 0, %s203
      %s218 = sphi 0, %s204
      %s222 = sphi 0, %s222
      %s224 = sphi 0, %s222
      %s225 = sphi 0, %s224
      %s239 = sphi 0, %s225
      %s243 = sphi 0, %s243
      %s245 = sphi 0, %s243
      %s246 = sphi 0, %s245
      %s260 = sphi 0, %s246
      %s266 = sphi 0, %s268
      %s269 = sphi 0, %s266
      %s270 = sphi 0, %s269
      %s286 = sphi 0, %s270
    $region4: #{rpn_head_forward.1} parent=1 // loop_header_branch
      %23 = sbr.rel (%p21) target = $region8
    $region5: #{rpn_head_forward.1} parent=1 // loop_body
      %s25 = ssub.s32 %s20, 1
      %s26 = ssub.s32 %s20, 2
      %s27 = sadd.s32 %s20, 1
      %s28 = ssub.s32 %s20, %s27
      %p29 = scmp.eq.s32.totalorder %s28, 0
      %s31 = sadd.s32 %s30, 1
      %s32 = scalar_select %p29, %s30, %s31
      %p35 = pneg %p29
      %p36 = scmp.eq.s32.totalorder %s20, 1
      %p37 = por %p35, %p36
      %p38 = scmp.ne.s32.totalorder %s30, %s33
      %p39 = scmp.eq.s32.totalorder %s20, 0
      %p40 = por %p38, %p39
      %p41 = scmp.ne.s32.totalorder %s30, %s33
      %p42 = scmp.eq.s32.totalorder %s25, 1
      %p43 = por %p41, %p42
      %p44 = scmp.ne.s32.totalorder %s33, %s34
      %p45 = scmp.eq.s32.totalorder %s25, 0
      %p46 = por %p44, %p45
      %p47 = scmp.ne.s32.totalorder %s33, %s34
      %p48 = scmp.eq.s32.totalorder %s26, 1
      %p49 = por %p47, %p48
      %p51 = scmp.ne.s32.totalorder %s34, %s50
      %p52 = scmp.eq.s32.totalorder %s26, 0
      %p53 = por %p51, %p52
      %s55 = sadd.s32 %s54, 1
      %p58 = scmp.eq.s32.totalorder %s20, 1
      %p59 = scmp.ne.s32.totalorder %s54, %s56
      %p60 = scmp.eq.s32.totalorder %s20, 0
      %p61 = por %p59, %p60
      %p62 = scmp.ne.s32.totalorder %s54, %s56
      %p63 = scmp.eq.s32.totalorder %s25, 1
      %p64 = por %p62, %p63
      %p65 = scmp.ne.s32.totalorder %s56, %s57
      %p66 = scmp.eq.s32.totalorder %s25, 0
      %p67 = por %p65, %p66
      %p68 = scmp.ne.s32.totalorder %s56, %s57
      %p69 = scmp.eq.s32.totalorder %s26, 1
      %p70 = por %p68, %p69
      %p72 = scmp.ne.s32.totalorder %s57, %s71
      %p73 = scmp.eq.s32.totalorder %s26, 0
      %p74 = por %p72, %p73
      %s76 = sadd.s32 %s75, 1
      %p79 = scmp.eq.s32.totalorder %s20, 1
      %p80 = scmp.ne.s32.totalorder %s75, %s77
      %p81 = scmp.eq.s32.totalorder %s20, 0
      %p82 = por %p80, %p81
      %p83 = scmp.ne.s32.totalorder %s75, %s77
      %p84 = scmp.eq.s32.totalorder %s25, 1
      %p85 = por %p83, %p84
      %p86 = scmp.ne.s32.totalorder %s77, %s78
      %p87 = scmp.eq.s32.totalorder %s25, 0
      %p88 = por %p86, %p87
      %p89 = scmp.ne.s32.totalorder %s77, %s78
      %p90 = scmp.eq.s32.totalorder %s26, 1
      %p91 = por %p89, %p90
      %p93 = scmp.ne.s32.totalorder %s78, %s92
      %p94 = scmp.eq.s32.totalorder %s26, 0
      %p95 = por %p93, %p94
      %s97 = sadd.s32 %s96, 1
      %p100 = scmp.eq.s32.totalorder %s20, 1
      %p101 = scmp.ne.s32.totalorder %s96, %s98
      %p102 = scmp.eq.s32.totalorder %s20, 0
      %p103 = por %p101, %p102
      %p104 = scmp.ne.s32.totalorder %s96, %s98
      %p105 = scmp.eq.s32.totalorder %s25, 1
      %p106 = por %p104, %p105
      %p107 = scmp.ne.s32.totalorder %s98, %s99
      %p108 = scmp.eq.s32.totalorder %s25, 0
      %p109 = por %p107, %p108
      %p110 = scmp.ne.s32.totalorder %s98, %s99
      %p111 = scmp.eq.s32.totalorder %s26, 1
      %p112 = por %p110, %p111
      %p114 = scmp.ne.s32.totalorder %s99, %s113
      %p115 = scmp.eq.s32.totalorder %s26, 0
      %p116 = por %p114, %p115
      %s118 = sadd.s32 %s117, 1
      %p121 = scmp.eq.s32.totalorder %s20, 1
      %p122 = scmp.ne.s32.totalorder %s117, %s119
      %p123 = scmp.eq.s32.totalorder %s20, 0
      %p124 = por %p122, %p123
      %p125 = scmp.ne.s32.totalorder %s117, %s119
      %p126 = scmp.eq.s32.totalorder %s25, 1
      %p127 = por %p125, %p126
      %p128 = scmp.ne.s32.totalorder %s119, %s120
      %p129 = scmp.eq.s32.totalorder %s25, 0
      %p130 = por %p128, %p129
      %p131 = scmp.ne.s32.totalorder %s119, %s120
      %p132 = scmp.eq.s32.totalorder %s26, 1
      %p133 = por %p131, %p132
      %p135 = scmp.ne.s32.totalorder %s120, %s134
      %p136 = scmp.eq.s32.totalorder %s26, 0
      %p137 = por %p135, %p136
      %s139 = sadd.s32 %s138, 1
      %p142 = scmp.eq.s32.totalorder %s20, 1
      %p143 = scmp.ne.s32.totalorder %s138, %s140
      %p144 = scmp.eq.s32.totalorder %s20, 0
      %p145 = por %p143, %p144
      %p146 = scmp.ne.s32.totalorder %s138, %s140
      %p147 = scmp.eq.s32.totalorder %s25, 1
      %p148 = por %p146, %p147
      %p149 = scmp.ne.s32.totalorder %s140, %s141
      %p150 = scmp.eq.s32.totalorder %s25, 0
      %p151 = por %p149, %p150
      %p152 = scmp.ne.s32.totalorder %s140, %s141
      %p153 = scmp.eq.s32.totalorder %s26, 1
      %p154 = por %p152, %p153
      %p156 = scmp.ne.s32.totalorder %s141, %s155
      %p157 = scmp.eq.s32.totalorder %s26, 0
      %p158 = por %p156, %p157
      %s160 = sadd.s32 %s159, 1
      %p163 = scmp.eq.s32.totalorder %s20, 1
      %p164 = scmp.ne.s32.totalorder %s159, %s161
      %p165 = scmp.eq.s32.totalorder %s20, 0
      %p166 = por %p164, %p165
      %p167 = scmp.ne.s32.totalorder %s159, %s161
      %p168 = scmp.eq.s32.totalorder %s25, 1
      %p169 = por %p167, %p168
      %p170 = scmp.ne.s32.totalorder %s161, %s162
      %p171 = scmp.eq.s32.totalorder %s25, 0
      %p172 = por %p170, %p171
      %p173 = scmp.ne.s32.totalorder %s161, %s162
      %p174 = scmp.eq.s32.totalorder %s26, 1
      %p175 = por %p173, %p174
      %p177 = scmp.ne.s32.totalorder %s162, %s176
      %p178 = scmp.eq.s32.totalorder %s26, 0
      %p179 = por %p177, %p178
      %s181 = sadd.s32 %s180, 1
      %p184 = scmp.eq.s32.totalorder %s20, 1
      %p185 = scmp.ne.s32.totalorder %s180, %s182
      %p186 = scmp.eq.s32.totalorder %s20, 0
      %p187 = por %p185, %p186
      %p188 = scmp.ne.s32.totalorder %s180, %s182
      %p189 = scmp.eq.s32.totalorder %s25, 1
      %p190 = por %p188, %p189
      %p191 = scmp.ne.s32.totalorder %s182, %s183
      %p192 = scmp.eq.s32.totalorder %s25, 0
      %p193 = por %p191, %p192
      %p194 = scmp.ne.s32.totalorder %s182, %s183
      %p195 = scmp.eq.s32.totalorder %s26, 1
      %p196 = por %p194, %p195
      %p198 = scmp.ne.s32.totalorder %s183, %s197
      %p199 = scmp.eq.s32.totalorder %s26, 0
      %p200 = por %p198, %p199
      %s202 = sadd.s32 %s201, 1
      %p205 = scmp.eq.s32.totalorder %s20, 1
      %p206 = scmp.ne.s32.totalorder %s201, %s203
      %p207 = scmp.eq.s32.totalorder %s20, 0
      %p208 = por %p206, %p207
      %p209 = scmp.ne.s32.totalorder %s201, %s203
      %p210 = scmp.eq.s32.totalorder %s25, 1
      %p211 = por %p209, %p210
      %p212 = scmp.ne.s32.totalorder %s203, %s204
      %p213 = scmp.eq.s32.totalorder %s25, 0
      %p214 = por %p212, %p213
      %p215 = scmp.ne.s32.totalorder %s203, %s204
      %p216 = scmp.eq.s32.totalorder %s26, 1
      %p217 = por %p215, %p216
      %p219 = scmp.ne.s32.totalorder %s204, %s218
      %p220 = scmp.eq.s32.totalorder %s26, 0
      %p221 = por %p219, %p220
      %s223 = sadd.s32 %s222, 1
      %p226 = scmp.eq.s32.totalorder %s20, 1
      %p227 = scmp.ne.s32.totalorder %s222, %s224
      %p228 = scmp.eq.s32.totalorder %s20, 0
      %p229 = por %p227, %p228
      %p230 = scmp.ne.s32.totalorder %s222, %s224
      %p231 = scmp.eq.s32.totalorder %s25, 1
      %p232 = por %p230, %p231
      %p233 = scmp.ne.s32.totalorder %s224, %s225
      %p234 = scmp.eq.s32.totalorder %s25, 0
      %p235 = por %p233, %p234
      %p236 = scmp.ne.s32.totalorder %s224, %s225
      %p237 = scmp.eq.s32.totalorder %s26, 1
      %p238 = por %p236, %p237
      %p240 = scmp.ne.s32.totalorder %s225, %s239
      %p241 = scmp.eq.s32.totalorder %s26, 0
      %p242 = por %p240, %p241
      %s244 = sadd.s32 %s243, 1
      %p247 = scmp.eq.s32.totalorder %s20, 1
      %p248 = scmp.ne.s32.totalorder %s243, %s245
      %p249 = scmp.eq.s32.totalorder %s20, 0
      %p250 = por %p248, %p249
      %p251 = scmp.ne.s32.totalorder %s243, %s245
      %p252 = scmp.eq.s32.totalorder %s25, 1
      %p253 = por %p251, %p252
      %p254 = scmp.ne.s32.totalorder %s245, %s246
      %p255 = scmp.eq.s32.totalorder %s25, 0
      %p256 = por %p254, %p255
      %p257 = scmp.ne.s32.totalorder %s245, %s246
      %p258 = scmp.eq.s32.totalorder %s26, 1
      %p259 = por %p257, %p258
      %p261 = scmp.ne.s32.totalorder %s246, %s260
      %p262 = scmp.eq.s32.totalorder %s26, 0
      %p263 = por %p261, %p262
      %s264 = ssub.s32 %s20, %s27
      %p265 = scmp.eq.s32.totalorder %s264, 0
      %s267 = sadd.s32 %s266, 1
      %s268 = scalar_select %p265, %s266, %s267
      %p271 = pneg %p265
      %p272 = scmp.eq.s32.totalorder %s20, 1
      %p273 = por %p271, %p272
      %p274 = scmp.ne.s32.totalorder %s266, %s269
      %p275 = scmp.eq.s32.totalorder %s20, 0
      %p276 = por %p274, %p275
      %p277 = scmp.ne.s32.totalorder %s266, %s269
      %p278 = scmp.eq.s32.totalorder %s25, 1
      %p279 = por %p277, %p278
      %p280 = scmp.ne.s32.totalorder %s269, %s270
      %p281 = scmp.eq.s32.totalorder %s25, 0
      %p282 = por %p280, %p281
      %p283 = scmp.ne.s32.totalorder %s269, %s270
      %p284 = scmp.eq.s32.totalorder %s26, 1
      %p285 = por %p283, %p284
      %p287 = scmp.ne.s32.totalorder %s270, %s286
      %p288 = scmp.eq.s32.totalorder %s26, 0
      %p289 = por %p287, %p288
      %p290 = scmp.le.s32.totalorder 1, %s20
      %p291 = scmp.lt.s32.totalorder %s20, 3
      %p292 = pnand %p290, %p291
      %p293 = pneg %p292
      // Predicated region
      $region9: #{rpn_head_forward.1} parent=5 // pred_check
        _
      $region10: #{rpn_head_forward.1} parent=5 // pred_check_branch
        %295 = sbr.rel (%p292) target = $region12
      $region11: #{rpn_head_forward.1} parent=5 // pred_region
        %s296 = ssub.s32 %s20, 1
        // Predicated region
        $region13: #{rpn_head_forward.1} parent=11 // pred_check
          %p297 = pneg %p67
        $region14: #{rpn_head_forward.1} parent=11 // pred_check_branch
          %299 = sbr.rel (%p297) target = $region16
        $region15: #{rpn_head_forward.1} parent=11 // pred_region
          _
        $region16: #{rpn_head_forward.1} parent=11 // pred_fallthru
          _
        // Predicated region
        $region17: #{rpn_head_forward.1} parent=11 // pred_check
          %p300 = pneg %p88
        $region18: #{rpn_head_forward.1} parent=11 // pred_check_branch
          %302 = sbr.rel (%p300) target = $region20
        $region19: #{rpn_head_forward.1} parent=11 // pred_region
          _
        $region20: #{rpn_head_forward.1} parent=11 // pred_fallthru
          _
        // Predicated region
        $region21: #{rpn_head_forward.1} parent=11 // pred_check
          %p303 = pneg %p109
        $region22: #{rpn_head_forward.1} parent=11 // pred_check_branch
          %305 = sbr.rel (%p303) target = $region24
        $region23: #{rpn_head_forward.1} parent=11 // pred_region
          _
        $region24: #{rpn_head_forward.1} parent=11 // pred_fallthru
          _
        // Predicated region
        $region25: #{rpn_head_forward.1} parent=11 // pred_check
          %p306 = pneg %p130
        $region26: #{rpn_head_forward.1} parent=11 // pred_check_branch
          %308 = sbr.rel (%p306) target = $region28
        $region27: #{rpn_head_forward.1} parent=11 // pred_region
          _
        $region28: #{rpn_head_forward.1} parent=11 // pred_fallthru
          _
        // Predicated region
        $region29: #{rpn_head_forward.1} parent=11 // pred_check
          %p309 = pneg %p151
        $region30: #{rpn_head_forward.1} parent=11 // pred_check_branch
          %311 = sbr.rel (%p309) target = $region32
        $region31: #{rpn_head_forward.1} parent=11 // pred_region
          _
        $region32: #{rpn_head_forward.1} parent=11 // pred_fallthru
          _
        // Predicated region
        $region33: #{rpn_head_forward.1} parent=11 // pred_check
          %p312 = pneg %p172
        $region34: #{rpn_head_forward.1} parent=11 // pred_check_branch
          %314 = sbr.rel (%p312) target = $region36
        $region35: #{rpn_head_forward.1} parent=11 // pred_region
          _
        $region36: #{rpn_head_forward.1} parent=11 // pred_fallthru
          _
        // Predicated region
        $region37: #{rpn_head_forward.1} parent=11 // pred_check
          %p315 = pneg %p193
        $region38: #{rpn_head_forward.1} parent=11 // pred_check_branch
          %317 = sbr.rel (%p315) target = $region40
        $region39: #{rpn_head_forward.1} parent=11 // pred_region
          _
        $region40: #{rpn_head_forward.1} parent=11 // pred_fallthru
          _
        // Predicated region
        $region41: #{rpn_head_forward.1} parent=11 // pred_check
          %p318 = pneg %p214
        $region42: #{rpn_head_forward.1} parent=11 // pred_check_branch
          %320 = sbr.rel (%p318) target = $region44
        $region43: #{rpn_head_forward.1} parent=11 // pred_region
          _
        $region44: #{rpn_head_forward.1} parent=11 // pred_fallthru
          _
        // Predicated region
        $region45: #{rpn_head_forward.1} parent=11 // pred_check
          %p321 = pneg %p235
        $region46: #{rpn_head_forward.1} parent=11 // pred_check_branch
          %323 = sbr.rel (%p321) target = $region48
        $region47: #{rpn_head_forward.1} parent=11 // pred_region
          _
        $region48: #{rpn_head_forward.1} parent=11 // pred_fallthru
          _
        // Predicated region
        $region49: #{rpn_head_forward.1} parent=11 // pred_check
          %p324 = pneg %p256
        $region50: #{rpn_head_forward.1} parent=11 // pred_check_branch
          %326 = sbr.rel (%p324) target = $region52
        $region51: #{rpn_head_forward.1} parent=11 // pred_region
          _
        $region52: #{rpn_head_forward.1} parent=11 // pred_fallthru
          _
      $region12: #{rpn_head_forward.1} parent=5 // pred_fallthru
        _
      %p327 = scmp.lt.s32.totalorder %s20, 2
      // Predicated region
      $region53: #{rpn_head_forward.1} parent=5 // pred_check
        %p328 = pneg %p327
      $region54: #{rpn_head_forward.1} parent=5 // pred_check_branch
        %330 = sbr.rel (%p328) target = $region56
      $region55: #{rpn_head_forward.1} parent=5 // pred_region
        // Predicated region
        $region57: #{rpn_head_forward.1} parent=55 // pred_check
          %p331 = pneg %p40
        $region58: #{rpn_head_forward.1} parent=55 // pred_check_branch
          %333 = sbr.rel (%p331) target = $region60
        $region59: #{rpn_head_forward.1} parent=55 // pred_region
          %p334 = scmp.lt.s32.totalorder %s20, 1
          %s335 = scalar_select %p334, %s20, 1
          %s336 = smul.addr %s335, 32
          %s337 = smul.addr %s336, 8
          %s338 = scalar_lea.vmem %s0, %s337
        $region60: #{rpn_head_forward.1} parent=55 // pred_fallthru
          _
      $region56: #{rpn_head_forward.1} parent=5 // pred_fallthru
        _
      %p339 = scmp.le.s32.totalorder 1, %s20
      %p340 = scmp.lt.s32.totalorder %s20, 3
      %p341 = pnand %p339, %p340
      %p342 = pneg %p341
      // Predicated region
      $region61: #{rpn_head_forward.1} parent=5 // pred_check
        _
      $region62: #{rpn_head_forward.1} parent=5 // pred_check_branch
        %344 = sbr.rel (%p341) target = $region64
      $region63: #{rpn_head_forward.1} parent=5 // pred_region
        %s345 = ssub.s32 %s20, 1
        %p346 = scmp.lt.s32.totalorder %s25, 1
        %s347 = scalar_select %p346, %s25, 1
        %s348 = smul.addr %s347, 32
        %s349 = smul.addr %s348, 8
        %s350 = scalar_lea.vmem %s0, %s349
        %p351 = pneg %p46
        %p352 = pneg %p43
        %p353 = pneg %p67
        %p354 = pneg %p64
        %p355 = pneg %p88
        %p356 = pneg %p85
        %p357 = pneg %p109
        %p358 = pneg %p106
        %p359 = pneg %p130
        %p360 = pneg %p127
        %p361 = pneg %p151
        %p362 = pneg %p148
        %p363 = pneg %p172
        %p364 = pneg %p169
        %p365 = pneg %p193
        %p366 = pneg %p190
        %p367 = pneg %p214
        %p368 = pneg %p211
        %p369 = pneg %p235
        %p370 = pneg %p232
        %p371 = pneg %p256
        %p372 = pneg %p253
        %p373 = pneg %p282
        %p374 = pneg %p279
        %s375 = sand.u32 %s269, 1
        %s376 = scalar_lea.sflag [#allocation3], %s375
        %s377 = sand.u32 %s269, 1
        %s378 = scalar_lea.vmem [#allocation2], %s377
        %p379 = scmp.lt.s32.totalorder %s25, 1
        %s380 = scalar_select %p379, %s25, 1
        %s381 = smul.addr %s380, 32
        %s382 = smul.addr %s381, 8
        %s383 = scalar_lea.vmem %s0, %s382
        %v384 = vld [vmem:[%s383] sm:$0xff]
        %v385 = vld [vmem:[%s383 + $0x8] sm:$0xff]
        %v386 = vld [vmem:[%s383 + $0x10] sm:$0xff]
        %v387 = vld [vmem:[%s383 + $0x18] sm:$0xff]
        %v388 = vld [vmem:[%s383 + $0x20] sm:$0xff]
        %v389 = vld [vmem:[%s383 + $0x28] sm:$0xff]
        %v390 = vld [vmem:[%s383 + $0x30] sm:$0xff]
        %v391 = vld [vmem:[%s383 + $0x38] sm:$0xff]
        %v392 = vld [vmem:[%s383 + $0x40] sm:$0xff]
        %v393 = vld [vmem:[%s383 + $0x48] sm:$0xff]
        %v394 = vld [vmem:[%s383 + $0x50] sm:$0xff]
        %v395 = vld [vmem:[%s383 + $0x58] sm:$0xff]
        %v396 = vld [vmem:[%s383 + $0x60] sm:$0xff]
        %v397 = vld [vmem:[%s383 + $0x68] sm:$0xff]
        %v398 = vld [vmem:[%s383 + $0x70] sm:$0xff]
        %v399 = vld [vmem:[%s383 + $0x78] sm:$0xff]
        %v400 = vld [vmem:[%s383 + $0x80] sm:$0xff]
        %v401 = vld [vmem:[%s383 + $0x88] sm:$0xff]
        %v402 = vld [vmem:[%s383 + $0x90] sm:$0xff]
        %v403 = vld [vmem:[%s383 + $0x98] sm:$0xff]
        %v404 = vld [vmem:[%s383 + $0xa0] sm:$0xff]
        %v405 = vld [vmem:[%s383 + $0xa8] sm:$0xff]
        %v406 = vld [vmem:[%s383 + $0xb0] sm:$0xff]
        %v407 = vld [vmem:[%s383 + $0xb8] sm:$0xff]
        %v408 = vld [vmem:[%s383 + $0xc0] sm:$0xff]
        %v409 = vld [vmem:[%s383 + $0xc8] sm:$0xff]
        %v410 = vld [vmem:[%s383 + $0xd0] sm:$0xff]
        %v411 = vld [vmem:[%s383 + $0xd8] sm:$0xff]
        %v412 = vld [vmem:[%s383 + $0xe0] sm:$0xff]
        %v413 = vld [vmem:[%s383 + $0xe8] sm:$0xff]
        %v414 = vld [vmem:[%s383 + $0xf0] sm:$0xff]
        %v415 = vld [vmem:[%s383 + $0xf8] sm:$0xff]
        %v416 = vld [vmem:[%s1] sm:$0xff]
        %v417 = vld [vmem:[%s1 + $0x8] sm:$0xff]
        %v418 = vld [vmem:[%s1 + $0x10] sm:$0xff]
        %v419 = vld [vmem:[%s1 + $0x18] sm:$0xff]
        %v420 = vld [vmem:[%s1 + $0x20] sm:$0xf]
        %v421 = vld [vmem:[%s2] sm:$0x1]
        %vm454 = vcmask 1040384
        %v455 = vrot.slane %v384, 7
        %v456 = vrot.slane %v385, 7
        %v457 = vsel %vm454, %v455, %v456
        %v458 = vrot.slane %v386, 7
        %v459 = vrot.slane %v387, 7
        %v460 = vsel %vm454, %v458, %v459
        %v461 = vrot.slane %v388, 7
        %v462 = vrot.slane %v389, 7
        %v463 = vsel %vm454, %v461, %v462
        %v464 = vrot.slane %v390, 7
        %v465 = vrot.slane %v391, 7
        %v466 = vsel %vm454, %v464, %v465
        %v467 = vrot.slane %v392, 7
        %v468 = vrot.slane %v393, 7
        %v469 = vsel %vm454, %v467, %v468
        %v470 = vrot.slane %v394, 7
        %v471 = vrot.slane %v395, 7
        %v472 = vsel %vm454, %v470, %v471
        %v473 = vrot.slane %v396, 7
        %v474 = vrot.slane %v397, 7
        %v475 = vsel %vm454, %v473, %v474
        %v476 = vrot.slane %v398, 7
        %v477 = vrot.slane %v399, 7
        %v478 = vsel %vm454, %v476, %v477
        %v479 = vrot.slane %v400, 7
        %v480 = vrot.slane %v401, 7
        %v481 = vsel %vm454, %v479, %v480
        %v482 = vrot.slane %v402, 7
        %v483 = vrot.slane %v403, 7
        %v484 = vsel %vm454, %v482, %v483
        %v485 = vrot.slane %v404, 7
        %v486 = vrot.slane %v405, 7
        %v487 = vsel %vm454, %v485, %v486
        %v488 = vrot.slane %v406, 7
        %v489 = vrot.slane %v407, 7
        %v490 = vsel %vm454, %v488, %v489
        %v491 = vrot.slane %v408, 7
        %v492 = vrot.slane %v409, 7
        %v493 = vsel %vm454, %v491, %v492
        %v494 = vrot.slane %v410, 7
        %v495 = vrot.slane %v411, 7
        %v496 = vsel %vm454, %v494, %v495
        %v497 = vrot.slane %v412, 7
        %v498 = vrot.slane %v413, 7
        %v499 = vsel %vm454, %v497, %v498
        %v500 = vrot.slane %v414, 7
        %v501 = vrot.slane %v415, 7
        %v502 = vsel %vm454, %v500, %v501
        %v550 = vsel %vm454, 0.0, %v455
        %v551 = vsel %vm454, 0.0, %v458
        %v552 = vsel %vm454, 0.0, %v461
        %v553 = vsel %vm454, 0.0, %v464
        %v554 = vsel %vm454, 0.0, %v467
        %v555 = vsel %vm454, 0.0, %v470
        %v556 = vsel %vm454, 0.0, %v473
        %v557 = vsel %vm454, 0.0, %v476
        %v558 = vsel %vm454, 0.0, %v479
        %v559 = vsel %vm454, 0.0, %v482
        %v560 = vsel %vm454, 0.0, %v485
        %v561 = vsel %vm454, 0.0, %v488
        %v562 = vsel %vm454, 0.0, %v491
        %v563 = vsel %vm454, 0.0, %v494
        %v564 = vsel %vm454, 0.0, %v497
        %v565 = vsel %vm454, 0.0, %v500
        %v566 = vsel %vm454, %v456, 0.0
        %v567 = vsel %vm454, %v459, 0.0
        %v568 = vsel %vm454, %v462, 0.0
        %v569 = vsel %vm454, %v465, 0.0
        %v570 = vsel %vm454, %v468, 0.0
        %v571 = vsel %vm454, %v471, 0.0
        %v572 = vsel %vm454, %v474, 0.0
        %v573 = vsel %vm454, %v477, 0.0
        %v574 = vsel %vm454, %v480, 0.0
        %v575 = vsel %vm454, %v483, 0.0
        %v576 = vsel %vm454, %v486, 0.0
        %v577 = vsel %vm454, %v489, 0.0
        %v578 = vsel %vm454, %v492, 0.0
        %v579 = vsel %vm454, %v495, 0.0
        %v580 = vsel %vm454, %v498, 0.0
        %v581 = vsel %vm454, %v501, 0.0
        %vm613 = vcmask 1046528
        %v614 = vrot.slane 0.0, 1
        %v615 = vsel %vm613, %v614, %v614
        %v616 = vrot.slane %v550, 1
        %v617 = vrot.slane %v457, 1
        %v618 = vsel %vm613, %v616, %v617
        %v619 = vrot.slane %v566, 1
        %v620 = vsel %vm613, %v617, %v619
        %v621 = vrot.slane %v551, 1
        %v622 = vrot.slane %v460, 1
        %v623 = vsel %vm613, %v621, %v622
        %v624 = vrot.slane %v567, 1
        %v625 = vsel %vm613, %v622, %v624
        %v626 = vrot.slane %v552, 1
        %v627 = vrot.slane %v463, 1
        %v628 = vsel %vm613, %v626, %v627
        %v629 = vrot.slane %v568, 1
        %v630 = vsel %vm613, %v627, %v629
        %v631 = vrot.slane %v553, 1
        %v632 = vrot.slane %v466, 1
        %v633 = vsel %vm613, %v631, %v632
        %v634 = vrot.slane %v569, 1
        %v635 = vsel %vm613, %v632, %v634
        %v636 = vrot.slane %v554, 1
        %v637 = vrot.slane %v469, 1
        %v638 = vsel %vm613, %v636, %v637
        %v639 = vrot.slane %v570, 1
        %v640 = vsel %vm613, %v637, %v639
        %v641 = vrot.slane %v555, 1
        %v642 = vrot.slane %v472, 1
        %v643 = vsel %vm613, %v641, %v642
        %v644 = vrot.slane %v571, 1
        %v645 = vsel %vm613, %v642, %v644
        %v646 = vrot.slane %v556, 1
        %v647 = vrot.slane %v475, 1
        %v648 = vsel %vm613, %v646, %v647
        %v649 = vrot.slane %v572, 1
        %v650 = vsel %vm613, %v647, %v649
        %v651 = vrot.slane %v557, 1
        %v652 = vrot.slane %v478, 1
        %v653 = vsel %vm613, %v651, %v652
        %v654 = vrot.slane %v573, 1
        %v655 = vsel %vm613, %v652, %v654
        %v656 = vrot.slane %v558, 1
        %v657 = vrot.slane %v481, 1
        %v658 = vsel %vm613, %v656, %v657
        %v659 = vrot.slane %v574, 1
        %v660 = vsel %vm613, %v657, %v659
        %v661 = vrot.slane %v559, 1
        %v662 = vrot.slane %v484, 1
        %v663 = vsel %vm613, %v661, %v662
        %v664 = vrot.slane %v575, 1
        %v665 = vsel %vm613, %v662, %v664
        %v666 = vrot.slane %v560, 1
        %v667 = vrot.slane %v487, 1
        %v668 = vsel %vm613, %v666, %v667
        %v669 = vrot.slane %v576, 1
        %v670 = vsel %vm613, %v667, %v669
        %v671 = vrot.slane %v561, 1
        %v672 = vrot.slane %v490, 1
        %v673 = vsel %vm613, %v671, %v672
        %v674 = vrot.slane %v577, 1
        %v675 = vsel %vm613, %v672, %v674
        %v676 = vrot.slane %v562, 1
        %v677 = vrot.slane %v493, 1
        %v678 = vsel %vm613, %v676, %v677
        %v679 = vrot.slane %v578, 1
        %v680 = vsel %vm613, %v677, %v679
        %v681 = vrot.slane %v563, 1
        %v682 = vrot.slane %v496, 1
        %v683 = vsel %vm613, %v681, %v682
        %v684 = vrot.slane %v579, 1
        %v685 = vsel %vm613, %v682, %v684
        %v686 = vrot.slane %v564, 1
        %v687 = vrot.slane %v499, 1
        %v688 = vsel %vm613, %v686, %v687
        %v689 = vrot.slane %v580, 1
        %v690 = vsel %vm613, %v687, %v689
        %vm691 = vcmask 1045504
        %v692 = vrot.slane 0.0, 2
        %v693 = vsel %vm691, %v692, %v692
        %v694 = vrot.slane %v550, 2
        %v695 = vrot.slane %v457, 2
        %v696 = vsel %vm691, %v694, %v695
        %v697 = vrot.slane %v566, 2
        %v698 = vsel %vm691, %v695, %v697
        %v699 = vrot.slane %v551, 2
        %v700 = vrot.slane %v460, 2
        %v701 = vsel %vm691, %v699, %v700
        %v702 = vrot.slane %v567, 2
        %v703 = vsel %vm691, %v700, %v702
        %v704 = vrot.slane %v552, 2
        %v705 = vrot.slane %v463, 2
        %v706 = vsel %vm691, %v704, %v705
        %v707 = vrot.slane %v568, 2
        %v708 = vsel %vm691, %v705, %v707
        %v709 = vrot.slane %v553, 2
        %v710 = vrot.slane %v466, 2
        %v711 = vsel %vm691, %v709, %v710
        %v712 = vrot.slane %v569, 2
        %v713 = vsel %vm691, %v710, %v712
        %v714 = vrot.slane %v554, 2
        %v715 = vrot.slane %v469, 2
        %v716 = vsel %vm691, %v714, %v715
        %v717 = vrot.slane %v570, 2
        %v718 = vsel %vm691, %v715, %v717
        %v719 = vrot.slane %v555, 2
        %v720 = vrot.slane %v472, 2
        %v721 = vsel %vm691, %v719, %v720
        %v722 = vrot.slane %v571, 2
        %v723 = vsel %vm691, %v720, %v722
        %v724 = vrot.slane %v556, 2
        %v725 = vrot.slane %v475, 2
        %v726 = vsel %vm691, %v724, %v725
        %v727 = vrot.slane %v572, 2
        %v728 = vsel %vm691, %v725, %v727
        %v729 = vrot.slane %v557, 2
        %v730 = vrot.slane %v478, 2
        %v731 = vsel %vm691, %v729, %v730
        %v732 = vrot.slane %v573, 2
        %v733 = vsel %vm691, %v730, %v732
        %v734 = vrot.slane %v558, 2
        %v735 = vrot.slane %v481, 2
        %v736 = vsel %vm691, %v734, %v735
        %v737 = vrot.slane %v574, 2
        %v738 = vsel %vm691, %v735, %v737
        %v739 = vrot.slane %v559, 2
        %v740 = vrot.slane %v484, 2
        %v741 = vsel %vm691, %v739, %v740
        %v742 = vrot.slane %v575, 2
        %v743 = vsel %vm691, %v740, %v742
        %v744 = vrot.slane %v560, 2
        %v745 = vrot.slane %v487, 2
        %v746 = vsel %vm691, %v744, %v745
        %v747 = vrot.slane %v576, 2
        %v748 = vsel %vm691, %v745, %v747
        %v749 = vrot.slane %v561, 2
        %v750 = vrot.slane %v490, 2
        %v751 = vsel %vm691, %v749, %v750
        %v752 = vrot.slane %v577, 2
        %v753 = vsel %vm691, %v750, %v752
        %v754 = vrot.slane %v562, 2
        %v755 = vrot.slane %v493, 2
        %v756 = vsel %vm691, %v754, %v755
        %v757 = vrot.slane %v578, 2
        %v758 = vsel %vm691, %v755, %v757
        %v759 = vrot.slane %v563, 2
        %v760 = vrot.slane %v496, 2
        %v761 = vsel %vm691, %v759, %v760
        %v762 = vrot.slane %v579, 2
        %v763 = vsel %vm691, %v760, %v762
        %v764 = vrot.slane %v564, 2
        %v765 = vrot.slane %v499, 2
        %v766 = vsel %vm691, %v764, %v765
        %v767 = vrot.slane %v580, 2
        %v768 = vsel %vm691, %v765, %v767
        %v771 = vrot.slane %v565, 1
        %v772 = vrot.slane %v502, 1
        %v773 = vsel %vm613, %v771, %v772
        %v774 = vrot.slane %v581, 1
        %v775 = vsel %vm613, %v772, %v774
        %v776 = vrot.slane %v565, 2
        %v777 = vrot.slane %v502, 2
        %v778 = vsel %vm691, %v776, %v777
        %v779 = vrot.slane %v581, 2
        %v780 = vsel %vm691, %v777, %v779
        %781 = vrot.lane.b32.xlu0 %v615, 4
        %v782 = vpop.permute.xlu0 %781
        %783 = vrot.lane.b32.xlu0 %v618, 4
        %v784 = vpop.permute.xlu0 %783
        %785 = vrot.lane.b32.xlu0 %v620, 4
        %v786 = vpop.permute.xlu0 %785
        %787 = vrot.lane.b32.xlu0 %v623, 4
        %v788 = vpop.permute.xlu0 %787
        %789 = vrot.lane.b32.xlu0 %v625, 4
        %v790 = vpop.permute.xlu0 %789
        %791 = vrot.lane.b32.xlu0 %v628, 4
        %v792 = vpop.permute.xlu0 %791
        %793 = vrot.lane.b32.xlu0 %v630, 4
        %v794 = vpop.permute.xlu0 %793
        %795 = vrot.lane.b32.xlu0 %v633, 4
        %v796 = vpop.permute.xlu0 %795
        %797 = vrot.lane.b32.xlu0 %v635, 4
        %v798 = vpop.permute.xlu0 %797
        %799 = vrot.lane.b32.xlu0 %v638, 4
        %v800 = vpop.permute.xlu0 %799
        %801 = vrot.lane.b32.xlu0 %v640, 4
        %v802 = vpop.permute.xlu0 %801
        %803 = vrot.lane.b32.xlu0 %v643, 4
        %v804 = vpop.permute.xlu0 %803
        %805 = vrot.lane.b32.xlu0 %v645, 4
        %v806 = vpop.permute.xlu0 %805
        %807 = vrot.lane.b32.xlu0 %v648, 4
        %v808 = vpop.permute.xlu0 %807
        %809 = vrot.lane.b32.xlu0 %v650, 4
        %v810 = vpop.permute.xlu0 %809
        %811 = vrot.lane.b32.xlu0 %v653, 4
        %v812 = vpop.permute.xlu0 %811
        %813 = vrot.lane.b32.xlu0 %v655, 4
        %v814 = vpop.permute.xlu0 %813
        %815 = vrot.lane.b32.xlu0 %v658, 4
        %v816 = vpop.permute.xlu0 %815
        %817 = vrot.lane.b32.xlu0 %v660, 4
        %v818 = vpop.permute.xlu0 %817
        %819 = vrot.lane.b32.xlu0 %v663, 4
        %v820 = vpop.permute.xlu0 %819
        %821 = vrot.lane.b32.xlu0 %v665, 4
        %v822 = vpop.permute.xlu0 %821
        %823 = vrot.lane.b32.xlu0 %v668, 4
        %v824 = vpop.permute.xlu0 %823
        %825 = vrot.lane.b32.xlu0 %v670, 4
        %v826 = vpop.permute.xlu0 %825
        %827 = vrot.lane.b32.xlu0 %v673, 4
        %v828 = vpop.permute.xlu0 %827
        %829 = vrot.lane.b32.xlu0 %v675, 4
        %v830 = vpop.permute.xlu0 %829
        %831 = vrot.lane.b32.xlu0 %v678, 4
        %v832 = vpop.permute.xlu0 %831
        %833 = vrot.lane.b32.xlu0 %v680, 4
        %v834 = vpop.permute.xlu0 %833
        %835 = vrot.lane.b32.xlu0 %v683, 4
        %v836 = vpop.permute.xlu0 %835
        %837 = vrot.lane.b32.xlu0 %v685, 4
        %v838 = vpop.permute.xlu0 %837
        %839 = vrot.lane.b32.xlu0 %v688, 4
        %v840 = vpop.permute.xlu0 %839
        %841 = vrot.lane.b32.xlu0 %v690, 4
        %v842 = vpop.permute.xlu0 %841
        %874 = vrot.lane.b32.xlu0 %v693, 8
        %v875 = vpop.permute.xlu0 %874
        %876 = vrot.lane.b32.xlu0 %v696, 8
        %v877 = vpop.permute.xlu0 %876
        %878 = vrot.lane.b32.xlu0 %v698, 8
        %v879 = vpop.permute.xlu0 %878
        %880 = vrot.lane.b32.xlu0 %v701, 8
        %v881 = vpop.permute.xlu0 %880
        %882 = vrot.lane.b32.xlu0 %v703, 8
        %v883 = vpop.permute.xlu0 %882
        %884 = vrot.lane.b32.xlu0 %v706, 8
        %v885 = vpop.permute.xlu0 %884
        %886 = vrot.lane.b32.xlu0 %v708, 8
        %v887 = vpop.permute.xlu0 %886
        %888 = vrot.lane.b32.xlu0 %v711, 8
        %v889 = vpop.permute.xlu0 %888
        %890 = vrot.lane.b32.xlu0 %v713, 8
        %v891 = vpop.permute.xlu0 %890
        %892 = vrot.lane.b32.xlu0 %v716, 8
        %v893 = vpop.permute.xlu0 %892
        %894 = vrot.lane.b32.xlu0 %v718, 8
        %v895 = vpop.permute.xlu0 %894
        %896 = vrot.lane.b32.xlu0 %v721, 8
        %v897 = vpop.permute.xlu0 %896
        %898 = vrot.lane.b32.xlu0 %v723, 8
        %v899 = vpop.permute.xlu0 %898
        %900 = vrot.lane.b32.xlu0 %v726, 8
        %v901 = vpop.permute.xlu0 %900
        %902 = vrot.lane.b32.xlu0 %v728, 8
        %v903 = vpop.permute.xlu0 %902
        %904 = vrot.lane.b32.xlu0 %v731, 8
        %v905 = vpop.permute.xlu0 %904
        %906 = vrot.lane.b32.xlu0 %v733, 8
        %v907 = vpop.permute.xlu0 %906
        %908 = vrot.lane.b32.xlu0 %v736, 8
        %v909 = vpop.permute.xlu0 %908
        %910 = vrot.lane.b32.xlu0 %v738, 8
        %v911 = vpop.permute.xlu0 %910
        %912 = vrot.lane.b32.xlu0 %v741, 8
        %v913 = vpop.permute.xlu0 %912
        %914 = vrot.lane.b32.xlu0 %v743, 8
        %v915 = vpop.permute.xlu0 %914
        %916 = vrot.lane.b32.xlu0 %v746, 8
        %v917 = vpop.permute.xlu0 %916
        %918 = vrot.lane.b32.xlu0 %v748, 8
        %v919 = vpop.permute.xlu0 %918
        %920 = vrot.lane.b32.xlu0 %v751, 8
        %v921 = vpop.permute.xlu0 %920
        %922 = vrot.lane.b32.xlu0 %v753, 8
        %v923 = vpop.permute.xlu0 %922
        %924 = vrot.lane.b32.xlu0 %v756, 8
        %v925 = vpop.permute.xlu0 %924
        %926 = vrot.lane.b32.xlu0 %v758, 8
        %v927 = vpop.permute.xlu0 %926
        %928 = vrot.lane.b32.xlu0 %v761, 8
        %v929 = vpop.permute.xlu0 %928
        %930 = vrot.lane.b32.xlu0 %v763, 8
        %v931 = vpop.permute.xlu0 %930
        %932 = vrot.lane.b32.xlu0 %v766, 8
        %v933 = vpop.permute.xlu0 %932
        %934 = vrot.lane.b32.xlu0 %v768, 8
        %v935 = vpop.permute.xlu0 %934
        %967 = vrot.lane.b32.xlu0 %v550, 12
        %v968 = vpop.permute.xlu0 %967
        %969 = vrot.lane.b32.xlu0 %v457, 12
        %v970 = vpop.permute.xlu0 %969
        %971 = vrot.lane.b32.xlu0 %v551, 12
        %v972 = vpop.permute.xlu0 %971
        %973 = vrot.lane.b32.xlu0 %v460, 12
        %v974 = vpop.permute.xlu0 %973
        %975 = vrot.lane.b32.xlu0 %v552, 12
        %v976 = vpop.permute.xlu0 %975
        %977 = vrot.lane.b32.xlu0 %v463, 12
        %v978 = vpop.permute.xlu0 %977
        %979 = vrot.lane.b32.xlu0 %v553, 12
        %v980 = vpop.permute.xlu0 %979
        %981 = vrot.lane.b32.xlu0 %v466, 12
        %v982 = vpop.permute.xlu0 %981
        %983 = vrot.lane.b32.xlu0 %v554, 12
        %v984 = vpop.permute.xlu0 %983
        %985 = vrot.lane.b32.xlu0 %v469, 12
        %v986 = vpop.permute.xlu0 %985
        %987 = vrot.lane.b32.xlu0 %v555, 12
        %v988 = vpop.permute.xlu0 %987
        %989 = vrot.lane.b32.xlu0 %v472, 12
        %v990 = vpop.permute.xlu0 %989
        %991 = vrot.lane.b32.xlu0 %v556, 12
        %v992 = vpop.permute.xlu0 %991
        %993 = vrot.lane.b32.xlu0 %v475, 12
        %v994 = vpop.permute.xlu0 %993
        %995 = vrot.lane.b32.xlu0 %v557, 12
        %v996 = vpop.permute.xlu0 %995
        %997 = vrot.lane.b32.xlu0 %v478, 12
        %v998 = vpop.permute.xlu0 %997
        %999 = vrot.lane.b32.xlu0 %v558, 12
        %v1000 = vpop.permute.xlu0 %999
        %1001 = vrot.lane.b32.xlu0 %v481, 12
        %v1002 = vpop.permute.xlu0 %1001
        %1003 = vrot.lane.b32.xlu0 %v559, 12
        %v1004 = vpop.permute.xlu0 %1003
        %1005 = vrot.lane.b32.xlu0 %v484, 12
        %v1006 = vpop.permute.xlu0 %1005
        %1007 = vrot.lane.b32.xlu0 %v560, 12
        %v1008 = vpop.permute.xlu0 %1007
        %1009 = vrot.lane.b32.xlu0 %v487, 12
        %v1010 = vpop.permute.xlu0 %1009
        %1011 = vrot.lane.b32.xlu0 %v561, 12
        %v1012 = vpop.permute.xlu0 %1011
        %1013 = vrot.lane.b32.xlu0 %v490, 12
        %v1014 = vpop.permute.xlu0 %1013
        %1015 = vrot.lane.b32.xlu0 %v562, 12
        %v1016 = vpop.permute.xlu0 %1015
        %1017 = vrot.lane.b32.xlu0 %v493, 12
        %v1018 = vpop.permute.xlu0 %1017
        %1019 = vrot.lane.b32.xlu0 %v563, 12
        %v1020 = vpop.permute.xlu0 %1019
        %1021 = vrot.lane.b32.xlu0 %v496, 12
        %v1022 = vpop.permute.xlu0 %1021
        %1023 = vrot.lane.b32.xlu0 %v564, 12
        %v1024 = vpop.permute.xlu0 %1023
        %1025 = vrot.lane.b32.xlu0 %v499, 12
        %v1026 = vpop.permute.xlu0 %1025
        %1027 = vrot.lane.b32.xlu0 %v565, 12
        %v1028 = vpop.permute.xlu0 %1027
        %1029 = vrot.lane.b32.xlu0 %v502, 12
        %v1030 = vpop.permute.xlu0 %1029
        %1063 = vrot.lane.b32.xlu0 %v618, 16
        %v1064 = vpop.permute.xlu0 %1063
        %1065 = vrot.lane.b32.xlu0 %v620, 16
        %v1066 = vpop.permute.xlu0 %1065
        %1067 = vrot.lane.b32.xlu0 %v623, 16
        %v1068 = vpop.permute.xlu0 %1067
        %1069 = vrot.lane.b32.xlu0 %v625, 16
        %v1070 = vpop.permute.xlu0 %1069
        %1071 = vrot.lane.b32.xlu0 %v628, 16
        %v1072 = vpop.permute.xlu0 %1071
        %1073 = vrot.lane.b32.xlu0 %v630, 16
        %v1074 = vpop.permute.xlu0 %1073
        %1075 = vrot.lane.b32.xlu0 %v633, 16
        %v1076 = vpop.permute.xlu0 %1075
        %1077 = vrot.lane.b32.xlu0 %v635, 16
        %v1078 = vpop.permute.xlu0 %1077
        %1079 = vrot.lane.b32.xlu0 %v638, 16
        %v1080 = vpop.permute.xlu0 %1079
        %1081 = vrot.lane.b32.xlu0 %v640, 16
        %v1082 = vpop.permute.xlu0 %1081
        %1083 = vrot.lane.b32.xlu0 %v643, 16
        %v1084 = vpop.permute.xlu0 %1083
        %1085 = vrot.lane.b32.xlu0 %v645, 16
        %v1086 = vpop.permute.xlu0 %1085
        %1087 = vrot.lane.b32.xlu0 %v648, 16
        %v1088 = vpop.permute.xlu0 %1087
        %1089 = vrot.lane.b32.xlu0 %v650, 16
        %v1090 = vpop.permute.xlu0 %1089
        %1091 = vrot.lane.b32.xlu0 %v653, 16
        %v1092 = vpop.permute.xlu0 %1091
        %1093 = vrot.lane.b32.xlu0 %v655, 16
        %v1094 = vpop.permute.xlu0 %1093
        %1095 = vrot.lane.b32.xlu0 %v658, 16
        %v1096 = vpop.permute.xlu0 %1095
        %1097 = vrot.lane.b32.xlu0 %v660, 16
        %v1098 = vpop.permute.xlu0 %1097
        %1099 = vrot.lane.b32.xlu0 %v663, 16
        %v1100 = vpop.permute.xlu0 %1099
        %1101 = vrot.lane.b32.xlu0 %v665, 16
        %v1102 = vpop.permute.xlu0 %1101
        %1103 = vrot.lane.b32.xlu0 %v668, 16
        %v1104 = vpop.permute.xlu0 %1103
        %1105 = vrot.lane.b32.xlu0 %v670, 16
        %v1106 = vpop.permute.xlu0 %1105
        %1107 = vrot.lane.b32.xlu0 %v673, 16
        %v1108 = vpop.permute.xlu0 %1107
        %1109 = vrot.lane.b32.xlu0 %v675, 16
        %v1110 = vpop.permute.xlu0 %1109
        %1111 = vrot.lane.b32.xlu0 %v678, 16
        %v1112 = vpop.permute.xlu0 %1111
        %1113 = vrot.lane.b32.xlu0 %v680, 16
        %v1114 = vpop.permute.xlu0 %1113
        %1115 = vrot.lane.b32.xlu0 %v683, 16
        %v1116 = vpop.permute.xlu0 %1115
        %1117 = vrot.lane.b32.xlu0 %v685, 16
        %v1118 = vpop.permute.xlu0 %1117
        %1119 = vrot.lane.b32.xlu0 %v688, 16
        %v1120 = vpop.permute.xlu0 %1119
        %1121 = vrot.lane.b32.xlu0 %v690, 16
        %v1122 = vpop.permute.xlu0 %1121
        %1123 = vrot.lane.b32.xlu0 %v773, 16
        %v1124 = vpop.permute.xlu0 %1123
        %1125 = vrot.lane.b32.xlu0 %v775, 16
        %v1126 = vpop.permute.xlu0 %1125
        %1159 = vrot.lane.b32.xlu0 %v696, 20
        %v1160 = vpop.permute.xlu0 %1159
        %1161 = vrot.lane.b32.xlu0 %v698, 20
        %v1162 = vpop.permute.xlu0 %1161
        %1163 = vrot.lane.b32.xlu0 %v701, 20
        %v1164 = vpop.permute.xlu0 %1163
        %1165 = vrot.lane.b32.xlu0 %v703, 20
        %v1166 = vpop.permute.xlu0 %1165
        %1167 = vrot.lane.b32.xlu0 %v706, 20
        %v1168 = vpop.permute.xlu0 %1167
        %1169 = vrot.lane.b32.xlu0 %v708, 20
        %v1170 = vpop.permute.xlu0 %1169
        %1171 = vrot.lane.b32.xlu0 %v711, 20
        %v1172 = vpop.permute.xlu0 %1171
        %1173 = vrot.lane.b32.xlu0 %v713, 20
        %v1174 = vpop.permute.xlu0 %1173
        %1175 = vrot.lane.b32.xlu0 %v716, 20
        %v1176 = vpop.permute.xlu0 %1175
        %1177 = vrot.lane.b32.xlu0 %v718, 20
        %v1178 = vpop.permute.xlu0 %1177
        %1179 = vrot.lane.b32.xlu0 %v721, 20
        %v1180 = vpop.permute.xlu0 %1179
        %1181 = vrot.lane.b32.xlu0 %v723, 20
        %v1182 = vpop.permute.xlu0 %1181
        %1183 = vrot.lane.b32.xlu0 %v726, 20
        %v1184 = vpop.permute.xlu0 %1183
        %1185 = vrot.lane.b32.xlu0 %v728, 20
        %v1186 = vpop.permute.xlu0 %1185
        %1187 = vrot.lane.b32.xlu0 %v731, 20
        %v1188 = vpop.permute.xlu0 %1187
        %1189 = vrot.lane.b32.xlu0 %v733, 20
        %v1190 = vpop.permute.xlu0 %1189
        %1191 = vrot.lane.b32.xlu0 %v736, 20
        %v1192 = vpop.permute.xlu0 %1191
        %1193 = vrot.lane.b32.xlu0 %v738, 20
        %v1194 = vpop.permute.xlu0 %1193
        %1195 = vrot.lane.b32.xlu0 %v741, 20
        %v1196 = vpop.permute.xlu0 %1195
        %1197 = vrot.lane.b32.xlu0 %v743, 20
        %v1198 = vpop.permute.xlu0 %1197
        %1199 = vrot.lane.b32.xlu0 %v746, 20
        %v1200 = vpop.permute.xlu0 %1199
        %1201 = vrot.lane.b32.xlu0 %v748, 20
        %v1202 = vpop.permute.xlu0 %1201
        %1203 = vrot.lane.b32.xlu0 %v751, 20
        %v1204 = vpop.permute.xlu0 %1203
        %1205 = vrot.lane.b32.xlu0 %v753, 20
        %v1206 = vpop.permute.xlu0 %1205
        %1207 = vrot.lane.b32.xlu0 %v756, 20
        %v1208 = vpop.permute.xlu0 %1207
        %1209 = vrot.lane.b32.xlu0 %v758, 20
        %v1210 = vpop.permute.xlu0 %1209
        %1211 = vrot.lane.b32.xlu0 %v761, 20
        %v1212 = vpop.permute.xlu0 %1211
        %1213 = vrot.lane.b32.xlu0 %v763, 20
        %v1214 = vpop.permute.xlu0 %1213
        %1215 = vrot.lane.b32.xlu0 %v766, 20
        %v1216 = vpop.permute.xlu0 %1215
        %1217 = vrot.lane.b32.xlu0 %v768, 20
        %v1218 = vpop.permute.xlu0 %1217
        %1219 = vrot.lane.b32.xlu0 %v778, 20
        %v1220 = vpop.permute.xlu0 %1219
        %1221 = vrot.lane.b32.xlu0 %v780, 20
        %v1222 = vpop.permute.xlu0 %1221
        %1255 = vrot.lane.b32.xlu0 %v551, 24
        %v1256 = vpop.permute.xlu0 %1255
        %1257 = vrot.lane.b32.xlu0 %v460, 24
        %v1258 = vpop.permute.xlu0 %1257
        %1259 = vrot.lane.b32.xlu0 %v552, 24
        %v1260 = vpop.permute.xlu0 %1259
        %1261 = vrot.lane.b32.xlu0 %v463, 24
        %v1262 = vpop.permute.xlu0 %1261
        %1263 = vrot.lane.b32.xlu0 %v553, 24
        %v1264 = vpop.permute.xlu0 %1263
        %1265 = vrot.lane.b32.xlu0 %v466, 24
        %v1266 = vpop.permute.xlu0 %1265
        %1267 = vrot.lane.b32.xlu0 %v554, 24
        %v1268 = vpop.permute.xlu0 %1267
        %1269 = vrot.lane.b32.xlu0 %v469, 24
        %v1270 = vpop.permute.xlu0 %1269
        %1271 = vrot.lane.b32.xlu0 %v555, 24
        %v1272 = vpop.permute.xlu0 %1271
        %1273 = vrot.lane.b32.xlu0 %v472, 24
        %v1274 = vpop.permute.xlu0 %1273
        %1275 = vrot.lane.b32.xlu0 %v556, 24
        %v1276 = vpop.permute.xlu0 %1275
        %1277 = vrot.lane.b32.xlu0 %v475, 24
        %v1278 = vpop.permute.xlu0 %1277
        %1279 = vrot.lane.b32.xlu0 %v557, 24
        %v1280 = vpop.permute.xlu0 %1279
        %1281 = vrot.lane.b32.xlu0 %v478, 24
        %v1282 = vpop.permute.xlu0 %1281
        %1283 = vrot.lane.b32.xlu0 %v558, 24
        %v1284 = vpop.permute.xlu0 %1283
        %1285 = vrot.lane.b32.xlu0 %v481, 24
        %v1286 = vpop.permute.xlu0 %1285
        %1287 = vrot.lane.b32.xlu0 %v559, 24
        %v1288 = vpop.permute.xlu0 %1287
        %1289 = vrot.lane.b32.xlu0 %v484, 24
        %v1290 = vpop.permute.xlu0 %1289
        %1291 = vrot.lane.b32.xlu0 %v560, 24
        %v1292 = vpop.permute.xlu0 %1291
        %1293 = vrot.lane.b32.xlu0 %v487, 24
        %v1294 = vpop.permute.xlu0 %1293
        %1295 = vrot.lane.b32.xlu0 %v561, 24
        %v1296 = vpop.permute.xlu0 %1295
        %1297 = vrot.lane.b32.xlu0 %v490, 24
        %v1298 = vpop.permute.xlu0 %1297
        %1299 = vrot.lane.b32.xlu0 %v562, 24
        %v1300 = vpop.permute.xlu0 %1299
        %1301 = vrot.lane.b32.xlu0 %v493, 24
        %v1302 = vpop.permute.xlu0 %1301
        %1303 = vrot.lane.b32.xlu0 %v563, 24
        %v1304 = vpop.permute.xlu0 %1303
        %1305 = vrot.lane.b32.xlu0 %v496, 24
        %v1306 = vpop.permute.xlu0 %1305
        %1307 = vrot.lane.b32.xlu0 %v564, 24
        %v1308 = vpop.permute.xlu0 %1307
        %1309 = vrot.lane.b32.xlu0 %v499, 24
        %v1310 = vpop.permute.xlu0 %1309
        %1311 = vrot.lane.b32.xlu0 %v565, 24
        %v1312 = vpop.permute.xlu0 %1311
        %1313 = vrot.lane.b32.xlu0 %v502, 24
        %v1314 = vpop.permute.xlu0 %1313
        %1315 = vrot.lane.b32.xlu0 0.0, 24
        %v1316 = vpop.permute.xlu0 %1315
        %1348 = vrot.lane.b32.xlu0 %v623, 28
        %v1349 = vpop.permute.xlu0 %1348
        %1350 = vrot.lane.b32.xlu0 %v625, 28
        %v1351 = vpop.permute.xlu0 %1350
        %1352 = vrot.lane.b32.xlu0 %v628, 28
        %v1353 = vpop.permute.xlu0 %1352
        %1354 = vrot.lane.b32.xlu0 %v630, 28
        %v1355 = vpop.permute.xlu0 %1354
        %1356 = vrot.lane.b32.xlu0 %v633, 28
        %v1357 = vpop.permute.xlu0 %1356
        %1358 = vrot.lane.b32.xlu0 %v635, 28
        %v1359 = vpop.permute.xlu0 %1358
        %1360 = vrot.lane.b32.xlu0 %v638, 28
        %v1361 = vpop.permute.xlu0 %1360
        %1362 = vrot.lane.b32.xlu0 %v640, 28
        %v1363 = vpop.permute.xlu0 %1362
        %1364 = vrot.lane.b32.xlu0 %v643, 28
        %v1365 = vpop.permute.xlu0 %1364
        %1366 = vrot.lane.b32.xlu0 %v645, 28
        %v1367 = vpop.permute.xlu0 %1366
        %1368 = vrot.lane.b32.xlu0 %v648, 28
        %v1369 = vpop.permute.xlu0 %1368
        %1370 = vrot.lane.b32.xlu0 %v650, 28
        %v1371 = vpop.permute.xlu0 %1370
        %1372 = vrot.lane.b32.xlu0 %v653, 28
        %v1373 = vpop.permute.xlu0 %1372
        %1374 = vrot.lane.b32.xlu0 %v655, 28
        %v1375 = vpop.permute.xlu0 %1374
        %1376 = vrot.lane.b32.xlu0 %v658, 28
        %v1377 = vpop.permute.xlu0 %1376
        %1378 = vrot.lane.b32.xlu0 %v660, 28
        %v1379 = vpop.permute.xlu0 %1378
        %1380 = vrot.lane.b32.xlu0 %v663, 28
        %v1381 = vpop.permute.xlu0 %1380
        %1382 = vrot.lane.b32.xlu0 %v665, 28
        %v1383 = vpop.permute.xlu0 %1382
        %1384 = vrot.lane.b32.xlu0 %v668, 28
        %v1385 = vpop.permute.xlu0 %1384
        %1386 = vrot.lane.b32.xlu0 %v670, 28
        %v1387 = vpop.permute.xlu0 %1386
        %1388 = vrot.lane.b32.xlu0 %v673, 28
        %v1389 = vpop.permute.xlu0 %1388
        %1390 = vrot.lane.b32.xlu0 %v675, 28
        %v1391 = vpop.permute.xlu0 %1390
        %1392 = vrot.lane.b32.xlu0 %v678, 28
        %v1393 = vpop.permute.xlu0 %1392
        %1394 = vrot.lane.b32.xlu0 %v680, 28
        %v1395 = vpop.permute.xlu0 %1394
        %1396 = vrot.lane.b32.xlu0 %v683, 28
        %v1397 = vpop.permute.xlu0 %1396
        %1398 = vrot.lane.b32.xlu0 %v685, 28
        %v1399 = vpop.permute.xlu0 %1398
        %1400 = vrot.lane.b32.xlu0 %v688, 28
        %v1401 = vpop.permute.xlu0 %1400
        %1402 = vrot.lane.b32.xlu0 %v690, 28
        %v1403 = vpop.permute.xlu0 %1402
        %1404 = vrot.lane.b32.xlu0 %v773, 28
        %v1405 = vpop.permute.xlu0 %1404
        %1406 = vrot.lane.b32.xlu0 %v775, 28
        %v1407 = vpop.permute.xlu0 %1406
        %1408 = vrot.lane.b32.xlu0 %v615, 28
        %v1409 = vpop.permute.xlu0 %1408
        %1441 = vrot.lane.b32.xlu0 %v701, 32
        %v1442 = vpop.permute.xlu0 %1441
        %1443 = vrot.lane.b32.xlu0 %v703, 32
        %v1444 = vpop.permute.xlu0 %1443
        %1445 = vrot.lane.b32.xlu0 %v706, 32
        %v1446 = vpop.permute.xlu0 %1445
        %1447 = vrot.lane.b32.xlu0 %v708, 32
        %v1448 = vpop.permute.xlu0 %1447
        %1449 = vrot.lane.b32.xlu0 %v711, 32
        %v1450 = vpop.permute.xlu0 %1449
        %1451 = vrot.lane.b32.xlu0 %v713, 32
        %v1452 = vpop.permute.xlu0 %1451
        %1453 = vrot.lane.b32.xlu0 %v716, 32
        %v1454 = vpop.permute.xlu0 %1453
        %1455 = vrot.lane.b32.xlu0 %v718, 32
        %v1456 = vpop.permute.xlu0 %1455
        %1457 = vrot.lane.b32.xlu0 %v721, 32
        %v1458 = vpop.permute.xlu0 %1457
        %1459 = vrot.lane.b32.xlu0 %v723, 32
        %v1460 = vpop.permute.xlu0 %1459
        %1461 = vrot.lane.b32.xlu0 %v726, 32
        %v1462 = vpop.permute.xlu0 %1461
        %1463 = vrot.lane.b32.xlu0 %v728, 32
        %v1464 = vpop.permute.xlu0 %1463
        %1465 = vrot.lane.b32.xlu0 %v731, 32
        %v1466 = vpop.permute.xlu0 %1465
        %1467 = vrot.lane.b32.xlu0 %v733, 32
        %v1468 = vpop.permute.xlu0 %1467
        %1469 = vrot.lane.b32.xlu0 %v736, 32
        %v1470 = vpop.permute.xlu0 %1469
        %1471 = vrot.lane.b32.xlu0 %v738, 32
        %v1472 = vpop.permute.xlu0 %1471
        %1473 = vrot.lane.b32.xlu0 %v741, 32
        %v1474 = vpop.permute.xlu0 %1473
        %1475 = vrot.lane.b32.xlu0 %v743, 32
        %v1476 = vpop.permute.xlu0 %1475
        %1477 = vrot.lane.b32.xlu0 %v746, 32
        %v1478 = vpop.permute.xlu0 %1477
        %1479 = vrot.lane.b32.xlu0 %v748, 32
        %v1480 = vpop.permute.xlu0 %1479
        %1481 = vrot.lane.b32.xlu0 %v751, 32
        %v1482 = vpop.permute.xlu0 %1481
        %1483 = vrot.lane.b32.xlu0 %v753, 32
        %v1484 = vpop.permute.xlu0 %1483
        %1485 = vrot.lane.b32.xlu0 %v756, 32
        %v1486 = vpop.permute.xlu0 %1485
        %1487 = vrot.lane.b32.xlu0 %v758, 32
        %v1488 = vpop.permute.xlu0 %1487
        %1489 = vrot.lane.b32.xlu0 %v761, 32
        %v1490 = vpop.permute.xlu0 %1489
        %1491 = vrot.lane.b32.xlu0 %v763, 32
        %v1492 = vpop.permute.xlu0 %1491
        %1493 = vrot.lane.b32.xlu0 %v766, 32
        %v1494 = vpop.permute.xlu0 %1493
        %1495 = vrot.lane.b32.xlu0 %v768, 32
        %v1496 = vpop.permute.xlu0 %1495
        %1497 = vrot.lane.b32.xlu0 %v778, 32
        %v1498 = vpop.permute.xlu0 %1497
        %1499 = vrot.lane.b32.xlu0 %v780, 32
        %v1500 = vpop.permute.xlu0 %1499
        %1501 = vrot.lane.b32.xlu0 %v693, 32
        %v1502 = vpop.permute.xlu0 %1501
        %vm1534 = vcmask 31744
        %v1535 = vsel %vm1534, 0.0, %v782
        %v1536 = vsel %vm1534, %v550, %v784
        %v1537 = vsel %vm1534, %v457, %v786
        %v1538 = vsel %vm1534, %v551, %v788
        %v1539 = vsel %vm1534, %v460, %v790
        %v1540 = vsel %vm1534, %v552, %v792
        %v1541 = vsel %vm1534, %v463, %v794
        %v1542 = vsel %vm1534, %v553, %v796
        %v1543 = vsel %vm1534, %v466, %v798
        %v1544 = vsel %vm1534, %v554, %v800
        %v1545 = vsel %vm1534, %v469, %v802
        %v1546 = vsel %vm1534, %v555, %v804
        %v1547 = vsel %vm1534, %v472, %v806
        %v1548 = vsel %vm1534, %v556, %v808
        %v1549 = vsel %vm1534, %v475, %v810
        %v1550 = vsel %vm1534, %v557, %v812
        %v1551 = vsel %vm1534, %v478, %v814
        %v1552 = vsel %vm1534, %v558, %v816
        %v1553 = vsel %vm1534, %v481, %v818
        %v1554 = vsel %vm1534, %v559, %v820
        %v1555 = vsel %vm1534, %v484, %v822
        %v1556 = vsel %vm1534, %v560, %v824
        %v1557 = vsel %vm1534, %v487, %v826
        %v1558 = vsel %vm1534, %v561, %v828
        %v1559 = vsel %vm1534, %v490, %v830
        %v1560 = vsel %vm1534, %v562, %v832
        %v1561 = vsel %vm1534, %v493, %v834
        %v1562 = vsel %vm1534, %v563, %v836
        %v1563 = vsel %vm1534, %v496, %v838
        %v1564 = vsel %vm1534, %v564, %v840
        %v1565 = vsel %vm1534, %v499, %v842
        %vm1566 = vcmask 64512
        %v1567 = vsel %vm1566, %v1535, %v875
        %v1568 = vsel %vm1566, %v1536, %v877
        %v1569 = vsel %vm1566, %v1537, %v879
        %v1570 = vsel %vm1566, %v1538, %v881
        %v1571 = vsel %vm1566, %v1539, %v883
        %v1572 = vsel %vm1566, %v1540, %v885
        %v1573 = vsel %vm1566, %v1541, %v887
        %v1574 = vsel %vm1566, %v1542, %v889
        %v1575 = vsel %vm1566, %v1543, %v891
        %v1576 = vsel %vm1566, %v1544, %v893
        %v1577 = vsel %vm1566, %v1545, %v895
        %v1578 = vsel %vm1566, %v1546, %v897
        %v1579 = vsel %vm1566, %v1547, %v899
        %v1580 = vsel %vm1566, %v1548, %v901
        %v1581 = vsel %vm1566, %v1549, %v903
        %v1582 = vsel %vm1566, %v1550, %v905
        %v1583 = vsel %vm1566, %v1551, %v907
        %v1584 = vsel %vm1566, %v1552, %v909
        %v1585 = vsel %vm1566, %v1553, %v911
        %v1586 = vsel %vm1566, %v1554, %v913
        %v1587 = vsel %vm1566, %v1555, %v915
        %v1588 = vsel %vm1566, %v1556, %v917
        %v1589 = vsel %vm1566, %v1557, %v919
        %v1590 = vsel %vm1566, %v1558, %v921
        %v1591 = vsel %vm1566, %v1559, %v923
        %v1592 = vsel %vm1566, %v1560, %v925
        %v1593 = vsel %vm1566, %v1561, %v927
        %v1594 = vsel %vm1566, %v1562, %v929
        %v1595 = vsel %vm1566, %v1563, %v931
        %v1596 = vsel %vm1566, %v1564, %v933
        %v1597 = vsel %vm1566, %v1565, %v935
        %vm1598 = vcmask 97280
        %v1599 = vsel %vm1598, %v1567, %v968
        %v1600 = vsel %vm1598, %v1567, %v970
        %v1601 = vsel %vm1598, %v1568, %v972
        %v1602 = vsel %vm1598, %v1569, %v974
        %v1603 = vsel %vm1598, %v1570, %v976
        %v1604 = vsel %vm1598, %v1571, %v978
        %v1605 = vsel %vm1598, %v1572, %v980
        %v1606 = vsel %vm1598, %v1573, %v982
        %v1607 = vsel %vm1598, %v1574, %v984
        %v1608 = vsel %vm1598, %v1575, %v986
        %v1609 = vsel %vm1598, %v1576, %v988
        %v1610 = vsel %vm1598, %v1577, %v990
        %v1611 = vsel %vm1598, %v1578, %v992
        %v1612 = vsel %vm1598, %v1579, %v994
        %v1613 = vsel %vm1598, %v1580, %v996
        %v1614 = vsel %vm1598, %v1581, %v998
        %v1615 = vsel %vm1598, %v1582, %v1000
        %v1616 = vsel %vm1598, %v1583, %v1002
        %v1617 = vsel %vm1598, %v1584, %v1004
        %v1618 = vsel %vm1598, %v1585, %v1006
        %v1619 = vsel %vm1598, %v1586, %v1008
        %v1620 = vsel %vm1598, %v1587, %v1010
        %v1621 = vsel %vm1598, %v1588, %v1012
        %v1622 = vsel %vm1598, %v1589, %v1014
        %v1623 = vsel %vm1598, %v1590, %v1016
        %v1624 = vsel %vm1598, %v1591, %v1018
        %v1625 = vsel %vm1598, %v1592, %v1020
        %v1626 = vsel %vm1598, %v1593, %v1022
        %v1627 = vsel %vm1598, %v1594, %v1024
        %v1628 = vsel %vm1598, %v1595, %v1026
        %v1629 = vsel %vm1598, %v1596, %v1028
        %v1630 = vsel %vm1598, %v1597, %v1030
        %vm1631 = vcmask 130048
        %v1632 = vsel %vm1631, %v1599, %v1064
        %v1633 = vsel %vm1631, %v1600, %v1066
        %v1634 = vsel %vm1631, %v1601, %v1068
        %v1635 = vsel %vm1631, %v1602, %v1070
        %v1636 = vsel %vm1631, %v1603, %v1072
        %v1637 = vsel %vm1631, %v1604, %v1074
        %v1638 = vsel %vm1631, %v1605, %v1076
        %v1639 = vsel %vm1631, %v1606, %v1078
        %v1640 = vsel %vm1631, %v1607, %v1080
        %v1641 = vsel %vm1631, %v1608, %v1082
        %v1642 = vsel %vm1631, %v1609, %v1084
        %v1643 = vsel %vm1631, %v1610, %v1086
        %v1644 = vsel %vm1631, %v1611, %v1088
        %v1645 = vsel %vm1631, %v1612, %v1090
        %v1646 = vsel %vm1631, %v1613, %v1092
        %v1647 = vsel %vm1631, %v1614, %v1094
        %v1648 = vsel %vm1631, %v1615, %v1096
        %v1649 = vsel %vm1631, %v1616, %v1098
        %v1650 = vsel %vm1631, %v1617, %v1100
        %v1651 = vsel %vm1631, %v1618, %v1102
        %v1652 = vsel %vm1631, %v1619, %v1104
        %v1653 = vsel %vm1631, %v1620, %v1106
        %v1654 = vsel %vm1631, %v1621, %v1108
        %v1655 = vsel %vm1631, %v1622, %v1110
        %v1656 = vsel %vm1631, %v1623, %v1112
        %v1657 = vsel %vm1631, %v1624, %v1114
        %v1658 = vsel %vm1631, %v1625, %v1116
        %v1659 = vsel %vm1631, %v1626, %v1118
        %v1660 = vsel %vm1631, %v1627, %v1120
        %v1661 = vsel %vm1631, %v1628, %v1122
        %v1662 = vsel %vm1631, %v1629, %v1124
        %v1663 = vsel %vm1631, %v1630, %v1126
        %vm1664 = vcmask 162816
        %v1665 = vsel %vm1664, %v1632, %v1160
        %v1666 = vsel %vm1664, %v1633, %v1162
        %v1667 = vsel %vm1664, %v1634, %v1164
        %v1668 = vsel %vm1664, %v1635, %v1166
        %v1669 = vsel %vm1664, %v1636, %v1168
        %v1670 = vsel %vm1664, %v1637, %v1170
        %v1671 = vsel %vm1664, %v1638, %v1172
        %v1672 = vsel %vm1664, %v1639, %v1174
        %v1673 = vsel %vm1664, %v1640, %v1176
        %v1674 = vsel %vm1664, %v1641, %v1178
        %v1675 = vsel %vm1664, %v1642, %v1180
        %v1676 = vsel %vm1664, %v1643, %v1182
        %v1677 = vsel %vm1664, %v1644, %v1184
        %v1678 = vsel %vm1664, %v1645, %v1186
        %v1679 = vsel %vm1664, %v1646, %v1188
        %v1680 = vsel %vm1664, %v1647, %v1190
        %v1681 = vsel %vm1664, %v1648, %v1192
        %v1682 = vsel %vm1664, %v1649, %v1194
        %v1683 = vsel %vm1664, %v1650, %v1196
        %v1684 = vsel %vm1664, %v1651, %v1198
        %v1685 = vsel %vm1664, %v1652, %v1200
        %v1686 = vsel %vm1664, %v1653, %v1202
        %v1687 = vsel %vm1664, %v1654, %v1204
        %v1688 = vsel %vm1664, %v1655, %v1206
        %v1689 = vsel %vm1664, %v1656, %v1208
        %v1690 = vsel %vm1664, %v1657, %v1210
        %v1691 = vsel %vm1664, %v1658, %v1212
        %v1692 = vsel %vm1664, %v1659, %v1214
        %v1693 = vsel %vm1664, %v1660, %v1216
        %v1694 = vsel %vm1664, %v1661, %v1218
        %v1695 = vsel %vm1664, %v1662, %v1220
        %v1696 = vsel %vm1664, %v1663, %v1222
        %vm1697 = vcmask 195584
        %v1698 = vsel %vm1697, %v1665, %v1256
        %v1699 = vsel %vm1697, %v1666, %v1258
        %v1700 = vsel %vm1697, %v1667, %v1260
        %v1701 = vsel %vm1697, %v1668, %v1262
        %v1702 = vsel %vm1697, %v1669, %v1264
        %v1703 = vsel %vm1697, %v1670, %v1266
        %v1704 = vsel %vm1697, %v1671, %v1268
        %v1705 = vsel %vm1697, %v1672, %v1270
        %v1706 = vsel %vm1697, %v1673, %v1272
        %v1707 = vsel %vm1697, %v1674, %v1274
        %v1708 = vsel %vm1697, %v1675, %v1276
        %v1709 = vsel %vm1697, %v1676, %v1278
        %v1710 = vsel %vm1697, %v1677, %v1280
        %v1711 = vsel %vm1697, %v1678, %v1282
        %v1712 = vsel %vm1697, %v1679, %v1284
        %v1713 = vsel %vm1697, %v1680, %v1286
        %v1714 = vsel %vm1697, %v1681, %v1288
        %v1715 = vsel %vm1697, %v1682, %v1290
        %v1716 = vsel %vm1697, %v1683, %v1292
        %v1717 = vsel %vm1697, %v1684, %v1294
        %v1718 = vsel %vm1697, %v1685, %v1296
        %v1719 = vsel %vm1697, %v1686, %v1298
        %v1720 = vsel %vm1697, %v1687, %v1300
        %v1721 = vsel %vm1697, %v1688, %v1302
        %v1722 = vsel %vm1697, %v1689, %v1304
        %v1723 = vsel %vm1697, %v1690, %v1306
        %v1724 = vsel %vm1697, %v1691, %v1308
        %v1725 = vsel %vm1697, %v1692, %v1310
        %v1726 = vsel %vm1697, %v1693, %v1312
        %v1727 = vsel %vm1697, %v1694, %v1314
        %v1728 = vsel %vm1697, %v1695, %v1316
        %v1729 = vsel %vm1697, %v1696, %v1316
        %vm1730 = vcmask 228352
        %v1731 = vsel %vm1730, %v1698, %v1349
        %v1732 = vsel %vm1730, %v1699, %v1351
        %v1733 = vsel %vm1730, %v1700, %v1353
        %v1734 = vsel %vm1730, %v1701, %v1355
        %v1735 = vsel %vm1730, %v1702, %v1357
        %v1736 = vsel %vm1730, %v1703, %v1359
        %v1737 = vsel %vm1730, %v1704, %v1361
        %v1738 = vsel %vm1730, %v1705, %v1363
        %v1739 = vsel %vm1730, %v1706, %v1365
        %v1740 = vsel %vm1730, %v1707, %v1367
        %v1741 = vsel %vm1730, %v1708, %v1369
        %v1742 = vsel %vm1730, %v1709, %v1371
        %v1743 = vsel %vm1730, %v1710, %v1373
        %v1744 = vsel %vm1730, %v1711, %v1375
        %v1745 = vsel %vm1730, %v1712, %v1377
        %v1746 = vsel %vm1730, %v1713, %v1379
        %v1747 = vsel %vm1730, %v1714, %v1381
        %v1748 = vsel %vm1730, %v1715, %v1383
        %v1749 = vsel %vm1730, %v1716, %v1385
        %v1750 = vsel %vm1730, %v1717, %v1387
        %v1751 = vsel %vm1730, %v1718, %v1389
        %v1752 = vsel %vm1730, %v1719, %v1391
        %v1753 = vsel %vm1730, %v1720, %v1393
        %v1754 = vsel %vm1730, %v1721, %v1395
        %v1755 = vsel %vm1730, %v1722, %v1397
        %v1756 = vsel %vm1730, %v1723, %v1399
        %v1757 = vsel %vm1730, %v1724, %v1401
        %v1758 = vsel %vm1730, %v1725, %v1403
        %v1759 = vsel %vm1730, %v1726, %v1405
        %v1760 = vsel %vm1730, %v1727, %v1407
        %v1761 = vsel %vm1730, %v1728, %v1409
        %v1762 = vsel %vm1730, %v1729, %v1409
        %vm1763 = vcmask 261120
        %v1764 = vsel %vm1763, %v1731, %v1442
        %v1765 = vsel %vm1763, %v1732, %v1444
        %v1766 = vsel %vm1763, %v1733, %v1446
        %v1767 = vsel %vm1763, %v1734, %v1448
        %v1768 = vsel %vm1763, %v1735, %v1450
        %v1769 = vsel %vm1763, %v1736, %v1452
        %v1770 = vsel %vm1763, %v1737, %v1454
        %v1771 = vsel %vm1763, %v1738, %v1456
        %v1772 = vsel %vm1763, %v1739, %v1458
        %v1773 = vsel %vm1763, %v1740, %v1460
        %v1774 = vsel %vm1763, %v1741, %v1462
        %v1775 = vsel %vm1763, %v1742, %v1464
        %v1776 = vsel %vm1763, %v1743, %v1466
        %v1777 = vsel %vm1763, %v1744, %v1468
        %v1778 = vsel %vm1763, %v1745, %v1470
        %v1779 = vsel %vm1763, %v1746, %v1472
        %v1780 = vsel %vm1763, %v1747, %v1474
        %v1781 = vsel %vm1763, %v1748, %v1476
        %v1782 = vsel %vm1763, %v1749, %v1478
        %v1783 = vsel %vm1763, %v1750, %v1480
        %v1784 = vsel %vm1763, %v1751, %v1482
        %v1785 = vsel %vm1763, %v1752, %v1484
        %v1786 = vsel %vm1763, %v1753, %v1486
        %v1787 = vsel %vm1763, %v1754, %v1488
        %v1788 = vsel %vm1763, %v1755, %v1490
        %v1789 = vsel %vm1763, %v1756, %v1492
        %v1790 = vsel %vm1763, %v1757, %v1494
        %v1791 = vsel %vm1763, %v1758, %v1496
        %v1792 = vsel %vm1763, %v1759, %v1498
        %v1793 = vsel %vm1763, %v1760, %v1500
        %v1794 = vsel %vm1763, %v1761, %v1502
        %v1795 = vsel %vm1763, %v1762, %v1502
        %v1797 = vlaneseq
        %v1798 = vshrl.u32 %v1797, 7
        %v1799 = vsub.s32 0, %v1798
        %v1800 = vrot.slane %v421, %v1799
        %vm1802 = vcmask 293888
        %v1804 = vsel %vm1802, %v1764, 0
        %v1807 = vsel %vm1802, %v1765, 0
        %v1810 = vsel %vm1802, %v1766, 0
        %v1813 = vsel %vm1802, %v1767, 0
        %v1816 = vsel %vm1802, %v1768, 0
        %v1819 = vsel %vm1802, %v1769, 0
        %v1822 = vsel %vm1802, %v1770, 0
        %v1825 = vsel %vm1802, %v1771, 0
        %v1828 = vsel %vm1802, %v1772, 0
        %v1831 = vsel %vm1802, %v1773, 0
        %v1834 = vsel %vm1802, %v1774, 0
        %v1837 = vsel %vm1802, %v1775, 0
        %v1840 = vsel %vm1802, %v1776, 0
        %v1843 = vsel %vm1802, %v1777, 0
        %v1846 = vsel %vm1802, %v1778, 0
        %v1849 = vsel %vm1802, %v1779, 0
        %v1852 = vsel %vm1802, %v1780, 0
        %v1855 = vsel %vm1802, %v1781, 0
        %v1858 = vsel %vm1802, %v1782, 0
        %v1861 = vsel %vm1802, %v1783, 0
        %v1864 = vsel %vm1802, %v1784, 0
        %v1867 = vsel %vm1802, %v1785, 0
        %v1870 = vsel %vm1802, %v1786, 0
        %v1873 = vsel %vm1802, %v1787, 0
        %v1876 = vsel %vm1802, %v1788, 0
        %v1879 = vsel %vm1802, %v1789, 0
        %v1882 = vsel %vm1802, %v1790, 0
        %v1885 = vsel %vm1802, %v1791, 0
        %v1888 = vsel %vm1802, %v1792, 0
        %v1891 = vsel %vm1802, %v1793, 0
        %v1894 = vsel %vm1802, %v1794, 0
        %v1897 = vsel %vm1802, %v1795, 0
        %vm1899 = vcmask 1043456
        %v1901 = vsel %vm1899, %v420, 0
        %1903 = vmatprep.subr.mxu0 0.0
        %1904 = vmatpush1.msra.mxu0 %v416
        %1905 = vmatprep.subr.mxu0 0.0
        %1906 = vmatpush1.msra.mxu0 %v417
        %1907 = vmatprep.subr.mxu0 0.0
        %1908 = vmatpush1.msra.mxu0 %v418
        %1909 = vmatprep.subr.mxu0 0.0
        %1910 = vmatpush1.msra.mxu0 %v419
        %1911 = vmatprep.subr.mxu0 0.0
        %1912 = vmatpush1.msra.mxu0 %v1901
        %1913 = vmatprep.subr.mxu0 0.0
        %1914 = vmatpush1.msra.mxu0 0.0
        %1915 = vmatprep.subr.mxu0 0.0
        %1916 = vmatpush1.msra.mxu0 0.0
        %1917 = vmatprep.subr.mxu0 0.0
        %1918 = vmatpush1.msra.mxu0 0.0
        %1919 = vmatprep.subr.mxu0 0.0
        %1920 = vmatpush1.msra.mxu0 0.0
        %1921 = vmatprep.subr.mxu0 0.0
        %1922 = vmatpush1.msra.mxu0 0.0
        %1923 = vmatprep.subr.mxu0 0.0
        %1924 = vmatpush1.msra.mxu0 0.0
        %1925 = vmatprep.subr.mxu0 0.0
        %1926 = vmatpush1.msra.mxu0 0.0
        %1927 = vmatprep.subr.mxu0 0.0
        %1928 = vmatpush1.msra.mxu0 0.0
        %1929 = vmatprep.subr.mxu0 0.0
        %1930 = vmatpush1.msra.mxu0 0.0
        %1931 = vmatprep.subr.mxu0 0.0
        %1932 = vmatpush1.msra.mxu0 0.0
        %1933 = vmatprep.subr.mxu0 0.0
        %1934 = vmatpush1.msra.mxu0 0.0
        %1935 = vmatprep.subr.mxu0 0.0
        %1936 = vmatpush1.msra.mxu0 0.0
        %1937 = vmatprep.subr.mxu0 0.0
        %1938 = vmatpush1.msra.mxu0 0.0
        %1939 = vmatprep.subr.mxu0 0.0
        %1940 = vmatpush1.msra.mxu0 0.0
        %1941 = vmatprep.subr.mxu0 0.0
        %1942 = vmatpush1.msra.mxu0 0.0
        %1943 = vmatprep.subr.mxu0 0.0
        %1944 = vmatpush1.msra.mxu0 0.0
        %1945 = vmatprep.subr.mxu0 0.0
        %1946 = vmatpush1.msra.mxu0 0.0
        %1947 = vmatprep.subr.mxu0 0.0
        %1948 = vmatpush1.msra.mxu0 0.0
        %1949 = vmatprep.subr.mxu0 0.0
        %1950 = vmatpush1.msra.mxu0 0.0
        %1951 = vmatprep.subr.mxu0 0.0
        %1952 = vmatpush1.msra.mxu0 0.0
        %1953 = vmatprep.subr.mxu0 0.0
        %1954 = vmatpush1.msra.mxu0 0.0
        %1955 = vmatprep.subr.mxu0 0.0
        %1956 = vmatpush1.msra.mxu0 0.0
        %1957 = vmatprep.subr.mxu0 0.0
        %1958 = vmatpush1.msra.mxu0 0.0
        %1959 = vmatprep.subr.mxu0 0.0
        %1960 = vmatpush1.msra.mxu0 0.0
        %1961 = vmatprep.subr.mxu0 0.0
        %1962 = vmatpush1.msra.mxu0 0.0
        %1963 = vmatprep.subr.mxu0 0.0
        %1964 = vmatpush1.msra.mxu0 0.0
        %1965 = vmatprep.subr.mxu0 0.0
        %1966 = vmatpush1.msra.mxu0 0.0
        %1967 = vmatprep.mubr.f32.mxu0 0.0
        %1968 = vmatmul.mubr.f32.gmra.mrb[0].mxu0 %v1804
        %v1969 = vpop.f32.mrb[0].mxu0
        %v1970 = vadd.f32 %v1800, %v1969
        %v1971 = vpop.f32.mrb[0].mxu0
        %1972 = vmatprep.mubr.f32.mxu0 0.0
        %1973 = vmatmul.mubr.f32.gmra.mrb[0].mxu0 %v1807
        %v1974 = vpop.f32.mrb[0].mxu0
        %v1975 = vadd.f32 %v1800, %v1974
        %v1976 = vpop.f32.mrb[0].mxu0
        %1977 = vmatprep.mubr.f32.mxu0 0.0
        %1978 = vmatmul.mubr.f32.gmra.mrb[0].mxu0 %v1810
        %v1979 = vpop.f32.mrb[0].mxu0
        %v1980 = vadd.f32 %v1800, %v1979
        %v1981 = vpop.f32.mrb[0].mxu0
        %1982 = vmatprep.mubr.f32.mxu0 0.0
        %1983 = vmatmul.mubr.f32.gmra.mrb[0].mxu0 %v1813
        %v1984 = vpop.f32.mrb[0].mxu0
        %v1985 = vadd.f32 %v1800, %v1984
        %v1986 = vpop.f32.mrb[0].mxu0
        %1987 = vmatprep.mubr.f32.mxu0 0.0
        %1988 = vmatmul.mubr.f32.gmra.mrb[0].mxu0 %v1816
        %v1989 = vpop.f32.mrb[0].mxu0
        %v1990 = vadd.f32 %v1800, %v1989
        %v1991 = vpop.f32.mrb[0].mxu0
        %1992 = vmatprep.mubr.f32.mxu0 0.0
        %1993 = vmatmul.mubr.f32.gmra.mrb[0].mxu0 %v1819
        %v1994 = vpop.f32.mrb[0].mxu0
        %v1995 = vadd.f32 %v1800, %v1994
        %v1996 = vpop.f32.mrb[0].mxu0
        %1997 = vmatprep.mubr.f32.mxu0 0.0
        %1998 = vmatmul.mubr.f32.gmra.mrb[0].mxu0 %v1822
        %v1999 = vpop.f32.mrb[0].mxu0
        %v2000 = vadd.f32 %v1800, %v1999
        %v2001 = vpop.f32.mrb[0].mxu0
        %2002 = vmatprep.mubr.f32.mxu0 0.0
        %2003 = vmatmul.mubr.f32.gmra.mrb[0].mxu0 %v1825
        %v2004 = vpop.f32.mrb[0].mxu0
        %v2005 = vadd.f32 %v1800, %v2004
        %v2006 = vpop.f32.mrb[0].mxu0
        %2007 = vmatprep.mubr.f32.mxu0 0.0
        %2008 = vmatmul.mubr.f32.gmra.mrb[0].mxu0 %v1828
        %v2009 = vpop.f32.mrb[0].mxu0
        %v2010 = vadd.f32 %v1800, %v2009
        %v2011 = vpop.f32.mrb[0].mxu0
        %2012 = vmatprep.mubr.f32.mxu0 0.0
        %2013 = vmatmul.mubr.f32.gmra.mrb[0].mxu0 %v1831
        %v2014 = vpop.f32.mrb[0].mxu0
        %v2015 = vadd.f32 %v1800, %v2014
        %v2016 = vpop.f32.mrb[0].mxu0
        %2017 = vmatprep.mubr.f32.mxu0 0.0
        %2018 = vmatmul.mubr.f32.gmra.mrb[0].mxu0 %v1834
        %v2019 = vpop.f32.mrb[0].mxu0
        %v2020 = vadd.f32 %v1800, %v2019
        %v2021 = vpop.f32.mrb[0].mxu0
        %2022 = vmatprep.mubr.f32.mxu0 0.0
        %2023 = vmatmul.mubr.f32.gmra.mrb[0].mxu0 %v1837
        %v2024 = vpop.f32.mrb[0].mxu0
        %v2025 = vadd.f32 %v1800, %v2024
        %v2026 = vpop.f32.mrb[0].mxu0
        %2027 = vmatprep.mubr.f32.mxu0 0.0
        %2028 = vmatmul.mubr.f32.gmra.mrb[0].mxu0 %v1840
        %v2029 = vpop.f32.mrb[0].mxu0
        %v2030 = vadd.f32 %v1800, %v2029
        %v2031 = vpop.f32.mrb[0].mxu0
        %2032 = vmatprep.mubr.f32.mxu0 0.0
        %2033 = vmatmul.mubr.f32.gmra.mrb[0].mxu0 %v1843
        %v2034 = vpop.f32.mrb[0].mxu0
        %v2035 = vadd.f32 %v1800, %v2034
        %v2036 = vpop.f32.mrb[0].mxu0
        %2037 = vmatprep.mubr.f32.mxu0 0.0
        %2038 = vmatmul.mubr.f32.gmra.mrb[0].mxu0 %v1846
        %v2039 = vpop.f32.mrb[0].mxu0
        %v2040 = vadd.f32 %v1800, %v2039
        %v2041 = vpop.f32.mrb[0].mxu0
        %2042 = vmatprep.mubr.f32.mxu0 0.0
        %2043 = vmatmul.mubr.f32.gmra.mrb[0].mxu0 %v1849
        %v2044 = vpop.f32.mrb[0].mxu0
        %v2045 = vadd.f32 %v1800, %v2044
        %v2046 = vpop.f32.mrb[0].mxu0
        %2047 = vmatprep.mubr.f32.mxu0 0.0
        %2048 = vmatmul.mubr.f32.gmra.mrb[0].mxu0 %v1852
        %v2049 = vpop.f32.mrb[0].mxu0
        %v2050 = vadd.f32 %v1800, %v2049
        %v2051 = vpop.f32.mrb[0].mxu0
        %2052 = vmatprep.mubr.f32.mxu0 0.0
        %2053 = vmatmul.mubr.f32.gmra.mrb[0].mxu0 %v1855
        %v2054 = vpop.f32.mrb[0].mxu0
        %v2055 = vadd.f32 %v1800, %v2054
        %v2056 = vpop.f32.mrb[0].mxu0
        %2057 = vmatprep.mubr.f32.mxu0 0.0
        %2058 = vmatmul.mubr.f32.gmra.mrb[0].mxu0 %v1858
        %v2059 = vpop.f32.mrb[0].mxu0
        %v2060 = vadd.f32 %v1800, %v2059
        %v2061 = vpop.f32.mrb[0].mxu0
        %2062 = vmatprep.mubr.f32.mxu0 0.0
        %2063 = vmatmul.mubr.f32.gmra.mrb[0].mxu0 %v1861
        %v2064 = vpop.f32.mrb[0].mxu0
        %v2065 = vadd.f32 %v1800, %v2064
        %v2066 = vpop.f32.mrb[0].mxu0
        %2067 = vmatprep.mubr.f32.mxu0 0.0
        %2068 = vmatmul.mubr.f32.gmra.mrb[0].mxu0 %v1864
        %v2069 = vpop.f32.mrb[0].mxu0
        %v2070 = vadd.f32 %v1800, %v2069
        %v2071 = vpop.f32.mrb[0].mxu0
        %2072 = vmatprep.mubr.f32.mxu0 0.0
        %2073 = vmatmul.mubr.f32.gmra.mrb[0].mxu0 %v1867
        %v2074 = vpop.f32.mrb[0].mxu0
        %v2075 = vadd.f32 %v1800, %v2074
        %v2076 = vpop.f32.mrb[0].mxu0
        %2077 = vmatprep.mubr.f32.mxu0 0.0
        %2078 = vmatmul.mubr.f32.gmra.mrb[0].mxu0 %v1870
        %v2079 = vpop.f32.mrb[0].mxu0
        %v2080 = vadd.f32 %v1800, %v2079
        %v2081 = vpop.f32.mrb[0].mxu0
        %2082 = vmatprep.mubr.f32.mxu0 0.0
        %2083 = vmatmul.mubr.f32.gmra.mrb[0].mxu0 %v1873
        %v2084 = vpop.f32.mrb[0].mxu0
        %v2085 = vadd.f32 %v1800, %v2084
        %v2086 = vpop.f32.mrb[0].mxu0
        %2087 = vmatprep.mubr.f32.mxu0 0.0
        %2088 = vmatmul.mubr.f32.gmra.mrb[0].mxu0 %v1876
        %v2089 = vpop.f32.mrb[0].mxu0
        %v2090 = vadd.f32 %v1800, %v2089
        %v2091 = vpop.f32.mrb[0].mxu0
        %2092 = vmatprep.mubr.f32.mxu0 0.0
        %2093 = vmatmul.mubr.f32.gmra.mrb[0].mxu0 %v1879
        %v2094 = vpop.f32.mrb[0].mxu0
        %v2095 = vadd.f32 %v1800, %v2094
        %v2096 = vpop.f32.mrb[0].mxu0
        %2097 = vmatprep.mubr.f32.mxu0 0.0
        %2098 = vmatmul.mubr.f32.gmra.mrb[0].mxu0 %v1882
        %v2099 = vpop.f32.mrb[0].mxu0
        %v2100 = vadd.f32 %v1800, %v2099
        %v2101 = vpop.f32.mrb[0].mxu0
        %2102 = vmatprep.mubr.f32.mxu0 0.0
        %2103 = vmatmul.mubr.f32.gmra.mrb[0].mxu0 %v1885
        %v2104 = vpop.f32.mrb[0].mxu0
        %v2105 = vadd.f32 %v1800, %v2104
        %v2106 = vpop.f32.mrb[0].mxu0
        %2107 = vmatprep.mubr.f32.mxu0 0.0
        %2108 = vmatmul.mubr.f32.gmra.mrb[0].mxu0 %v1888
        %v2109 = vpop.f32.mrb[0].mxu0
        %v2110 = vadd.f32 %v1800, %v2109
        %v2111 = vpop.f32.mrb[0].mxu0
        %2112 = vmatprep.mubr.f32.mxu0 0.0
        %2113 = vmatmul.mubr.f32.gmra.mrb[0].mxu0 %v1891
        %v2114 = vpop.f32.mrb[0].mxu0
        %v2115 = vadd.f32 %v1800, %v2114
        %v2116 = vpop.f32.mrb[0].mxu0
        %2117 = vmatprep.mubr.f32.mxu0 0.0
        %2118 = vmatmul.mubr.f32.gmra.mrb[0].mxu0 %v1894
        %v2119 = vpop.f32.mrb[0].mxu0
        %v2120 = vadd.f32 %v1800, %v2119
        %v2121 = vpop.f32.mrb[0].mxu0
        %2122 = vmatprep.mubr.f32.mxu0 0.0
        %2123 = vmatmul.mubr.f32.gmra.mrb[0].mxu0 %v1897
        %v2124 = vpop.f32.mrb[0].mxu0
        %v2125 = vadd.f32 %v1800, %v2124
        %v2126 = vpop.f32.mrb[0].mxu0
        %2127 = vdwg.mxu0
        %v2128 = vmax.f32 %v1970, 0.0
        %v2129 = vmax.f32 %v1975, 0.0
        %v2130 = vmax.f32 %v1980, 0.0
        %v2131 = vmax.f32 %v1985, 0.0
        %v2132 = vmax.f32 %v1990, 0.0
        %v2133 = vmax.f32 %v1995, 0.0
        %v2134 = vmax.f32 %v2000, 0.0
        %v2135 = vmax.f32 %v2005, 0.0
        %v2136 = vmax.f32 %v2010, 0.0
        %v2137 = vmax.f32 %v2015, 0.0
        %v2138 = vmax.f32 %v2020, 0.0
        %v2139 = vmax.f32 %v2025, 0.0
        %v2140 = vmax.f32 %v2030, 0.0
        %v2141 = vmax.f32 %v2035, 0.0
        %v2142 = vmax.f32 %v2040, 0.0
        %v2143 = vmax.f32 %v2045, 0.0
        %v2144 = vmax.f32 %v2050, 0.0
        %v2145 = vmax.f32 %v2055, 0.0
        %v2146 = vmax.f32 %v2060, 0.0
        %v2147 = vmax.f32 %v2065, 0.0
        %v2148 = vmax.f32 %v2070, 0.0
        %v2149 = vmax.f32 %v2075, 0.0
        %v2150 = vmax.f32 %v2080, 0.0
        %v2151 = vmax.f32 %v2085, 0.0
        %v2152 = vmax.f32 %v2090, 0.0
        %v2153 = vmax.f32 %v2095, 0.0
        %v2154 = vmax.f32 %v2100, 0.0
        %v2155 = vmax.f32 %v2105, 0.0
        %v2156 = vmax.f32 %v2110, 0.0
        %v2157 = vmax.f32 %v2115, 0.0
        %v2158 = vmax.f32 %v2120, 0.0
        %v2159 = vmax.f32 %v2125, 0.0
        %v2160 = vld [vmem:[%s3] sm:$0xff]
        %v2161 = vld [vmem:[%s3 + $0x8] sm:$0xff]
        %v2162 = vld [vmem:[%s3 + $0x10] sm:$0xff]
        %v2163 = vld [vmem:[%s3 + $0x18] sm:$0xff]
        %v2164 = vld [vmem:[%s3 + $0x20] sm:$0xff]
        %v2165 = vld [vmem:[%s3 + $0x28] sm:$0xff]
        %v2166 = vld [vmem:[%s3 + $0x30] sm:$0xff]
        %v2167 = vld [vmem:[%s3 + $0x38] sm:$0xff]
        %v2168 = vld [vmem:[%s3 + $0x40] sm:$0xff]
        %v2169 = vld [vmem:[%s3 + $0x48] sm:$0xff]
        %v2170 = vld [vmem:[%s3 + $0x50] sm:$0xff]
        %v2171 = vld [vmem:[%s3 + $0x58] sm:$0xff]
        %v2172 = vld [vmem:[%s3 + $0x60] sm:$0xff]
        %v2173 = vld [vmem:[%s3 + $0x68] sm:$0xff]
        %v2174 = vld [vmem:[%s3 + $0x70] sm:$0xff]
        %v2175 = vld [vmem:[%s3 + $0x78] sm:$0xff]
        %v2176 = vld [vmem:[%s3 + $0x80] sm:$0xff]
        %v2177 = vld [vmem:[%s3 + $0x88] sm:$0xff]
        %v2178 = vld [vmem:[%s3 + $0x90] sm:$0xff]
        %v2179 = vld [vmem:[%s3 + $0x98] sm:$0xff]
        %v2180 = vld [vmem:[%s3 + $0xa0] sm:$0xff]
        %v2181 = vld [vmem:[%s3 + $0xa8] sm:$0xff]
        %v2182 = vld [vmem:[%s3 + $0xb0] sm:$0xff]
        %v2183 = vld [vmem:[%s3 + $0xb8] sm:$0xff]
        %v2184 = vld [vmem:[%s3 + $0xc0] sm:$0xff]
        %v2185 = vld [vmem:[%s3 + $0xc8] sm:$0xff]
        %v2186 = vld [vmem:[%s3 + $0xd0] sm:$0xff]
        %v2187 = vld [vmem:[%s3 + $0xd8] sm:$0xff]
        %v2188 = vld [vmem:[%s3 + $0xe0] sm:$0xff]
        %v2189 = vld [vmem:[%s3 + $0xe8] sm:$0xff]
        %v2190 = vld [vmem:[%s3 + $0xf0] sm:$0xff]
        %v2191 = vld [vmem:[%s3 + $0xf8] sm:$0xff]
        %v2192 = vld [vmem:[%s3 + $0x100] sm:$0xff]
        %v2193 = vld [vmem:[%s3 + $0x108] sm:$0xff]
        %v2194 = vld [vmem:[%s3 + $0x110] sm:$0xff]
        %v2195 = vld [vmem:[%s3 + $0x118] sm:$0xff]
        %v2196 = vld [vmem:[%s3 + $0x120] sm:$0xff]
        %v2197 = vld [vmem:[%s3 + $0x128] sm:$0xff]
        %v2198 = vld [vmem:[%s3 + $0x130] sm:$0xff]
        %v2199 = vld [vmem:[%s3 + $0x138] sm:$0xff]
        %v2200 = vld [vmem:[%s3 + $0x140] sm:$0xff]
        %v2201 = vld [vmem:[%s3 + $0x148] sm:$0xff]
        %v2202 = vld [vmem:[%s3 + $0x150] sm:$0xff]
        %v2203 = vld [vmem:[%s3 + $0x158] sm:$0xff]
        %v2204 = vld [vmem:[%s3 + $0x160] sm:$0xff]
        %v2205 = vld [vmem:[%s3 + $0x168] sm:$0xff]
        %v2206 = vld [vmem:[%s3 + $0x170] sm:$0xff]
        %v2207 = vld [vmem:[%s3 + $0x178] sm:$0xff]
        %v2208 = vld [vmem:[%s3 + $0x180] sm:$0xff]
        %v2209 = vld [vmem:[%s3 + $0x188] sm:$0xff]
        %v2210 = vld [vmem:[%s3 + $0x190] sm:$0xff]
        %v2211 = vld [vmem:[%s3 + $0x198] sm:$0xff]
        %v2212 = vld [vmem:[%s3 + $0x1a0] sm:$0xff]
        %v2213 = vld [vmem:[%s3 + $0x1a8] sm:$0xff]
        %v2214 = vld [vmem:[%s3 + $0x1b0] sm:$0xff]
        %v2215 = vld [vmem:[%s3 + $0x1b8] sm:$0xff]
        %v2216 = vld [vmem:[%s3 + $0x1c0] sm:$0xff]
        %v2217 = vld [vmem:[%s3 + $0x1c8] sm:$0xff]
        %v2218 = vld [vmem:[%s3 + $0x1d0] sm:$0xff]
        %v2219 = vld [vmem:[%s3 + $0x1d8] sm:$0xff]
        %v2220 = vld [vmem:[%s3 + $0x1e0] sm:$0xff]
        %v2221 = vld [vmem:[%s3 + $0x1e8] sm:$0xff]
        %v2222 = vld [vmem:[%s3 + $0x1f0] sm:$0xff]
        %v2223 = vld [vmem:[%s3 + $0x1f8] sm:$0xff]
        %v2224 = vld [vmem:[%s3 + $0x200] sm:$0xff]
        %v2225 = vld [vmem:[%s3 + $0x208] sm:$0xff]
        %v2226 = vld [vmem:[%s3 + $0x210] sm:$0xff]
        %v2227 = vld [vmem:[%s3 + $0x218] sm:$0xff]
        %v2228 = vld [vmem:[%s3 + $0x220] sm:$0xff]
        %v2229 = vld [vmem:[%s3 + $0x228] sm:$0xff]
        %v2230 = vld [vmem:[%s3 + $0x230] sm:$0xff]
        %v2231 = vld [vmem:[%s3 + $0x238] sm:$0xff]
        %v2232 = vld [vmem:[%s4] sm:$0x1]
        %v2265 = vrot.slane %v2128, 7
        %v2266 = vrot.slane %v2129, 7
        %v2267 = vsel %vm454, %v2265, %v2266
        %v2268 = vrot.slane %v2130, 7
        %v2269 = vrot.slane %v2131, 7
        %v2270 = vsel %vm454, %v2268, %v2269
        %v2271 = vrot.slane %v2132, 7
        %v2272 = vrot.slane %v2133, 7
        %v2273 = vsel %vm454, %v2271, %v2272
        %v2274 = vrot.slane %v2134, 7
        %v2275 = vrot.slane %v2135, 7
        %v2276 = vsel %vm454, %v2274, %v2275
        %v2277 = vrot.slane %v2136, 7
        %v2278 = vrot.slane %v2137, 7
        %v2279 = vsel %vm454, %v2277, %v2278
        %v2280 = vrot.slane %v2138, 7
        %v2281 = vrot.slane %v2139, 7
        %v2282 = vsel %vm454, %v2280, %v2281
        %v2283 = vrot.slane %v2140, 7
        %v2284 = vrot.slane %v2141, 7
        %v2285 = vsel %vm454, %v2283, %v2284
        %v2286 = vrot.slane %v2142, 7
        %v2287 = vrot.slane %v2143, 7
        %v2288 = vsel %vm454, %v2286, %v2287
        %v2289 = vrot.slane %v2144, 7
        %v2290 = vrot.slane %v2145, 7
        %v2291 = vsel %vm454, %v2289, %v2290
        %v2292 = vrot.slane %v2146, 7
        %v2293 = vrot.slane %v2147, 7
        %v2294 = vsel %vm454, %v2292, %v2293
        %v2295 = vrot.slane %v2148, 7
        %v2296 = vrot.slane %v2149, 7
        %v2297 = vsel %vm454, %v2295, %v2296
        %v2298 = vrot.slane %v2150, 7
        %v2299 = vrot.slane %v2151, 7
        %v2300 = vsel %vm454, %v2298, %v2299
        %v2301 = vrot.slane %v2152, 7
        %v2302 = vrot.slane %v2153, 7
        %v2303 = vsel %vm454, %v2301, %v2302
        %v2304 = vrot.slane %v2154, 7
        %v2305 = vrot.slane %v2155, 7
        %v2306 = vsel %vm454, %v2304, %v2305
        %v2307 = vrot.slane %v2156, 7
        %v2308 = vrot.slane %v2157, 7
        %v2309 = vsel %vm454, %v2307, %v2308
        %v2310 = vrot.slane %v2158, 7
        %v2311 = vrot.slane %v2159, 7
        %v2312 = vsel %vm454, %v2310, %v2311
        %v2361 = vsel %vm454, 0.0, %v2265
        %v2362 = vsel %vm454, 0.0, %v2268
        %v2363 = vsel %vm454, 0.0, %v2271
        %v2364 = vsel %vm454, 0.0, %v2274
        %v2365 = vsel %vm454, 0.0, %v2277
        %v2366 = vsel %vm454, 0.0, %v2280
        %v2367 = vsel %vm454, 0.0, %v2283
        %v2368 = vsel %vm454, 0.0, %v2286
        %v2369 = vsel %vm454, 0.0, %v2289
        %v2370 = vsel %vm454, 0.0, %v2292
        %v2371 = vsel %vm454, 0.0, %v2295
        %v2372 = vsel %vm454, 0.0, %v2298
        %v2373 = vsel %vm454, 0.0, %v2301
        %v2374 = vsel %vm454, 0.0, %v2304
        %v2375 = vsel %vm454, 0.0, %v2307
        %v2376 = vsel %vm454, 0.0, %v2310
        %v2377 = vsel %vm454, %v2266, 0.0
        %v2378 = vsel %vm454, %v2269, 0.0
        %v2379 = vsel %vm454, %v2272, 0.0
        %v2380 = vsel %vm454, %v2275, 0.0
        %v2381 = vsel %vm454, %v2278, 0.0
        %v2382 = vsel %vm454, %v2281, 0.0
        %v2383 = vsel %vm454, %v2284, 0.0
        %v2384 = vsel %vm454, %v2287, 0.0
        %v2385 = vsel %vm454, %v2290, 0.0
        %v2386 = vsel %vm454, %v2293, 0.0
        %v2387 = vsel %vm454, %v2296, 0.0
        %v2388 = vsel %vm454, %v2299, 0.0
        %v2389 = vsel %vm454, %v2302, 0.0
        %v2390 = vsel %vm454, %v2305, 0.0
        %v2391 = vsel %vm454, %v2308, 0.0
        %v2392 = vsel %vm454, %v2311, 0.0
        %v2423 = vrot.slane %v2361, 1
        %v2424 = vrot.slane %v2267, 1
        %v2425 = vsel %vm613, %v2423, %v2424
        %v2426 = vrot.slane %v2377, 1
        %v2427 = vsel %vm613, %v2424, %v2426
        %v2428 = vrot.slane %v2362, 1
        %v2429 = vrot.slane %v2270, 1
        %v2430 = vsel %vm613, %v2428, %v2429
        %v2431 = vrot.slane %v2378, 1
        %v2432 = vsel %vm613, %v2429, %v2431
        %v2433 = vrot.slane %v2363, 1
        %v2434 = vrot.slane %v2273, 1
        %v2435 = vsel %vm613, %v2433, %v2434
        %v2436 = vrot.slane %v2379, 1
        %v2437 = vsel %vm613, %v2434, %v2436
        %v2438 = vrot.slane %v2364, 1
        %v2439 = vrot.slane %v2276, 1
        %v2440 = vsel %vm613, %v2438, %v2439
        %v2441 = vrot.slane %v2380, 1
        %v2442 = vsel %vm613, %v2439, %v2441
        %v2443 = vrot.slane %v2365, 1
        %v2444 = vrot.slane %v2279, 1
        %v2445 = vsel %vm613, %v2443, %v2444
        %v2446 = vrot.slane %v2381, 1
        %v2447 = vsel %vm613, %v2444, %v2446
        %v2448 = vrot.slane %v2366, 1
        %v2449 = vrot.slane %v2282, 1
        %v2450 = vsel %vm613, %v2448, %v2449
        %v2451 = vrot.slane %v2382, 1
        %v2452 = vsel %vm613, %v2449, %v2451
        %v2453 = vrot.slane %v2367, 1
        %v2454 = vrot.slane %v2285, 1
        %v2455 = vsel %vm613, %v2453, %v2454
        %v2456 = vrot.slane %v2383, 1
        %v2457 = vsel %vm613, %v2454, %v2456
        %v2458 = vrot.slane %v2368, 1
        %v2459 = vrot.slane %v2288, 1
        %v2460 = vsel %vm613, %v2458, %v2459
        %v2461 = vrot.slane %v2384, 1
        %v2462 = vsel %vm613, %v2459, %v2461
        %v2463 = vrot.slane %v2369, 1
        %v2464 = vrot.slane %v2291, 1
        %v2465 = vsel %vm613, %v2463, %v2464
        %v2466 = vrot.slane %v2385, 1
        %v2467 = vsel %vm613, %v2464, %v2466
        %v2468 = vrot.slane %v2370, 1
        %v2469 = vrot.slane %v2294, 1
        %v2470 = vsel %vm613, %v2468, %v2469
        %v2471 = vrot.slane %v2386, 1
        %v2472 = vsel %vm613, %v2469, %v2471
        %v2473 = vrot.slane %v2371, 1
        %v2474 = vrot.slane %v2297, 1
        %v2475 = vsel %vm613, %v2473, %v2474
        %v2476 = vrot.slane %v2387, 1
        %v2477 = vsel %vm613, %v2474, %v2476
        %v2478 = vrot.slane %v2372, 1
        %v2479 = vrot.slane %v2300, 1
        %v2480 = vsel %vm613, %v2478, %v2479
        %v2481 = vrot.slane %v2388, 1
        %v2482 = vsel %vm613, %v2479, %v2481
        %v2483 = vrot.slane %v2373, 1
        %v2484 = vrot.slane %v2303, 1
        %v2485 = vsel %vm613, %v2483, %v2484
        %v2486 = vrot.slane %v2389, 1
        %v2487 = vsel %vm613, %v2484, %v2486
        %v2488 = vrot.slane %v2374, 1
        %v2489 = vrot.slane %v2306, 1
        %v2490 = vsel %vm613, %v2488, %v2489
        %v2491 = vrot.slane %v2390, 1
        %v2492 = vsel %vm613, %v2489, %v2491
        %v2493 = vrot.slane %v2375, 1
        %v2494 = vrot.slane %v2309, 1
        %v2495 = vsel %vm613, %v2493, %v2494
        %v2496 = vrot.slane %v2391, 1
        %v2497 = vsel %vm613, %v2494, %v2496
        %v2498 = vrot.slane %v2361, 2
        %v2499 = vrot.slane %v2267, 2
        %v2500 = vsel %vm691, %v2498, %v2499
        %v2501 = vrot.slane %v2377, 2
        %v2502 = vsel %vm691, %v2499, %v2501
        %v2503 = vrot.slane %v2362, 2
        %v2504 = vrot.slane %v2270, 2
        %v2505 = vsel %vm691, %v2503, %v2504
        %v2506 = vrot.slane %v2378, 2
        %v2507 = vsel %vm691, %v2504, %v2506
        %v2508 = vrot.slane %v2363, 2
        %v2509 = vrot.slane %v2273, 2
        %v2510 = vsel %vm691, %v2508, %v2509
        %v2511 = vrot.slane %v2379, 2
        %v2512 = vsel %vm691, %v2509, %v2511
        %v2513 = vrot.slane %v2364, 2
        %v2514 = vrot.slane %v2276, 2
        %v2515 = vsel %vm691, %v2513, %v2514
        %v2516 = vrot.slane %v2380, 2
        %v2517 = vsel %vm691, %v2514, %v2516
        %v2518 = vrot.slane %v2365, 2
        %v2519 = vrot.slane %v2279, 2
        %v2520 = vsel %vm691, %v2518, %v2519
        %v2521 = vrot.slane %v2381, 2
        %v2522 = vsel %vm691, %v2519, %v2521
        %v2523 = vrot.slane %v2366, 2
        %v2524 = vrot.slane %v2282, 2
        %v2525 = vsel %vm691, %v2523, %v2524
        %v2526 = vrot.slane %v2382, 2
        %v2527 = vsel %vm691, %v2524, %v2526
        %v2528 = vrot.slane %v2367, 2
        %v2529 = vrot.slane %v2285, 2
        %v2530 = vsel %vm691, %v2528, %v2529
        %v2531 = vrot.slane %v2383, 2
        %v2532 = vsel %vm691, %v2529, %v2531
        %v2533 = vrot.slane %v2368, 2
        %v2534 = vrot.slane %v2288, 2
        %v2535 = vsel %vm691, %v2533, %v2534
        %v2536 = vrot.slane %v2384, 2
        %v2537 = vsel %vm691, %v2534, %v2536
        %v2538 = vrot.slane %v2369, 2
        %v2539 = vrot.slane %v2291, 2
        %v2540 = vsel %vm691, %v2538, %v2539
        %v2541 = vrot.slane %v2385, 2
        %v2542 = vsel %vm691, %v2539, %v2541
        %v2543 = vrot.slane %v2370, 2
        %v2544 = vrot.slane %v2294, 2
        %v2545 = vsel %vm691, %v2543, %v2544
        %v2546 = vrot.slane %v2386, 2
        %v2547 = vsel %vm691, %v2544, %v2546
        %v2548 = vrot.slane %v2371, 2
        %v2549 = vrot.slane %v2297, 2
        %v2550 = vsel %vm691, %v2548, %v2549
        %v2551 = vrot.slane %v2387, 2
        %v2552 = vsel %vm691, %v2549, %v2551
        %v2553 = vrot.slane %v2372, 2
        %v2554 = vrot.slane %v2300, 2
        %v2555 = vsel %vm691, %v2553, %v2554
        %v2556 = vrot.slane %v2388, 2
        %v2557 = vsel %vm691, %v2554, %v2556
        %v2558 = vrot.slane %v2373, 2
        %v2559 = vrot.slane %v2303, 2
        %v2560 = vsel %vm691, %v2558, %v2559
        %v2561 = vrot.slane %v2389, 2
        %v2562 = vsel %vm691, %v2559, %v2561
        %v2563 = vrot.slane %v2374, 2
        %v2564 = vrot.slane %v2306, 2
        %v2565 = vsel %vm691, %v2563, %v2564
        %v2566 = vrot.slane %v2390, 2
        %v2567 = vsel %vm691, %v2564, %v2566
        %v2568 = vrot.slane %v2375, 2
        %v2569 = vrot.slane %v2309, 2
        %v2570 = vsel %vm691, %v2568, %v2569
        %v2571 = vrot.slane %v2391, 2
        %v2572 = vsel %vm691, %v2569, %v2571
        %v2606 = vrot.slane %v2376, 1
        %v2607 = vrot.slane %v2312, 1
        %v2608 = vsel %vm613, %v2606, %v2607
        %v2609 = vrot.slane %v2392, 1
        %v2610 = vsel %vm613, %v2607, %v2609
        %v2643 = vrot.slane %v2376, 2
        %v2644 = vrot.slane %v2312, 2
        %v2645 = vsel %vm691, %v2643, %v2644
        %v2646 = vrot.slane %v2392, 2
        %v2647 = vsel %vm691, %v2644, %v2646
        %2648 = vrot.lane.b32.xlu0 %v615, 64
        %v2649 = vpop.permute.xlu0 %2648
        %2650 = vrot.lane.b32.xlu0 %v2425, 64
        %v2651 = vpop.permute.xlu0 %2650
        %2652 = vrot.lane.b32.xlu0 %v2427, 64
        %v2653 = vpop.permute.xlu0 %2652
        %2654 = vrot.lane.b32.xlu0 %v2430, 64
        %v2655 = vpop.permute.xlu0 %2654
        %2656 = vrot.lane.b32.xlu0 %v2432, 64
        %v2657 = vpop.permute.xlu0 %2656
        %2658 = vrot.lane.b32.xlu0 %v2435, 64
        %v2659 = vpop.permute.xlu0 %2658
        %2660 = vrot.lane.b32.xlu0 %v2437, 64
        %v2661 = vpop.permute.xlu0 %2660
        %2662 = vrot.lane.b32.xlu0 %v2440, 64
        %v2663 = vpop.permute.xlu0 %2662
        %2664 = vrot.lane.b32.xlu0 %v2442, 64
        %v2665 = vpop.permute.xlu0 %2664
        %2666 = vrot.lane.b32.xlu0 %v2445, 64
        %v2667 = vpop.permute.xlu0 %2666
        %2668 = vrot.lane.b32.xlu0 %v2447, 64
        %v2669 = vpop.permute.xlu0 %2668
        %2670 = vrot.lane.b32.xlu0 %v2450, 64
        %v2671 = vpop.permute.xlu0 %2670
        %2672 = vrot.lane.b32.xlu0 %v2452, 64
        %v2673 = vpop.permute.xlu0 %2672
        %2674 = vrot.lane.b32.xlu0 %v2455, 64
        %v2675 = vpop.permute.xlu0 %2674
        %2676 = vrot.lane.b32.xlu0 %v2457, 64
        %v2677 = vpop.permute.xlu0 %2676
        %2678 = vrot.lane.b32.xlu0 %v2460, 64
        %v2679 = vpop.permute.xlu0 %2678
        %2680 = vrot.lane.b32.xlu0 %v2462, 64
        %v2681 = vpop.permute.xlu0 %2680
        %2682 = vrot.lane.b32.xlu0 %v2465, 64
        %v2683 = vpop.permute.xlu0 %2682
        %2684 = vrot.lane.b32.xlu0 %v2467, 64
        %v2685 = vpop.permute.xlu0 %2684
        %2686 = vrot.lane.b32.xlu0 %v2470, 64
        %v2687 = vpop.permute.xlu0 %2686
        %2688 = vrot.lane.b32.xlu0 %v2472, 64
        %v2689 = vpop.permute.xlu0 %2688
        %2690 = vrot.lane.b32.xlu0 %v2475, 64
        %v2691 = vpop.permute.xlu0 %2690
        %2692 = vrot.lane.b32.xlu0 %v2477, 64
        %v2693 = vpop.permute.xlu0 %2692
        %2694 = vrot.lane.b32.xlu0 %v2480, 64
        %v2695 = vpop.permute.xlu0 %2694
        %2696 = vrot.lane.b32.xlu0 %v2482, 64
        %v2697 = vpop.permute.xlu0 %2696
        %2698 = vrot.lane.b32.xlu0 %v2485, 64
        %v2699 = vpop.permute.xlu0 %2698
        %2700 = vrot.lane.b32.xlu0 %v2487, 64
        %v2701 = vpop.permute.xlu0 %2700
        %2702 = vrot.lane.b32.xlu0 %v2490, 64
        %v2703 = vpop.permute.xlu0 %2702
        %2704 = vrot.lane.b32.xlu0 %v2492, 64
        %v2705 = vpop.permute.xlu0 %2704
        %2706 = vrot.lane.b32.xlu0 %v2495, 64
        %v2707 = vpop.permute.xlu0 %2706
        %2708 = vrot.lane.b32.xlu0 %v2497, 64
        %v2709 = vpop.permute.xlu0 %2708
        %2741 = vrot.lane.b32.xlu0 %v2361, 64
        %v2742 = vpop.permute.xlu0 %2741
        %2743 = vrot.lane.b32.xlu0 %v2267, 64
        %v2744 = vpop.permute.xlu0 %2743
        %2745 = vrot.lane.b32.xlu0 %v2362, 64
        %v2746 = vpop.permute.xlu0 %2745
        %2747 = vrot.lane.b32.xlu0 %v2270, 64
        %v2748 = vpop.permute.xlu0 %2747
        %2749 = vrot.lane.b32.xlu0 %v2363, 64
        %v2750 = vpop.permute.xlu0 %2749
        %2751 = vrot.lane.b32.xlu0 %v2273, 64
        %v2752 = vpop.permute.xlu0 %2751
        %2753 = vrot.lane.b32.xlu0 %v2364, 64
        %v2754 = vpop.permute.xlu0 %2753
        %2755 = vrot.lane.b32.xlu0 %v2276, 64
        %v2756 = vpop.permute.xlu0 %2755
        %2757 = vrot.lane.b32.xlu0 %v2365, 64
        %v2758 = vpop.permute.xlu0 %2757
        %2759 = vrot.lane.b32.xlu0 %v2279, 64
        %v2760 = vpop.permute.xlu0 %2759
        %2761 = vrot.lane.b32.xlu0 %v2366, 64
        %v2762 = vpop.permute.xlu0 %2761
        %2763 = vrot.lane.b32.xlu0 %v2282, 64
        %v2764 = vpop.permute.xlu0 %2763
        %2765 = vrot.lane.b32.xlu0 %v2367, 64
        %v2766 = vpop.permute.xlu0 %2765
        %2767 = vrot.lane.b32.xlu0 %v2285, 64
        %v2768 = vpop.permute.xlu0 %2767
        %2769 = vrot.lane.b32.xlu0 %v2368, 64
        %v2770 = vpop.permute.xlu0 %2769
        %2771 = vrot.lane.b32.xlu0 %v2288, 64
        %v2772 = vpop.permute.xlu0 %2771
        %2773 = vrot.lane.b32.xlu0 %v2369, 64
        %v2774 = vpop.permute.xlu0 %2773
        %2775 = vrot.lane.b32.xlu0 %v2291, 64
        %v2776 = vpop.permute.xlu0 %2775
        %2777 = vrot.lane.b32.xlu0 %v2370, 64
        %v2778 = vpop.permute.xlu0 %2777
        %2779 = vrot.lane.b32.xlu0 %v2294, 64
        %v2780 = vpop.permute.xlu0 %2779
        %2781 = vrot.lane.b32.xlu0 %v2371, 64
        %v2782 = vpop.permute.xlu0 %2781
        %2783 = vrot.lane.b32.xlu0 %v2297, 64
        %v2784 = vpop.permute.xlu0 %2783
        %2785 = vrot.lane.b32.xlu0 %v2372, 64
        %v2786 = vpop.permute.xlu0 %2785
        %2787 = vrot.lane.b32.xlu0 %v2300, 64
        %v2788 = vpop.permute.xlu0 %2787
        %2789 = vrot.lane.b32.xlu0 %v2373, 64
        %v2790 = vpop.permute.xlu0 %2789
        %2791 = vrot.lane.b32.xlu0 %v2303, 64
        %v2792 = vpop.permute.xlu0 %2791
        %2793 = vrot.lane.b32.xlu0 %v2374, 64
        %v2794 = vpop.permute.xlu0 %2793
        %2795 = vrot.lane.b32.xlu0 %v2306, 64
        %v2796 = vpop.permute.xlu0 %2795
        %2797 = vrot.lane.b32.xlu0 %v2375, 64
        %v2798 = vpop.permute.xlu0 %2797
        %2799 = vrot.lane.b32.xlu0 %v2309, 64
        %v2800 = vpop.permute.xlu0 %2799
        %2801 = vrot.lane.b32.xlu0 %v2376, 64
        %v2802 = vpop.permute.xlu0 %2801
        %2803 = vrot.lane.b32.xlu0 %v2312, 64
        %v2804 = vpop.permute.xlu0 %2803
        %2837 = vrot.lane.b32.xlu0 %v2500, 64
        %v2838 = vpop.permute.xlu0 %2837
        %2839 = vrot.lane.b32.xlu0 %v2502, 64
        %v2840 = vpop.permute.xlu0 %2839
        %2841 = vrot.lane.b32.xlu0 %v2505, 64
        %v2842 = vpop.permute.xlu0 %2841
        %2843 = vrot.lane.b32.xlu0 %v2507, 64
        %v2844 = vpop.permute.xlu0 %2843
        %2845 = vrot.lane.b32.xlu0 %v2510, 64
        %v2846 = vpop.permute.xlu0 %2845
        %2847 = vrot.lane.b32.xlu0 %v2512, 64
        %v2848 = vpop.permute.xlu0 %2847
        %2849 = vrot.lane.b32.xlu0 %v2515, 64
        %v2850 = vpop.permute.xlu0 %2849
        %2851 = vrot.lane.b32.xlu0 %v2517, 64
        %v2852 = vpop.permute.xlu0 %2851
        %2853 = vrot.lane.b32.xlu0 %v2520, 64
        %v2854 = vpop.permute.xlu0 %2853
        %2855 = vrot.lane.b32.xlu0 %v2522, 64
        %v2856 = vpop.permute.xlu0 %2855
        %2857 = vrot.lane.b32.xlu0 %v2525, 64
        %v2858 = vpop.permute.xlu0 %2857
        %2859 = vrot.lane.b32.xlu0 %v2527, 64
        %v2860 = vpop.permute.xlu0 %2859
        %2861 = vrot.lane.b32.xlu0 %v2530, 64
        %v2862 = vpop.permute.xlu0 %2861
        %2863 = vrot.lane.b32.xlu0 %v2532, 64
        %v2864 = vpop.permute.xlu0 %2863
        %2865 = vrot.lane.b32.xlu0 %v2535, 64
        %v2866 = vpop.permute.xlu0 %2865
        %2867 = vrot.lane.b32.xlu0 %v2537, 64
        %v2868 = vpop.permute.xlu0 %2867
        %2869 = vrot.lane.b32.xlu0 %v2540, 64
        %v2870 = vpop.permute.xlu0 %2869
        %2871 = vrot.lane.b32.xlu0 %v2542, 64
        %v2872 = vpop.permute.xlu0 %2871
        %2873 = vrot.lane.b32.xlu0 %v2545, 64
        %v2874 = vpop.permute.xlu0 %2873
        %2875 = vrot.lane.b32.xlu0 %v2547, 64
        %v2876 = vpop.permute.xlu0 %2875
        %2877 = vrot.lane.b32.xlu0 %v2550, 64
        %v2878 = vpop.permute.xlu0 %2877
        %2879 = vrot.lane.b32.xlu0 %v2552, 64
        %v2880 = vpop.permute.xlu0 %2879
        %2881 = vrot.lane.b32.xlu0 %v2555, 64
        %v2882 = vpop.permute.xlu0 %2881
        %2883 = vrot.lane.b32.xlu0 %v2557, 64
        %v2884 = vpop.permute.xlu0 %2883
        %2885 = vrot.lane.b32.xlu0 %v2560, 64
        %v2886 = vpop.permute.xlu0 %2885
        %2887 = vrot.lane.b32.xlu0 %v2562, 64
        %v2888 = vpop.permute.xlu0 %2887
        %2889 = vrot.lane.b32.xlu0 %v2565, 64
        %v2890 = vpop.permute.xlu0 %2889
        %2891 = vrot.lane.b32.xlu0 %v2567, 64
        %v2892 = vpop.permute.xlu0 %2891
        %2893 = vrot.lane.b32.xlu0 %v2570, 64
        %v2894 = vpop.permute.xlu0 %2893
        %2895 = vrot.lane.b32.xlu0 %v2572, 64
        %v2896 = vpop.permute.xlu0 %2895
        %2897 = vrot.lane.b32.xlu0 %v2645, 64
        %v2898 = vpop.permute.xlu0 %2897
        %2899 = vrot.lane.b32.xlu0 %v2647, 64
        %v2900 = vpop.permute.xlu0 %2899
        %2933 = vrot.lane.b32.xlu0 %v2608, 64
        %v2934 = vpop.permute.xlu0 %2933
        %2935 = vrot.lane.b32.xlu0 %v2610, 64
        %v2936 = vpop.permute.xlu0 %2935
        %vm2939 = vcmask 523264
        %v2940 = vsel %vm2939, 0.0, %v2649
        %v2941 = vsel %vm2939, %v2361, %v2651
        %v2942 = vsel %vm2939, %v2267, %v2653
        %v2943 = vsel %vm2939, %v2362, %v2655
        %v2944 = vsel %vm2939, %v2270, %v2657
        %v2945 = vsel %vm2939, %v2363, %v2659
        %v2946 = vsel %vm2939, %v2273, %v2661
        %v2947 = vsel %vm2939, %v2364, %v2663
        %v2948 = vsel %vm2939, %v2276, %v2665
        %v2949 = vsel %vm2939, %v2365, %v2667
        %v2950 = vsel %vm2939, %v2279, %v2669
        %v2951 = vsel %vm2939, %v2366, %v2671
        %v2952 = vsel %vm2939, %v2282, %v2673
        %v2953 = vsel %vm2939, %v2367, %v2675
        %v2954 = vsel %vm2939, %v2285, %v2677
        %v2955 = vsel %vm2939, %v2368, %v2679
        %v2956 = vsel %vm2939, %v2288, %v2681
        %v2957 = vsel %vm2939, %v2369, %v2683
        %v2958 = vsel %vm2939, %v2291, %v2685
        %v2959 = vsel %vm2939, %v2370, %v2687
        %v2960 = vsel %vm2939, %v2294, %v2689
        %v2961 = vsel %vm2939, %v2371, %v2691
        %v2962 = vsel %vm2939, %v2297, %v2693
        %v2963 = vsel %vm2939, %v2372, %v2695
        %v2964 = vsel %vm2939, %v2300, %v2697
        %v2965 = vsel %vm2939, %v2373, %v2699
        %v2966 = vsel %vm2939, %v2303, %v2701
        %v2967 = vsel %vm2939, %v2374, %v2703
        %v2968 = vsel %vm2939, %v2306, %v2705
        %v2969 = vsel %vm2939, %v2375, %v2707
        %v2970 = vsel %vm2939, %v2309, %v2709
        %v2971 = vsel %vm2939, %v693, %v2742
        %v2972 = vsel %vm2939, %v693, %v2744
        %v2973 = vsel %vm2939, %v2500, %v2746
        %v2974 = vsel %vm2939, %v2502, %v2748
        %v2975 = vsel %vm2939, %v2505, %v2750
        %v2976 = vsel %vm2939, %v2507, %v2752
        %v2977 = vsel %vm2939, %v2510, %v2754
        %v2978 = vsel %vm2939, %v2512, %v2756
        %v2979 = vsel %vm2939, %v2515, %v2758
        %v2980 = vsel %vm2939, %v2517, %v2760
        %v2981 = vsel %vm2939, %v2520, %v2762
        %v2982 = vsel %vm2939, %v2522, %v2764
        %v2983 = vsel %vm2939, %v2525, %v2766
        %v2984 = vsel %vm2939, %v2527, %v2768
        %v2985 = vsel %vm2939, %v2530, %v2770
        %v2986 = vsel %vm2939, %v2532, %v2772
        %v2987 = vsel %vm2939, %v2535, %v2774
        %v2988 = vsel %vm2939, %v2537, %v2776
        %v2989 = vsel %vm2939, %v2540, %v2778
        %v2990 = vsel %vm2939, %v2542, %v2780
        %v2991 = vsel %vm2939, %v2545, %v2782
        %v2992 = vsel %vm2939, %v2547, %v2784
        %v2993 = vsel %vm2939, %v2550, %v2786
        %v2994 = vsel %vm2939, %v2552, %v2788
        %v2995 = vsel %vm2939, %v2555, %v2790
        %v2996 = vsel %vm2939, %v2557, %v2792
        %v2997 = vsel %vm2939, %v2560, %v2794
        %v2998 = vsel %vm2939, %v2562, %v2796
        %v2999 = vsel %vm2939, %v2565, %v2798
        %v3000 = vsel %vm2939, %v2567, %v2800
        %v3001 = vsel %vm2939, %v2570, %v2802
        %v3002 = vsel %vm2939, %v2572, %v2804
        %v3003 = vsel %vm2939, %v2425, %v2838
        %v3004 = vsel %vm2939, %v2427, %v2840
        %v3005 = vsel %vm2939, %v2430, %v2842
        %v3006 = vsel %vm2939, %v2432, %v2844
        %v3007 = vsel %vm2939, %v2435, %v2846
        %v3008 = vsel %vm2939, %v2437, %v2848
        %v3009 = vsel %vm2939, %v2440, %v2850
        %v3010 = vsel %vm2939, %v2442, %v2852
        %v3011 = vsel %vm2939, %v2445, %v2854
        %v3012 = vsel %vm2939, %v2447, %v2856
        %v3013 = vsel %vm2939, %v2450, %v2858
        %v3014 = vsel %vm2939, %v2452, %v2860
        %v3015 = vsel %vm2939, %v2455, %v2862
        %v3016 = vsel %vm2939, %v2457, %v2864
        %v3017 = vsel %vm2939, %v2460, %v2866
        %v3018 = vsel %vm2939, %v2462, %v2868
        %v3019 = vsel %vm2939, %v2465, %v2870
        %v3020 = vsel %vm2939, %v2467, %v2872
        %v3021 = vsel %vm2939, %v2470, %v2874
        %v3022 = vsel %vm2939, %v2472, %v2876
        %v3023 = vsel %vm2939, %v2475, %v2878
        %v3024 = vsel %vm2939, %v2477, %v2880
        %v3025 = vsel %vm2939, %v2480, %v2882
        %v3026 = vsel %vm2939, %v2482, %v2884
        %v3027 = vsel %vm2939, %v2485, %v2886
        %v3028 = vsel %vm2939, %v2487, %v2888
        %v3029 = vsel %vm2939, %v2490, %v2890
        %v3030 = vsel %vm2939, %v2492, %v2892
        %v3031 = vsel %vm2939, %v2495, %v2894
        %v3032 = vsel %vm2939, %v2497, %v2896
        %v3033 = vsel %vm2939, %v2608, %v2898
        %v3034 = vsel %vm2939, %v2610, %v2900
        %v3035 = vsel %vm2939, %v2376, %v2934
        %v3036 = vsel %vm2939, %v2312, %v2936
        %v3038 = vlaneseq
        %v3039 = vshrl.u32 %v3038, 7
        %v3040 = vsub.s32 0, %v3039
        %v3041 = vrot.slane %v2232, %v3040
        %v3043 = vsel %vm2939, %v2505, 0
        %v3045 = vsel %vm2939, %v2507, 0
        %v3047 = vsel %vm2939, %v2510, 0
        %v3049 = vsel %vm2939, %v2512, 0
        %v3051 = vsel %vm2939, %v2515, 0
        %v3053 = vsel %vm2939, %v2517, 0
        %v3055 = vsel %vm2939, %v2520, 0
        %v3057 = vsel %vm2939, %v2522, 0
        %v3059 = vsel %vm2939, %v2525, 0
        %v3061 = vsel %vm2939, %v2527, 0
        %v3063 = vsel %vm2939, %v2530, 0
        %v3065 = vsel %vm2939, %v2532, 0
        %v3067 = vsel %vm2939, %v2535, 0
        %v3069 = vsel %vm2939, %v2537, 0
        %v3071 = vsel %vm2939, %v2540, 0
        %v3073 = vsel %vm2939, %v2542, 0
        %v3075 = vsel %vm2939, %v2545, 0
        %v3077 = vsel %vm2939, %v2547, 0
        %v3079 = vsel %vm2939, %v2550, 0
        %v3081 = vsel %vm2939, %v2552, 0
        %v3083 = vsel %vm2939, %v2555, 0
        %v3085 = vsel %vm2939, %v2557, 0
        %v3087 = vsel %vm2939, %v2560, 0
        %v3089 = vsel %vm2939, %v2562, 0
        %v3091 = vsel %vm2939, %v2565, 0
        %v3093 = vsel %vm2939, %v2567, 0
        %v3095 = vsel %vm2939, %v2570, 0
        %v3097 = vsel %vm2939, %v2572, 0
        %v3099 = vsel %vm2939, %v2645, 0
        %v3101 = vsel %vm2939, %v2647, 0
        %v3103 = vsel %vm2939, %v693, 0
        %3105 = vmatprep.subr.mxu0 0.0
        %3106 = vmatpush1.msra.mxu0 %v2160
        %3107 = vmatprep.subr.mxu0 0.0
        %3108 = vmatpush1.msra.mxu0 %v2161
        %3109 = vmatprep.subr.mxu0 0.0
        %3110 = vmatpush1.msra.mxu0 %v2162
        %3111 = vmatprep.subr.mxu0 0.0
        %3112 = vmatpush1.msra.mxu0 %v2163
        %3113 = vmatprep.subr.mxu0 0.0
        %3114 = vmatpush1.msra.mxu0 %v2164
        %3115 = vmatprep.subr.mxu0 0.0
        %3116 = vmatpush1.msra.mxu0 %v2165
        %3117 = vmatprep.subr.mxu0 0.0
        %3118 = vmatpush1.msra.mxu0 %v2166
        %3119 = vmatprep.subr.mxu0 0.0
        %3120 = vmatpush1.msra.mxu0 %v2167
        %3121 = vmatprep.subr.mxu0 0.0
        %3122 = vmatpush1.msra.mxu0 %v2168
        %3123 = vmatprep.subr.mxu0 0.0
        %3124 = vmatpush1.msra.mxu0 %v2169
        %3125 = vmatprep.subr.mxu0 0.0
        %3126 = vmatpush1.msra.mxu0 %v2170
        %3127 = vmatprep.subr.mxu0 0.0
        %3128 = vmatpush1.msra.mxu0 %v2171
        %3129 = vmatprep.subr.mxu0 0.0
        %3130 = vmatpush1.msra.mxu0 %v2172
        %3131 = vmatprep.subr.mxu0 0.0
        %3132 = vmatpush1.msra.mxu0 %v2173
        %3133 = vmatprep.subr.mxu0 0.0
        %3134 = vmatpush1.msra.mxu0 %v2174
        %3135 = vmatprep.subr.mxu0 0.0
        %3136 = vmatpush1.msra.mxu0 %v2175
        %3137 = vmatprep.subr.mxu0 0.0
        %3138 = vmatpush1.msra.mxu0 %v2176
        %3139 = vmatprep.subr.mxu0 0.0
        %3140 = vmatpush1.msra.mxu0 %v2177
        %3141 = vmatprep.subr.mxu0 0.0
        %3142 = vmatpush1.msra.mxu0 %v2178
        %3143 = vmatprep.subr.mxu0 0.0
        %3144 = vmatpush1.msra.mxu0 %v2179
        %3145 = vmatprep.subr.mxu0 0.0
        %3146 = vmatpush1.msra.mxu0 %v2180
        %3147 = vmatprep.subr.mxu0 0.0
        %3148 = vmatpush1.msra.mxu0 %v2181
        %3149 = vmatprep.subr.mxu0 0.0
        %3150 = vmatpush1.msra.mxu0 %v2182
        %3151 = vmatprep.subr.mxu0 0.0
        %3152 = vmatpush1.msra.mxu0 %v2183
        %3153 = vmatprep.subr.mxu0 0.0
        %3154 = vmatpush1.msra.mxu0 %v2184
        %3155 = vmatprep.subr.mxu0 0.0
        %3156 = vmatpush1.msra.mxu0 %v2185
        %3157 = vmatprep.subr.mxu0 0.0
        %3158 = vmatpush1.msra.mxu0 %v2186
        %3159 = vmatprep.subr.mxu0 0.0
        %3160 = vmatpush1.msra.mxu0 %v2187
        %3161 = vmatprep.subr.mxu0 0.0
        %3162 = vmatpush1.msra.mxu0 %v2188
        %3163 = vmatprep.subr.mxu0 0.0
        %3164 = vmatpush1.msra.mxu0 %v2189
        %3165 = vmatprep.subr.mxu0 0.0
        %3166 = vmatpush1.msra.mxu0 %v2190
        %3167 = vmatprep.subr.mxu0 0.0
        %3168 = vmatpush1.msra.mxu0 %v2191
        %3169 = vmatprep.mubr.f32.mxu0 %v2971
        %3170 = vmatmul.mubr.f32.gmra.mrb[0].mxu0 %v2940
        %v3171 = vpop.f32.mrb[0].mxu0
        %v3172 = vadd.f32 %v3041, %v3171
        %v3173 = vpop.f32.mrb[0].mxu0
        %3174 = vmatprep.mubr.f32.mxu0 %v2972
        %3175 = vmatmul.mubr.f32.gmra.mrb[0].mxu0 %v2940
        %v3176 = vpop.f32.mrb[0].mxu0
        %v3177 = vadd.f32 %v3041, %v3176
        %v3178 = vpop.f32.mrb[0].mxu0
        %3179 = vmatprep.mubr.f32.mxu0 %v2973
        %3180 = vmatmul.mubr.f32.gmra.mrb[0].mxu0 %v2941
        %v3181 = vpop.f32.mrb[0].mxu0
        %v3182 = vadd.f32 %v3041, %v3181
        %v3183 = vpop.f32.mrb[0].mxu0
        %3184 = vmatprep.mubr.f32.mxu0 %v2974
        %3185 = vmatmul.mubr.f32.gmra.mrb[0].mxu0 %v2942
        %v3186 = vpop.f32.mrb[0].mxu0
        %v3187 = vadd.f32 %v3041, %v3186
        %v3188 = vpop.f32.mrb[0].mxu0
        %3189 = vmatprep.mubr.f32.mxu0 %v2975
        %3190 = vmatmul.mubr.f32.gmra.mrb[0].mxu0 %v2943
        %v3191 = vpop.f32.mrb[0].mxu0
        %v3192 = vadd.f32 %v3041, %v3191
        %v3193 = vpop.f32.mrb[0].mxu0
        %3194 = vmatprep.mubr.f32.mxu0 %v2976
        %3195 = vmatmul.mubr.f32.gmra.mrb[0].mxu0 %v2944
        %v3196 = vpop.f32.mrb[0].mxu0
        %v3197 = vadd.f32 %v3041, %v3196
        %v3198 = vpop.f32.mrb[0].mxu0
        %3199 = vmatprep.mubr.f32.mxu0 %v2977
        %3200 = vmatmul.mubr.f32.gmra.mrb[0].mxu0 %v2945
        %v3201 = vpop.f32.mrb[0].mxu0
        %v3202 = vadd.f32 %v3041, %v3201
        %v3203 = vpop.f32.mrb[0].mxu0
        %3204 = vmatprep.mubr.f32.mxu0 %v2978
        %3205 = vmatmul.mubr.f32.gmra.mrb[0].mxu0 %v2946
        %v3206 = vpop.f32.mrb[0].mxu0
        %v3207 = vadd.f32 %v3041, %v3206
        %v3208 = vpop.f32.mrb[0].mxu0
        %3209 = vmatprep.mubr.f32.mxu0 %v2979
        %3210 = vmatmul.mubr.f32.gmra.mrb[0].mxu0 %v2947
        %v3211 = vpop.f32.mrb[0].mxu0
        %v3212 = vadd.f32 %v3041, %v3211
        %v3213 = vpop.f32.mrb[0].mxu0
        %3214 = vmatprep.mubr.f32.mxu0 %v2980
        %3215 = vmatmul.mubr.f32.gmra.mrb[0].mxu0 %v2948
        %v3216 = vpop.f32.mrb[0].mxu0
        %v3217 = vadd.f32 %v3041, %v3216
        %v3218 = vpop.f32.mrb[0].mxu0
        %3219 = vmatprep.mubr.f32.mxu0 %v2981
        %3220 = vmatmul.mubr.f32.gmra.mrb[0].mxu0 %v2949
        %v3221 = vpop.f32.mrb[0].mxu0
        %v3222 = vadd.f32 %v3041, %v3221
        %v3223 = vpop.f32.mrb[0].mxu0
        %3224 = vmatprep.mubr.f32.mxu0 %v2982
        %3225 = vmatmul.mubr.f32.gmra.mrb[0].mxu0 %v2950
        %v3226 = vpop.f32.mrb[0].mxu0
        %v3227 = vadd.f32 %v3041, %v3226
        %v3228 = vpop.f32.mrb[0].mxu0
        %3229 = vmatprep.mubr.f32.mxu0 %v2983
        %3230 = vmatmul.mubr.f32.gmra.mrb[0].mxu0 %v2951
        %v3231 = vpop.f32.mrb[0].mxu0
        %v3232 = vadd.f32 %v3041, %v3231
        %v3233 = vpop.f32.mrb[0].mxu0
        %3234 = vmatprep.mubr.f32.mxu0 %v2984
        %3235 = vmatmul.mubr.f32.gmra.mrb[0].mxu0 %v2952
        %v3236 = vpop.f32.mrb[0].mxu0
        %v3237 = vadd.f32 %v3041, %v3236
        %v3238 = vpop.f32.mrb[0].mxu0
        %3239 = vmatprep.mubr.f32.mxu0 %v2985
        %3240 = vmatmul.mubr.f32.gmra.mrb[0].mxu0 %v2953
        %v3241 = vpop.f32.mrb[0].mxu0
        %v3242 = vadd.f32 %v3041, %v3241
        %v3243 = vpop.f32.mrb[0].mxu0
        %3244 = vmatprep.mubr.f32.mxu0 %v2986
        %3245 = vmatmul.mubr.f32.gmra.mrb[0].mxu0 %v2954
        %v3246 = vpop.f32.mrb[0].mxu0
        %v3247 = vadd.f32 %v3041, %v3246
        %v3248 = vpop.f32.mrb[0].mxu0
        %3249 = vmatprep.mubr.f32.mxu0 %v2987
        %3250 = vmatmul.mubr.f32.gmra.mrb[0].mxu0 %v2955
        %v3251 = vpop.f32.mrb[0].mxu0
        %v3252 = vadd.f32 %v3041, %v3251
        %v3253 = vpop.f32.mrb[0].mxu0
        %3254 = vmatprep.mubr.f32.mxu0 %v2988
        %3255 = vmatmul.mubr.f32.gmra.mrb[0].mxu0 %v2956
        %v3256 = vpop.f32.mrb[0].mxu0
        %v3257 = vadd.f32 %v3041, %v3256
        %v3258 = vpop.f32.mrb[0].mxu0
        %3259 = vmatprep.mubr.f32.mxu0 %v2989
        %3260 = vmatmul.mubr.f32.gmra.mrb[0].mxu0 %v2957
        %v3261 = vpop.f32.mrb[0].mxu0
        %v3262 = vadd.f32 %v3041, %v3261
        %v3263 = vpop.f32.mrb[0].mxu0
        %3264 = vmatprep.mubr.f32.mxu0 %v2990
        %3265 = vmatmul.mubr.f32.gmra.mrb[0].mxu0 %v2958
        %v3266 = vpop.f32.mrb[0].mxu0
        %v3267 = vadd.f32 %v3041, %v3266
        %v3268 = vpop.f32.mrb[0].mxu0
        %3269 = vmatprep.mubr.f32.mxu0 %v2991
        %3270 = vmatmul.mubr.f32.gmra.mrb[0].mxu0 %v2959
        %v3271 = vpop.f32.mrb[0].mxu0
        %v3272 = vadd.f32 %v3041, %v3271
        %v3273 = vpop.f32.mrb[0].mxu0
        %3274 = vmatprep.mubr.f32.mxu0 %v2992
        %3275 = vmatmul.mubr.f32.gmra.mrb[0].mxu0 %v2960
        %v3276 = vpop.f32.mrb[0].mxu0
        %v3277 = vadd.f32 %v3041, %v3276
        %v3278 = vpop.f32.mrb[0].mxu0
        %3279 = vmatprep.mubr.f32.mxu0 %v2993
        %3280 = vmatmul.mubr.f32.gmra.mrb[0].mxu0 %v2961
        %v3281 = vpop.f32.mrb[0].mxu0
        %v3282 = vadd.f32 %v3041, %v3281
        %v3283 = vpop.f32.mrb[0].mxu0
        %3284 = vmatprep.mubr.f32.mxu0 %v2994
        %3285 = vmatmul.mubr.f32.gmra.mrb[0].mxu0 %v2962
        %v3286 = vpop.f32.mrb[0].mxu0
        %v3287 = vadd.f32 %v3041, %v3286
        %v3288 = vpop.f32.mrb[0].mxu0
        %3289 = vmatprep.mubr.f32.mxu0 %v2995
        %3290 = vmatmul.mubr.f32.gmra.mrb[0].mxu0 %v2963
        %v3291 = vpop.f32.mrb[0].mxu0
        %v3292 = vadd.f32 %v3041, %v3291
        %v3293 = vpop.f32.mrb[0].mxu0
        %3294 = vmatprep.mubr.f32.mxu0 %v2996
        %3295 = vmatmul.mubr.f32.gmra.mrb[0].mxu0 %v2964
        %v3296 = vpop.f32.mrb[0].mxu0
        %v3297 = vadd.f32 %v3041, %v3296
        %v3298 = vpop.f32.mrb[0].mxu0
        %3299 = vmatprep.mubr.f32.mxu0 %v2997
        %3300 = vmatmul.mubr.f32.gmra.mrb[0].mxu0 %v2965
        %v3301 = vpop.f32.mrb[0].mxu0
        %v3302 = vadd.f32 %v3041, %v3301
        %v3303 = vpop.f32.mrb[0].mxu0
        %3304 = vmatprep.mubr.f32.mxu0 %v2998
        %3305 = vmatmul.mubr.f32.gmra.mrb[0].mxu0 %v2966
        %v3306 = vpop.f32.mrb[0].mxu0
        %v3307 = vadd.f32 %v3041, %v3306
        %v3308 = vpop.f32.mrb[0].mxu0
        %3309 = vmatprep.mubr.f32.mxu0 %v2999
        %3310 = vmatmul.mubr.f32.gmra.mrb[0].mxu0 %v2967
        %v3311 = vpop.f32.mrb[0].mxu0
        %v3312 = vadd.f32 %v3041, %v3311
        %v3313 = vpop.f32.mrb[0].mxu0
        %3314 = vmatprep.mubr.f32.mxu0 %v3000
        %3315 = vmatmul.mubr.f32.gmra.mrb[0].mxu0 %v2968
        %v3316 = vpop.f32.mrb[0].mxu0
        %v3317 = vadd.f32 %v3041, %v3316
        %v3318 = vpop.f32.mrb[0].mxu0
        %3319 = vmatprep.mubr.f32.mxu0 %v3001
        %3320 = vmatmul.mubr.f32.gmra.mrb[0].mxu0 %v2969
        %v3321 = vpop.f32.mrb[0].mxu0
        %v3322 = vadd.f32 %v3041, %v3321
        %v3323 = vpop.f32.mrb[0].mxu0
        %3324 = vmatprep.mubr.f32.mxu0 %v3002
        %3325 = vmatmul.mubr.f32.gmra.mrb[0].mxu0 %v2970
        %v3326 = vpop.f32.mrb[0].mxu0
        %v3327 = vadd.f32 %v3041, %v3326
        %v3328 = vpop.f32.mrb[0].mxu0
        %3329 = vdwg.mxu0
        %3330 = vmatprep.subr.mxu0 0.0
        %3331 = vmatpush1.msra.mxu0 %v2192
        %3332 = vmatprep.subr.mxu0 0.0
        %3333 = vmatpush1.msra.mxu0 %v2193
        %3334 = vmatprep.subr.mxu0 0.0
        %3335 = vmatpush1.msra.mxu0 %v2194
        %3336 = vmatprep.subr.mxu0 0.0
        %3337 = vmatpush1.msra.mxu0 %v2195
        %3338 = vmatprep.subr.mxu0 0.0
        %3339 = vmatpush1.msra.mxu0 %v2196
        %3340 = vmatprep.subr.mxu0 0.0
        %3341 = vmatpush1.msra.mxu0 %v2197
        %3342 = vmatprep.subr.mxu0 0.0
        %3343 = vmatpush1.msra.mxu0 %v2198
        %3344 = vmatprep.subr.mxu0 0.0
        %3345 = vmatpush1.msra.mxu0 %v2199
        %3346 = vmatprep.subr.mxu0 0.0
        %3347 = vmatpush1.msra.mxu0 %v2200
        %3348 = vmatprep.subr.mxu0 0.0
        %3349 = vmatpush1.msra.mxu0 %v2201
        %3350 = vmatprep.subr.mxu0 0.0
        %3351 = vmatpush1.msra.mxu0 %v2202
        %3352 = vmatprep.subr.mxu0 0.0
        %3353 = vmatpush1.msra.mxu0 %v2203
        %3354 = vmatprep.subr.mxu0 0.0
        %3355 = vmatpush1.msra.mxu0 %v2204
        %3356 = vmatprep.subr.mxu0 0.0
        %3357 = vmatpush1.msra.mxu0 %v2205
        %3358 = vmatprep.subr.mxu0 0.0
        %3359 = vmatpush1.msra.mxu0 %v2206
        %3360 = vmatprep.subr.mxu0 0.0
        %3361 = vmatpush1.msra.mxu0 %v2207
        %3362 = vmatprep.subr.mxu0 0.0
        %3363 = vmatpush1.msra.mxu0 %v2208
        %3364 = vmatprep.subr.mxu0 0.0
        %3365 = vmatpush1.msra.mxu0 %v2209
        %3366 = vmatprep.subr.mxu0 0.0
        %3367 = vmatpush1.msra.mxu0 %v2210
        %3368 = vmatprep.subr.mxu0 0.0
        %3369 = vmatpush1.msra.mxu0 %v2211
        %3370 = vmatprep.subr.mxu0 0.0
        %3371 = vmatpush1.msra.mxu0 %v2212
        %3372 = vmatprep.subr.mxu0 0.0
        %3373 = vmatpush1.msra.mxu0 %v2213
        %3374 = vmatprep.subr.mxu0 0.0
        %3375 = vmatpush1.msra.mxu0 %v2214
        %3376 = vmatprep.subr.mxu0 0.0
        %3377 = vmatpush1.msra.mxu0 %v2215
        %3378 = vmatprep.subr.mxu0 0.0
        %3379 = vmatpush1.msra.mxu0 %v2216
        %3380 = vmatprep.subr.mxu0 0.0
        %3381 = vmatpush1.msra.mxu0 %v2217
        %3382 = vmatprep.subr.mxu0 0.0
        %3383 = vmatpush1.msra.mxu0 %v2218
        %3384 = vmatprep.subr.mxu0 0.0
        %3385 = vmatpush1.msra.mxu0 %v2219
        %3386 = vmatprep.subr.mxu0 0.0
        %3387 = vmatpush1.msra.mxu0 %v2220
        %3388 = vmatprep.subr.mxu0 0.0
        %3389 = vmatpush1.msra.mxu0 %v2221
        %3390 = vmatprep.subr.mxu0 0.0
        %3391 = vmatpush1.msra.mxu0 %v2222
        %3392 = vmatprep.subr.mxu0 0.0
        %3393 = vmatpush1.msra.mxu0 %v2223
        %3394 = vmatprep.mubr.f32.mxu0 %v2943
        %3395 = vmatmul.mubr.f32.gmra.mrb[0].mxu0 %v3003
        %v3396 = vpop.f32.mrb[0].mxu0
        %v3397 = vadd.f32 %v3172, %v3396
        %v3398 = vpop.f32.mrb[0].mxu0
        %3399 = vmatprep.mubr.f32.mxu0 %v2944
        %3400 = vmatmul.mubr.f32.gmra.mrb[0].mxu0 %v3004
        %v3401 = vpop.f32.mrb[0].mxu0
        %v3402 = vadd.f32 %v3177, %v3401
        %v3403 = vpop.f32.mrb[0].mxu0
        %3404 = vmatprep.mubr.f32.mxu0 %v2945
        %3405 = vmatmul.mubr.f32.gmra.mrb[0].mxu0 %v3005
        %v3406 = vpop.f32.mrb[0].mxu0
        %v3407 = vadd.f32 %v3182, %v3406
        %v3408 = vpop.f32.mrb[0].mxu0
        %3409 = vmatprep.mubr.f32.mxu0 %v2946
        %3410 = vmatmul.mubr.f32.gmra.mrb[0].mxu0 %v3006
        %v3411 = vpop.f32.mrb[0].mxu0
        %v3412 = vadd.f32 %v3187, %v3411
        %v3413 = vpop.f32.mrb[0].mxu0
        %3414 = vmatprep.mubr.f32.mxu0 %v2947
        %3415 = vmatmul.mubr.f32.gmra.mrb[0].mxu0 %v3007
        %v3416 = vpop.f32.mrb[0].mxu0
        %v3417 = vadd.f32 %v3192, %v3416
        %v3418 = vpop.f32.mrb[0].mxu0
        %3419 = vmatprep.mubr.f32.mxu0 %v2948
        %3420 = vmatmul.mubr.f32.gmra.mrb[0].mxu0 %v3008
        %v3421 = vpop.f32.mrb[0].mxu0
        %v3422 = vadd.f32 %v3197, %v3421
        %v3423 = vpop.f32.mrb[0].mxu0
        %3424 = vmatprep.mubr.f32.mxu0 %v2949
        %3425 = vmatmul.mubr.f32.gmra.mrb[0].mxu0 %v3009
        %v3426 = vpop.f32.mrb[0].mxu0
        %v3427 = vadd.f32 %v3202, %v3426
        %v3428 = vpop.f32.mrb[0].mxu0
        %3429 = vmatprep.mubr.f32.mxu0 %v2950
        %3430 = vmatmul.mubr.f32.gmra.mrb[0].mxu0 %v3010
        %v3431 = vpop.f32.mrb[0].mxu0
        %v3432 = vadd.f32 %v3207, %v3431
        %v3433 = vpop.f32.mrb[0].mxu0
        %3434 = vmatprep.mubr.f32.mxu0 %v2951
        %3435 = vmatmul.mubr.f32.gmra.mrb[0].mxu0 %v3011
        %v3436 = vpop.f32.mrb[0].mxu0
        %v3437 = vadd.f32 %v3212, %v3436
        %v3438 = vpop.f32.mrb[0].mxu0
        %3439 = vmatprep.mubr.f32.mxu0 %v2952
        %3440 = vmatmul.mubr.f32.gmra.mrb[0].mxu0 %v3012
        %v3441 = vpop.f32.mrb[0].mxu0
        %v3442 = vadd.f32 %v3217, %v3441
        %v3443 = vpop.f32.mrb[0].mxu0
        %3444 = vmatprep.mubr.f32.mxu0 %v2953
        %3445 = vmatmul.mubr.f32.gmra.mrb[0].mxu0 %v3013
        %v3446 = vpop.f32.mrb[0].mxu0
        %v3447 = vadd.f32 %v3222, %v3446
        %v3448 = vpop.f32.mrb[0].mxu0
        %3449 = vmatprep.mubr.f32.mxu0 %v2954
        %3450 = vmatmul.mubr.f32.gmra.mrb[0].mxu0 %v3014
        %v3451 = vpop.f32.mrb[0].mxu0
        %v3452 = vadd.f32 %v3227, %v3451
        %v3453 = vpop.f32.mrb[0].mxu0
        %3454 = vmatprep.mubr.f32.mxu0 %v2955
        %3455 = vmatmul.mubr.f32.gmra.mrb[0].mxu0 %v3015
        %v3456 = vpop.f32.mrb[0].mxu0
        %v3457 = vadd.f32 %v3232, %v3456
        %v3458 = vpop.f32.mrb[0].mxu0
        %3459 = vmatprep.mubr.f32.mxu0 %v2956
        %3460 = vmatmul.mubr.f32.gmra.mrb[0].mxu0 %v3016
        %v3461 = vpop.f32.mrb[0].mxu0
        %v3462 = vadd.f32 %v3237, %v3461
        %v3463 = vpop.f32.mrb[0].mxu0
        %3464 = vmatprep.mubr.f32.mxu0 %v2957
        %3465 = vmatmul.mubr.f32.gmra.mrb[0].mxu0 %v3017
        %v3466 = vpop.f32.mrb[0].mxu0
        %v3467 = vadd.f32 %v3242, %v3466
        %v3468 = vpop.f32.mrb[0].mxu0
        %3469 = vmatprep.mubr.f32.mxu0 %v2958
        %3470 = vmatmul.mubr.f32.gmra.mrb[0].mxu0 %v3018
        %v3471 = vpop.f32.mrb[0].mxu0
        %v3472 = vadd.f32 %v3247, %v3471
        %v3473 = vpop.f32.mrb[0].mxu0
        %3474 = vmatprep.mubr.f32.mxu0 %v2959
        %3475 = vmatmul.mubr.f32.gmra.mrb[0].mxu0 %v3019
        %v3476 = vpop.f32.mrb[0].mxu0
        %v3477 = vadd.f32 %v3252, %v3476
        %v3478 = vpop.f32.mrb[0].mxu0
        %3479 = vmatprep.mubr.f32.mxu0 %v2960
        %3480 = vmatmul.mubr.f32.gmra.mrb[0].mxu0 %v3020
        %v3481 = vpop.f32.mrb[0].mxu0
        %v3482 = vadd.f32 %v3257, %v3481
        %v3483 = vpop.f32.mrb[0].mxu0
        %3484 = vmatprep.mubr.f32.mxu0 %v2961
        %3485 = vmatmul.mubr.f32.gmra.mrb[0].mxu0 %v3021
        %v3486 = vpop.f32.mrb[0].mxu0
        %v3487 = vadd.f32 %v3262, %v3486
        %v3488 = vpop.f32.mrb[0].mxu0
        %3489 = vmatprep.mubr.f32.mxu0 %v2962
        %3490 = vmatmul.mubr.f32.gmra.mrb[0].mxu0 %v3022
        %v3491 = vpop.f32.mrb[0].mxu0
        %v3492 = vadd.f32 %v3267, %v3491
        %v3493 = vpop.f32.mrb[0].mxu0
        %3494 = vmatprep.mubr.f32.mxu0 %v2963
        %3495 = vmatmul.mubr.f32.gmra.mrb[0].mxu0 %v3023
        %v3496 = vpop.f32.mrb[0].mxu0
        %v3497 = vadd.f32 %v3272, %v3496
        %v3498 = vpop.f32.mrb[0].mxu0
        %3499 = vmatprep.mubr.f32.mxu0 %v2964
        %3500 = vmatmul.mubr.f32.gmra.mrb[0].mxu0 %v3024
        %v3501 = vpop.f32.mrb[0].mxu0
        %v3502 = vadd.f32 %v3277, %v3501
        %v3503 = vpop.f32.mrb[0].mxu0
        %3504 = vmatprep.mubr.f32.mxu0 %v2965
        %3505 = vmatmul.mubr.f32.gmra.mrb[0].mxu0 %v3025
        %v3506 = vpop.f32.mrb[0].mxu0
        %v3507 = vadd.f32 %v3282, %v3506
        %v3508 = vpop.f32.mrb[0].mxu0
        %3509 = vmatprep.mubr.f32.mxu0 %v2966
        %3510 = vmatmul.mubr.f32.gmra.mrb[0].mxu0 %v3026
        %v3511 = vpop.f32.mrb[0].mxu0
        %v3512 = vadd.f32 %v3287, %v3511
        %v3513 = vpop.f32.mrb[0].mxu0
        %3514 = vmatprep.mubr.f32.mxu0 %v2967
        %3515 = vmatmul.mubr.f32.gmra.mrb[0].mxu0 %v3027
        %v3516 = vpop.f32.mrb[0].mxu0
        %v3517 = vadd.f32 %v3292, %v3516
        %v3518 = vpop.f32.mrb[0].mxu0
        %3519 = vmatprep.mubr.f32.mxu0 %v2968
        %3520 = vmatmul.mubr.f32.gmra.mrb[0].mxu0 %v3028
        %v3521 = vpop.f32.mrb[0].mxu0
        %v3522 = vadd.f32 %v3297, %v3521
        %v3523 = vpop.f32.mrb[0].mxu0
        %3524 = vmatprep.mubr.f32.mxu0 %v2969
        %3525 = vmatmul.mubr.f32.gmra.mrb[0].mxu0 %v3029
        %v3526 = vpop.f32.mrb[0].mxu0
        %v3527 = vadd.f32 %v3302, %v3526
        %v3528 = vpop.f32.mrb[0].mxu0
        %3529 = vmatprep.mubr.f32.mxu0 %v2970
        %3530 = vmatmul.mubr.f32.gmra.mrb[0].mxu0 %v3030
        %v3531 = vpop.f32.mrb[0].mxu0
        %v3532 = vadd.f32 %v3307, %v3531
        %v3533 = vpop.f32.mrb[0].mxu0
        %3534 = vmatprep.mubr.f32.mxu0 %v3035
        %3535 = vmatmul.mubr.f32.gmra.mrb[0].mxu0 %v3031
        %v3536 = vpop.f32.mrb[0].mxu0
        %v3537 = vadd.f32 %v3312, %v3536
        %v3538 = vpop.f32.mrb[0].mxu0
        %3539 = vmatprep.mubr.f32.mxu0 %v3036
        %3540 = vmatmul.mubr.f32.gmra.mrb[0].mxu0 %v3032
        %v3541 = vpop.f32.mrb[0].mxu0
        %v3542 = vadd.f32 %v3317, %v3541
        %v3543 = vpop.f32.mrb[0].mxu0
        %3544 = vmatprep.mubr.f32.mxu0 %v2940
        %3545 = vmatmul.mubr.f32.gmra.mrb[0].mxu0 %v3033
        %v3546 = vpop.f32.mrb[0].mxu0
        %v3547 = vadd.f32 %v3322, %v3546
        %v3548 = vpop.f32.mrb[0].mxu0
        %3549 = vmatprep.mubr.f32.mxu0 %v2940
        %3550 = vmatmul.mubr.f32.gmra.mrb[0].mxu0 %v3034
        %v3551 = vpop.f32.mrb[0].mxu0
        %v3552 = vadd.f32 %v3327, %v3551
        %v3553 = vpop.f32.mrb[0].mxu0
        %3554 = vdwg.mxu0
        %3555 = vmatprep.subr.mxu0 0.0
        %3556 = vmatpush1.msra.mxu0 %v2224
        %3557 = vmatprep.subr.mxu0 0.0
        %3558 = vmatpush1.msra.mxu0 %v2225
        %3559 = vmatprep.subr.mxu0 0.0
        %3560 = vmatpush1.msra.mxu0 %v2226
        %3561 = vmatprep.subr.mxu0 0.0
        %3562 = vmatpush1.msra.mxu0 %v2227
        %3563 = vmatprep.subr.mxu0 0.0
        %3564 = vmatpush1.msra.mxu0 %v2228
        %3565 = vmatprep.subr.mxu0 0.0
        %3566 = vmatpush1.msra.mxu0 %v2229
        %3567 = vmatprep.subr.mxu0 0.0
        %3568 = vmatpush1.msra.mxu0 %v2230
        %3569 = vmatprep.subr.mxu0 0.0
        %3570 = vmatpush1.msra.mxu0 %v2231
        %3571 = vmatprep.subr.mxu0 0.0
        %3572 = vmatpush1.msra.mxu0 0.0
        %3573 = vmatprep.subr.mxu0 0.0
        %3574 = vmatpush1.msra.mxu0 0.0
        %3575 = vmatprep.subr.mxu0 0.0
        %3576 = vmatpush1.msra.mxu0 0.0
        %3577 = vmatprep.subr.mxu0 0.0
        %3578 = vmatpush1.msra.mxu0 0.0
        %3579 = vmatprep.subr.mxu0 0.0
        %3580 = vmatpush1.msra.mxu0 0.0
        %3581 = vmatprep.subr.mxu0 0.0
        %3582 = vmatpush1.msra.mxu0 0.0
        %3583 = vmatprep.subr.mxu0 0.0
        %3584 = vmatpush1.msra.mxu0 0.0
        %3585 = vmatprep.subr.mxu0 0.0
        %3586 = vmatpush1.msra.mxu0 0.0
        %3587 = vmatprep.subr.mxu0 0.0
        %3588 = vmatpush1.msra.mxu0 0.0
        %3589 = vmatprep.subr.mxu0 0.0
        %3590 = vmatpush1.msra.mxu0 0.0
        %3591 = vmatprep.subr.mxu0 0.0
        %3592 = vmatpush1.msra.mxu0 0.0
        %3593 = vmatprep.subr.mxu0 0.0
        %3594 = vmatpush1.msra.mxu0 0.0
        %3595 = vmatprep.subr.mxu0 0.0
        %3596 = vmatpush1.msra.mxu0 0.0
        %3597 = vmatprep.subr.mxu0 0.0
        %3598 = vmatpush1.msra.mxu0 0.0
        %3599 = vmatprep.subr.mxu0 0.0
        %3600 = vmatpush1.msra.mxu0 0.0
        %3601 = vmatprep.subr.mxu0 0.0
        %3602 = vmatpush1.msra.mxu0 0.0
        %3603 = vmatprep.subr.mxu0 0.0
        %3604 = vmatpush1.msra.mxu0 0.0
        %3605 = vmatprep.subr.mxu0 0.0
        %3606 = vmatpush1.msra.mxu0 0.0
        %3607 = vmatprep.subr.mxu0 0.0
        %3608 = vmatpush1.msra.mxu0 0.0
        %3609 = vmatprep.subr.mxu0 0.0
        %3610 = vmatpush1.msra.mxu0 0.0
        %3611 = vmatprep.subr.mxu0 0.0
        %3612 = vmatpush1.msra.mxu0 0.0
        %3613 = vmatprep.subr.mxu0 0.0
        %3614 = vmatpush1.msra.mxu0 0.0
        %3615 = vmatprep.subr.mxu0 0.0
        %3616 = vmatpush1.msra.mxu0 0.0
        %3617 = vmatprep.subr.mxu0 0.0
        %3618 = vmatpush1.msra.mxu0 0.0
        %3619 = vmatprep.mubr.f32.mxu0 0.0
        %3620 = vmatmul.mubr.f32.gmra.mrb[0].mxu0 %v3043
        %v3621 = vpop.f32.mrb[0].mxu0
        %v3622 = vadd.f32 %v3397, %v3621
        %v3623 = vpop.f32.mrb[0].mxu0
        %3624 = vmatprep.mubr.f32.mxu0 0.0
        %3625 = vmatmul.mubr.f32.gmra.mrb[0].mxu0 %v3045
        %v3626 = vpop.f32.mrb[0].mxu0
        %v3627 = vadd.f32 %v3402, %v3626
        %v3628 = vpop.f32.mrb[0].mxu0
        %3629 = vmatprep.mubr.f32.mxu0 0.0
        %3630 = vmatmul.mubr.f32.gmra.mrb[0].mxu0 %v3047
        %v3631 = vpop.f32.mrb[0].mxu0
        %v3632 = vadd.f32 %v3407, %v3631
        %v3633 = vpop.f32.mrb[0].mxu0
        %3634 = vmatprep.mubr.f32.mxu0 0.0
        %3635 = vmatmul.mubr.f32.gmra.mrb[0].mxu0 %v3049
        %v3636 = vpop.f32.mrb[0].mxu0
        %v3637 = vadd.f32 %v3412, %v3636
        %v3638 = vpop.f32.mrb[0].mxu0
        %3639 = vmatprep.mubr.f32.mxu0 0.0
        %3640 = vmatmul.mubr.f32.gmra.mrb[0].mxu0 %v3051
        %v3641 = vpop.f32.mrb[0].mxu0
        %v3642 = vadd.f32 %v3417, %v3641
        %v3643 = vpop.f32.mrb[0].mxu0
        %3644 = vmatprep.mubr.f32.mxu0 0.0
        %3645 = vmatmul.mubr.f32.gmra.mrb[0].mxu0 %v3053
        %v3646 = vpop.f32.mrb[0].mxu0
        %v3647 = vadd.f32 %v3422, %v3646
        %v3648 = vpop.f32.mrb[0].mxu0
        %3649 = vmatprep.mubr.f32.mxu0 0.0
        %3650 = vmatmul.mubr.f32.gmra.mrb[0].mxu0 %v3055
        %v3651 = vpop.f32.mrb[0].mxu0
        %v3652 = vadd.f32 %v3427, %v3651
        %v3653 = vpop.f32.mrb[0].mxu0
        %3654 = vmatprep.mubr.f32.mxu0 0.0
        %3655 = vmatmul.mubr.f32.gmra.mrb[0].mxu0 %v3057
        %v3656 = vpop.f32.mrb[0].mxu0
        %v3657 = vadd.f32 %v3432, %v3656
        %v3658 = vpop.f32.mrb[0].mxu0
        %3659 = vmatprep.mubr.f32.mxu0 0.0
        %3660 = vmatmul.mubr.f32.gmra.mrb[0].mxu0 %v3059
        %v3661 = vpop.f32.mrb[0].mxu0
        %v3662 = vadd.f32 %v3437, %v3661
        %v3663 = vpop.f32.mrb[0].mxu0
        %3664 = vmatprep.mubr.f32.mxu0 0.0
        %3665 = vmatmul.mubr.f32.gmra.mrb[0].mxu0 %v3061
        %v3666 = vpop.f32.mrb[0].mxu0
        %v3667 = vadd.f32 %v3442, %v3666
        %v3668 = vpop.f32.mrb[0].mxu0
        %3669 = vmatprep.mubr.f32.mxu0 0.0
        %3670 = vmatmul.mubr.f32.gmra.mrb[0].mxu0 %v3063
        %v3671 = vpop.f32.mrb[0].mxu0
        %v3672 = vadd.f32 %v3447, %v3671
        %v3673 = vpop.f32.mrb[0].mxu0
        %3674 = vmatprep.mubr.f32.mxu0 0.0
        %3675 = vmatmul.mubr.f32.gmra.mrb[0].mxu0 %v3065
        %v3676 = vpop.f32.mrb[0].mxu0
        %v3677 = vadd.f32 %v3452, %v3676
        %v3678 = vpop.f32.mrb[0].mxu0
        %3679 = vmatprep.mubr.f32.mxu0 0.0
        %3680 = vmatmul.mubr.f32.gmra.mrb[0].mxu0 %v3067
        %v3681 = vpop.f32.mrb[0].mxu0
        %v3682 = vadd.f32 %v3457, %v3681
        %v3683 = vpop.f32.mrb[0].mxu0
        %3684 = vmatprep.mubr.f32.mxu0 0.0
        %3685 = vmatmul.mubr.f32.gmra.mrb[0].mxu0 %v3069
        %v3686 = vpop.f32.mrb[0].mxu0
        %v3687 = vadd.f32 %v3462, %v3686
        %v3688 = vpop.f32.mrb[0].mxu0
        %3689 = vmatprep.mubr.f32.mxu0 0.0
        %3690 = vmatmul.mubr.f32.gmra.mrb[0].mxu0 %v3071
        %v3691 = vpop.f32.mrb[0].mxu0
        %v3692 = vadd.f32 %v3467, %v3691
        %v3693 = vpop.f32.mrb[0].mxu0
        %3694 = vmatprep.mubr.f32.mxu0 0.0
        %3695 = vmatmul.mubr.f32.gmra.mrb[0].mxu0 %v3073
        %v3696 = vpop.f32.mrb[0].mxu0
        %v3697 = vadd.f32 %v3472, %v3696
        %v3698 = vpop.f32.mrb[0].mxu0
        %3699 = vmatprep.mubr.f32.mxu0 0.0
        %3700 = vmatmul.mubr.f32.gmra.mrb[0].mxu0 %v3075
        %v3701 = vpop.f32.mrb[0].mxu0
        %v3702 = vadd.f32 %v3477, %v3701
        %v3703 = vpop.f32.mrb[0].mxu0
        %3704 = vmatprep.mubr.f32.mxu0 0.0
        %3705 = vmatmul.mubr.f32.gmra.mrb[0].mxu0 %v3077
        %v3706 = vpop.f32.mrb[0].mxu0
        %v3707 = vadd.f32 %v3482, %v3706
        %v3708 = vpop.f32.mrb[0].mxu0
        %3709 = vmatprep.mubr.f32.mxu0 0.0
        %3710 = vmatmul.mubr.f32.gmra.mrb[0].mxu0 %v3079
        %v3711 = vpop.f32.mrb[0].mxu0
        %v3712 = vadd.f32 %v3487, %v3711
        %v3713 = vpop.f32.mrb[0].mxu0
        %3714 = vmatprep.mubr.f32.mxu0 0.0
        %3715 = vmatmul.mubr.f32.gmra.mrb[0].mxu0 %v3081
        %v3716 = vpop.f32.mrb[0].mxu0
        %v3717 = vadd.f32 %v3492, %v3716
        %v3718 = vpop.f32.mrb[0].mxu0
        %3719 = vmatprep.mubr.f32.mxu0 0.0
        %3720 = vmatmul.mubr.f32.gmra.mrb[0].mxu0 %v3083
        %v3721 = vpop.f32.mrb[0].mxu0
        %v3722 = vadd.f32 %v3497, %v3721
        %v3723 = vpop.f32.mrb[0].mxu0
        %3724 = vmatprep.mubr.f32.mxu0 0.0
        %3725 = vmatmul.mubr.f32.gmra.mrb[0].mxu0 %v3085
        %v3726 = vpop.f32.mrb[0].mxu0
        %v3727 = vadd.f32 %v3502, %v3726
        %v3728 = vpop.f32.mrb[0].mxu0
        %3729 = vmatprep.mubr.f32.mxu0 0.0
        %3730 = vmatmul.mubr.f32.gmra.mrb[0].mxu0 %v3087
        %v3731 = vpop.f32.mrb[0].mxu0
        %v3732 = vadd.f32 %v3507, %v3731
        %v3733 = vpop.f32.mrb[0].mxu0
        %3734 = vmatprep.mubr.f32.mxu0 0.0
        %3735 = vmatmul.mubr.f32.gmra.mrb[0].mxu0 %v3089
        %v3736 = vpop.f32.mrb[0].mxu0
        %v3737 = vadd.f32 %v3512, %v3736
        %v3738 = vpop.f32.mrb[0].mxu0
        %3739 = vmatprep.mubr.f32.mxu0 0.0
        %3740 = vmatmul.mubr.f32.gmra.mrb[0].mxu0 %v3091
        %v3741 = vpop.f32.mrb[0].mxu0
        %v3742 = vadd.f32 %v3517, %v3741
        %v3743 = vpop.f32.mrb[0].mxu0
        %3744 = vmatprep.mubr.f32.mxu0 0.0
        %3745 = vmatmul.mubr.f32.gmra.mrb[0].mxu0 %v3093
        %v3746 = vpop.f32.mrb[0].mxu0
        %v3747 = vadd.f32 %v3522, %v3746
        %v3748 = vpop.f32.mrb[0].mxu0
        %3749 = vmatprep.mubr.f32.mxu0 0.0
        %3750 = vmatmul.mubr.f32.gmra.mrb[0].mxu0 %v3095
        %v3751 = vpop.f32.mrb[0].mxu0
        %v3752 = vadd.f32 %v3527, %v3751
        %v3753 = vpop.f32.mrb[0].mxu0
        %3754 = vmatprep.mubr.f32.mxu0 0.0
        %3755 = vmatmul.mubr.f32.gmra.mrb[0].mxu0 %v3097
        %v3756 = vpop.f32.mrb[0].mxu0
        %v3757 = vadd.f32 %v3532, %v3756
        %v3758 = vpop.f32.mrb[0].mxu0
        %3759 = vmatprep.mubr.f32.mxu0 0.0
        %3760 = vmatmul.mubr.f32.gmra.mrb[0].mxu0 %v3099
        %v3761 = vpop.f32.mrb[0].mxu0
        %v3762 = vadd.f32 %v3537, %v3761
        %v3763 = vpop.f32.mrb[0].mxu0
        %3764 = vmatprep.mubr.f32.mxu0 0.0
        %3765 = vmatmul.mubr.f32.gmra.mrb[0].mxu0 %v3101
        %v3766 = vpop.f32.mrb[0].mxu0
        %v3767 = vadd.f32 %v3542, %v3766
        %v3768 = vpop.f32.mrb[0].mxu0
        %3769 = vmatprep.mubr.f32.mxu0 0.0
        %3770 = vmatmul.mubr.f32.gmra.mrb[0].mxu0 %v3103
        %v3771 = vpop.f32.mrb[0].mxu0
        %v3772 = vadd.f32 %v3547, %v3771
        %v3773 = vpop.f32.mrb[0].mxu0
        %3774 = vmatprep.mubr.f32.mxu0 0.0
        %3775 = vmatmul.mubr.f32.gmra.mrb[0].mxu0 %v3103
        %v3776 = vpop.f32.mrb[0].mxu0
        %v3777 = vadd.f32 %v3552, %v3776
        %v3778 = vpop.f32.mrb[0].mxu0
        %3779 = vdwg.mxu0
        %v3780 = vmax.f32 %v3622, 0.0
        %v3781 = vmax.f32 %v3627, 0.0
        %v3782 = vmax.f32 %v3632, 0.0
        %v3783 = vmax.f32 %v3637, 0.0
        %v3784 = vmax.f32 %v3642, 0.0
        %v3785 = vmax.f32 %v3647, 0.0
        %v3786 = vmax.f32 %v3652, 0.0
        %v3787 = vmax.f32 %v3657, 0.0
        %v3788 = vmax.f32 %v3662, 0.0
        %v3789 = vmax.f32 %v3667, 0.0
        %v3790 = vmax.f32 %v3672, 0.0
        %v3791 = vmax.f32 %v3677, 0.0
        %v3792 = vmax.f32 %v3682, 0.0
        %v3793 = vmax.f32 %v3687, 0.0
        %v3794 = vmax.f32 %v3692, 0.0
        %v3795 = vmax.f32 %v3697, 0.0
        %v3796 = vmax.f32 %v3702, 0.0
        %v3797 = vmax.f32 %v3707, 0.0
        %v3798 = vmax.f32 %v3712, 0.0
        %v3799 = vmax.f32 %v3717, 0.0
        %v3800 = vmax.f32 %v3722, 0.0
        %v3801 = vmax.f32 %v3727, 0.0
        %v3802 = vmax.f32 %v3732, 0.0
        %v3803 = vmax.f32 %v3737, 0.0
        %v3804 = vmax.f32 %v3742, 0.0
        %v3805 = vmax.f32 %v3747, 0.0
        %v3806 = vmax.f32 %v3752, 0.0
        %v3807 = vmax.f32 %v3757, 0.0
        %v3808 = vmax.f32 %v3762, 0.0
        %v3809 = vmax.f32 %v3767, 0.0
        %v3810 = vmax.f32 %v3772, 0.0
        %v3811 = vmax.f32 %v3777, 0.0
        %v3812 = vld [vmem:[%s5] sm:$0xff]
        %v3813 = vld [vmem:[%s5 + $0x8] sm:$0xff]
        %v3814 = vld [vmem:[%s5 + $0x10] sm:$0xff]
        %v3815 = vld [vmem:[%s5 + $0x18] sm:$0xff]
        %v3816 = vld [vmem:[%s5 + $0x20] sm:$0xff]
        %v3817 = vld [vmem:[%s5 + $0x28] sm:$0xff]
        %v3818 = vld [vmem:[%s5 + $0x30] sm:$0xff]
        %v3819 = vld [vmem:[%s5 + $0x38] sm:$0xff]
        %v3820 = vld [vmem:[%s5 + $0x40] sm:$0xff]
        %v3821 = vld [vmem:[%s5 + $0x48] sm:$0xff]
        %v3822 = vld [vmem:[%s5 + $0x50] sm:$0xff]
        %v3823 = vld [vmem:[%s5 + $0x58] sm:$0xff]
        %v3824 = vld [vmem:[%s5 + $0x60] sm:$0xff]
        %v3825 = vld [vmem:[%s5 + $0x68] sm:$0xff]
        %v3826 = vld [vmem:[%s5 + $0x70] sm:$0xff]
        %v3827 = vld [vmem:[%s5 + $0x78] sm:$0xff]
        %v3828 = vld [vmem:[%s5 + $0x80] sm:$0xff]
        %v3829 = vld [vmem:[%s5 + $0x88] sm:$0xff]
        %v3830 = vld [vmem:[%s5 + $0x90] sm:$0xff]
        %v3831 = vld [vmem:[%s5 + $0x98] sm:$0xff]
        %v3832 = vld [vmem:[%s5 + $0xa0] sm:$0xff]
        %v3833 = vld [vmem:[%s5 + $0xa8] sm:$0xff]
        %v3834 = vld [vmem:[%s5 + $0xb0] sm:$0xff]
        %v3835 = vld [vmem:[%s5 + $0xb8] sm:$0xff]
        %v3836 = vld [vmem:[%s5 + $0xc0] sm:$0xff]
        %v3837 = vld [vmem:[%s5 + $0xc8] sm:$0xff]
        %v3838 = vld [vmem:[%s5 + $0xd0] sm:$0xff]
        %v3839 = vld [vmem:[%s5 + $0xd8] sm:$0xff]
        %v3840 = vld [vmem:[%s5 + $0xe0] sm:$0xff]
        %v3841 = vld [vmem:[%s5 + $0xe8] sm:$0xff]
        %v3842 = vld [vmem:[%s5 + $0xf0] sm:$0xff]
        %v3843 = vld [vmem:[%s5 + $0xf8] sm:$0xff]
        %v3844 = vld [vmem:[%s5 + $0x100] sm:$0xff]
        %v3845 = vld [vmem:[%s5 + $0x108] sm:$0xff]
        %v3846 = vld [vmem:[%s5 + $0x110] sm:$0xff]
        %v3847 = vld [vmem:[%s5 + $0x118] sm:$0xff]
        %v3848 = vld [vmem:[%s5 + $0x120] sm:$0xff]
        %v3849 = vld [vmem:[%s5 + $0x128] sm:$0xff]
        %v3850 = vld [vmem:[%s5 + $0x130] sm:$0xff]
        %v3851 = vld [vmem:[%s5 + $0x138] sm:$0xff]
        %v3852 = vld [vmem:[%s5 + $0x140] sm:$0xff]
        %v3853 = vld [vmem:[%s5 + $0x148] sm:$0xff]
        %v3854 = vld [vmem:[%s5 + $0x150] sm:$0xff]
        %v3855 = vld [vmem:[%s5 + $0x158] sm:$0xff]
        %v3856 = vld [vmem:[%s5 + $0x160] sm:$0xff]
        %v3857 = vld [vmem:[%s5 + $0x168] sm:$0xff]
        %v3858 = vld [vmem:[%s5 + $0x170] sm:$0xff]
        %v3859 = vld [vmem:[%s5 + $0x178] sm:$0xff]
        %v3860 = vld [vmem:[%s5 + $0x180] sm:$0xff]
        %v3861 = vld [vmem:[%s5 + $0x188] sm:$0xff]
        %v3862 = vld [vmem:[%s5 + $0x190] sm:$0xff]
        %v3863 = vld [vmem:[%s5 + $0x198] sm:$0xff]
        %v3864 = vld [vmem:[%s5 + $0x1a0] sm:$0xff]
        %v3865 = vld [vmem:[%s5 + $0x1a8] sm:$0xff]
        %v3866 = vld [vmem:[%s5 + $0x1b0] sm:$0xff]
        %v3867 = vld [vmem:[%s5 + $0x1b8] sm:$0xff]
        %v3868 = vld [vmem:[%s5 + $0x1c0] sm:$0xff]
        %v3869 = vld [vmem:[%s5 + $0x1c8] sm:$0xff]
        %v3870 = vld [vmem:[%s5 + $0x1d0] sm:$0xff]
        %v3871 = vld [vmem:[%s5 + $0x1d8] sm:$0xff]
        %v3872 = vld [vmem:[%s5 + $0x1e0] sm:$0xff]
        %v3873 = vld [vmem:[%s5 + $0x1e8] sm:$0xff]
        %v3874 = vld [vmem:[%s5 + $0x1f0] sm:$0xff]
        %v3875 = vld [vmem:[%s5 + $0x1f8] sm:$0xff]
        %v3876 = vld [vmem:[%s5 + $0x200] sm:$0xff]
        %v3877 = vld [vmem:[%s5 + $0x208] sm:$0xff]
        %v3878 = vld [vmem:[%s5 + $0x210] sm:$0xff]
        %v3879 = vld [vmem:[%s5 + $0x218] sm:$0xff]
        %v3880 = vld [vmem:[%s5 + $0x220] sm:$0xff]
        %v3881 = vld [vmem:[%s5 + $0x228] sm:$0xff]
        %v3882 = vld [vmem:[%s5 + $0x230] sm:$0xff]
        %v3883 = vld [vmem:[%s5 + $0x238] sm:$0xff]
        %v3884 = vld [vmem:[%s6] sm:$0x1]
        %v3917 = vrot.slane %v3780, 7
        %v3918 = vrot.slane %v3781, 7
        %v3919 = vsel %vm454, %v3917, %v3918
        %v3920 = vrot.slane %v3782, 7
        %v3921 = vrot.slane %v3783, 7
        %v3922 = vsel %vm454, %v3920, %v3921
        %v3923 = vrot.slane %v3784, 7
        %v3924 = vrot.slane %v3785, 7
        %v3925 = vsel %vm454, %v3923, %v3924
        %v3926 = vrot.slane %v3786, 7
        %v3927 = vrot.slane %v3787, 7
        %v3928 = vsel %vm454, %v3926, %v3927
        %v3929 = vrot.slane %v3788, 7
        %v3930 = vrot.slane %v3789, 7
        %v3931 = vsel %vm454, %v3929, %v3930
        %v3932 = vrot.slane %v3790, 7
        %v3933 = vrot.slane %v3791, 7
        %v3934 = vsel %vm454, %v3932, %v3933
        %v3935 = vrot.slane %v3792, 7
        %v3936 = vrot.slane %v3793, 7
        %v3937 = vsel %vm454, %v3935, %v3936
        %v3938 = vrot.slane %v3794, 7
        %v3939 = vrot.slane %v3795, 7
        %v3940 = vsel %vm454, %v3938, %v3939
        %v3941 = vrot.slane %v3796, 7
        %v3942 = vrot.slane %v3797, 7
        %v3943 = vsel %vm454, %v3941, %v3942
        %v3944 = vrot.slane %v3798, 7
        %v3945 = vrot.slane %v3799, 7
        %v3946 = vsel %vm454, %v3944, %v3945
        %v3947 = vrot.slane %v3800, 7
        %v3948 = vrot.slane %v3801, 7
        %v3949 = vsel %vm454, %v3947, %v3948
        %v3950 = vrot.slane %v3802, 7
        %v3951 = vrot.slane %v3803, 7
        %v3952 = vsel %vm454, %v3950, %v3951
        %v3953 = vrot.slane %v3804, 7
        %v3954 = vrot.slane %v3805, 7
        %v3955 = vsel %vm454, %v3953, %v3954
        %v3956 = vrot.slane %v3806, 7
        %v3957 = vrot.slane %v3807, 7
        %v3958 = vsel %vm454, %v3956, %v3957
        %v3959 = vrot.slane %v3808, 7
        %v3960 = vrot.slane %v3809, 7
        %v3961 = vsel %vm454, %v3959, %v3960
        %v3962 = vrot.slane %v3810, 7
        %v3963 = vrot.slane %v3811, 7
        %v3964 = vsel %vm454, %v3962, %v3963
        %v4013 = vsel %vm454, 0.0, %v3917
        %v4014 = vsel %vm454, 0.0, %v3920
        %v4015 = vsel %vm454, 0.0, %v3923
        %v4016 = vsel %vm454, 0.0, %v3926
        %v4017 = vsel %vm454, 0.0, %v3929
        %v4018 = vsel %vm454, 0.0, %v3932
        %v4019 = vsel %vm454, 0.0, %v3935
        %v4020 = vsel %vm454, 0.0, %v3938
        %v4021 = vsel %vm454, 0.0, %v3941
        %v4022 = vsel %vm454, 0.0, %v3944
        %v4023 = vsel %vm454, 0.0, %v3947
        %v4024 = vsel %vm454, 0.0, %v3950
        %v4025 = vsel %vm454, 0.0, %v3953
        %v4026 = vsel %vm454, 0.0, %v3956
        %v4027 = vsel %vm454, 0.0, %v3959
        %v4028 = vsel %vm454, 0.0, %v3962
        %v4029 = vsel %vm454, %v3918, 0.0
        %v4030 = vsel %vm454, %v3921, 0.0
        %v4031 = vsel %vm454, %v3924, 0.0
        %v4032 = vsel %vm454, %v3927, 0.0
        %v4033 = vsel %vm454, %v3930, 0.0
        %v4034 = vsel %vm454, %v3933, 0.0
        %v4035 = vsel %vm454, %v3936, 0.0
        %v4036 = vsel %vm454, %v3939, 0.0
        %v4037 = vsel %vm454, %v3942, 0.0
        %v4038 = vsel %vm454, %v3945, 0.0
        %v4039 = vsel %vm454, %v3948, 0.0
        %v4040 = vsel %vm454, %v3951, 0.0
        %v4041 = vsel %vm454, %v3954, 0.0
        %v4042 = vsel %vm454, %v3957, 0.0
        %v4043 = vsel %vm454, %v3960, 0.0
        %v4044 = vsel %vm454, %v3963, 0.0
        %v4075 = vrot.slane %v4013, 1
        %v4076 = vrot.slane %v3919, 1
        %v4077 = vsel %vm613, %v4075, %v4076
        %v4078 = vrot.slane %v4029, 1
        %v4079 = vsel %vm613, %v4076, %v4078
        %v4080 = vrot.slane %v4014, 1
        %v4081 = vrot.slane %v3922, 1
        %v4082 = vsel %vm613, %v4080, %v4081
        %v4083 = vrot.slane %v4030, 1
        %v4084 = vsel %vm613, %v4081, %v4083
        %v4085 = vrot.slane %v4015, 1
        %v4086 = vrot.slane %v3925, 1
        %v4087 = vsel %vm613, %v4085, %v4086
        %v4088 = vrot.slane %v4031, 1
        %v4089 = vsel %vm613, %v4086, %v4088
        %v4090 = vrot.slane %v4016, 1
        %v4091 = vrot.slane %v3928, 1
        %v4092 = vsel %vm613, %v4090, %v4091
        %v4093 = vrot.slane %v4032, 1
        %v4094 = vsel %vm613, %v4091, %v4093
        %v4095 = vrot.slane %v4017, 1
        %v4096 = vrot.slane %v3931, 1
        %v4097 = vsel %vm613, %v4095, %v4096
        %v4098 = vrot.slane %v4033, 1
        %v4099 = vsel %vm613, %v4096, %v4098
        %v4100 = vrot.slane %v4018, 1
        %v4101 = vrot.slane %v3934, 1
        %v4102 = vsel %vm613, %v4100, %v4101
        %v4103 = vrot.slane %v4034, 1
        %v4104 = vsel %vm613, %v4101, %v4103
        %v4105 = vrot.slane %v4019, 1
        %v4106 = vrot.slane %v3937, 1
        %v4107 = vsel %vm613, %v4105, %v4106
        %v4108 = vrot.slane %v4035, 1
        %v4109 = vsel %vm613, %v4106, %v4108
        %v4110 = vrot.slane %v4020, 1
        %v4111 = vrot.slane %v3940, 1
        %v4112 = vsel %vm613, %v4110, %v4111
        %v4113 = vrot.slane %v4036, 1
        %v4114 = vsel %vm613, %v4111, %v4113
        %v4115 = vrot.slane %v4021, 1
        %v4116 = vrot.slane %v3943, 1
        %v4117 = vsel %vm613, %v4115, %v4116
        %v4118 = vrot.slane %v4037, 1
        %v4119 = vsel %vm613, %v4116, %v4118
        %v4120 = vrot.slane %v4022, 1
        %v4121 = vrot.slane %v3946, 1
        %v4122 = vsel %vm613, %v4120, %v4121
        %v4123 = vrot.slane %v4038, 1
        %v4124 = vsel %vm613, %v4121, %v4123
        %v4125 = vrot.slane %v4023, 1
        %v4126 = vrot.slane %v3949, 1
        %v4127 = vsel %vm613, %v4125, %v4126
        %v4128 = vrot.slane %v4039, 1
        %v4129 = vsel %vm613, %v4126, %v4128
        %v4130 = vrot.slane %v4024, 1
        %v4131 = vrot.slane %v3952, 1
        %v4132 = vsel %vm613, %v4130, %v4131
        %v4133 = vrot.slane %v4040, 1
        %v4134 = vsel %vm613, %v4131, %v4133
        %v4135 = vrot.slane %v4025, 1
        %v4136 = vrot.slane %v3955, 1
        %v4137 = vsel %vm613, %v4135, %v4136
        %v4138 = vrot.slane %v4041, 1
        %v4139 = vsel %vm613, %v4136, %v4138
        %v4140 = vrot.slane %v4026, 1
        %v4141 = vrot.slane %v3958, 1
        %v4142 = vsel %vm613, %v4140, %v4141
        %v4143 = vrot.slane %v4042, 1
        %v4144 = vsel %vm613, %v4141, %v4143
        %v4145 = vrot.slane %v4027, 1
        %v4146 = vrot.slane %v3961, 1
        %v4147 = vsel %vm613, %v4145, %v4146
        %v4148 = vrot.slane %v4043, 1
        %v4149 = vsel %vm613, %v4146, %v4148
        %v4150 = vrot.slane %v4013, 2
        %v4151 = vrot.slane %v3919, 2
        %v4152 = vsel %vm691, %v4150, %v4151
        %v4153 = vrot.slane %v4029, 2
        %v4154 = vsel %vm691, %v4151, %v4153
        %v4155 = vrot.slane %v4014, 2
        %v4156 = vrot.slane %v3922, 2
        %v4157 = vsel %vm691, %v4155, %v4156
        %v4158 = vrot.slane %v4030, 2
        %v4159 = vsel %vm691, %v4156, %v4158
        %v4160 = vrot.slane %v4015, 2
        %v4161 = vrot.slane %v3925, 2
        %v4162 = vsel %vm691, %v4160, %v4161
        %v4163 = vrot.slane %v4031, 2
        %v4164 = vsel %vm691, %v4161, %v4163
        %v4165 = vrot.slane %v4016, 2
        %v4166 = vrot.slane %v3928, 2
        %v4167 = vsel %vm691, %v4165, %v4166
        %v4168 = vrot.slane %v4032, 2
        %v4169 = vsel %vm691, %v4166, %v4168
        %v4170 = vrot.slane %v4017, 2
        %v4171 = vrot.slane %v3931, 2
        %v4172 = vsel %vm691, %v4170, %v4171
        %v4173 = vrot.slane %v4033, 2
        %v4174 = vsel %vm691, %v4171, %v4173
        %v4175 = vrot.slane %v4018, 2
        %v4176 = vrot.slane %v3934, 2
        %v4177 = vsel %vm691, %v4175, %v4176
        %v4178 = vrot.slane %v4034, 2
        %v4179 = vsel %vm691, %v4176, %v4178
        %v4180 = vrot.slane %v4019, 2
        %v4181 = vrot.slane %v3937, 2
        %v4182 = vsel %vm691, %v4180, %v4181
        %v4183 = vrot.slane %v4035, 2
        %v4184 = vsel %vm691, %v4181, %v4183
        %v4185 = vrot.slane %v4020, 2
        %v4186 = vrot.slane %v3940, 2
        %v4187 = vsel %vm691, %v4185, %v4186
        %v4188 = vrot.slane %v4036, 2
        %v4189 = vsel %vm691, %v4186, %v4188
        %v4190 = vrot.slane %v4021, 2
        %v4191 = vrot.slane %v3943, 2
        %v4192 = vsel %vm691, %v4190, %v4191
        %v4193 = vrot.slane %v4037, 2
        %v4194 = vsel %vm691, %v4191, %v4193
        %v4195 = vrot.slane %v4022, 2
        %v4196 = vrot.slane %v3946, 2
        %v4197 = vsel %vm691, %v4195, %v4196
        %v4198 = vrot.slane %v4038, 2
        %v4199 = vsel %vm691, %v4196, %v4198
        %v4200 = vrot.slane %v4023, 2
        %v4201 = vrot.slane %v3949, 2
        %v4202 = vsel %vm691, %v4200, %v4201
        %v4203 = vrot.slane %v4039, 2
        %v4204 = vsel %vm691, %v4201, %v4203
        %v4205 = vrot.slane %v4024, 2
        %v4206 = vrot.slane %v3952, 2
        %v4207 = vsel %vm691, %v4205, %v4206
        %v4208 = vrot.slane %v4040, 2
        %v4209 = vsel %vm691, %v4206, %v4208
        %v4210 = vrot.slane %v4025, 2
        %v4211 = vrot.slane %v3955, 2
        %v4212 = vsel %vm691, %v4210, %v4211
        %v4213 = vrot.slane %v4041, 2
        %v4214 = vsel %vm691, %v4211, %v4213
        %v4215 = vrot.slane %v4026, 2
        %v4216 = vrot.slane %v3958, 2
        %v4217 = vsel %vm691, %v4215, %v4216
        %v4218 = vrot.slane %v4042, 2
        %v4219 = vsel %vm691, %v4216, %v4218
        %v4220 = vrot.slane %v4027, 2
        %v4221 = vrot.slane %v3961, 2
        %v4222 = vsel %vm691, %v4220, %v4221
        %v4223 = vrot.slane %v4043, 2
        %v4224 = vsel %vm691, %v4221, %v4223
        %v4257 = vrot.slane %v4028, 1
        %v4258 = vrot.slane %v3964, 1
        %v4259 = vsel %vm613, %v4257, %v4258
        %v4260 = vrot.slane %v4044, 1
        %v4261 = vsel %vm613, %v4258, %v4260
        %v4294 = vrot.slane %v4028, 2
        %v4295 = vrot.slane %v3964, 2
        %v4296 = vsel %vm691, %v4294, %v4295
        %v4297 = vrot.slane %v4044, 2
        %v4298 = vsel %vm691, %v4295, %v4297
        %4299 = vrot.lane.b32.xlu0 %v4077, 64
        %v4300 = vpop.permute.xlu0 %4299
        %4301 = vrot.lane.b32.xlu0 %v4079, 64
        %v4302 = vpop.permute.xlu0 %4301
        %4303 = vrot.lane.b32.xlu0 %v4082, 64
        %v4304 = vpop.permute.xlu0 %4303
        %4305 = vrot.lane.b32.xlu0 %v4084, 64
        %v4306 = vpop.permute.xlu0 %4305
        %4307 = vrot.lane.b32.xlu0 %v4087, 64
        %v4308 = vpop.permute.xlu0 %4307
        %4309 = vrot.lane.b32.xlu0 %v4089, 64
        %v4310 = vpop.permute.xlu0 %4309
        %4311 = vrot.lane.b32.xlu0 %v4092, 64
        %v4312 = vpop.permute.xlu0 %4311
        %4313 = vrot.lane.b32.xlu0 %v4094, 64
        %v4314 = vpop.permute.xlu0 %4313
        %4315 = vrot.lane.b32.xlu0 %v4097, 64
        %v4316 = vpop.permute.xlu0 %4315
        %4317 = vrot.lane.b32.xlu0 %v4099, 64
        %v4318 = vpop.permute.xlu0 %4317
        %4319 = vrot.lane.b32.xlu0 %v4102, 64
        %v4320 = vpop.permute.xlu0 %4319
        %4321 = vrot.lane.b32.xlu0 %v4104, 64
        %v4322 = vpop.permute.xlu0 %4321
        %4323 = vrot.lane.b32.xlu0 %v4107, 64
        %v4324 = vpop.permute.xlu0 %4323
        %4325 = vrot.lane.b32.xlu0 %v4109, 64
        %v4326 = vpop.permute.xlu0 %4325
        %4327 = vrot.lane.b32.xlu0 %v4112, 64
        %v4328 = vpop.permute.xlu0 %4327
        %4329 = vrot.lane.b32.xlu0 %v4114, 64
        %v4330 = vpop.permute.xlu0 %4329
        %4331 = vrot.lane.b32.xlu0 %v4117, 64
        %v4332 = vpop.permute.xlu0 %4331
        %4333 = vrot.lane.b32.xlu0 %v4119, 64
        %v4334 = vpop.permute.xlu0 %4333
        %4335 = vrot.lane.b32.xlu0 %v4122, 64
        %v4336 = vpop.permute.xlu0 %4335
        %4337 = vrot.lane.b32.xlu0 %v4124, 64
        %v4338 = vpop.permute.xlu0 %4337
        %4339 = vrot.lane.b32.xlu0 %v4127, 64
        %v4340 = vpop.permute.xlu0 %4339
        %4341 = vrot.lane.b32.xlu0 %v4129, 64
        %v4342 = vpop.permute.xlu0 %4341
        %4343 = vrot.lane.b32.xlu0 %v4132, 64
        %v4344 = vpop.permute.xlu0 %4343
        %4345 = vrot.lane.b32.xlu0 %v4134, 64
        %v4346 = vpop.permute.xlu0 %4345
        %4347 = vrot.lane.b32.xlu0 %v4137, 64
        %v4348 = vpop.permute.xlu0 %4347
        %4349 = vrot.lane.b32.xlu0 %v4139, 64
        %v4350 = vpop.permute.xlu0 %4349
        %4351 = vrot.lane.b32.xlu0 %v4142, 64
        %v4352 = vpop.permute.xlu0 %4351
        %4353 = vrot.lane.b32.xlu0 %v4144, 64
        %v4354 = vpop.permute.xlu0 %4353
        %4355 = vrot.lane.b32.xlu0 %v4147, 64
        %v4356 = vpop.permute.xlu0 %4355
        %4357 = vrot.lane.b32.xlu0 %v4149, 64
        %v4358 = vpop.permute.xlu0 %4357
        %4389 = vrot.lane.b32.xlu0 %v4013, 64
        %v4390 = vpop.permute.xlu0 %4389
        %4391 = vrot.lane.b32.xlu0 %v3919, 64
        %v4392 = vpop.permute.xlu0 %4391
        %4393 = vrot.lane.b32.xlu0 %v4014, 64
        %v4394 = vpop.permute.xlu0 %4393
        %4395 = vrot.lane.b32.xlu0 %v3922, 64
        %v4396 = vpop.permute.xlu0 %4395
        %4397 = vrot.lane.b32.xlu0 %v4015, 64
        %v4398 = vpop.permute.xlu0 %4397
        %4399 = vrot.lane.b32.xlu0 %v3925, 64
        %v4400 = vpop.permute.xlu0 %4399
        %4401 = vrot.lane.b32.xlu0 %v4016, 64
        %v4402 = vpop.permute.xlu0 %4401
        %4403 = vrot.lane.b32.xlu0 %v3928, 64
        %v4404 = vpop.permute.xlu0 %4403
        %4405 = vrot.lane.b32.xlu0 %v4017, 64
        %v4406 = vpop.permute.xlu0 %4405
        %4407 = vrot.lane.b32.xlu0 %v3931, 64
        %v4408 = vpop.permute.xlu0 %4407
        %4409 = vrot.lane.b32.xlu0 %v4018, 64
        %v4410 = vpop.permute.xlu0 %4409
        %4411 = vrot.lane.b32.xlu0 %v3934, 64
        %v4412 = vpop.permute.xlu0 %4411
        %4413 = vrot.lane.b32.xlu0 %v4019, 64
        %v4414 = vpop.permute.xlu0 %4413
        %4415 = vrot.lane.b32.xlu0 %v3937, 64
        %v4416 = vpop.permute.xlu0 %4415
        %4417 = vrot.lane.b32.xlu0 %v4020, 64
        %v4418 = vpop.permute.xlu0 %4417
        %4419 = vrot.lane.b32.xlu0 %v3940, 64
        %v4420 = vpop.permute.xlu0 %4419
        %4421 = vrot.lane.b32.xlu0 %v4021, 64
        %v4422 = vpop.permute.xlu0 %4421
        %4423 = vrot.lane.b32.xlu0 %v3943, 64
        %v4424 = vpop.permute.xlu0 %4423
        %4425 = vrot.lane.b32.xlu0 %v4022, 64
        %v4426 = vpop.permute.xlu0 %4425
        %4427 = vrot.lane.b32.xlu0 %v3946, 64
        %v4428 = vpop.permute.xlu0 %4427
        %4429 = vrot.lane.b32.xlu0 %v4023, 64
        %v4430 = vpop.permute.xlu0 %4429
        %4431 = vrot.lane.b32.xlu0 %v3949, 64
        %v4432 = vpop.permute.xlu0 %4431
        %4433 = vrot.lane.b32.xlu0 %v4024, 64
        %v4434 = vpop.permute.xlu0 %4433
        %4435 = vrot.lane.b32.xlu0 %v3952, 64
        %v4436 = vpop.permute.xlu0 %4435
        %4437 = vrot.lane.b32.xlu0 %v4025, 64
        %v4438 = vpop.permute.xlu0 %4437
        %4439 = vrot.lane.b32.xlu0 %v3955, 64
        %v4440 = vpop.permute.xlu0 %4439
        %4441 = vrot.lane.b32.xlu0 %v4026, 64
        %v4442 = vpop.permute.xlu0 %4441
        %4443 = vrot.lane.b32.xlu0 %v3958, 64
        %v4444 = vpop.permute.xlu0 %4443
        %4445 = vrot.lane.b32.xlu0 %v4027, 64
        %v4446 = vpop.permute.xlu0 %4445
        %4447 = vrot.lane.b32.xlu0 %v3961, 64
        %v4448 = vpop.permute.xlu0 %4447
        %4449 = vrot.lane.b32.xlu0 %v4028, 64
        %v4450 = vpop.permute.xlu0 %4449
        %4451 = vrot.lane.b32.xlu0 %v3964, 64
        %v4452 = vpop.permute.xlu0 %4451
        %4485 = vrot.lane.b32.xlu0 %v4152, 64
        %v4486 = vpop.permute.xlu0 %4485
        %4487 = vrot.lane.b32.xlu0 %v4154, 64
        %v4488 = vpop.permute.xlu0 %4487
        %4489 = vrot.lane.b32.xlu0 %v4157, 64
        %v4490 = vpop.permute.xlu0 %4489
        %4491 = vrot.lane.b32.xlu0 %v4159, 64
        %v4492 = vpop.permute.xlu0 %4491
        %4493 = vrot.lane.b32.xlu0 %v4162, 64
        %v4494 = vpop.permute.xlu0 %4493
        %4495 = vrot.lane.b32.xlu0 %v4164, 64
        %v4496 = vpop.permute.xlu0 %4495
        %4497 = vrot.lane.b32.xlu0 %v4167, 64
        %v4498 = vpop.permute.xlu0 %4497
        %4499 = vrot.lane.b32.xlu0 %v4169, 64
        %v4500 = vpop.permute.xlu0 %4499
        %4501 = vrot.lane.b32.xlu0 %v4172, 64
        %v4502 = vpop.permute.xlu0 %4501
        %4503 = vrot.lane.b32.xlu0 %v4174, 64
        %v4504 = vpop.permute.xlu0 %4503
        %4505 = vrot.lane.b32.xlu0 %v4177, 64
        %v4506 = vpop.permute.xlu0 %4505
        %4507 = vrot.lane.b32.xlu0 %v4179, 64
        %v4508 = vpop.permute.xlu0 %4507
        %4509 = vrot.lane.b32.xlu0 %v4182, 64
        %v4510 = vpop.permute.xlu0 %4509
        %4511 = vrot.lane.b32.xlu0 %v4184, 64
        %v4512 = vpop.permute.xlu0 %4511
        %4513 = vrot.lane.b32.xlu0 %v4187, 64
        %v4514 = vpop.permute.xlu0 %4513
        %4515 = vrot.lane.b32.xlu0 %v4189, 64
        %v4516 = vpop.permute.xlu0 %4515
        %4517 = vrot.lane.b32.xlu0 %v4192, 64
        %v4518 = vpop.permute.xlu0 %4517
        %4519 = vrot.lane.b32.xlu0 %v4194, 64
        %v4520 = vpop.permute.xlu0 %4519
        %4521 = vrot.lane.b32.xlu0 %v4197, 64
        %v4522 = vpop.permute.xlu0 %4521
        %4523 = vrot.lane.b32.xlu0 %v4199, 64
        %v4524 = vpop.permute.xlu0 %4523
        %4525 = vrot.lane.b32.xlu0 %v4202, 64
        %v4526 = vpop.permute.xlu0 %4525
        %4527 = vrot.lane.b32.xlu0 %v4204, 64
        %v4528 = vpop.permute.xlu0 %4527
        %4529 = vrot.lane.b32.xlu0 %v4207, 64
        %v4530 = vpop.permute.xlu0 %4529
        %4531 = vrot.lane.b32.xlu0 %v4209, 64
        %v4532 = vpop.permute.xlu0 %4531
        %4533 = vrot.lane.b32.xlu0 %v4212, 64
        %v4534 = vpop.permute.xlu0 %4533
        %4535 = vrot.lane.b32.xlu0 %v4214, 64
        %v4536 = vpop.permute.xlu0 %4535
        %4537 = vrot.lane.b32.xlu0 %v4217, 64
        %v4538 = vpop.permute.xlu0 %4537
        %4539 = vrot.lane.b32.xlu0 %v4219, 64
        %v4540 = vpop.permute.xlu0 %4539
        %4541 = vrot.lane.b32.xlu0 %v4222, 64
        %v4542 = vpop.permute.xlu0 %4541
        %4543 = vrot.lane.b32.xlu0 %v4224, 64
        %v4544 = vpop.permute.xlu0 %4543
        %4545 = vrot.lane.b32.xlu0 %v4296, 64
        %v4546 = vpop.permute.xlu0 %4545
        %4547 = vrot.lane.b32.xlu0 %v4298, 64
        %v4548 = vpop.permute.xlu0 %4547
        %4581 = vrot.lane.b32.xlu0 %v4259, 64
        %v4582 = vpop.permute.xlu0 %4581
        %4583 = vrot.lane.b32.xlu0 %v4261, 64
        %v4584 = vpop.permute.xlu0 %4583
        %v4587 = vsel %vm2939, %v4013, %v4300
        %v4588 = vsel %vm2939, %v3919, %v4302
        %v4589 = vsel %vm2939, %v4014, %v4304
        %v4590 = vsel %vm2939, %v3922, %v4306
        %v4591 = vsel %vm2939, %v4015, %v4308
        %v4592 = vsel %vm2939, %v3925, %v4310
        %v4593 = vsel %vm2939, %v4016, %v4312
        %v4594 = vsel %vm2939, %v3928, %v4314
        %v4595 = vsel %vm2939, %v4017, %v4316
        %v4596 = vsel %vm2939, %v3931, %v4318
        %v4597 = vsel %vm2939, %v4018, %v4320
        %v4598 = vsel %vm2939, %v3934, %v4322
        %v4599 = vsel %vm2939, %v4019, %v4324
        %v4600 = vsel %vm2939, %v3937, %v4326
        %v4601 = vsel %vm2939, %v4020, %v4328
        %v4602 = vsel %vm2939, %v3940, %v4330
        %v4603 = vsel %vm2939, %v4021, %v4332
        %v4604 = vsel %vm2939, %v3943, %v4334
        %v4605 = vsel %vm2939, %v4022, %v4336
        %v4606 = vsel %vm2939, %v3946, %v4338
        %v4607 = vsel %vm2939, %v4023, %v4340
        %v4608 = vsel %vm2939, %v3949, %v4342
        %v4609 = vsel %vm2939, %v4024, %v4344
        %v4610 = vsel %vm2939, %v3952, %v4346
        %v4611 = vsel %vm2939, %v4025, %v4348
        %v4612 = vsel %vm2939, %v3955, %v4350
        %v4613 = vsel %vm2939, %v4026, %v4352
        %v4614 = vsel %vm2939, %v3958, %v4354
        %v4615 = vsel %vm2939, %v4027, %v4356
        %v4616 = vsel %vm2939, %v3961, %v4358
        %v4617 = vsel %vm2939, %v693, %v4390
        %v4618 = vsel %vm2939, %v693, %v4392
        %v4619 = vsel %vm2939, %v4152, %v4394
        %v4620 = vsel %vm2939, %v4154, %v4396
        %v4621 = vsel %vm2939, %v4157, %v4398
        %v4622 = vsel %vm2939, %v4159, %v4400
        %v4623 = vsel %vm2939, %v4162, %v4402
        %v4624 = vsel %vm2939, %v4164, %v4404
        %v4625 = vsel %vm2939, %v4167, %v4406
        %v4626 = vsel %vm2939, %v4169, %v4408
        %v4627 = vsel %vm2939, %v4172, %v4410
        %v4628 = vsel %vm2939, %v4174, %v4412
        %v4629 = vsel %vm2939, %v4177, %v4414
        %v4630 = vsel %vm2939, %v4179, %v4416
        %v4631 = vsel %vm2939, %v4182, %v4418
        %v4632 = vsel %vm2939, %v4184, %v4420
        %v4633 = vsel %vm2939, %v4187, %v4422
        %v4634 = vsel %vm2939, %v4189, %v4424
        %v4635 = vsel %vm2939, %v4192, %v4426
        %v4636 = vsel %vm2939, %v4194, %v4428
        %v4637 = vsel %vm2939, %v4197, %v4430
        %v4638 = vsel %vm2939, %v4199, %v4432
        %v4639 = vsel %vm2939, %v4202, %v4434
        %v4640 = vsel %vm2939, %v4204, %v4436
        %v4641 = vsel %vm2939, %v4207, %v4438
        %v4642 = vsel %vm2939, %v4209, %v4440
        %v4643 = vsel %vm2939, %v4212, %v4442
        %v4644 = vsel %vm2939, %v4214, %v4444
        %v4645 = vsel %vm2939, %v4217, %v4446
        %v4646 = vsel %vm2939, %v4219, %v4448
        %v4647 = vsel %vm2939, %v4222, %v4450
        %v4648 = vsel %vm2939, %v4224, %v4452
        %v4649 = vsel %vm2939, %v4077, %v4486
        %v4650 = vsel %vm2939, %v4079, %v4488
        %v4651 = vsel %vm2939, %v4082, %v4490
        %v4652 = vsel %vm2939, %v4084, %v4492
        %v4653 = vsel %vm2939, %v4087, %v4494
        %v4654 = vsel %vm2939, %v4089, %v4496
        %v4655 = vsel %vm2939, %v4092, %v4498
        %v4656 = vsel %vm2939, %v4094, %v4500
        %v4657 = vsel %vm2939, %v4097, %v4502
        %v4658 = vsel %vm2939, %v4099, %v4504
        %v4659 = vsel %vm2939, %v4102, %v4506
        %v4660 = vsel %vm2939, %v4104, %v4508
        %v4661 = vsel %vm2939, %v4107, %v4510
        %v4662 = vsel %vm2939, %v4109, %v4512
        %v4663 = vsel %vm2939, %v4112, %v4514
        %v4664 = vsel %vm2939, %v4114, %v4516
        %v4665 = vsel %vm2939, %v4117, %v4518
        %v4666 = vsel %vm2939, %v4119, %v4520
        %v4667 = vsel %vm2939, %v4122, %v4522
        %v4668 = vsel %vm2939, %v4124, %v4524
        %v4669 = vsel %vm2939, %v4127, %v4526
        %v4670 = vsel %vm2939, %v4129, %v4528
        %v4671 = vsel %vm2939, %v4132, %v4530
        %v4672 = vsel %vm2939, %v4134, %v4532
        %v4673 = vsel %vm2939, %v4137, %v4534
        %v4674 = vsel %vm2939, %v4139, %v4536
        %v4675 = vsel %vm2939, %v4142, %v4538
        %v4676 = vsel %vm2939, %v4144, %v4540
        %v4677 = vsel %vm2939, %v4147, %v4542
        %v4678 = vsel %vm2939, %v4149, %v4544
        %v4679 = vsel %vm2939, %v4259, %v4546
        %v4680 = vsel %vm2939, %v4261, %v4548
        %v4681 = vsel %vm2939, %v4028, %v4582
        %v4682 = vsel %vm2939, %v3964, %v4584
        %v4684 = vlaneseq
        %v4685 = vshrl.u32 %v4684, 7
        %v4686 = vsub.s32 0, %v4685
        %v4687 = vrot.slane %v3884, %v4686
        %v4689 = vsel %vm2939, %v4157, 0
        %v4691 = vsel %vm2939, %v4159, 0
        %v4693 = vsel %vm2939, %v4162, 0
        %v4695 = vsel %vm2939, %v4164, 0
        %v4697 = vsel %vm2939, %v4167, 0
        %v4699 = vsel %vm2939, %v4169, 0
        %v4701 = vsel %vm2939, %v4172, 0
        %v4703 = vsel %vm2939, %v4174, 0
        %v4705 = vsel %vm2939, %v4177, 0
        %v4707 = vsel %vm2939, %v4179, 0
        %v4709 = vsel %vm2939, %v4182, 0
        %v4711 = vsel %vm2939, %v4184, 0
        %v4713 = vsel %vm2939, %v4187, 0
        %v4715 = vsel %vm2939, %v4189, 0
        %v4717 = vsel %vm2939, %v4192, 0
        %v4719 = vsel %vm2939, %v4194, 0
        %v4721 = vsel %vm2939, %v4197, 0
        %v4723 = vsel %vm2939, %v4199, 0
        %v4725 = vsel %vm2939, %v4202, 0
        %v4727 = vsel %vm2939, %v4204, 0
        %v4729 = vsel %vm2939, %v4207, 0
        %v4731 = vsel %vm2939, %v4209, 0
        %v4733 = vsel %vm2939, %v4212, 0
        %v4735 = vsel %vm2939, %v4214, 0
        %v4737 = vsel %vm2939, %v4217, 0
        %v4739 = vsel %vm2939, %v4219, 0
        %v4741 = vsel %vm2939, %v4222, 0
        %v4743 = vsel %vm2939, %v4224, 0
        %v4745 = vsel %vm2939, %v4296, 0
        %v4747 = vsel %vm2939, %v4298, 0
        %4749 = vmatprep.subr.mxu0 0.0
        %4750 = vmatpush1.msra.mxu0 %v3812
        %4751 = vmatprep.subr.mxu0 0.0
        %4752 = vmatpush1.msra.mxu0 %v3813
        %4753 = vmatprep.subr.mxu0 0.0
        %4754 = vmatpush1.msra.mxu0 %v3814
        %4755 = vmatprep.subr.mxu0 0.0
        %4756 = vmatpush1.msra.mxu0 %v3815
        %4757 = vmatprep.subr.mxu0 0.0
        %4758 = vmatpush1.msra.mxu0 %v3816
        %4759 = vmatprep.subr.mxu0 0.0
        %4760 = vmatpush1.msra.mxu0 %v3817
        %4761 = vmatprep.subr.mxu0 0.0
        %4762 = vmatpush1.msra.mxu0 %v3818
        %4763 = vmatprep.subr.mxu0 0.0
        %4764 = vmatpush1.msra.mxu0 %v3819
        %4765 = vmatprep.subr.mxu0 0.0
        %4766 = vmatpush1.msra.mxu0 %v3820
        %4767 = vmatprep.subr.mxu0 0.0
        %4768 = vmatpush1.msra.mxu0 %v3821
        %4769 = vmatprep.subr.mxu0 0.0
        %4770 = vmatpush1.msra.mxu0 %v3822
        %4771 = vmatprep.subr.mxu0 0.0
        %4772 = vmatpush1.msra.mxu0 %v3823
        %4773 = vmatprep.subr.mxu0 0.0
        %4774 = vmatpush1.msra.mxu0 %v3824
        %4775 = vmatprep.subr.mxu0 0.0
        %4776 = vmatpush1.msra.mxu0 %v3825
        %4777 = vmatprep.subr.mxu0 0.0
        %4778 = vmatpush1.msra.mxu0 %v3826
        %4779 = vmatprep.subr.mxu0 0.0
        %4780 = vmatpush1.msra.mxu0 %v3827
        %4781 = vmatprep.subr.mxu0 0.0
        %4782 = vmatpush1.msra.mxu0 %v3828
        %4783 = vmatprep.subr.mxu0 0.0
        %4784 = vmatpush1.msra.mxu0 %v3829
        %4785 = vmatprep.subr.mxu0 0.0
        %4786 = vmatpush1.msra.mxu0 %v3830
        %4787 = vmatprep.subr.mxu0 0.0
        %4788 = vmatpush1.msra.mxu0 %v3831
        %4789 = vmatprep.subr.mxu0 0.0
        %4790 = vmatpush1.msra.mxu0 %v3832
        %4791 = vmatprep.subr.mxu0 0.0
        %4792 = vmatpush1.msra.mxu0 %v3833
        %4793 = vmatprep.subr.mxu0 0.0
        %4794 = vmatpush1.msra.mxu0 %v3834
        %4795 = vmatprep.subr.mxu0 0.0
        %4796 = vmatpush1.msra.mxu0 %v3835
        %4797 = vmatprep.subr.mxu0 0.0
        %4798 = vmatpush1.msra.mxu0 %v3836
        %4799 = vmatprep.subr.mxu0 0.0
        %4800 = vmatpush1.msra.mxu0 %v3837
        %4801 = vmatprep.subr.mxu0 0.0
        %4802 = vmatpush1.msra.mxu0 %v3838
        %4803 = vmatprep.subr.mxu0 0.0
        %4804 = vmatpush1.msra.mxu0 %v3839
        %4805 = vmatprep.subr.mxu0 0.0
        %4806 = vmatpush1.msra.mxu0 %v3840
        %4807 = vmatprep.subr.mxu0 0.0
        %4808 = vmatpush1.msra.mxu0 %v3841
        %4809 = vmatprep.subr.mxu0 0.0
        %4810 = vmatpush1.msra.mxu0 %v3842
        %4811 = vmatprep.subr.mxu0 0.0
        %4812 = vmatpush1.msra.mxu0 %v3843
        %4813 = vmatprep.mubr.f32.mxu0 %v4617
        %4814 = vmatmul.mubr.f32.gmra.mrb[0].mxu0 %v2940
        %v4815 = vpop.f32.mrb[0].mxu0
        %v4816 = vadd.f32 %v4687, %v4815
        %v4817 = vpop.f32.mrb[0].mxu0
        %4818 = vmatprep.mubr.f32.mxu0 %v4618
        %4819 = vmatmul.mubr.f32.gmra.mrb[0].mxu0 %v2940
        %v4820 = vpop.f32.mrb[0].mxu0
        %v4821 = vadd.f32 %v4687, %v4820
        %v4822 = vpop.f32.mrb[0].mxu0
        %4823 = vmatprep.mubr.f32.mxu0 %v4619
        %4824 = vmatmul.mubr.f32.gmra.mrb[0].mxu0 %v4587
        %v4825 = vpop.f32.mrb[0].mxu0
        %v4826 = vadd.f32 %v4687, %v4825
        %v4827 = vpop.f32.mrb[0].mxu0
        %4828 = vmatprep.mubr.f32.mxu0 %v4620
        %4829 = vmatmul.mubr.f32.gmra.mrb[0].mxu0 %v4588
        %v4830 = vpop.f32.mrb[0].mxu0
        %v4831 = vadd.f32 %v4687, %v4830
        %v4832 = vpop.f32.mrb[0].mxu0
        %4833 = vmatprep.mubr.f32.mxu0 %v4621
        %4834 = vmatmul.mubr.f32.gmra.mrb[0].mxu0 %v4589
        %v4835 = vpop.f32.mrb[0].mxu0
        %v4836 = vadd.f32 %v4687, %v4835
        %v4837 = vpop.f32.mrb[0].mxu0
        %4838 = vmatprep.mubr.f32.mxu0 %v4622
        %4839 = vmatmul.mubr.f32.gmra.mrb[0].mxu0 %v4590
        %v4840 = vpop.f32.mrb[0].mxu0
        %v4841 = vadd.f32 %v4687, %v4840
        %v4842 = vpop.f32.mrb[0].mxu0
        %4843 = vmatprep.mubr.f32.mxu0 %v4623
        %4844 = vmatmul.mubr.f32.gmra.mrb[0].mxu0 %v4591
        %v4845 = vpop.f32.mrb[0].mxu0
        %v4846 = vadd.f32 %v4687, %v4845
        %v4847 = vpop.f32.mrb[0].mxu0
        %4848 = vmatprep.mubr.f32.mxu0 %v4624
        %4849 = vmatmul.mubr.f32.gmra.mrb[0].mxu0 %v4592
        %v4850 = vpop.f32.mrb[0].mxu0
        %v4851 = vadd.f32 %v4687, %v4850
        %v4852 = vpop.f32.mrb[0].mxu0
        %4853 = vmatprep.mubr.f32.mxu0 %v4625
        %4854 = vmatmul.mubr.f32.gmra.mrb[0].mxu0 %v4593
        %v4855 = vpop.f32.mrb[0].mxu0
        %v4856 = vadd.f32 %v4687, %v4855
        %v4857 = vpop.f32.mrb[0].mxu0
        %4858 = vmatprep.mubr.f32.mxu0 %v4626
        %4859 = vmatmul.mubr.f32.gmra.mrb[0].mxu0 %v4594
        %v4860 = vpop.f32.mrb[0].mxu0
        %v4861 = vadd.f32 %v4687, %v4860
        %v4862 = vpop.f32.mrb[0].mxu0
        %4863 = vmatprep.mubr.f32.mxu0 %v4627
        %4864 = vmatmul.mubr.f32.gmra.mrb[0].mxu0 %v4595
        %v4865 = vpop.f32.mrb[0].mxu0
        %v4866 = vadd.f32 %v4687, %v4865
        %v4867 = vpop.f32.mrb[0].mxu0
        %4868 = vmatprep.mubr.f32.mxu0 %v4628
        %4869 = vmatmul.mubr.f32.gmra.mrb[0].mxu0 %v4596
        %v4870 = vpop.f32.mrb[0].mxu0
        %v4871 = vadd.f32 %v4687, %v4870
        %v4872 = vpop.f32.mrb[0].mxu0
        %4873 = vmatprep.mubr.f32.mxu0 %v4629
        %4874 = vmatmul.mubr.f32.gmra.mrb[0].mxu0 %v4597
        %v4875 = vpop.f32.mrb[0].mxu0
        %v4876 = vadd.f32 %v4687, %v4875
        %v4877 = vpop.f32.mrb[0].mxu0
        %4878 = vmatprep.mubr.f32.mxu0 %v4630
        %4879 = vmatmul.mubr.f32.gmra.mrb[0].mxu0 %v4598
        %v4880 = vpop.f32.mrb[0].mxu0
        %v4881 = vadd.f32 %v4687, %v4880
        %v4882 = vpop.f32.mrb[0].mxu0
        %4883 = vmatprep.mubr.f32.mxu0 %v4631
        %4884 = vmatmul.mubr.f32.gmra.mrb[0].mxu0 %v4599
        %v4885 = vpop.f32.mrb[0].mxu0
        %v4886 = vadd.f32 %v4687, %v4885
        %v4887 = vpop.f32.mrb[0].mxu0
        %4888 = vmatprep.mubr.f32.mxu0 %v4632
        %4889 = vmatmul.mubr.f32.gmra.mrb[0].mxu0 %v4600
        %v4890 = vpop.f32.mrb[0].mxu0
        %v4891 = vadd.f32 %v4687, %v4890
        %v4892 = vpop.f32.mrb[0].mxu0
        %4893 = vmatprep.mubr.f32.mxu0 %v4633
        %4894 = vmatmul.mubr.f32.gmra.mrb[0].mxu0 %v4601
        %v4895 = vpop.f32.mrb[0].mxu0
        %v4896 = vadd.f32 %v4687, %v4895
        %v4897 = vpop.f32.mrb[0].mxu0
        %4898 = vmatprep.mubr.f32.mxu0 %v4634
        %4899 = vmatmul.mubr.f32.gmra.mrb[0].mxu0 %v4602
        %v4900 = vpop.f32.mrb[0].mxu0
        %v4901 = vadd.f32 %v4687, %v4900
        %v4902 = vpop.f32.mrb[0].mxu0
        %4903 = vmatprep.mubr.f32.mxu0 %v4635
        %4904 = vmatmul.mubr.f32.gmra.mrb[0].mxu0 %v4603
        %v4905 = vpop.f32.mrb[0].mxu0
        %v4906 = vadd.f32 %v4687, %v4905
        %v4907 = vpop.f32.mrb[0].mxu0
        %4908 = vmatprep.mubr.f32.mxu0 %v4636
        %4909 = vmatmul.mubr.f32.gmra.mrb[0].mxu0 %v4604
        %v4910 = vpop.f32.mrb[0].mxu0
        %v4911 = vadd.f32 %v4687, %v4910
        %v4912 = vpop.f32.mrb[0].mxu0
        %4913 = vmatprep.mubr.f32.mxu0 %v4637
        %4914 = vmatmul.mubr.f32.gmra.mrb[0].mxu0 %v4605
        %v4915 = vpop.f32.mrb[0].mxu0
        %v4916 = vadd.f32 %v4687, %v4915
        %v4917 = vpop.f32.mrb[0].mxu0
        %4918 = vmatprep.mubr.f32.mxu0 %v4638
        %4919 = vmatmul.mubr.f32.gmra.mrb[0].mxu0 %v4606
        %v4920 = vpop.f32.mrb[0].mxu0
        %v4921 = vadd.f32 %v4687, %v4920
        %v4922 = vpop.f32.mrb[0].mxu0
        %4923 = vmatprep.mubr.f32.mxu0 %v4639
        %4924 = vmatmul.mubr.f32.gmra.mrb[0].mxu0 %v4607
        %v4925 = vpop.f32.mrb[0].mxu0
        %v4926 = vadd.f32 %v4687, %v4925
        %v4927 = vpop.f32.mrb[0].mxu0
        %4928 = vmatprep.mubr.f32.mxu0 %v4640
        %4929 = vmatmul.mubr.f32.gmra.mrb[0].mxu0 %v4608
        %v4930 = vpop.f32.mrb[0].mxu0
        %v4931 = vadd.f32 %v4687, %v4930
        %v4932 = vpop.f32.mrb[0].mxu0
        %4933 = vmatprep.mubr.f32.mxu0 %v4641
        %4934 = vmatmul.mubr.f32.gmra.mrb[0].mxu0 %v4609
        %v4935 = vpop.f32.mrb[0].mxu0
        %v4936 = vadd.f32 %v4687, %v4935
        %v4937 = vpop.f32.mrb[0].mxu0
        %4938 = vmatprep.mubr.f32.mxu0 %v4642
        %4939 = vmatmul.mubr.f32.gmra.mrb[0].mxu0 %v4610
        %v4940 = vpop.f32.mrb[0].mxu0
        %v4941 = vadd.f32 %v4687, %v4940
        %v4942 = vpop.f32.mrb[0].mxu0
        %4943 = vmatprep.mubr.f32.mxu0 %v4643
        %4944 = vmatmul.mubr.f32.gmra.mrb[0].mxu0 %v4611
        %v4945 = vpop.f32.mrb[0].mxu0
        %v4946 = vadd.f32 %v4687, %v4945
        %v4947 = vpop.f32.mrb[0].mxu0
        %4948 = vmatprep.mubr.f32.mxu0 %v4644
        %4949 = vmatmul.mubr.f32.gmra.mrb[0].mxu0 %v4612
        %v4950 = vpop.f32.mrb[0].mxu0
        %v4951 = vadd.f32 %v4687, %v4950
        %v4952 = vpop.f32.mrb[0].mxu0
        %4953 = vmatprep.mubr.f32.mxu0 %v4645
        %4954 = vmatmul.mubr.f32.gmra.mrb[0].mxu0 %v4613
        %v4955 = vpop.f32.mrb[0].mxu0
        %v4956 = vadd.f32 %v4687, %v4955
        %v4957 = vpop.f32.mrb[0].mxu0
        %4958 = vmatprep.mubr.f32.mxu0 %v4646
        %4959 = vmatmul.mubr.f32.gmra.mrb[0].mxu0 %v4614
        %v4960 = vpop.f32.mrb[0].mxu0
        %v4961 = vadd.f32 %v4687, %v4960
        %v4962 = vpop.f32.mrb[0].mxu0
        %4963 = vmatprep.mubr.f32.mxu0 %v4647
        %4964 = vmatmul.mubr.f32.gmra.mrb[0].mxu0 %v4615
        %v4965 = vpop.f32.mrb[0].mxu0
        %v4966 = vadd.f32 %v4687, %v4965
        %v4967 = vpop.f32.mrb[0].mxu0
        %4968 = vmatprep.mubr.f32.mxu0 %v4648
        %4969 = vmatmul.mubr.f32.gmra.mrb[0].mxu0 %v4616
        %v4970 = vpop.f32.mrb[0].mxu0
        %v4971 = vadd.f32 %v4687, %v4970
        %v4972 = vpop.f32.mrb[0].mxu0
        %4973 = vdwg.mxu0
        %4974 = vmatprep.subr.mxu0 0.0
        %4975 = vmatpush1.msra.mxu0 %v3844
        %4976 = vmatprep.subr.mxu0 0.0
        %4977 = vmatpush1.msra.mxu0 %v3845
        %4978 = vmatprep.subr.mxu0 0.0
        %4979 = vmatpush1.msra.mxu0 %v3846
        %4980 = vmatprep.subr.mxu0 0.0
        %4981 = vmatpush1.msra.mxu0 %v3847
        %4982 = vmatprep.subr.mxu0 0.0
        %4983 = vmatpush1.msra.mxu0 %v3848
        %4984 = vmatprep.subr.mxu0 0.0
        %4985 = vmatpush1.msra.mxu0 %v3849
        %4986 = vmatprep.subr.mxu0 0.0
        %4987 = vmatpush1.msra.mxu0 %v3850
        %4988 = vmatprep.subr.mxu0 0.0
        %4989 = vmatpush1.msra.mxu0 %v3851
        %4990 = vmatprep.subr.mxu0 0.0
        %4991 = vmatpush1.msra.mxu0 %v3852
        %4992 = vmatprep.subr.mxu0 0.0
        %4993 = vmatpush1.msra.mxu0 %v3853
        %4994 = vmatprep.subr.mxu0 0.0
        %4995 = vmatpush1.msra.mxu0 %v3854
        %4996 = vmatprep.subr.mxu0 0.0
        %4997 = vmatpush1.msra.mxu0 %v3855
        %4998 = vmatprep.subr.mxu0 0.0
        %4999 = vmatpush1.msra.mxu0 %v3856
        %5000 = vmatprep.subr.mxu0 0.0
        %5001 = vmatpush1.msra.mxu0 %v3857
        %5002 = vmatprep.subr.mxu0 0.0
        %5003 = vmatpush1.msra.mxu0 %v3858
        %5004 = vmatprep.subr.mxu0 0.0
        %5005 = vmatpush1.msra.mxu0 %v3859
        %5006 = vmatprep.subr.mxu0 0.0
        %5007 = vmatpush1.msra.mxu0 %v3860
        %5008 = vmatprep.subr.mxu0 0.0
        %5009 = vmatpush1.msra.mxu0 %v3861
        %5010 = vmatprep.subr.mxu0 0.0
        %5011 = vmatpush1.msra.mxu0 %v3862
        %5012 = vmatprep.subr.mxu0 0.0
        %5013 = vmatpush1.msra.mxu0 %v3863
        %5014 = vmatprep.subr.mxu0 0.0
        %5015 = vmatpush1.msra.mxu0 %v3864
        %5016 = vmatprep.subr.mxu0 0.0
        %5017 = vmatpush1.msra.mxu0 %v3865
        %5018 = vmatprep.subr.mxu0 0.0
        %5019 = vmatpush1.msra.mxu0 %v3866
        %5020 = vmatprep.subr.mxu0 0.0
        %5021 = vmatpush1.msra.mxu0 %v3867
        %5022 = vmatprep.subr.mxu0 0.0
        %5023 = vmatpush1.msra.mxu0 %v3868
        %5024 = vmatprep.subr.mxu0 0.0
        %5025 = vmatpush1.msra.mxu0 %v3869
        %5026 = vmatprep.subr.mxu0 0.0
        %5027 = vmatpush1.msra.mxu0 %v3870
        %5028 = vmatprep.subr.mxu0 0.0
        %5029 = vmatpush1.msra.mxu0 %v3871
        %5030 = vmatprep.subr.mxu0 0.0
        %5031 = vmatpush1.msra.mxu0 %v3872
        %5032 = vmatprep.subr.mxu0 0.0
        %5033 = vmatpush1.msra.mxu0 %v3873
        %5034 = vmatprep.subr.mxu0 0.0
        %5035 = vmatpush1.msra.mxu0 %v3874
        %5036 = vmatprep.subr.mxu0 0.0
        %5037 = vmatpush1.msra.mxu0 %v3875
        %5038 = vmatprep.mubr.f32.mxu0 %v4589
        %5039 = vmatmul.mubr.f32.gmra.mrb[0].mxu0 %v4649
        %v5040 = vpop.f32.mrb[0].mxu0
        %v5041 = vadd.f32 %v4816, %v5040
        %v5042 = vpop.f32.mrb[0].mxu0
        %5043 = vmatprep.mubr.f32.mxu0 %v4590
        %5044 = vmatmul.mubr.f32.gmra.mrb[0].mxu0 %v4650
        %v5045 = vpop.f32.mrb[0].mxu0
        %v5046 = vadd.f32 %v4821, %v5045
        %v5047 = vpop.f32.mrb[0].mxu0
        %5048 = vmatprep.mubr.f32.mxu0 %v4591
        %5049 = vmatmul.mubr.f32.gmra.mrb[0].mxu0 %v4651
        %v5050 = vpop.f32.mrb[0].mxu0
        %v5051 = vadd.f32 %v4826, %v5050
        %v5052 = vpop.f32.mrb[0].mxu0
        %5053 = vmatprep.mubr.f32.mxu0 %v4592
        %5054 = vmatmul.mubr.f32.gmra.mrb[0].mxu0 %v4652
        %v5055 = vpop.f32.mrb[0].mxu0
        %v5056 = vadd.f32 %v4831, %v5055
        %v5057 = vpop.f32.mrb[0].mxu0
        %5058 = vmatprep.mubr.f32.mxu0 %v4593
        %5059 = vmatmul.mubr.f32.gmra.mrb[0].mxu0 %v4653
        %v5060 = vpop.f32.mrb[0].mxu0
        %v5061 = vadd.f32 %v4836, %v5060
        %v5062 = vpop.f32.mrb[0].mxu0
        %5063 = vmatprep.mubr.f32.mxu0 %v4594
        %5064 = vmatmul.mubr.f32.gmra.mrb[0].mxu0 %v4654
        %v5065 = vpop.f32.mrb[0].mxu0
        %v5066 = vadd.f32 %v4841, %v5065
        %v5067 = vpop.f32.mrb[0].mxu0
        %5068 = vmatprep.mubr.f32.mxu0 %v4595
        %5069 = vmatmul.mubr.f32.gmra.mrb[0].mxu0 %v4655
        %v5070 = vpop.f32.mrb[0].mxu0
        %v5071 = vadd.f32 %v4846, %v5070
        %v5072 = vpop.f32.mrb[0].mxu0
        %5073 = vmatprep.mubr.f32.mxu0 %v4596
        %5074 = vmatmul.mubr.f32.gmra.mrb[0].mxu0 %v4656
        %v5075 = vpop.f32.mrb[0].mxu0
        %v5076 = vadd.f32 %v4851, %v5075
        %v5077 = vpop.f32.mrb[0].mxu0
        %5078 = vmatprep.mubr.f32.mxu0 %v4597
        %5079 = vmatmul.mubr.f32.gmra.mrb[0].mxu0 %v4657
        %v5080 = vpop.f32.mrb[0].mxu0
        %v5081 = vadd.f32 %v4856, %v5080
        %v5082 = vpop.f32.mrb[0].mxu0
        %5083 = vmatprep.mubr.f32.mxu0 %v4598
        %5084 = vmatmul.mubr.f32.gmra.mrb[0].mxu0 %v4658
        %v5085 = vpop.f32.mrb[0].mxu0
        %v5086 = vadd.f32 %v4861, %v5085
        %v5087 = vpop.f32.mrb[0].mxu0
        %5088 = vmatprep.mubr.f32.mxu0 %v4599
        %5089 = vmatmul.mubr.f32.gmra.mrb[0].mxu0 %v4659
        %v5090 = vpop.f32.mrb[0].mxu0
        %v5091 = vadd.f32 %v4866, %v5090
        %v5092 = vpop.f32.mrb[0].mxu0
        %5093 = vmatprep.mubr.f32.mxu0 %v4600
        %5094 = vmatmul.mubr.f32.gmra.mrb[0].mxu0 %v4660
        %v5095 = vpop.f32.mrb[0].mxu0
        %v5096 = vadd.f32 %v4871, %v5095
        %v5097 = vpop.f32.mrb[0].mxu0
        %5098 = vmatprep.mubr.f32.mxu0 %v4601
        %5099 = vmatmul.mubr.f32.gmra.mrb[0].mxu0 %v4661
        %v5100 = vpop.f32.mrb[0].mxu0
        %v5101 = vadd.f32 %v4876, %v5100
        %v5102 = vpop.f32.mrb[0].mxu0
        %5103 = vmatprep.mubr.f32.mxu0 %v4602
        %5104 = vmatmul.mubr.f32.gmra.mrb[0].mxu0 %v4662
        %v5105 = vpop.f32.mrb[0].mxu0
        %v5106 = vadd.f32 %v4881, %v5105
        %v5107 = vpop.f32.mrb[0].mxu0
        %5108 = vmatprep.mubr.f32.mxu0 %v4603
        %5109 = vmatmul.mubr.f32.gmra.mrb[0].mxu0 %v4663
        %v5110 = vpop.f32.mrb[0].mxu0
        %v5111 = vadd.f32 %v4886, %v5110
        %v5112 = vpop.f32.mrb[0].mxu0
        %5113 = vmatprep.mubr.f32.mxu0 %v4604
        %5114 = vmatmul.mubr.f32.gmra.mrb[0].mxu0 %v4664
        %v5115 = vpop.f32.mrb[0].mxu0
        %v5116 = vadd.f32 %v4891, %v5115
        %v5117 = vpop.f32.mrb[0].mxu0
        %5118 = vmatprep.mubr.f32.mxu0 %v4605
        %5119 = vmatmul.mubr.f32.gmra.mrb[0].mxu0 %v4665
        %v5120 = vpop.f32.mrb[0].mxu0
        %v5121 = vadd.f32 %v4896, %v5120
        %v5122 = vpop.f32.mrb[0].mxu0
        %5123 = vmatprep.mubr.f32.mxu0 %v4606
        %5124 = vmatmul.mubr.f32.gmra.mrb[0].mxu0 %v4666
        %v5125 = vpop.f32.mrb[0].mxu0
        %v5126 = vadd.f32 %v4901, %v5125
        %v5127 = vpop.f32.mrb[0].mxu0
        %5128 = vmatprep.mubr.f32.mxu0 %v4607
        %5129 = vmatmul.mubr.f32.gmra.mrb[0].mxu0 %v4667
        %v5130 = vpop.f32.mrb[0].mxu0
        %v5131 = vadd.f32 %v4906, %v5130
        %v5132 = vpop.f32.mrb[0].mxu0
        %5133 = vmatprep.mubr.f32.mxu0 %v4608
        %5134 = vmatmul.mubr.f32.gmra.mrb[0].mxu0 %v4668
        %v5135 = vpop.f32.mrb[0].mxu0
        %v5136 = vadd.f32 %v4911, %v5135
        %v5137 = vpop.f32.mrb[0].mxu0
        %5138 = vmatprep.mubr.f32.mxu0 %v4609
        %5139 = vmatmul.mubr.f32.gmra.mrb[0].mxu0 %v4669
        %v5140 = vpop.f32.mrb[0].mxu0
        %v5141 = vadd.f32 %v4916, %v5140
        %v5142 = vpop.f32.mrb[0].mxu0
        %5143 = vmatprep.mubr.f32.mxu0 %v4610
        %5144 = vmatmul.mubr.f32.gmra.mrb[0].mxu0 %v4670
        %v5145 = vpop.f32.mrb[0].mxu0
        %v5146 = vadd.f32 %v4921, %v5145
        %v5147 = vpop.f32.mrb[0].mxu0
        %5148 = vmatprep.mubr.f32.mxu0 %v4611
        %5149 = vmatmul.mubr.f32.gmra.mrb[0].mxu0 %v4671
        %v5150 = vpop.f32.mrb[0].mxu0
        %v5151 = vadd.f32 %v4926, %v5150
        %v5152 = vpop.f32.mrb[0].mxu0
        %5153 = vmatprep.mubr.f32.mxu0 %v4612
        %5154 = vmatmul.mubr.f32.gmra.mrb[0].mxu0 %v4672
        %v5155 = vpop.f32.mrb[0].mxu0
        %v5156 = vadd.f32 %v4931, %v5155
        %v5157 = vpop.f32.mrb[0].mxu0
        %5158 = vmatprep.mubr.f32.mxu0 %v4613
        %5159 = vmatmul.mubr.f32.gmra.mrb[0].mxu0 %v4673
        %v5160 = vpop.f32.mrb[0].mxu0
        %v5161 = vadd.f32 %v4936, %v5160
        %v5162 = vpop.f32.mrb[0].mxu0
        %5163 = vmatprep.mubr.f32.mxu0 %v4614
        %5164 = vmatmul.mubr.f32.gmra.mrb[0].mxu0 %v4674
        %v5165 = vpop.f32.mrb[0].mxu0
        %v5166 = vadd.f32 %v4941, %v5165
        %v5167 = vpop.f32.mrb[0].mxu0
        %5168 = vmatprep.mubr.f32.mxu0 %v4615
        %5169 = vmatmul.mubr.f32.gmra.mrb[0].mxu0 %v4675
        %v5170 = vpop.f32.mrb[0].mxu0
        %v5171 = vadd.f32 %v4946, %v5170
        %v5172 = vpop.f32.mrb[0].mxu0
        %5173 = vmatprep.mubr.f32.mxu0 %v4616
        %5174 = vmatmul.mubr.f32.gmra.mrb[0].mxu0 %v4676
        %v5175 = vpop.f32.mrb[0].mxu0
        %v5176 = vadd.f32 %v4951, %v5175
        %v5177 = vpop.f32.mrb[0].mxu0
        %5178 = vmatprep.mubr.f32.mxu0 %v4681
        %5179 = vmatmul.mubr.f32.gmra.mrb[0].mxu0 %v4677
        %v5180 = vpop.f32.mrb[0].mxu0
        %v5181 = vadd.f32 %v4956, %v5180
        %v5182 = vpop.f32.mrb[0].mxu0
        %5183 = vmatprep.mubr.f32.mxu0 %v4682
        %5184 = vmatmul.mubr.f32.gmra.mrb[0].mxu0 %v4678
        %v5185 = vpop.f32.mrb[0].mxu0
        %v5186 = vadd.f32 %v4961, %v5185
        %v5187 = vpop.f32.mrb[0].mxu0
        %5188 = vmatprep.mubr.f32.mxu0 %v2940
        %5189 = vmatmul.mubr.f32.gmra.mrb[0].mxu0 %v4679
        %v5190 = vpop.f32.mrb[0].mxu0
        %v5191 = vadd.f32 %v4966, %v5190
        %v5192 = vpop.f32.mrb[0].mxu0
        %5193 = vmatprep.mubr.f32.mxu0 %v2940
        %5194 = vmatmul.mubr.f32.gmra.mrb[0].mxu0 %v4680
        %v5195 = vpop.f32.mrb[0].mxu0
        %v5196 = vadd.f32 %v4971, %v5195
        %v5197 = vpop.f32.mrb[0].mxu0
        %5198 = vdwg.mxu0
        %5199 = vmatprep.subr.mxu0 0.0
        %5200 = vmatpush1.msra.mxu0 %v3876
        %5201 = vmatprep.subr.mxu0 0.0
        %5202 = vmatpush1.msra.mxu0 %v3877
        %5203 = vmatprep.subr.mxu0 0.0
        %5204 = vmatpush1.msra.mxu0 %v3878
        %5205 = vmatprep.subr.mxu0 0.0
        %5206 = vmatpush1.msra.mxu0 %v3879
        %5207 = vmatprep.subr.mxu0 0.0
        %5208 = vmatpush1.msra.mxu0 %v3880
        %5209 = vmatprep.subr.mxu0 0.0
        %5210 = vmatpush1.msra.mxu0 %v3881
        %5211 = vmatprep.subr.mxu0 0.0
        %5212 = vmatpush1.msra.mxu0 %v3882
        %5213 = vmatprep.subr.mxu0 0.0
        %5214 = vmatpush1.msra.mxu0 %v3883
        %5215 = vmatprep.subr.mxu0 0.0
        %5216 = vmatpush1.msra.mxu0 0.0
        %5217 = vmatprep.subr.mxu0 0.0
        %5218 = vmatpush1.msra.mxu0 0.0
        %5219 = vmatprep.subr.mxu0 0.0
        %5220 = vmatpush1.msra.mxu0 0.0
        %5221 = vmatprep.subr.mxu0 0.0
        %5222 = vmatpush1.msra.mxu0 0.0
        %5223 = vmatprep.subr.mxu0 0.0
        %5224 = vmatpush1.msra.mxu0 0.0
        %5225 = vmatprep.subr.mxu0 0.0
        %5226 = vmatpush1.msra.mxu0 0.0
        %5227 = vmatprep.subr.mxu0 0.0
        %5228 = vmatpush1.msra.mxu0 0.0
        %5229 = vmatprep.subr.mxu0 0.0
        %5230 = vmatpush1.msra.mxu0 0.0
        %5231 = vmatprep.subr.mxu0 0.0
        %5232 = vmatpush1.msra.mxu0 0.0
        %5233 = vmatprep.subr.mxu0 0.0
        %5234 = vmatpush1.msra.mxu0 0.0
        %5235 = vmatprep.subr.mxu0 0.0
        %5236 = vmatpush1.msra.mxu0 0.0
        %5237 = vmatprep.subr.mxu0 0.0
        %5238 = vmatpush1.msra.mxu0 0.0
        %5239 = vmatprep.subr.mxu0 0.0
        %5240 = vmatpush1.msra.mxu0 0.0
        %5241 = vmatprep.subr.mxu0 0.0
        %5242 = vmatpush1.msra.mxu0 0.0
        %5243 = vmatprep.subr.mxu0 0.0
        %5244 = vmatpush1.msra.mxu0 0.0
        %5245 = vmatprep.subr.mxu0 0.0
        %5246 = vmatpush1.msra.mxu0 0.0
        %5247 = vmatprep.subr.mxu0 0.0
        %5248 = vmatpush1.msra.mxu0 0.0
        %5249 = vmatprep.subr.mxu0 0.0
        %5250 = vmatpush1.msra.mxu0 0.0
        %5251 = vmatprep.subr.mxu0 0.0
        %5252 = vmatpush1.msra.mxu0 0.0
        %5253 = vmatprep.subr.mxu0 0.0
        %5254 = vmatpush1.msra.mxu0 0.0
        %5255 = vmatprep.subr.mxu0 0.0
        %5256 = vmatpush1.msra.mxu0 0.0
        %5257 = vmatprep.subr.mxu0 0.0
        %5258 = vmatpush1.msra.mxu0 0.0
        %5259 = vmatprep.subr.mxu0 0.0
        %5260 = vmatpush1.msra.mxu0 0.0
        %5261 = vmatprep.subr.mxu0 0.0
        %5262 = vmatpush1.msra.mxu0 0.0
        %5263 = vmatprep.mubr.f32.mxu0 0.0
        %5264 = vmatmul.mubr.f32.gmra.mrb[0].mxu0 %v4689
        %v5265 = vpop.f32.mrb[0].mxu0
        %v5266 = vadd.f32 %v5041, %v5265
        %v5267 = vpop.f32.mrb[0].mxu0
        %5268 = vmatprep.mubr.f32.mxu0 0.0
        %5269 = vmatmul.mubr.f32.gmra.mrb[0].mxu0 %v4691
        %v5270 = vpop.f32.mrb[0].mxu0
        %v5271 = vadd.f32 %v5046, %v5270
        %v5272 = vpop.f32.mrb[0].mxu0
        %5273 = vmatprep.mubr.f32.mxu0 0.0
        %5274 = vmatmul.mubr.f32.gmra.mrb[0].mxu0 %v4693
        %v5275 = vpop.f32.mrb[0].mxu0
        %v5276 = vadd.f32 %v5051, %v5275
        %v5277 = vpop.f32.mrb[0].mxu0
        %5278 = vmatprep.mubr.f32.mxu0 0.0
        %5279 = vmatmul.mubr.f32.gmra.mrb[0].mxu0 %v4695
        %v5280 = vpop.f32.mrb[0].mxu0
        %v5281 = vadd.f32 %v5056, %v5280
        %v5282 = vpop.f32.mrb[0].mxu0
        %5283 = vmatprep.mubr.f32.mxu0 0.0
        %5284 = vmatmul.mubr.f32.gmra.mrb[0].mxu0 %v4697
        %v5285 = vpop.f32.mrb[0].mxu0
        %v5286 = vadd.f32 %v5061, %v5285
        %v5287 = vpop.f32.mrb[0].mxu0
        %5288 = vmatprep.mubr.f32.mxu0 0.0
        %5289 = vmatmul.mubr.f32.gmra.mrb[0].mxu0 %v4699
        %v5290 = vpop.f32.mrb[0].mxu0
        %v5291 = vadd.f32 %v5066, %v5290
        %v5292 = vpop.f32.mrb[0].mxu0
        %5293 = vmatprep.mubr.f32.mxu0 0.0
        %5294 = vmatmul.mubr.f32.gmra.mrb[0].mxu0 %v4701
        %v5295 = vpop.f32.mrb[0].mxu0
        %v5296 = vadd.f32 %v5071, %v5295
        %v5297 = vpop.f32.mrb[0].mxu0
        %5298 = vmatprep.mubr.f32.mxu0 0.0
        %5299 = vmatmul.mubr.f32.gmra.mrb[0].mxu0 %v4703
        %v5300 = vpop.f32.mrb[0].mxu0
        %v5301 = vadd.f32 %v5076, %v5300
        %v5302 = vpop.f32.mrb[0].mxu0
        %5303 = vmatprep.mubr.f32.mxu0 0.0
        %5304 = vmatmul.mubr.f32.gmra.mrb[0].mxu0 %v4705
        %v5305 = vpop.f32.mrb[0].mxu0
        %v5306 = vadd.f32 %v5081, %v5305
        %v5307 = vpop.f32.mrb[0].mxu0
        %5308 = vmatprep.mubr.f32.mxu0 0.0
        %5309 = vmatmul.mubr.f32.gmra.mrb[0].mxu0 %v4707
        %v5310 = vpop.f32.mrb[0].mxu0
        %v5311 = vadd.f32 %v5086, %v5310
        %v5312 = vpop.f32.mrb[0].mxu0
        %5313 = vmatprep.mubr.f32.mxu0 0.0
        %5314 = vmatmul.mubr.f32.gmra.mrb[0].mxu0 %v4709
        %v5315 = vpop.f32.mrb[0].mxu0
        %v5316 = vadd.f32 %v5091, %v5315
        %v5317 = vpop.f32.mrb[0].mxu0
        %5318 = vmatprep.mubr.f32.mxu0 0.0
        %5319 = vmatmul.mubr.f32.gmra.mrb[0].mxu0 %v4711
        %v5320 = vpop.f32.mrb[0].mxu0
        %v5321 = vadd.f32 %v5096, %v5320
        %v5322 = vpop.f32.mrb[0].mxu0
        %5323 = vmatprep.mubr.f32.mxu0 0.0
        %5324 = vmatmul.mubr.f32.gmra.mrb[0].mxu0 %v4713
        %v5325 = vpop.f32.mrb[0].mxu0
        %v5326 = vadd.f32 %v5101, %v5325
        %v5327 = vpop.f32.mrb[0].mxu0
        %5328 = vmatprep.mubr.f32.mxu0 0.0
        %5329 = vmatmul.mubr.f32.gmra.mrb[0].mxu0 %v4715
        %v5330 = vpop.f32.mrb[0].mxu0
        %v5331 = vadd.f32 %v5106, %v5330
        %v5332 = vpop.f32.mrb[0].mxu0
        %5333 = vmatprep.mubr.f32.mxu0 0.0
        %5334 = vmatmul.mubr.f32.gmra.mrb[0].mxu0 %v4717
        %v5335 = vpop.f32.mrb[0].mxu0
        %v5336 = vadd.f32 %v5111, %v5335
        %v5337 = vpop.f32.mrb[0].mxu0
        %5338 = vmatprep.mubr.f32.mxu0 0.0
        %5339 = vmatmul.mubr.f32.gmra.mrb[0].mxu0 %v4719
        %v5340 = vpop.f32.mrb[0].mxu0
        %v5341 = vadd.f32 %v5116, %v5340
        %v5342 = vpop.f32.mrb[0].mxu0
        %5343 = vmatprep.mubr.f32.mxu0 0.0
        %5344 = vmatmul.mubr.f32.gmra.mrb[0].mxu0 %v4721
        %v5345 = vpop.f32.mrb[0].mxu0
        %v5346 = vadd.f32 %v5121, %v5345
        %v5347 = vpop.f32.mrb[0].mxu0
        %5348 = vmatprep.mubr.f32.mxu0 0.0
        %5349 = vmatmul.mubr.f32.gmra.mrb[0].mxu0 %v4723
        %v5350 = vpop.f32.mrb[0].mxu0
        %v5351 = vadd.f32 %v5126, %v5350
        %v5352 = vpop.f32.mrb[0].mxu0
        %5353 = vmatprep.mubr.f32.mxu0 0.0
        %5354 = vmatmul.mubr.f32.gmra.mrb[0].mxu0 %v4725
        %v5355 = vpop.f32.mrb[0].mxu0
        %v5356 = vadd.f32 %v5131, %v5355
        %v5357 = vpop.f32.mrb[0].mxu0
        %5358 = vmatprep.mubr.f32.mxu0 0.0
        %5359 = vmatmul.mubr.f32.gmra.mrb[0].mxu0 %v4727
        %v5360 = vpop.f32.mrb[0].mxu0
        %v5361 = vadd.f32 %v5136, %v5360
        %v5362 = vpop.f32.mrb[0].mxu0
        %5363 = vmatprep.mubr.f32.mxu0 0.0
        %5364 = vmatmul.mubr.f32.gmra.mrb[0].mxu0 %v4729
        %v5365 = vpop.f32.mrb[0].mxu0
        %v5366 = vadd.f32 %v5141, %v5365
        %v5367 = vpop.f32.mrb[0].mxu0
        %5368 = vmatprep.mubr.f32.mxu0 0.0
        %5369 = vmatmul.mubr.f32.gmra.mrb[0].mxu0 %v4731
        %v5370 = vpop.f32.mrb[0].mxu0
        %v5371 = vadd.f32 %v5146, %v5370
        %v5372 = vpop.f32.mrb[0].mxu0
        %5373 = vmatprep.mubr.f32.mxu0 0.0
        %5374 = vmatmul.mubr.f32.gmra.mrb[0].mxu0 %v4733
        %v5375 = vpop.f32.mrb[0].mxu0
        %v5376 = vadd.f32 %v5151, %v5375
        %v5377 = vpop.f32.mrb[0].mxu0
        %5378 = vmatprep.mubr.f32.mxu0 0.0
        %5379 = vmatmul.mubr.f32.gmra.mrb[0].mxu0 %v4735
        %v5380 = vpop.f32.mrb[0].mxu0
        %v5381 = vadd.f32 %v5156, %v5380
        %v5382 = vpop.f32.mrb[0].mxu0
        %5383 = vmatprep.mubr.f32.mxu0 0.0
        %5384 = vmatmul.mubr.f32.gmra.mrb[0].mxu0 %v4737
        %v5385 = vpop.f32.mrb[0].mxu0
        %v5386 = vadd.f32 %v5161, %v5385
        %v5387 = vpop.f32.mrb[0].mxu0
        %5388 = vmatprep.mubr.f32.mxu0 0.0
        %5389 = vmatmul.mubr.f32.gmra.mrb[0].mxu0 %v4739
        %v5390 = vpop.f32.mrb[0].mxu0
        %v5391 = vadd.f32 %v5166, %v5390
        %v5392 = vpop.f32.mrb[0].mxu0
        %5393 = vmatprep.mubr.f32.mxu0 0.0
        %5394 = vmatmul.mubr.f32.gmra.mrb[0].mxu0 %v4741
        %v5395 = vpop.f32.mrb[0].mxu0
        %v5396 = vadd.f32 %v5171, %v5395
        %v5397 = vpop.f32.mrb[0].mxu0
        %5398 = vmatprep.mubr.f32.mxu0 0.0
        %5399 = vmatmul.mubr.f32.gmra.mrb[0].mxu0 %v4743
        %v5400 = vpop.f32.mrb[0].mxu0
        %v5401 = vadd.f32 %v5176, %v5400
        %v5402 = vpop.f32.mrb[0].mxu0
        %5403 = vmatprep.mubr.f32.mxu0 0.0
        %5404 = vmatmul.mubr.f32.gmra.mrb[0].mxu0 %v4745
        %v5405 = vpop.f32.mrb[0].mxu0
        %v5406 = vadd.f32 %v5181, %v5405
        %v5407 = vpop.f32.mrb[0].mxu0
        %5408 = vmatprep.mubr.f32.mxu0 0.0
        %5409 = vmatmul.mubr.f32.gmra.mrb[0].mxu0 %v4747
        %v5410 = vpop.f32.mrb[0].mxu0
        %v5411 = vadd.f32 %v5186, %v5410
        %v5412 = vpop.f32.mrb[0].mxu0
        %5413 = vmatprep.mubr.f32.mxu0 0.0
        %5414 = vmatmul.mubr.f32.gmra.mrb[0].mxu0 %v3103
        %v5415 = vpop.f32.mrb[0].mxu0
        %v5416 = vadd.f32 %v5191, %v5415
        %v5417 = vpop.f32.mrb[0].mxu0
        %5418 = vmatprep.mubr.f32.mxu0 0.0
        %5419 = vmatmul.mubr.f32.gmra.mrb[0].mxu0 %v3103
        %v5420 = vpop.f32.mrb[0].mxu0
        %v5421 = vadd.f32 %v5196, %v5420
        %v5422 = vpop.f32.mrb[0].mxu0
        %5423 = vdwg.mxu0
        %v5424 = vmax.f32 %v5266, 0.0
        %v5425 = vmax.f32 %v5271, 0.0
        %v5426 = vmax.f32 %v5276, 0.0
        %v5427 = vmax.f32 %v5281, 0.0
        %v5428 = vmax.f32 %v5286, 0.0
        %v5429 = vmax.f32 %v5291, 0.0
        %v5430 = vmax.f32 %v5296, 0.0
        %v5431 = vmax.f32 %v5301, 0.0
        %v5432 = vmax.f32 %v5306, 0.0
        %v5433 = vmax.f32 %v5311, 0.0
        %v5434 = vmax.f32 %v5316, 0.0
        %v5435 = vmax.f32 %v5321, 0.0
        %v5436 = vmax.f32 %v5326, 0.0
        %v5437 = vmax.f32 %v5331, 0.0
        %v5438 = vmax.f32 %v5336, 0.0
        %v5439 = vmax.f32 %v5341, 0.0
        %v5440 = vmax.f32 %v5346, 0.0
        %v5441 = vmax.f32 %v5351, 0.0
        %v5442 = vmax.f32 %v5356, 0.0
        %v5443 = vmax.f32 %v5361, 0.0
        %v5444 = vmax.f32 %v5366, 0.0
        %v5445 = vmax.f32 %v5371, 0.0
        %v5446 = vmax.f32 %v5376, 0.0
        %v5447 = vmax.f32 %v5381, 0.0
        %v5448 = vmax.f32 %v5386, 0.0
        %v5449 = vmax.f32 %v5391, 0.0
        %v5450 = vmax.f32 %v5396, 0.0
        %v5451 = vmax.f32 %v5401, 0.0
        %v5452 = vmax.f32 %v5406, 0.0
        %v5453 = vmax.f32 %v5411, 0.0
        %v5454 = vmax.f32 %v5416, 0.0
        %v5455 = vmax.f32 %v5421, 0.0
        %v5456 = vld [vmem:[%s7] sm:$0xff]
        %v5457 = vld [vmem:[%s7 + $0x8] sm:$0xff]
        %v5458 = vld [vmem:[%s7 + $0x10] sm:$0xff]
        %v5459 = vld [vmem:[%s7 + $0x18] sm:$0xff]
        %v5460 = vld [vmem:[%s7 + $0x20] sm:$0xff]
        %v5461 = vld [vmem:[%s7 + $0x28] sm:$0xff]
        %v5462 = vld [vmem:[%s7 + $0x30] sm:$0xff]
        %v5463 = vld [vmem:[%s7 + $0x38] sm:$0xff]
        %v5464 = vld [vmem:[%s7 + $0x40] sm:$0xff]
        %v5465 = vld [vmem:[%s7 + $0x48] sm:$0xff]
        %v5466 = vld [vmem:[%s7 + $0x50] sm:$0xff]
        %v5467 = vld [vmem:[%s7 + $0x58] sm:$0xff]
        %v5468 = vld [vmem:[%s7 + $0x60] sm:$0xff]
        %v5469 = vld [vmem:[%s7 + $0x68] sm:$0xff]
        %v5470 = vld [vmem:[%s7 + $0x70] sm:$0xff]
        %v5471 = vld [vmem:[%s7 + $0x78] sm:$0xff]
        %v5472 = vld [vmem:[%s7 + $0x80] sm:$0xff]
        %v5473 = vld [vmem:[%s7 + $0x88] sm:$0xff]
        %v5474 = vld [vmem:[%s7 + $0x90] sm:$0xff]
        %v5475 = vld [vmem:[%s7 + $0x98] sm:$0xff]
        %v5476 = vld [vmem:[%s7 + $0xa0] sm:$0xff]
        %v5477 = vld [vmem:[%s7 + $0xa8] sm:$0xff]
        %v5478 = vld [vmem:[%s7 + $0xb0] sm:$0xff]
        %v5479 = vld [vmem:[%s7 + $0xb8] sm:$0xff]
        %v5480 = vld [vmem:[%s7 + $0xc0] sm:$0xff]
        %v5481 = vld [vmem:[%s7 + $0xc8] sm:$0xff]
        %v5482 = vld [vmem:[%s7 + $0xd0] sm:$0xff]
        %v5483 = vld [vmem:[%s7 + $0xd8] sm:$0xff]
        %v5484 = vld [vmem:[%s7 + $0xe0] sm:$0xff]
        %v5485 = vld [vmem:[%s7 + $0xe8] sm:$0xff]
        %v5486 = vld [vmem:[%s7 + $0xf0] sm:$0xff]
        %v5487 = vld [vmem:[%s7 + $0xf8] sm:$0xff]
        %v5488 = vld [vmem:[%s7 + $0x100] sm:$0xff]
        %v5489 = vld [vmem:[%s7 + $0x108] sm:$0xff]
        %v5490 = vld [vmem:[%s7 + $0x110] sm:$0xff]
        %v5491 = vld [vmem:[%s7 + $0x118] sm:$0xff]
        %v5492 = vld [vmem:[%s7 + $0x120] sm:$0xff]
        %v5493 = vld [vmem:[%s7 + $0x128] sm:$0xff]
        %v5494 = vld [vmem:[%s7 + $0x130] sm:$0xff]
        %v5495 = vld [vmem:[%s7 + $0x138] sm:$0xff]
        %v5496 = vld [vmem:[%s7 + $0x140] sm:$0xff]
        %v5497 = vld [vmem:[%s7 + $0x148] sm:$0xff]
        %v5498 = vld [vmem:[%s7 + $0x150] sm:$0xff]
        %v5499 = vld [vmem:[%s7 + $0x158] sm:$0xff]
        %v5500 = vld [vmem:[%s7 + $0x160] sm:$0xff]
        %v5501 = vld [vmem:[%s7 + $0x168] sm:$0xff]
        %v5502 = vld [vmem:[%s7 + $0x170] sm:$0xff]
        %v5503 = vld [vmem:[%s7 + $0x178] sm:$0xff]
        %v5504 = vld [vmem:[%s7 + $0x180] sm:$0xff]
        %v5505 = vld [vmem:[%s7 + $0x188] sm:$0xff]
        %v5506 = vld [vmem:[%s7 + $0x190] sm:$0xff]
        %v5507 = vld [vmem:[%s7 + $0x198] sm:$0xff]
        %v5508 = vld [vmem:[%s7 + $0x1a0] sm:$0xff]
        %v5509 = vld [vmem:[%s7 + $0x1a8] sm:$0xff]
        %v5510 = vld [vmem:[%s7 + $0x1b0] sm:$0xff]
        %v5511 = vld [vmem:[%s7 + $0x1b8] sm:$0xff]
        %v5512 = vld [vmem:[%s7 + $0x1c0] sm:$0xff]
        %v5513 = vld [vmem:[%s7 + $0x1c8] sm:$0xff]
        %v5514 = vld [vmem:[%s7 + $0x1d0] sm:$0xff]
        %v5515 = vld [vmem:[%s7 + $0x1d8] sm:$0xff]
        %v5516 = vld [vmem:[%s7 + $0x1e0] sm:$0xff]
        %v5517 = vld [vmem:[%s7 + $0x1e8] sm:$0xff]
        %v5518 = vld [vmem:[%s7 + $0x1f0] sm:$0xff]
        %v5519 = vld [vmem:[%s7 + $0x1f8] sm:$0xff]
        %v5520 = vld [vmem:[%s7 + $0x200] sm:$0xff]
        %v5521 = vld [vmem:[%s7 + $0x208] sm:$0xff]
        %v5522 = vld [vmem:[%s7 + $0x210] sm:$0xff]
        %v5523 = vld [vmem:[%s7 + $0x218] sm:$0xff]
        %v5524 = vld [vmem:[%s7 + $0x220] sm:$0xff]
        %v5525 = vld [vmem:[%s7 + $0x228] sm:$0xff]
        %v5526 = vld [vmem:[%s7 + $0x230] sm:$0xff]
        %v5527 = vld [vmem:[%s7 + $0x238] sm:$0xff]
        %v5528 = vld [vmem:[%s8] sm:$0x1]
        %v5561 = vrot.slane %v5424, 7
        %v5562 = vrot.slane %v5425, 7
        %v5563 = vsel %vm454, %v5561, %v5562
        %v5564 = vrot.slane %v5426, 7
        %v5565 = vrot.slane %v5427, 7
        %v5566 = vsel %vm454, %v5564, %v5565
        %v5567 = vrot.slane %v5428, 7
        %v5568 = vrot.slane %v5429, 7
        %v5569 = vsel %vm454, %v5567, %v5568
        %v5570 = vrot.slane %v5430, 7
        %v5571 = vrot.slane %v5431, 7
        %v5572 = vsel %vm454, %v5570, %v5571
        %v5573 = vrot.slane %v5432, 7
        %v5574 = vrot.slane %v5433, 7
        %v5575 = vsel %vm454, %v5573, %v5574
        %v5576 = vrot.slane %v5434, 7
        %v5577 = vrot.slane %v5435, 7
        %v5578 = vsel %vm454, %v5576, %v5577
        %v5579 = vrot.slane %v5436, 7
        %v5580 = vrot.slane %v5437, 7
        %v5581 = vsel %vm454, %v5579, %v5580
        %v5582 = vrot.slane %v5438, 7
        %v5583 = vrot.slane %v5439, 7
        %v5584 = vsel %vm454, %v5582, %v5583
        %v5585 = vrot.slane %v5440, 7
        %v5586 = vrot.slane %v5441, 7
        %v5587 = vsel %vm454, %v5585, %v5586
        %v5588 = vrot.slane %v5442, 7
        %v5589 = vrot.slane %v5443, 7
        %v5590 = vsel %vm454, %v5588, %v5589
        %v5591 = vrot.slane %v5444, 7
        %v5592 = vrot.slane %v5445, 7
        %v5593 = vsel %vm454, %v5591, %v5592
        %v5594 = vrot.slane %v5446, 7
        %v5595 = vrot.slane %v5447, 7
        %v5596 = vsel %vm454, %v5594, %v5595
        %v5597 = vrot.slane %v5448, 7
        %v5598 = vrot.slane %v5449, 7
        %v5599 = vsel %vm454, %v5597, %v5598
        %v5600 = vrot.slane %v5450, 7
        %v5601 = vrot.slane %v5451, 7
        %v5602 = vsel %vm454, %v5600, %v5601
        %v5603 = vrot.slane %v5452, 7
        %v5604 = vrot.slane %v5453, 7
        %v5605 = vsel %vm454, %v5603, %v5604
        %v5606 = vrot.slane %v5454, 7
        %v5607 = vrot.slane %v5455, 7
        %v5608 = vsel %vm454, %v5606, %v5607
        %v5657 = vsel %vm454, 0.0, %v5561
        %v5658 = vsel %vm454, 0.0, %v5564
        %v5659 = vsel %vm454, 0.0, %v5567
        %v5660 = vsel %vm454, 0.0, %v5570
        %v5661 = vsel %vm454, 0.0, %v5573
        %v5662 = vsel %vm454, 0.0, %v5576
        %v5663 = vsel %vm454, 0.0, %v5579
        %v5664 = vsel %vm454, 0.0, %v5582
        %v5665 = vsel %vm454, 0.0, %v5585
        %v5666 = vsel %vm454, 0.0, %v5588
        %v5667 = vsel %vm454, 0.0, %v5591
        %v5668 = vsel %vm454, 0.0, %v5594
        %v5669 = vsel %vm454, 0.0, %v5597
        %v5670 = vsel %vm454, 0.0, %v5600
        %v5671 = vsel %vm454, 0.0, %v5603
        %v5672 = vsel %vm454, 0.0, %v5606
        %v5673 = vsel %vm454, %v5562, 0.0
        %v5674 = vsel %vm454, %v5565, 0.0
        %v5675 = vsel %vm454, %v5568, 0.0
        %v5676 = vsel %vm454, %v5571, 0.0
        %v5677 = vsel %vm454, %v5574, 0.0
        %v5678 = vsel %vm454, %v5577, 0.0
        %v5679 = vsel %vm454, %v5580, 0.0
        %v5680 = vsel %vm454, %v5583, 0.0
        %v5681 = vsel %vm454, %v5586, 0.0
        %v5682 = vsel %vm454, %v5589, 0.0
        %v5683 = vsel %vm454, %v5592, 0.0
        %v5684 = vsel %vm454, %v5595, 0.0
        %v5685 = vsel %vm454, %v5598, 0.0
        %v5686 = vsel %vm454, %v5601, 0.0
        %v5687 = vsel %vm454, %v5604, 0.0
        %v5688 = vsel %vm454, %v5607, 0.0
        %v5719 = vrot.slane %v5657, 1
        %v5720 = vrot.slane %v5563, 1
        %v5721 = vsel %vm613, %v5719, %v5720
        %v5722 = vrot.slane %v5673, 1
        %v5723 = vsel %vm613, %v5720, %v5722
        %v5724 = vrot.slane %v5658, 1
        %v5725 = vrot.slane %v5566, 1
        %v5726 = vsel %vm613, %v5724, %v5725
        %v5727 = vrot.slane %v5674, 1
        %v5728 = vsel %vm613, %v5725, %v5727
        %v5729 = vrot.slane %v5659, 1
        %v5730 = vrot.slane %v5569, 1
        %v5731 = vsel %vm613, %v5729, %v5730
        %v5732 = vrot.slane %v5675, 1
        %v5733 = vsel %vm613, %v5730, %v5732
        %v5734 = vrot.slane %v5660, 1
        %v5735 = vrot.slane %v5572, 1
        %v5736 = vsel %vm613, %v5734, %v5735
        %v5737 = vrot.slane %v5676, 1
        %v5738 = vsel %vm613, %v5735, %v5737
        %v5739 = vrot.slane %v5661, 1
        %v5740 = vrot.slane %v5575, 1
        %v5741 = vsel %vm613, %v5739, %v5740
        %v5742 = vrot.slane %v5677, 1
        %v5743 = vsel %vm613, %v5740, %v5742
        %v5744 = vrot.slane %v5662, 1
        %v5745 = vrot.slane %v5578, 1
        %v5746 = vsel %vm613, %v5744, %v5745
        %v5747 = vrot.slane %v5678, 1
        %v5748 = vsel %vm613, %v5745, %v5747
        %v5749 = vrot.slane %v5663, 1
        %v5750 = vrot.slane %v5581, 1
        %v5751 = vsel %vm613, %v5749, %v5750
        %v5752 = vrot.slane %v5679, 1
        %v5753 = vsel %vm613, %v5750, %v5752
        %v5754 = vrot.slane %v5664, 1
        %v5755 = vrot.slane %v5584, 1
        %v5756 = vsel %vm613, %v5754, %v5755
        %v5757 = vrot.slane %v5680, 1
        %v5758 = vsel %vm613, %v5755, %v5757
        %v5759 = vrot.slane %v5665, 1
        %v5760 = vrot.slane %v5587, 1
        %v5761 = vsel %vm613, %v5759, %v5760
        %v5762 = vrot.slane %v5681, 1
        %v5763 = vsel %vm613, %v5760, %v5762
        %v5764 = vrot.slane %v5666, 1
        %v5765 = vrot.slane %v5590, 1
        %v5766 = vsel %vm613, %v5764, %v5765
        %v5767 = vrot.slane %v5682, 1
        %v5768 = vsel %vm613, %v5765, %v5767
        %v5769 = vrot.slane %v5667, 1
        %v5770 = vrot.slane %v5593, 1
        %v5771 = vsel %vm613, %v5769, %v5770
        %v5772 = vrot.slane %v5683, 1
        %v5773 = vsel %vm613, %v5770, %v5772
        %v5774 = vrot.slane %v5668, 1
        %v5775 = vrot.slane %v5596, 1
        %v5776 = vsel %vm613, %v5774, %v5775
        %v5777 = vrot.slane %v5684, 1
        %v5778 = vsel %vm613, %v5775, %v5777
        %v5779 = vrot.slane %v5669, 1
        %v5780 = vrot.slane %v5599, 1
        %v5781 = vsel %vm613, %v5779, %v5780
        %v5782 = vrot.slane %v5685, 1
        %v5783 = vsel %vm613, %v5780, %v5782
        %v5784 = vrot.slane %v5670, 1
        %v5785 = vrot.slane %v5602, 1
        %v5786 = vsel %vm613, %v5784, %v5785
        %v5787 = vrot.slane %v5686, 1
        %v5788 = vsel %vm613, %v5785, %v5787
        %v5789 = vrot.slane %v5671, 1
        %v5790 = vrot.slane %v5605, 1
        %v5791 = vsel %vm613, %v5789, %v5790
        %v5792 = vrot.slane %v5687, 1
        %v5793 = vsel %vm613, %v5790, %v5792
        %v5794 = vrot.slane %v5657, 2
        %v5795 = vrot.slane %v5563, 2
        %v5796 = vsel %vm691, %v5794, %v5795
        %v5797 = vrot.slane %v5673, 2
        %v5798 = vsel %vm691, %v5795, %v5797
        %v5799 = vrot.slane %v5658, 2
        %v5800 = vrot.slane %v5566, 2
        %v5801 = vsel %vm691, %v5799, %v5800
        %v5802 = vrot.slane %v5674, 2
        %v5803 = vsel %vm691, %v5800, %v5802
        %v5804 = vrot.slane %v5659, 2
        %v5805 = vrot.slane %v5569, 2
        %v5806 = vsel %vm691, %v5804, %v5805
        %v5807 = vrot.slane %v5675, 2
        %v5808 = vsel %vm691, %v5805, %v5807
        %v5809 = vrot.slane %v5660, 2
        %v5810 = vrot.slane %v5572, 2
        %v5811 = vsel %vm691, %v5809, %v5810
        %v5812 = vrot.slane %v5676, 2
        %v5813 = vsel %vm691, %v5810, %v5812
        %v5814 = vrot.slane %v5661, 2
        %v5815 = vrot.slane %v5575, 2
        %v5816 = vsel %vm691, %v5814, %v5815
        %v5817 = vrot.slane %v5677, 2
        %v5818 = vsel %vm691, %v5815, %v5817
        %v5819 = vrot.slane %v5662, 2
        %v5820 = vrot.slane %v5578, 2
        %v5821 = vsel %vm691, %v5819, %v5820
        %v5822 = vrot.slane %v5678, 2
        %v5823 = vsel %vm691, %v5820, %v5822
        %v5824 = vrot.slane %v5663, 2
        %v5825 = vrot.slane %v5581, 2
        %v5826 = vsel %vm691, %v5824, %v5825
        %v5827 = vrot.slane %v5679, 2
        %v5828 = vsel %vm691, %v5825, %v5827
        %v5829 = vrot.slane %v5664, 2
        %v5830 = vrot.slane %v5584, 2
        %v5831 = vsel %vm691, %v5829, %v5830
        %v5832 = vrot.slane %v5680, 2
        %v5833 = vsel %vm691, %v5830, %v5832
        %v5834 = vrot.slane %v5665, 2
        %v5835 = vrot.slane %v5587, 2
        %v5836 = vsel %vm691, %v5834, %v5835
        %v5837 = vrot.slane %v5681, 2
        %v5838 = vsel %vm691, %v5835, %v5837
        %v5839 = vrot.slane %v5666, 2
        %v5840 = vrot.slane %v5590, 2
        %v5841 = vsel %vm691, %v5839, %v5840
        %v5842 = vrot.slane %v5682, 2
        %v5843 = vsel %vm691, %v5840, %v5842
        %v5844 = vrot.slane %v5667, 2
        %v5845 = vrot.slane %v5593, 2
        %v5846 = vsel %vm691, %v5844, %v5845
        %v5847 = vrot.slane %v5683, 2
        %v5848 = vsel %vm691, %v5845, %v5847
        %v5849 = vrot.slane %v5668, 2
        %v5850 = vrot.slane %v5596, 2
        %v5851 = vsel %vm691, %v5849, %v5850
        %v5852 = vrot.slane %v5684, 2
        %v5853 = vsel %vm691, %v5850, %v5852
        %v5854 = vrot.slane %v5669, 2
        %v5855 = vrot.slane %v5599, 2
        %v5856 = vsel %vm691, %v5854, %v5855
        %v5857 = vrot.slane %v5685, 2
        %v5858 = vsel %vm691, %v5855, %v5857
        %v5859 = vrot.slane %v5670, 2
        %v5860 = vrot.slane %v5602, 2
        %v5861 = vsel %vm691, %v5859, %v5860
        %v5862 = vrot.slane %v5686, 2
        %v5863 = vsel %vm691, %v5860, %v5862
        %v5864 = vrot.slane %v5671, 2
        %v5865 = vrot.slane %v5605, 2
        %v5866 = vsel %vm691, %v5864, %v5865
        %v5867 = vrot.slane %v5687, 2
        %v5868 = vsel %vm691, %v5865, %v5867
        %v5901 = vrot.slane %v5672, 1
        %v5902 = vrot.slane %v5608, 1
        %v5903 = vsel %vm613, %v5901, %v5902
        %v5904 = vrot.slane %v5688, 1
        %v5905 = vsel %vm613, %v5902, %v5904
        %v5938 = vrot.slane %v5672, 2
        %v5939 = vrot.slane %v5608, 2
        %v5940 = vsel %vm691, %v5938, %v5939
        %v5941 = vrot.slane %v5688, 2
        %v5942 = vsel %vm691, %v5939, %v5941
        %5943 = vrot.lane.b32.xlu0 %v5721, 64
        %v5944 = vpop.permute.xlu0 %5943
        %5945 = vrot.lane.b32.xlu0 %v5723, 64
        %v5946 = vpop.permute.xlu0 %5945
        %5947 = vrot.lane.b32.xlu0 %v5726, 64
        %v5948 = vpop.permute.xlu0 %5947
        %5949 = vrot.lane.b32.xlu0 %v5728, 64
        %v5950 = vpop.permute.xlu0 %5949
        %5951 = vrot.lane.b32.xlu0 %v5731, 64
        %v5952 = vpop.permute.xlu0 %5951
        %5953 = vrot.lane.b32.xlu0 %v5733, 64
        %v5954 = vpop.permute.xlu0 %5953
        %5955 = vrot.lane.b32.xlu0 %v5736, 64
        %v5956 = vpop.permute.xlu0 %5955
        %5957 = vrot.lane.b32.xlu0 %v5738, 64
        %v5958 = vpop.permute.xlu0 %5957
        %5959 = vrot.lane.b32.xlu0 %v5741, 64
        %v5960 = vpop.permute.xlu0 %5959
        %5961 = vrot.lane.b32.xlu0 %v5743, 64
        %v5962 = vpop.permute.xlu0 %5961
        %5963 = vrot.lane.b32.xlu0 %v5746, 64
        %v5964 = vpop.permute.xlu0 %5963
        %5965 = vrot.lane.b32.xlu0 %v5748, 64
        %v5966 = vpop.permute.xlu0 %5965
        %5967 = vrot.lane.b32.xlu0 %v5751, 64
        %v5968 = vpop.permute.xlu0 %5967
        %5969 = vrot.lane.b32.xlu0 %v5753, 64
        %v5970 = vpop.permute.xlu0 %5969
        %5971 = vrot.lane.b32.xlu0 %v5756, 64
        %v5972 = vpop.permute.xlu0 %5971
        %5973 = vrot.lane.b32.xlu0 %v5758, 64
        %v5974 = vpop.permute.xlu0 %5973
        %5975 = vrot.lane.b32.xlu0 %v5761, 64
        %v5976 = vpop.permute.xlu0 %5975
        %5977 = vrot.lane.b32.xlu0 %v5763, 64
        %v5978 = vpop.permute.xlu0 %5977
        %5979 = vrot.lane.b32.xlu0 %v5766, 64
        %v5980 = vpop.permute.xlu0 %5979
        %5981 = vrot.lane.b32.xlu0 %v5768, 64
        %v5982 = vpop.permute.xlu0 %5981
        %5983 = vrot.lane.b32.xlu0 %v5771, 64
        %v5984 = vpop.permute.xlu0 %5983
        %5985 = vrot.lane.b32.xlu0 %v5773, 64
        %v5986 = vpop.permute.xlu0 %5985
        %5987 = vrot.lane.b32.xlu0 %v5776, 64
        %v5988 = vpop.permute.xlu0 %5987
        %5989 = vrot.lane.b32.xlu0 %v5778, 64
        %v5990 = vpop.permute.xlu0 %5989
        %5991 = vrot.lane.b32.xlu0 %v5781, 64
        %v5992 = vpop.permute.xlu0 %5991
        %5993 = vrot.lane.b32.xlu0 %v5783, 64
        %v5994 = vpop.permute.xlu0 %5993
        %5995 = vrot.lane.b32.xlu0 %v5786, 64
        %v5996 = vpop.permute.xlu0 %5995
        %5997 = vrot.lane.b32.xlu0 %v5788, 64
        %v5998 = vpop.permute.xlu0 %5997
        %5999 = vrot.lane.b32.xlu0 %v5791, 64
        %v6000 = vpop.permute.xlu0 %5999
        %6001 = vrot.lane.b32.xlu0 %v5793, 64
        %v6002 = vpop.permute.xlu0 %6001
        %6033 = vrot.lane.b32.xlu0 %v5657, 64
        %v6034 = vpop.permute.xlu0 %6033
        %6035 = vrot.lane.b32.xlu0 %v5563, 64
        %v6036 = vpop.permute.xlu0 %6035
        %6037 = vrot.lane.b32.xlu0 %v5658, 64
        %v6038 = vpop.permute.xlu0 %6037
        %6039 = vrot.lane.b32.xlu0 %v5566, 64
        %v6040 = vpop.permute.xlu0 %6039
        %6041 = vrot.lane.b32.xlu0 %v5659, 64
        %v6042 = vpop.permute.xlu0 %6041
        %6043 = vrot.lane.b32.xlu0 %v5569, 64
        %v6044 = vpop.permute.xlu0 %6043
        %6045 = vrot.lane.b32.xlu0 %v5660, 64
        %v6046 = vpop.permute.xlu0 %6045
        %6047 = vrot.lane.b32.xlu0 %v5572, 64
        %v6048 = vpop.permute.xlu0 %6047
        %6049 = vrot.lane.b32.xlu0 %v5661, 64
        %v6050 = vpop.permute.xlu0 %6049
        %6051 = vrot.lane.b32.xlu0 %v5575, 64
        %v6052 = vpop.permute.xlu0 %6051
        %6053 = vrot.lane.b32.xlu0 %v5662, 64
        %v6054 = vpop.permute.xlu0 %6053
        %6055 = vrot.lane.b32.xlu0 %v5578, 64
        %v6056 = vpop.permute.xlu0 %6055
        %6057 = vrot.lane.b32.xlu0 %v5663, 64
        %v6058 = vpop.permute.xlu0 %6057
        %6059 = vrot.lane.b32.xlu0 %v5581, 64
        %v6060 = vpop.permute.xlu0 %6059
        %6061 = vrot.lane.b32.xlu0 %v5664, 64
        %v6062 = vpop.permute.xlu0 %6061
        %6063 = vrot.lane.b32.xlu0 %v5584, 64
        %v6064 = vpop.permute.xlu0 %6063
        %6065 = vrot.lane.b32.xlu0 %v5665, 64
        %v6066 = vpop.permute.xlu0 %6065
        %6067 = vrot.lane.b32.xlu0 %v5587, 64
        %v6068 = vpop.permute.xlu0 %6067
        %6069 = vrot.lane.b32.xlu0 %v5666, 64
        %v6070 = vpop.permute.xlu0 %6069
        %6071 = vrot.lane.b32.xlu0 %v5590, 64
        %v6072 = vpop.permute.xlu0 %6071
        %6073 = vrot.lane.b32.xlu0 %v5667, 64
        %v6074 = vpop.permute.xlu0 %6073
        %6075 = vrot.lane.b32.xlu0 %v5593, 64
        %v6076 = vpop.permute.xlu0 %6075
        %6077 = vrot.lane.b32.xlu0 %v5668, 64
        %v6078 = vpop.permute.xlu0 %6077
        %6079 = vrot.lane.b32.xlu0 %v5596, 64
        %v6080 = vpop.permute.xlu0 %6079
        %6081 = vrot.lane.b32.xlu0 %v5669, 64
        %v6082 = vpop.permute.xlu0 %6081
        %6083 = vrot.lane.b32.xlu0 %v5599, 64
        %v6084 = vpop.permute.xlu0 %6083
        %6085 = vrot.lane.b32.xlu0 %v5670, 64
        %v6086 = vpop.permute.xlu0 %6085
        %6087 = vrot.lane.b32.xlu0 %v5602, 64
        %v6088 = vpop.permute.xlu0 %6087
        %6089 = vrot.lane.b32.xlu0 %v5671, 64
        %v6090 = vpop.permute.xlu0 %6089
        %6091 = vrot.lane.b32.xlu0 %v5605, 64
        %v6092 = vpop.permute.xlu0 %6091
        %6093 = vrot.lane.b32.xlu0 %v5672, 64
        %v6094 = vpop.permute.xlu0 %6093
        %6095 = vrot.lane.b32.xlu0 %v5608, 64
        %v6096 = vpop.permute.xlu0 %6095
        %6129 = vrot.lane.b32.xlu0 %v5796, 64
        %v6130 = vpop.permute.xlu0 %6129
        %6131 = vrot.lane.b32.xlu0 %v5798, 64
        %v6132 = vpop.permute.xlu0 %6131
        %6133 = vrot.lane.b32.xlu0 %v5801, 64
        %v6134 = vpop.permute.xlu0 %6133
        %6135 = vrot.lane.b32.xlu0 %v5803, 64
        %v6136 = vpop.permute.xlu0 %6135
        %6137 = vrot.lane.b32.xlu0 %v5806, 64
        %v6138 = vpop.permute.xlu0 %6137
        %6139 = vrot.lane.b32.xlu0 %v5808, 64
        %v6140 = vpop.permute.xlu0 %6139
        %6141 = vrot.lane.b32.xlu0 %v5811, 64
        %v6142 = vpop.permute.xlu0 %6141
        %6143 = vrot.lane.b32.xlu0 %v5813, 64
        %v6144 = vpop.permute.xlu0 %6143
        %6145 = vrot.lane.b32.xlu0 %v5816, 64
        %v6146 = vpop.permute.xlu0 %6145
        %6147 = vrot.lane.b32.xlu0 %v5818, 64
        %v6148 = vpop.permute.xlu0 %6147
        %6149 = vrot.lane.b32.xlu0 %v5821, 64
        %v6150 = vpop.permute.xlu0 %6149
        %6151 = vrot.lane.b32.xlu0 %v5823, 64
        %v6152 = vpop.permute.xlu0 %6151
        %6153 = vrot.lane.b32.xlu0 %v5826, 64
        %v6154 = vpop.permute.xlu0 %6153
        %6155 = vrot.lane.b32.xlu0 %v5828, 64
        %v6156 = vpop.permute.xlu0 %6155
        %6157 = vrot.lane.b32.xlu0 %v5831, 64
        %v6158 = vpop.permute.xlu0 %6157
        %6159 = vrot.lane.b32.xlu0 %v5833, 64
        %v6160 = vpop.permute.xlu0 %6159
        %6161 = vrot.lane.b32.xlu0 %v5836, 64
        %v6162 = vpop.permute.xlu0 %6161
        %6163 = vrot.lane.b32.xlu0 %v5838, 64
        %v6164 = vpop.permute.xlu0 %6163
        %6165 = vrot.lane.b32.xlu0 %v5841, 64
        %v6166 = vpop.permute.xlu0 %6165
        %6167 = vrot.lane.b32.xlu0 %v5843, 64
        %v6168 = vpop.permute.xlu0 %6167
        %6169 = vrot.lane.b32.xlu0 %v5846, 64
        %v6170 = vpop.permute.xlu0 %6169
        %6171 = vrot.lane.b32.xlu0 %v5848, 64
        %v6172 = vpop.permute.xlu0 %6171
        %6173 = vrot.lane.b32.xlu0 %v5851, 64
        %v6174 = vpop.permute.xlu0 %6173
        %6175 = vrot.lane.b32.xlu0 %v5853, 64
        %v6176 = vpop.permute.xlu0 %6175
        %6177 = vrot.lane.b32.xlu0 %v5856, 64
        %v6178 = vpop.permute.xlu0 %6177
        %6179 = vrot.lane.b32.xlu0 %v5858, 64
        %v6180 = vpop.permute.xlu0 %6179
        %6181 = vrot.lane.b32.xlu0 %v5861, 64
        %v6182 = vpop.permute.xlu0 %6181
        %6183 = vrot.lane.b32.xlu0 %v5863, 64
        %v6184 = vpop.permute.xlu0 %6183
        %6185 = vrot.lane.b32.xlu0 %v5866, 64
        %v6186 = vpop.permute.xlu0 %6185
        %6187 = vrot.lane.b32.xlu0 %v5868, 64
        %v6188 = vpop.permute.xlu0 %6187
        %6189 = vrot.lane.b32.xlu0 %v5940, 64
        %v6190 = vpop.permute.xlu0 %6189
        %6191 = vrot.lane.b32.xlu0 %v5942, 64
        %v6192 = vpop.permute.xlu0 %6191
        %6225 = vrot.lane.b32.xlu0 %v5903, 64
        %v6226 = vpop.permute.xlu0 %6225
        %6227 = vrot.lane.b32.xlu0 %v5905, 64
        %v6228 = vpop.permute.xlu0 %6227
        %v6231 = vsel %vm2939, %v5657, %v5944
        %v6232 = vsel %vm2939, %v5563, %v5946
        %v6233 = vsel %vm2939, %v5658, %v5948
        %v6234 = vsel %vm2939, %v5566, %v5950
        %v6235 = vsel %vm2939, %v5659, %v5952
        %v6236 = vsel %vm2939, %v5569, %v5954
        %v6237 = vsel %vm2939, %v5660, %v5956
        %v6238 = vsel %vm2939, %v5572, %v5958
        %v6239 = vsel %vm2939, %v5661, %v5960
        %v6240 = vsel %vm2939, %v5575, %v5962
        %v6241 = vsel %vm2939, %v5662, %v5964
        %v6242 = vsel %vm2939, %v5578, %v5966
        %v6243 = vsel %vm2939, %v5663, %v5968
        %v6244 = vsel %vm2939, %v5581, %v5970
        %v6245 = vsel %vm2939, %v5664, %v5972
        %v6246 = vsel %vm2939, %v5584, %v5974
        %v6247 = vsel %vm2939, %v5665, %v5976
        %v6248 = vsel %vm2939, %v5587, %v5978
        %v6249 = vsel %vm2939, %v5666, %v5980
        %v6250 = vsel %vm2939, %v5590, %v5982
        %v6251 = vsel %vm2939, %v5667, %v5984
        %v6252 = vsel %vm2939, %v5593, %v5986
        %v6253 = vsel %vm2939, %v5668, %v5988
        %v6254 = vsel %vm2939, %v5596, %v5990
        %v6255 = vsel %vm2939, %v5669, %v5992
        %v6256 = vsel %vm2939, %v5599, %v5994
        %v6257 = vsel %vm2939, %v5670, %v5996
        %v6258 = vsel %vm2939, %v5602, %v5998
        %v6259 = vsel %vm2939, %v5671, %v6000
        %v6260 = vsel %vm2939, %v5605, %v6002
        %v6261 = vsel %vm2939, %v693, %v6034
        %v6262 = vsel %vm2939, %v693, %v6036
        %v6263 = vsel %vm2939, %v5796, %v6038
        %v6264 = vsel %vm2939, %v5798, %v6040
        %v6265 = vsel %vm2939, %v5801, %v6042
        %v6266 = vsel %vm2939, %v5803, %v6044
        %v6267 = vsel %vm2939, %v5806, %v6046
        %v6268 = vsel %vm2939, %v5808, %v6048
        %v6269 = vsel %vm2939, %v5811, %v6050
        %v6270 = vsel %vm2939, %v5813, %v6052
        %v6271 = vsel %vm2939, %v5816, %v6054
        %v6272 = vsel %vm2939, %v5818, %v6056
        %v6273 = vsel %vm2939, %v5821, %v6058
        %v6274 = vsel %vm2939, %v5823, %v6060
        %v6275 = vsel %vm2939, %v5826, %v6062
        %v6276 = vsel %vm2939, %v5828, %v6064
        %v6277 = vsel %vm2939, %v5831, %v6066
        %v6278 = vsel %vm2939, %v5833, %v6068
        %v6279 = vsel %vm2939, %v5836, %v6070
        %v6280 = vsel %vm2939, %v5838, %v6072
        %v6281 = vsel %vm2939, %v5841, %v6074
        %v6282 = vsel %vm2939, %v5843, %v6076
        %v6283 = vsel %vm2939, %v5846, %v6078
        %v6284 = vsel %vm2939, %v5848, %v6080
        %v6285 = vsel %vm2939, %v5851, %v6082
        %v6286 = vsel %vm2939, %v5853, %v6084
        %v6287 = vsel %vm2939, %v5856, %v6086
        %v6288 = vsel %vm2939, %v5858, %v6088
        %v6289 = vsel %vm2939, %v5861, %v6090
        %v6290 = vsel %vm2939, %v5863, %v6092
        %v6291 = vsel %vm2939, %v5866, %v6094
        %v6292 = vsel %vm2939, %v5868, %v6096
        %v6293 = vsel %vm2939, %v5721, %v6130
        %v6294 = vsel %vm2939, %v5723, %v6132
        %v6295 = vsel %vm2939, %v5726, %v6134
        %v6296 = vsel %vm2939, %v5728, %v6136
        %v6297 = vsel %vm2939, %v5731, %v6138
        %v6298 = vsel %vm2939, %v5733, %v6140
        %v6299 = vsel %vm2939, %v5736, %v6142
        %v6300 = vsel %vm2939, %v5738, %v6144
        %v6301 = vsel %vm2939, %v5741, %v6146
        %v6302 = vsel %vm2939, %v5743, %v6148
        %v6303 = vsel %vm2939, %v5746, %v6150
        %v6304 = vsel %vm2939, %v5748, %v6152
        %v6305 = vsel %vm2939, %v5751, %v6154
        %v6306 = vsel %vm2939, %v5753, %v6156
        %v6307 = vsel %vm2939, %v5756, %v6158
        %v6308 = vsel %vm2939, %v5758, %v6160
        %v6309 = vsel %vm2939, %v5761, %v6162
        %v6310 = vsel %vm2939, %v5763, %v6164
        %v6311 = vsel %vm2939, %v5766, %v6166
        %v6312 = vsel %vm2939, %v5768, %v6168
        %v6313 = vsel %vm2939, %v5771, %v6170
        %v6314 = vsel %vm2939, %v5773, %v6172
        %v6315 = vsel %vm2939, %v5776, %v6174
        %v6316 = vsel %vm2939, %v5778, %v6176
        %v6317 = vsel %vm2939, %v5781, %v6178
        %v6318 = vsel %vm2939, %v5783, %v6180
        %v6319 = vsel %vm2939, %v5786, %v6182
        %v6320 = vsel %vm2939, %v5788, %v6184
        %v6321 = vsel %vm2939, %v5791, %v6186
        %v6322 = vsel %vm2939, %v5793, %v6188
        %v6323 = vsel %vm2939, %v5903, %v6190
        %v6324 = vsel %vm2939, %v5905, %v6192
        %v6325 = vsel %vm2939, %v5672, %v6226
        %v6326 = vsel %vm2939, %v5608, %v6228
        %v6328 = vlaneseq
        %v6329 = vshrl.u32 %v6328, 7
        %v6330 = vsub.s32 0, %v6329
        %v6331 = vrot.slane %v5528, %v6330
        %v6333 = vsel %vm2939, %v5801, 0
        %v6335 = vsel %vm2939, %v5803, 0
        %v6337 = vsel %vm2939, %v5806, 0
        %v6339 = vsel %vm2939, %v5808, 0
        %v6341 = vsel %vm2939, %v5811, 0
        %v6343 = vsel %vm2939, %v5813, 0
        %v6345 = vsel %vm2939, %v5816, 0
        %v6347 = vsel %vm2939, %v5818, 0
        %v6349 = vsel %vm2939, %v5821, 0
        %v6351 = vsel %vm2939, %v5823, 0
        %v6353 = vsel %vm2939, %v5826, 0
        %v6355 = vsel %vm2939, %v5828, 0
        %v6357 = vsel %vm2939, %v5831, 0
        %v6359 = vsel %vm2939, %v5833, 0
        %v6361 = vsel %vm2939, %v5836, 0
        %v6363 = vsel %vm2939, %v5838, 0
        %v6365 = vsel %vm2939, %v5841, 0
        %v6367 = vsel %vm2939, %v5843, 0
        %v6369 = vsel %vm2939, %v5846, 0
        %v6371 = vsel %vm2939, %v5848, 0
        %v6373 = vsel %vm2939, %v5851, 0
        %v6375 = vsel %vm2939, %v5853, 0
        %v6377 = vsel %vm2939, %v5856, 0
        %v6379 = vsel %vm2939, %v5858, 0
        %v6381 = vsel %vm2939, %v5861, 0
        %v6383 = vsel %vm2939, %v5863, 0
        %v6385 = vsel %vm2939, %v5866, 0
        %v6387 = vsel %vm2939, %v5868, 0
        %v6389 = vsel %vm2939, %v5940, 0
        %v6391 = vsel %vm2939, %v5942, 0
        %6393 = vmatprep.subr.mxu0 0.0
        %6394 = vmatpush1.msra.mxu0 %v5456
        %6395 = vmatprep.subr.mxu0 0.0
        %6396 = vmatpush1.msra.mxu0 %v5457
        %6397 = vmatprep.subr.mxu0 0.0
        %6398 = vmatpush1.msra.mxu0 %v5458
        %6399 = vmatprep.subr.mxu0 0.0
        %6400 = vmatpush1.msra.mxu0 %v5459
        %6401 = vmatprep.subr.mxu0 0.0
        %6402 = vmatpush1.msra.mxu0 %v5460
        %6403 = vmatprep.subr.mxu0 0.0
        %6404 = vmatpush1.msra.mxu0 %v5461
        %6405 = vmatprep.subr.mxu0 0.0
        %6406 = vmatpush1.msra.mxu0 %v5462
        %6407 = vmatprep.subr.mxu0 0.0
        %6408 = vmatpush1.msra.mxu0 %v5463
        %6409 = vmatprep.subr.mxu0 0.0
        %6410 = vmatpush1.msra.mxu0 %v5464
        %6411 = vmatprep.subr.mxu0 0.0
        %6412 = vmatpush1.msra.mxu0 %v5465
        %6413 = vmatprep.subr.mxu0 0.0
        %6414 = vmatpush1.msra.mxu0 %v5466
        %6415 = vmatprep.subr.mxu0 0.0
        %6416 = vmatpush1.msra.mxu0 %v5467
        %6417 = vmatprep.subr.mxu0 0.0
        %6418 = vmatpush1.msra.mxu0 %v5468
        %6419 = vmatprep.subr.mxu0 0.0
        %6420 = vmatpush1.msra.mxu0 %v5469
        %6421 = vmatprep.subr.mxu0 0.0
        %6422 = vmatpush1.msra.mxu0 %v5470
        %6423 = vmatprep.subr.mxu0 0.0
        %6424 = vmatpush1.msra.mxu0 %v5471
        %6425 = vmatprep.subr.mxu0 0.0
        %6426 = vmatpush1.msra.mxu0 %v5472
        %6427 = vmatprep.subr.mxu0 0.0
        %6428 = vmatpush1.msra.mxu0 %v5473
        %6429 = vmatprep.subr.mxu0 0.0
        %6430 = vmatpush1.msra.mxu0 %v5474
        %6431 = vmatprep.subr.mxu0 0.0
        %6432 = vmatpush1.msra.mxu0 %v5475
        %6433 = vmatprep.subr.mxu0 0.0
        %6434 = vmatpush1.msra.mxu0 %v5476
        %6435 = vmatprep.subr.mxu0 0.0
        %6436 = vmatpush1.msra.mxu0 %v5477
        %6437 = vmatprep.subr.mxu0 0.0
        %6438 = vmatpush1.msra.mxu0 %v5478
        %6439 = vmatprep.subr.mxu0 0.0
        %6440 = vmatpush1.msra.mxu0 %v5479
        %6441 = vmatprep.subr.mxu0 0.0
        %6442 = vmatpush1.msra.mxu0 %v5480
        %6443 = vmatprep.subr.mxu0 0.0
        %6444 = vmatpush1.msra.mxu0 %v5481
        %6445 = vmatprep.subr.mxu0 0.0
        %6446 = vmatpush1.msra.mxu0 %v5482
        %6447 = vmatprep.subr.mxu0 0.0
        %6448 = vmatpush1.msra.mxu0 %v5483
        %6449 = vmatprep.subr.mxu0 0.0
        %6450 = vmatpush1.msra.mxu0 %v5484
        %6451 = vmatprep.subr.mxu0 0.0
        %6452 = vmatpush1.msra.mxu0 %v5485
        %6453 = vmatprep.subr.mxu0 0.0
        %6454 = vmatpush1.msra.mxu0 %v5486
        %6455 = vmatprep.subr.mxu0 0.0
        %6456 = vmatpush1.msra.mxu0 %v5487
        %6457 = vmatprep.mubr.f32.mxu0 %v6261
        %6458 = vmatmul.mubr.f32.gmra.mrb[0].mxu0 %v2940
        %v6459 = vpop.f32.mrb[0].mxu0
        %v6460 = vadd.f32 %v6331, %v6459
        %v6461 = vpop.f32.mrb[0].mxu0
        %6462 = vmatprep.mubr.f32.mxu0 %v6262
        %6463 = vmatmul.mubr.f32.gmra.mrb[0].mxu0 %v2940
        %v6464 = vpop.f32.mrb[0].mxu0
        %v6465 = vadd.f32 %v6331, %v6464
        %v6466 = vpop.f32.mrb[0].mxu0
        %6467 = vmatprep.mubr.f32.mxu0 %v6263
        %6468 = vmatmul.mubr.f32.gmra.mrb[0].mxu0 %v6231
        %v6469 = vpop.f32.mrb[0].mxu0
        %v6470 = vadd.f32 %v6331, %v6469
        %v6471 = vpop.f32.mrb[0].mxu0
        %6472 = vmatprep.mubr.f32.mxu0 %v6264
        %6473 = vmatmul.mubr.f32.gmra.mrb[0].mxu0 %v6232
        %v6474 = vpop.f32.mrb[0].mxu0
        %v6475 = vadd.f32 %v6331, %v6474
        %v6476 = vpop.f32.mrb[0].mxu0
        %6477 = vmatprep.mubr.f32.mxu0 %v6265
        %6478 = vmatmul.mubr.f32.gmra.mrb[0].mxu0 %v6233
        %v6479 = vpop.f32.mrb[0].mxu0
        %v6480 = vadd.f32 %v6331, %v6479
        %v6481 = vpop.f32.mrb[0].mxu0
        %6482 = vmatprep.mubr.f32.mxu0 %v6266
        %6483 = vmatmul.mubr.f32.gmra.mrb[0].mxu0 %v6234
        %v6484 = vpop.f32.mrb[0].mxu0
        %v6485 = vadd.f32 %v6331, %v6484
        %v6486 = vpop.f32.mrb[0].mxu0
        %6487 = vmatprep.mubr.f32.mxu0 %v6267
        %6488 = vmatmul.mubr.f32.gmra.mrb[0].mxu0 %v6235
        %v6489 = vpop.f32.mrb[0].mxu0
        %v6490 = vadd.f32 %v6331, %v6489
        %v6491 = vpop.f32.mrb[0].mxu0
        %6492 = vmatprep.mubr.f32.mxu0 %v6268
        %6493 = vmatmul.mubr.f32.gmra.mrb[0].mxu0 %v6236
        %v6494 = vpop.f32.mrb[0].mxu0
        %v6495 = vadd.f32 %v6331, %v6494
        %v6496 = vpop.f32.mrb[0].mxu0
        %6497 = vmatprep.mubr.f32.mxu0 %v6269
        %6498 = vmatmul.mubr.f32.gmra.mrb[0].mxu0 %v6237
        %v6499 = vpop.f32.mrb[0].mxu0
        %v6500 = vadd.f32 %v6331, %v6499
        %v6501 = vpop.f32.mrb[0].mxu0
        %6502 = vmatprep.mubr.f32.mxu0 %v6270
        %6503 = vmatmul.mubr.f32.gmra.mrb[0].mxu0 %v6238
        %v6504 = vpop.f32.mrb[0].mxu0
        %v6505 = vadd.f32 %v6331, %v6504
        %v6506 = vpop.f32.mrb[0].mxu0
        %6507 = vmatprep.mubr.f32.mxu0 %v6271
        %6508 = vmatmul.mubr.f32.gmra.mrb[0].mxu0 %v6239
        %v6509 = vpop.f32.mrb[0].mxu0
        %v6510 = vadd.f32 %v6331, %v6509
        %v6511 = vpop.f32.mrb[0].mxu0
        %6512 = vmatprep.mubr.f32.mxu0 %v6272
        %6513 = vmatmul.mubr.f32.gmra.mrb[0].mxu0 %v6240
        %v6514 = vpop.f32.mrb[0].mxu0
        %v6515 = vadd.f32 %v6331, %v6514
        %v6516 = vpop.f32.mrb[0].mxu0
        %6517 = vmatprep.mubr.f32.mxu0 %v6273
        %6518 = vmatmul.mubr.f32.gmra.mrb[0].mxu0 %v6241
        %v6519 = vpop.f32.mrb[0].mxu0
        %v6520 = vadd.f32 %v6331, %v6519
        %v6521 = vpop.f32.mrb[0].mxu0
        %6522 = vmatprep.mubr.f32.mxu0 %v6274
        %6523 = vmatmul.mubr.f32.gmra.mrb[0].mxu0 %v6242
        %v6524 = vpop.f32.mrb[0].mxu0
        %v6525 = vadd.f32 %v6331, %v6524
        %v6526 = vpop.f32.mrb[0].mxu0
        %6527 = vmatprep.mubr.f32.mxu0 %v6275
        %6528 = vmatmul.mubr.f32.gmra.mrb[0].mxu0 %v6243
        %v6529 = vpop.f32.mrb[0].mxu0
        %v6530 = vadd.f32 %v6331, %v6529
        %v6531 = vpop.f32.mrb[0].mxu0
        %6532 = vmatprep.mubr.f32.mxu0 %v6276
        %6533 = vmatmul.mubr.f32.gmra.mrb[0].mxu0 %v6244
        %v6534 = vpop.f32.mrb[0].mxu0
        %v6535 = vadd.f32 %v6331, %v6534
        %v6536 = vpop.f32.mrb[0].mxu0
        %6537 = vmatprep.mubr.f32.mxu0 %v6277
        %6538 = vmatmul.mubr.f32.gmra.mrb[0].mxu0 %v6245
        %v6539 = vpop.f32.mrb[0].mxu0
        %v6540 = vadd.f32 %v6331, %v6539
        %v6541 = vpop.f32.mrb[0].mxu0
        %6542 = vmatprep.mubr.f32.mxu0 %v6278
        %6543 = vmatmul.mubr.f32.gmra.mrb[0].mxu0 %v6246
        %v6544 = vpop.f32.mrb[0].mxu0
        %v6545 = vadd.f32 %v6331, %v6544
        %v6546 = vpop.f32.mrb[0].mxu0
        %6547 = vmatprep.mubr.f32.mxu0 %v6279
        %6548 = vmatmul.mubr.f32.gmra.mrb[0].mxu0 %v6247
        %v6549 = vpop.f32.mrb[0].mxu0
        %v6550 = vadd.f32 %v6331, %v6549
        %v6551 = vpop.f32.mrb[0].mxu0
        %6552 = vmatprep.mubr.f32.mxu0 %v6280
        %6553 = vmatmul.mubr.f32.gmra.mrb[0].mxu0 %v6248
        %v6554 = vpop.f32.mrb[0].mxu0
        %v6555 = vadd.f32 %v6331, %v6554
        %v6556 = vpop.f32.mrb[0].mxu0
        %6557 = vmatprep.mubr.f32.mxu0 %v6281
        %6558 = vmatmul.mubr.f32.gmra.mrb[0].mxu0 %v6249
        %v6559 = vpop.f32.mrb[0].mxu0
        %v6560 = vadd.f32 %v6331, %v6559
        %v6561 = vpop.f32.mrb[0].mxu0
        %6562 = vmatprep.mubr.f32.mxu0 %v6282
        %6563 = vmatmul.mubr.f32.gmra.mrb[0].mxu0 %v6250
        %v6564 = vpop.f32.mrb[0].mxu0
        %v6565 = vadd.f32 %v6331, %v6564
        %v6566 = vpop.f32.mrb[0].mxu0
        %6567 = vmatprep.mubr.f32.mxu0 %v6283
        %6568 = vmatmul.mubr.f32.gmra.mrb[0].mxu0 %v6251
        %v6569 = vpop.f32.mrb[0].mxu0
        %v6570 = vadd.f32 %v6331, %v6569
        %v6571 = vpop.f32.mrb[0].mxu0
        %6572 = vmatprep.mubr.f32.mxu0 %v6284
        %6573 = vmatmul.mubr.f32.gmra.mrb[0].mxu0 %v6252
        %v6574 = vpop.f32.mrb[0].mxu0
        %v6575 = vadd.f32 %v6331, %v6574
        %v6576 = vpop.f32.mrb[0].mxu0
        %6577 = vmatprep.mubr.f32.mxu0 %v6285
        %6578 = vmatmul.mubr.f32.gmra.mrb[0].mxu0 %v6253
        %v6579 = vpop.f32.mrb[0].mxu0
        %v6580 = vadd.f32 %v6331, %v6579
        %v6581 = vpop.f32.mrb[0].mxu0
        %6582 = vmatprep.mubr.f32.mxu0 %v6286
        %6583 = vmatmul.mubr.f32.gmra.mrb[0].mxu0 %v6254
        %v6584 = vpop.f32.mrb[0].mxu0
        %v6585 = vadd.f32 %v6331, %v6584
        %v6586 = vpop.f32.mrb[0].mxu0
        %6587 = vmatprep.mubr.f32.mxu0 %v6287
        %6588 = vmatmul.mubr.f32.gmra.mrb[0].mxu0 %v6255
        %v6589 = vpop.f32.mrb[0].mxu0
        %v6590 = vadd.f32 %v6331, %v6589
        %v6591 = vpop.f32.mrb[0].mxu0
        %6592 = vmatprep.mubr.f32.mxu0 %v6288
        %6593 = vmatmul.mubr.f32.gmra.mrb[0].mxu0 %v6256
        %v6594 = vpop.f32.mrb[0].mxu0
        %v6595 = vadd.f32 %v6331, %v6594
        %v6596 = vpop.f32.mrb[0].mxu0
        %6597 = vmatprep.mubr.f32.mxu0 %v6289
        %6598 = vmatmul.mubr.f32.gmra.mrb[0].mxu0 %v6257
        %v6599 = vpop.f32.mrb[0].mxu0
        %v6600 = vadd.f32 %v6331, %v6599
        %v6601 = vpop.f32.mrb[0].mxu0
        %6602 = vmatprep.mubr.f32.mxu0 %v6290
        %6603 = vmatmul.mubr.f32.gmra.mrb[0].mxu0 %v6258
        %v6604 = vpop.f32.mrb[0].mxu0
        %v6605 = vadd.f32 %v6331, %v6604
        %v6606 = vpop.f32.mrb[0].mxu0
        %6607 = vmatprep.mubr.f32.mxu0 %v6291
        %6608 = vmatmul.mubr.f32.gmra.mrb[0].mxu0 %v6259
        %v6609 = vpop.f32.mrb[0].mxu0
        %v6610 = vadd.f32 %v6331, %v6609
        %v6611 = vpop.f32.mrb[0].mxu0
        %6612 = vmatprep.mubr.f32.mxu0 %v6292
        %6613 = vmatmul.mubr.f32.gmra.mrb[0].mxu0 %v6260
        %v6614 = vpop.f32.mrb[0].mxu0
        %v6615 = vadd.f32 %v6331, %v6614
        %v6616 = vpop.f32.mrb[0].mxu0
        %6617 = vdwg.mxu0
        %6618 = vmatprep.subr.mxu0 0.0
        %6619 = vmatpush1.msra.mxu0 %v5488
        %6620 = vmatprep.subr.mxu0 0.0
        %6621 = vmatpush1.msra.mxu0 %v5489
        %6622 = vmatprep.subr.mxu0 0.0
        %6623 = vmatpush1.msra.mxu0 %v5490
        %6624 = vmatprep.subr.mxu0 0.0
        %6625 = vmatpush1.msra.mxu0 %v5491
        %6626 = vmatprep.subr.mxu0 0.0
        %6627 = vmatpush1.msra.mxu0 %v5492
        %6628 = vmatprep.subr.mxu0 0.0
        %6629 = vmatpush1.msra.mxu0 %v5493
        %6630 = vmatprep.subr.mxu0 0.0
        %6631 = vmatpush1.msra.mxu0 %v5494
        %6632 = vmatprep.subr.mxu0 0.0
        %6633 = vmatpush1.msra.mxu0 %v5495
        %6634 = vmatprep.subr.mxu0 0.0
        %6635 = vmatpush1.msra.mxu0 %v5496
        %6636 = vmatprep.subr.mxu0 0.0
        %6637 = vmatpush1.msra.mxu0 %v5497
        %6638 = vmatprep.subr.mxu0 0.0
        %6639 = vmatpush1.msra.mxu0 %v5498
        %6640 = vmatprep.subr.mxu0 0.0
        %6641 = vmatpush1.msra.mxu0 %v5499
        %6642 = vmatprep.subr.mxu0 0.0
        %6643 = vmatpush1.msra.mxu0 %v5500
        %6644 = vmatprep.subr.mxu0 0.0
        %6645 = vmatpush1.msra.mxu0 %v5501
        %6646 = vmatprep.subr.mxu0 0.0
        %6647 = vmatpush1.msra.mxu0 %v5502
        %6648 = vmatprep.subr.mxu0 0.0
        %6649 = vmatpush1.msra.mxu0 %v5503
        %6650 = vmatprep.subr.mxu0 0.0
        %6651 = vmatpush1.msra.mxu0 %v5504
        %6652 = vmatprep.subr.mxu0 0.0
        %6653 = vmatpush1.msra.mxu0 %v5505
        %6654 = vmatprep.subr.mxu0 0.0
        %6655 = vmatpush1.msra.mxu0 %v5506
        %6656 = vmatprep.subr.mxu0 0.0
        %6657 = vmatpush1.msra.mxu0 %v5507
        %6658 = vmatprep.subr.mxu0 0.0
        %6659 = vmatpush1.msra.mxu0 %v5508
        %6660 = vmatprep.subr.mxu0 0.0
        %6661 = vmatpush1.msra.mxu0 %v5509
        %6662 = vmatprep.subr.mxu0 0.0
        %6663 = vmatpush1.msra.mxu0 %v5510
        %6664 = vmatprep.subr.mxu0 0.0
        %6665 = vmatpush1.msra.mxu0 %v5511
        %6666 = vmatprep.subr.mxu0 0.0
        %6667 = vmatpush1.msra.mxu0 %v5512
        %6668 = vmatprep.subr.mxu0 0.0
        %6669 = vmatpush1.msra.mxu0 %v5513
        %6670 = vmatprep.subr.mxu0 0.0
        %6671 = vmatpush1.msra.mxu0 %v5514
        %6672 = vmatprep.subr.mxu0 0.0
        %6673 = vmatpush1.msra.mxu0 %v5515
        %6674 = vmatprep.subr.mxu0 0.0
        %6675 = vmatpush1.msra.mxu0 %v5516
        %6676 = vmatprep.subr.mxu0 0.0
        %6677 = vmatpush1.msra.mxu0 %v5517
        %6678 = vmatprep.subr.mxu0 0.0
        %6679 = vmatpush1.msra.mxu0 %v5518
        %6680 = vmatprep.subr.mxu0 0.0
        %6681 = vmatpush1.msra.mxu0 %v5519
        %6682 = vmatprep.mubr.f32.mxu0 %v6233
        %6683 = vmatmul.mubr.f32.gmra.mrb[0].mxu0 %v6293
        %v6684 = vpop.f32.mrb[0].mxu0
        %v6685 = vadd.f32 %v6460, %v6684
        %v6686 = vpop.f32.mrb[0].mxu0
        %6687 = vmatprep.mubr.f32.mxu0 %v6234
        %6688 = vmatmul.mubr.f32.gmra.mrb[0].mxu0 %v6294
        %v6689 = vpop.f32.mrb[0].mxu0
        %v6690 = vadd.f32 %v6465, %v6689
        %v6691 = vpop.f32.mrb[0].mxu0
        %6692 = vmatprep.mubr.f32.mxu0 %v6235
        %6693 = vmatmul.mubr.f32.gmra.mrb[0].mxu0 %v6295
        %v6694 = vpop.f32.mrb[0].mxu0
        %v6695 = vadd.f32 %v6470, %v6694
        %v6696 = vpop.f32.mrb[0].mxu0
        %6697 = vmatprep.mubr.f32.mxu0 %v6236
        %6698 = vmatmul.mubr.f32.gmra.mrb[0].mxu0 %v6296
        %v6699 = vpop.f32.mrb[0].mxu0
        %v6700 = vadd.f32 %v6475, %v6699
        %v6701 = vpop.f32.mrb[0].mxu0
        %6702 = vmatprep.mubr.f32.mxu0 %v6237
        %6703 = vmatmul.mubr.f32.gmra.mrb[0].mxu0 %v6297
        %v6704 = vpop.f32.mrb[0].mxu0
        %v6705 = vadd.f32 %v6480, %v6704
        %v6706 = vpop.f32.mrb[0].mxu0
        %6707 = vmatprep.mubr.f32.mxu0 %v6238
        %6708 = vmatmul.mubr.f32.gmra.mrb[0].mxu0 %v6298
        %v6709 = vpop.f32.mrb[0].mxu0
        %v6710 = vadd.f32 %v6485, %v6709
        %v6711 = vpop.f32.mrb[0].mxu0
        %6712 = vmatprep.mubr.f32.mxu0 %v6239
        %6713 = vmatmul.mubr.f32.gmra.mrb[0].mxu0 %v6299
        %v6714 = vpop.f32.mrb[0].mxu0
        %v6715 = vadd.f32 %v6490, %v6714
        %v6716 = vpop.f32.mrb[0].mxu0
        %6717 = vmatprep.mubr.f32.mxu0 %v6240
        %6718 = vmatmul.mubr.f32.gmra.mrb[0].mxu0 %v6300
        %v6719 = vpop.f32.mrb[0].mxu0
        %v6720 = vadd.f32 %v6495, %v6719
        %v6721 = vpop.f32.mrb[0].mxu0
        %6722 = vmatprep.mubr.f32.mxu0 %v6241
        %6723 = vmatmul.mubr.f32.gmra.mrb[0].mxu0 %v6301
        %v6724 = vpop.f32.mrb[0].mxu0
        %v6725 = vadd.f32 %v6500, %v6724
        %v6726 = vpop.f32.mrb[0].mxu0
        %6727 = vmatprep.mubr.f32.mxu0 %v6242
        %6728 = vmatmul.mubr.f32.gmra.mrb[0].mxu0 %v6302
        %v6729 = vpop.f32.mrb[0].mxu0
        %v6730 = vadd.f32 %v6505, %v6729
        %v6731 = vpop.f32.mrb[0].mxu0
        %6732 = vmatprep.mubr.f32.mxu0 %v6243
        %6733 = vmatmul.mubr.f32.gmra.mrb[0].mxu0 %v6303
        %v6734 = vpop.f32.mrb[0].mxu0
        %v6735 = vadd.f32 %v6510, %v6734
        %v6736 = vpop.f32.mrb[0].mxu0
        %6737 = vmatprep.mubr.f32.mxu0 %v6244
        %6738 = vmatmul.mubr.f32.gmra.mrb[0].mxu0 %v6304
        %v6739 = vpop.f32.mrb[0].mxu0
        %v6740 = vadd.f32 %v6515, %v6739
        %v6741 = vpop.f32.mrb[0].mxu0
        %6742 = vmatprep.mubr.f32.mxu0 %v6245
        %6743 = vmatmul.mubr.f32.gmra.mrb[0].mxu0 %v6305
        %v6744 = vpop.f32.mrb[0].mxu0
        %v6745 = vadd.f32 %v6520, %v6744
        %v6746 = vpop.f32.mrb[0].mxu0
        %6747 = vmatprep.mubr.f32.mxu0 %v6246
        %6748 = vmatmul.mubr.f32.gmra.mrb[0].mxu0 %v6306
        %v6749 = vpop.f32.mrb[0].mxu0
        %v6750 = vadd.f32 %v6525, %v6749
        %v6751 = vpop.f32.mrb[0].mxu0
        %6752 = vmatprep.mubr.f32.mxu0 %v6247
        %6753 = vmatmul.mubr.f32.gmra.mrb[0].mxu0 %v6307
        %v6754 = vpop.f32.mrb[0].mxu0
        %v6755 = vadd.f32 %v6530, %v6754
        %v6756 = vpop.f32.mrb[0].mxu0
        %6757 = vmatprep.mubr.f32.mxu0 %v6248
        %6758 = vmatmul.mubr.f32.gmra.mrb[0].mxu0 %v6308
        %v6759 = vpop.f32.mrb[0].mxu0
        %v6760 = vadd.f32 %v6535, %v6759
        %v6761 = vpop.f32.mrb[0].mxu0
        %6762 = vmatprep.mubr.f32.mxu0 %v6249
        %6763 = vmatmul.mubr.f32.gmra.mrb[0].mxu0 %v6309
        %v6764 = vpop.f32.mrb[0].mxu0
        %v6765 = vadd.f32 %v6540, %v6764
        %v6766 = vpop.f32.mrb[0].mxu0
        %6767 = vmatprep.mubr.f32.mxu0 %v6250
        %6768 = vmatmul.mubr.f32.gmra.mrb[0].mxu0 %v6310
        %v6769 = vpop.f32.mrb[0].mxu0
        %v6770 = vadd.f32 %v6545, %v6769
        %v6771 = vpop.f32.mrb[0].mxu0
        %6772 = vmatprep.mubr.f32.mxu0 %v6251
        %6773 = vmatmul.mubr.f32.gmra.mrb[0].mxu0 %v6311
        %v6774 = vpop.f32.mrb[0].mxu0
        %v6775 = vadd.f32 %v6550, %v6774
        %v6776 = vpop.f32.mrb[0].mxu0
        %6777 = vmatprep.mubr.f32.mxu0 %v6252
        %6778 = vmatmul.mubr.f32.gmra.mrb[0].mxu0 %v6312
        %v6779 = vpop.f32.mrb[0].mxu0
        %v6780 = vadd.f32 %v6555, %v6779
        %v6781 = vpop.f32.mrb[0].mxu0
        %6782 = vmatprep.mubr.f32.mxu0 %v6253
        %6783 = vmatmul.mubr.f32.gmra.mrb[0].mxu0 %v6313
        %v6784 = vpop.f32.mrb[0].mxu0
        %v6785 = vadd.f32 %v6560, %v6784
        %v6786 = vpop.f32.mrb[0].mxu0
        %6787 = vmatprep.mubr.f32.mxu0 %v6254
        %6788 = vmatmul.mubr.f32.gmra.mrb[0].mxu0 %v6314
        %v6789 = vpop.f32.mrb[0].mxu0
        %v6790 = vadd.f32 %v6565, %v6789
        %v6791 = vpop.f32.mrb[0].mxu0
        %6792 = vmatprep.mubr.f32.mxu0 %v6255
        %6793 = vmatmul.mubr.f32.gmra.mrb[0].mxu0 %v6315
        %v6794 = vpop.f32.mrb[0].mxu0
        %v6795 = vadd.f32 %v6570, %v6794
        %v6796 = vpop.f32.mrb[0].mxu0
        %6797 = vmatprep.mubr.f32.mxu0 %v6256
        %6798 = vmatmul.mubr.f32.gmra.mrb[0].mxu0 %v6316
        %v6799 = vpop.f32.mrb[0].mxu0
        %v6800 = vadd.f32 %v6575, %v6799
        %v6801 = vpop.f32.mrb[0].mxu0
        %6802 = vmatprep.mubr.f32.mxu0 %v6257
        %6803 = vmatmul.mubr.f32.gmra.mrb[0].mxu0 %v6317
        %v6804 = vpop.f32.mrb[0].mxu0
        %v6805 = vadd.f32 %v6580, %v6804
        %v6806 = vpop.f32.mrb[0].mxu0
        %6807 = vmatprep.mubr.f32.mxu0 %v6258
        %6808 = vmatmul.mubr.f32.gmra.mrb[0].mxu0 %v6318
        %v6809 = vpop.f32.mrb[0].mxu0
        %v6810 = vadd.f32 %v6585, %v6809
        %v6811 = vpop.f32.mrb[0].mxu0
        %6812 = vmatprep.mubr.f32.mxu0 %v6259
        %6813 = vmatmul.mubr.f32.gmra.mrb[0].mxu0 %v6319
        %v6814 = vpop.f32.mrb[0].mxu0
        %v6815 = vadd.f32 %v6590, %v6814
        %v6816 = vpop.f32.mrb[0].mxu0
        %6817 = vmatprep.mubr.f32.mxu0 %v6260
        %6818 = vmatmul.mubr.f32.gmra.mrb[0].mxu0 %v6320
        %v6819 = vpop.f32.mrb[0].mxu0
        %v6820 = vadd.f32 %v6595, %v6819
        %v6821 = vpop.f32.mrb[0].mxu0
        %6822 = vmatprep.mubr.f32.mxu0 %v6325
        %6823 = vmatmul.mubr.f32.gmra.mrb[0].mxu0 %v6321
        %v6824 = vpop.f32.mrb[0].mxu0
        %v6825 = vadd.f32 %v6600, %v6824
        %v6826 = vpop.f32.mrb[0].mxu0
        %6827 = vmatprep.mubr.f32.mxu0 %v6326
        %6828 = vmatmul.mubr.f32.gmra.mrb[0].mxu0 %v6322
        %v6829 = vpop.f32.mrb[0].mxu0
        %v6830 = vadd.f32 %v6605, %v6829
        %v6831 = vpop.f32.mrb[0].mxu0
        %6832 = vmatprep.mubr.f32.mxu0 %v2940
        %6833 = vmatmul.mubr.f32.gmra.mrb[0].mxu0 %v6323
        %v6834 = vpop.f32.mrb[0].mxu0
        %v6835 = vadd.f32 %v6610, %v6834
        %v6836 = vpop.f32.mrb[0].mxu0
        %6837 = vmatprep.mubr.f32.mxu0 %v2940
        %6838 = vmatmul.mubr.f32.gmra.mrb[0].mxu0 %v6324
        %v6839 = vpop.f32.mrb[0].mxu0
        %v6840 = vadd.f32 %v6615, %v6839
        %v6841 = vpop.f32.mrb[0].mxu0
        %6842 = vdwg.mxu0
        %6843 = vmatprep.subr.mxu0 0.0
        %6844 = vmatpush1.msra.mxu0 %v5520
        %6845 = vmatprep.subr.mxu0 0.0
        %6846 = vmatpush1.msra.mxu0 %v5521
        %6847 = vmatprep.subr.mxu0 0.0
        %6848 = vmatpush1.msra.mxu0 %v5522
        %6849 = vmatprep.subr.mxu0 0.0
        %6850 = vmatpush1.msra.mxu0 %v5523
        %6851 = vmatprep.subr.mxu0 0.0
        %6852 = vmatpush1.msra.mxu0 %v5524
        %6853 = vmatprep.subr.mxu0 0.0
        %6854 = vmatpush1.msra.mxu0 %v5525
        %6855 = vmatprep.subr.mxu0 0.0
        %6856 = vmatpush1.msra.mxu0 %v5526
        %6857 = vmatprep.subr.mxu0 0.0
        %6858 = vmatpush1.msra.mxu0 %v5527
        %6859 = vmatprep.subr.mxu0 0.0
        %6860 = vmatpush1.msra.mxu0 0.0
        %6861 = vmatprep.subr.mxu0 0.0
        %6862 = vmatpush1.msra.mxu0 0.0
        %6863 = vmatprep.subr.mxu0 0.0
        %6864 = vmatpush1.msra.mxu0 0.0
        %6865 = vmatprep.subr.mxu0 0.0
        %6866 = vmatpush1.msra.mxu0 0.0
        %6867 = vmatprep.subr.mxu0 0.0
        %6868 = vmatpush1.msra.mxu0 0.0
        %6869 = vmatprep.subr.mxu0 0.0
        %6870 = vmatpush1.msra.mxu0 0.0
        %6871 = vmatprep.subr.mxu0 0.0
        %6872 = vmatpush1.msra.mxu0 0.0
        %6873 = vmatprep.subr.mxu0 0.0
        %6874 = vmatpush1.msra.mxu0 0.0
        %6875 = vmatprep.subr.mxu0 0.0
        %6876 = vmatpush1.msra.mxu0 0.0
        %6877 = vmatprep.subr.mxu0 0.0
        %6878 = vmatpush1.msra.mxu0 0.0
        %6879 = vmatprep.subr.mxu0 0.0
        %6880 = vmatpush1.msra.mxu0 0.0
        %6881 = vmatprep.subr.mxu0 0.0
        %6882 = vmatpush1.msra.mxu0 0.0
        %6883 = vmatprep.subr.mxu0 0.0
        %6884 = vmatpush1.msra.mxu0 0.0
        %6885 = vmatprep.subr.mxu0 0.0
        %6886 = vmatpush1.msra.mxu0 0.0
        %6887 = vmatprep.subr.mxu0 0.0
        %6888 = vmatpush1.msra.mxu0 0.0
        %6889 = vmatprep.subr.mxu0 0.0
        %6890 = vmatpush1.msra.mxu0 0.0
        %6891 = vmatprep.subr.mxu0 0.0
        %6892 = vmatpush1.msra.mxu0 0.0
        %6893 = vmatprep.subr.mxu0 0.0
        %6894 = vmatpush1.msra.mxu0 0.0
        %6895 = vmatprep.subr.mxu0 0.0
        %6896 = vmatpush1.msra.mxu0 0.0
        %6897 = vmatprep.subr.mxu0 0.0
        %6898 = vmatpush1.msra.mxu0 0.0
        %6899 = vmatprep.subr.mxu0 0.0
        %6900 = vmatpush1.msra.mxu0 0.0
        %6901 = vmatprep.subr.mxu0 0.0
        %6902 = vmatpush1.msra.mxu0 0.0
        %6903 = vmatprep.subr.mxu0 0.0
        %6904 = vmatpush1.msra.mxu0 0.0
        %6905 = vmatprep.subr.mxu0 0.0
        %6906 = vmatpush1.msra.mxu0 0.0
        %6907 = vmatprep.mubr.f32.mxu0 0.0
        %6908 = vmatmul.mubr.f32.gmra.mrb[0].mxu0 %v6333
        %v6909 = vpop.f32.mrb[0].mxu0
        %v6910 = vadd.f32 %v6685, %v6909
        %v6911 = vpop.f32.mrb[0].mxu0
        %6912 = vmatprep.mubr.f32.mxu0 0.0
        %6913 = vmatmul.mubr.f32.gmra.mrb[0].mxu0 %v6335
        %v6914 = vpop.f32.mrb[0].mxu0
        %v6915 = vadd.f32 %v6690, %v6914
        %v6916 = vpop.f32.mrb[0].mxu0
        %6917 = vmatprep.mubr.f32.mxu0 0.0
        %6918 = vmatmul.mubr.f32.gmra.mrb[0].mxu0 %v6337
        %v6919 = vpop.f32.mrb[0].mxu0
        %v6920 = vadd.f32 %v6695, %v6919
        %v6921 = vpop.f32.mrb[0].mxu0
        %6922 = vmatprep.mubr.f32.mxu0 0.0
        %6923 = vmatmul.mubr.f32.gmra.mrb[0].mxu0 %v6339
        %v6924 = vpop.f32.mrb[0].mxu0
        %v6925 = vadd.f32 %v6700, %v6924
        %v6926 = vpop.f32.mrb[0].mxu0
        %6927 = vmatprep.mubr.f32.mxu0 0.0
        %6928 = vmatmul.mubr.f32.gmra.mrb[0].mxu0 %v6341
        %v6929 = vpop.f32.mrb[0].mxu0
        %v6930 = vadd.f32 %v6705, %v6929
        %v6931 = vpop.f32.mrb[0].mxu0
        %6932 = vmatprep.mubr.f32.mxu0 0.0
        %6933 = vmatmul.mubr.f32.gmra.mrb[0].mxu0 %v6343
        %v6934 = vpop.f32.mrb[0].mxu0
        %v6935 = vadd.f32 %v6710, %v6934
        %v6936 = vpop.f32.mrb[0].mxu0
        %6937 = vmatprep.mubr.f32.mxu0 0.0
        %6938 = vmatmul.mubr.f32.gmra.mrb[0].mxu0 %v6345
        %v6939 = vpop.f32.mrb[0].mxu0
        %v6940 = vadd.f32 %v6715, %v6939
        %v6941 = vpop.f32.mrb[0].mxu0
        %6942 = vmatprep.mubr.f32.mxu0 0.0
        %6943 = vmatmul.mubr.f32.gmra.mrb[0].mxu0 %v6347
        %v6944 = vpop.f32.mrb[0].mxu0
        %v6945 = vadd.f32 %v6720, %v6944
        %v6946 = vpop.f32.mrb[0].mxu0
        %6947 = vmatprep.mubr.f32.mxu0 0.0
        %6948 = vmatmul.mubr.f32.gmra.mrb[0].mxu0 %v6349
        %v6949 = vpop.f32.mrb[0].mxu0
        %v6950 = vadd.f32 %v6725, %v6949
        %v6951 = vpop.f32.mrb[0].mxu0
        %6952 = vmatprep.mubr.f32.mxu0 0.0
        %6953 = vmatmul.mubr.f32.gmra.mrb[0].mxu0 %v6351
        %v6954 = vpop.f32.mrb[0].mxu0
        %v6955 = vadd.f32 %v6730, %v6954
        %v6956 = vpop.f32.mrb[0].mxu0
        %6957 = vmatprep.mubr.f32.mxu0 0.0
        %6958 = vmatmul.mubr.f32.gmra.mrb[0].mxu0 %v6353
        %v6959 = vpop.f32.mrb[0].mxu0
        %v6960 = vadd.f32 %v6735, %v6959
        %v6961 = vpop.f32.mrb[0].mxu0
        %6962 = vmatprep.mubr.f32.mxu0 0.0
        %6963 = vmatmul.mubr.f32.gmra.mrb[0].mxu0 %v6355
        %v6964 = vpop.f32.mrb[0].mxu0
        %v6965 = vadd.f32 %v6740, %v6964
        %v6966 = vpop.f32.mrb[0].mxu0
        %6967 = vmatprep.mubr.f32.mxu0 0.0
        %6968 = vmatmul.mubr.f32.gmra.mrb[0].mxu0 %v6357
        %v6969 = vpop.f32.mrb[0].mxu0
        %v6970 = vadd.f32 %v6745, %v6969
        %v6971 = vpop.f32.mrb[0].mxu0
        %6972 = vmatprep.mubr.f32.mxu0 0.0
        %6973 = vmatmul.mubr.f32.gmra.mrb[0].mxu0 %v6359
        %v6974 = vpop.f32.mrb[0].mxu0
        %v6975 = vadd.f32 %v6750, %v6974
        %v6976 = vpop.f32.mrb[0].mxu0
        %6977 = vmatprep.mubr.f32.mxu0 0.0
        %6978 = vmatmul.mubr.f32.gmra.mrb[0].mxu0 %v6361
        %v6979 = vpop.f32.mrb[0].mxu0
        %v6980 = vadd.f32 %v6755, %v6979
        %v6981 = vpop.f32.mrb[0].mxu0
        %6982 = vmatprep.mubr.f32.mxu0 0.0
        %6983 = vmatmul.mubr.f32.gmra.mrb[0].mxu0 %v6363
        %v6984 = vpop.f32.mrb[0].mxu0
        %v6985 = vadd.f32 %v6760, %v6984
        %v6986 = vpop.f32.mrb[0].mxu0
        %6987 = vmatprep.mubr.f32.mxu0 0.0
        %6988 = vmatmul.mubr.f32.gmra.mrb[0].mxu0 %v6365
        %v6989 = vpop.f32.mrb[0].mxu0
        %v6990 = vadd.f32 %v6765, %v6989
        %v6991 = vpop.f32.mrb[0].mxu0
        %6992 = vmatprep.mubr.f32.mxu0 0.0
        %6993 = vmatmul.mubr.f32.gmra.mrb[0].mxu0 %v6367
        %v6994 = vpop.f32.mrb[0].mxu0
        %v6995 = vadd.f32 %v6770, %v6994
        %v6996 = vpop.f32.mrb[0].mxu0
        %6997 = vmatprep.mubr.f32.mxu0 0.0
        %6998 = vmatmul.mubr.f32.gmra.mrb[0].mxu0 %v6369
        %v6999 = vpop.f32.mrb[0].mxu0
        %v7000 = vadd.f32 %v6775, %v6999
        %v7001 = vpop.f32.mrb[0].mxu0
        %7002 = vmatprep.mubr.f32.mxu0 0.0
        %7003 = vmatmul.mubr.f32.gmra.mrb[0].mxu0 %v6371
        %v7004 = vpop.f32.mrb[0].mxu0
        %v7005 = vadd.f32 %v6780, %v7004
        %v7006 = vpop.f32.mrb[0].mxu0
        %7007 = vmatprep.mubr.f32.mxu0 0.0
        %7008 = vmatmul.mubr.f32.gmra.mrb[0].mxu0 %v6373
        %v7009 = vpop.f32.mrb[0].mxu0
        %v7010 = vadd.f32 %v6785, %v7009
        %v7011 = vpop.f32.mrb[0].mxu0
        %7012 = vmatprep.mubr.f32.mxu0 0.0
        %7013 = vmatmul.mubr.f32.gmra.mrb[0].mxu0 %v6375
        %v7014 = vpop.f32.mrb[0].mxu0
        %v7015 = vadd.f32 %v6790, %v7014
        %v7016 = vpop.f32.mrb[0].mxu0
        %7017 = vmatprep.mubr.f32.mxu0 0.0
        %7018 = vmatmul.mubr.f32.gmra.mrb[0].mxu0 %v6377
        %v7019 = vpop.f32.mrb[0].mxu0
        %v7020 = vadd.f32 %v6795, %v7019
        %v7021 = vpop.f32.mrb[0].mxu0
        %7022 = vmatprep.mubr.f32.mxu0 0.0
        %7023 = vmatmul.mubr.f32.gmra.mrb[0].mxu0 %v6379
        %v7024 = vpop.f32.mrb[0].mxu0
        %v7025 = vadd.f32 %v6800, %v7024
        %v7026 = vpop.f32.mrb[0].mxu0
        %7027 = vmatprep.mubr.f32.mxu0 0.0
        %7028 = vmatmul.mubr.f32.gmra.mrb[0].mxu0 %v6381
        %v7029 = vpop.f32.mrb[0].mxu0
        %v7030 = vadd.f32 %v6805, %v7029
        %v7031 = vpop.f32.mrb[0].mxu0
        %7032 = vmatprep.mubr.f32.mxu0 0.0
        %7033 = vmatmul.mubr.f32.gmra.mrb[0].mxu0 %v6383
        %v7034 = vpop.f32.mrb[0].mxu0
        %v7035 = vadd.f32 %v6810, %v7034
        %v7036 = vpop.f32.mrb[0].mxu0
        %7037 = vmatprep.mubr.f32.mxu0 0.0
        %7038 = vmatmul.mubr.f32.gmra.mrb[0].mxu0 %v6385
        %v7039 = vpop.f32.mrb[0].mxu0
        %v7040 = vadd.f32 %v6815, %v7039
        %v7041 = vpop.f32.mrb[0].mxu0
        %7042 = vmatprep.mubr.f32.mxu0 0.0
        %7043 = vmatmul.mubr.f32.gmra.mrb[0].mxu0 %v6387
        %v7044 = vpop.f32.mrb[0].mxu0
        %v7045 = vadd.f32 %v6820, %v7044
        %v7046 = vpop.f32.mrb[0].mxu0
        %7047 = vmatprep.mubr.f32.mxu0 0.0
        %7048 = vmatmul.mubr.f32.gmra.mrb[0].mxu0 %v6389
        %v7049 = vpop.f32.mrb[0].mxu0
        %v7050 = vadd.f32 %v6825, %v7049
        %v7051 = vpop.f32.mrb[0].mxu0
        %7052 = vmatprep.mubr.f32.mxu0 0.0
        %7053 = vmatmul.mubr.f32.gmra.mrb[0].mxu0 %v6391
        %v7054 = vpop.f32.mrb[0].mxu0
        %v7055 = vadd.f32 %v6830, %v7054
        %v7056 = vpop.f32.mrb[0].mxu0
        %7057 = vmatprep.mubr.f32.mxu0 0.0
        %7058 = vmatmul.mubr.f32.gmra.mrb[0].mxu0 %v3103
        %v7059 = vpop.f32.mrb[0].mxu0
        %v7060 = vadd.f32 %v6835, %v7059
        %v7061 = vpop.f32.mrb[0].mxu0
        %7062 = vmatprep.mubr.f32.mxu0 0.0
        %7063 = vmatmul.mubr.f32.gmra.mrb[0].mxu0 %v3103
        %v7064 = vpop.f32.mrb[0].mxu0
        %v7065 = vadd.f32 %v6840, %v7064
        %v7066 = vpop.f32.mrb[0].mxu0
        %7067 = vdwg.mxu0
        %v7068 = vmax.f32 %v6910, 0.0
        %v7069 = vmax.f32 %v6915, 0.0
        %v7070 = vmax.f32 %v6920, 0.0
        %v7071 = vmax.f32 %v6925, 0.0
        %v7072 = vmax.f32 %v6930, 0.0
        %v7073 = vmax.f32 %v6935, 0.0
        %v7074 = vmax.f32 %v6940, 0.0
        %v7075 = vmax.f32 %v6945, 0.0
        %v7076 = vmax.f32 %v6950, 0.0
        %v7077 = vmax.f32 %v6955, 0.0
        %v7078 = vmax.f32 %v6960, 0.0
        %v7079 = vmax.f32 %v6965, 0.0
        %v7080 = vmax.f32 %v6970, 0.0
        %v7081 = vmax.f32 %v6975, 0.0
        %v7082 = vmax.f32 %v6980, 0.0
        %v7083 = vmax.f32 %v6985, 0.0
        %v7084 = vmax.f32 %v6990, 0.0
        %v7085 = vmax.f32 %v6995, 0.0
        %v7086 = vmax.f32 %v7000, 0.0
        %v7087 = vmax.f32 %v7005, 0.0
        %v7088 = vmax.f32 %v7010, 0.0
        %v7089 = vmax.f32 %v7015, 0.0
        %v7090 = vmax.f32 %v7020, 0.0
        %v7091 = vmax.f32 %v7025, 0.0
        %v7092 = vmax.f32 %v7030, 0.0
        %v7093 = vmax.f32 %v7035, 0.0
        %v7094 = vmax.f32 %v7040, 0.0
        %v7095 = vmax.f32 %v7045, 0.0
        %v7096 = vmax.f32 %v7050, 0.0
        %v7097 = vmax.f32 %v7055, 0.0
        %v7098 = vmax.f32 %v7060, 0.0
        %v7099 = vmax.f32 %v7065, 0.0
        %v7100 = vld [vmem:[%s9] sm:$0xff]
        %v7101 = vld [vmem:[%s9 + $0x8] sm:$0xff]
        %v7102 = vld [vmem:[%s9 + $0x10] sm:$0xff]
        %v7103 = vld [vmem:[%s9 + $0x18] sm:$0xff]
        %v7104 = vld [vmem:[%s9 + $0x20] sm:$0xff]
        %v7105 = vld [vmem:[%s9 + $0x28] sm:$0xff]
        %v7106 = vld [vmem:[%s9 + $0x30] sm:$0xff]
        %v7107 = vld [vmem:[%s9 + $0x38] sm:$0xff]
        %v7108 = vld [vmem:[%s10] sm:$0x1]
        %v7110 = vlaneseq
        %v7111 = vshrl.u32 %v7110, 7
        %v7112 = vsub.s32 0, %v7111
        %v7113 = vrot.slane %v7108, %v7112
        %v7116 = vsel %vm2939, %v7068, 0
        %v7119 = vsel %vm2939, %v7069, 0
        %v7122 = vsel %vm2939, %v7070, 0
        %v7125 = vsel %vm2939, %v7071, 0
        %v7128 = vsel %vm2939, %v7072, 0
        %v7131 = vsel %vm2939, %v7073, 0
        %v7134 = vsel %vm2939, %v7074, 0
        %v7137 = vsel %vm2939, %v7075, 0
        %v7140 = vsel %vm2939, %v7076, 0
        %v7143 = vsel %vm2939, %v7077, 0
        %v7146 = vsel %vm2939, %v7078, 0
        %v7149 = vsel %vm2939, %v7079, 0
        %v7152 = vsel %vm2939, %v7080, 0
        %v7155 = vsel %vm2939, %v7081, 0
        %v7158 = vsel %vm2939, %v7082, 0
        %v7161 = vsel %vm2939, %v7083, 0
        %v7164 = vsel %vm2939, %v7084, 0
        %v7167 = vsel %vm2939, %v7085, 0
        %v7170 = vsel %vm2939, %v7086, 0
        %v7173 = vsel %vm2939, %v7087, 0
        %v7176 = vsel %vm2939, %v7088, 0
        %v7179 = vsel %vm2939, %v7089, 0
        %v7182 = vsel %vm2939, %v7090, 0
        %v7185 = vsel %vm2939, %v7091, 0
        %v7188 = vsel %vm2939, %v7092, 0
        %v7191 = vsel %vm2939, %v7093, 0
        %v7194 = vsel %vm2939, %v7094, 0
        %v7197 = vsel %vm2939, %v7095, 0
        %v7200 = vsel %vm2939, %v7096, 0
        %v7203 = vsel %vm2939, %v7097, 0
        %v7206 = vsel %vm2939, %v7098, 0
        %v7209 = vsel %vm2939, %v7099, 0
        %7211 = vmatprep.subr.mxu0 0.0
        %7212 = vmatpush1.msra.mxu0 %v7100
        %7213 = vmatprep.subr.mxu0 0.0
        %7214 = vmatpush1.msra.mxu0 %v7101
        %7215 = vmatprep.subr.mxu0 0.0
        %7216 = vmatpush1.msra.mxu0 %v7102
        %7217 = vmatprep.subr.mxu0 0.0
        %7218 = vmatpush1.msra.mxu0 %v7103
        %7219 = vmatprep.subr.mxu0 0.0
        %7220 = vmatpush1.msra.mxu0 %v7104
        %7221 = vmatprep.subr.mxu0 0.0
        %7222 = vmatpush1.msra.mxu0 %v7105
        %7223 = vmatprep.subr.mxu0 0.0
        %7224 = vmatpush1.msra.mxu0 %v7106
        %7225 = vmatprep.subr.mxu0 0.0
        %7226 = vmatpush1.msra.mxu0 %v7107
        %7227 = vmatprep.subr.mxu0 0.0
        %7228 = vmatpush1.msra.mxu0 0.0
        %7229 = vmatprep.subr.mxu0 0.0
        %7230 = vmatpush1.msra.mxu0 0.0
        %7231 = vmatprep.subr.mxu0 0.0
        %7232 = vmatpush1.msra.mxu0 0.0
        %7233 = vmatprep.subr.mxu0 0.0
        %7234 = vmatpush1.msra.mxu0 0.0
        %7235 = vmatprep.subr.mxu0 0.0
        %7236 = vmatpush1.msra.mxu0 0.0
        %7237 = vmatprep.subr.mxu0 0.0
        %7238 = vmatpush1.msra.mxu0 0.0
        %7239 = vmatprep.subr.mxu0 0.0
        %7240 = vmatpush1.msra.mxu0 0.0
        %7241 = vmatprep.subr.mxu0 0.0
        %7242 = vmatpush1.msra.mxu0 0.0
        %7243 = vmatprep.subr.mxu0 0.0
        %7244 = vmatpush1.msra.mxu0 0.0
        %7245 = vmatprep.subr.mxu0 0.0
        %7246 = vmatpush1.msra.mxu0 0.0
        %7247 = vmatprep.subr.mxu0 0.0
        %7248 = vmatpush1.msra.mxu0 0.0
        %7249 = vmatprep.subr.mxu0 0.0
        %7250 = vmatpush1.msra.mxu0 0.0
        %7251 = vmatprep.subr.mxu0 0.0
        %7252 = vmatpush1.msra.mxu0 0.0
        %7253 = vmatprep.subr.mxu0 0.0
        %7254 = vmatpush1.msra.mxu0 0.0
        %7255 = vmatprep.subr.mxu0 0.0
        %7256 = vmatpush1.msra.mxu0 0.0
        %7257 = vmatprep.subr.mxu0 0.0
        %7258 = vmatpush1.msra.mxu0 0.0
        %7259 = vmatprep.subr.mxu0 0.0
        %7260 = vmatpush1.msra.mxu0 0.0
        %7261 = vmatprep.subr.mxu0 0.0
        %7262 = vmatpush1.msra.mxu0 0.0
        %7263 = vmatprep.subr.mxu0 0.0
        %7264 = vmatpush1.msra.mxu0 0.0
        %7265 = vmatprep.subr.mxu0 0.0
        %7266 = vmatpush1.msra.mxu0 0.0
        %7267 = vmatprep.subr.mxu0 0.0
        %7268 = vmatpush1.msra.mxu0 0.0
        %7269 = vmatprep.subr.mxu0 0.0
        %7270 = vmatpush1.msra.mxu0 0.0
        %7271 = vmatprep.subr.mxu0 0.0
        %7272 = vmatpush1.msra.mxu0 0.0
        %7273 = vmatprep.subr.mxu0 0.0
        %7274 = vmatpush1.msra.mxu0 0.0
        %7275 = vmatprep.mubr.f32.mxu0 0.0
        %7276 = vmatmul.mubr.f32.gmra.mrb[0].mxu0 %v7116
        %v7277 = vpop.f32.mrb[0].mxu0
        %v7278 = vadd.f32 %v7113, %v7277
        %v7279 = vpop.f32.mrb[0].mxu0
        %7280 = vmatprep.mubr.f32.mxu0 0.0
        %7281 = vmatmul.mubr.f32.gmra.mrb[0].mxu0 %v7119
        %v7282 = vpop.f32.mrb[0].mxu0
        %v7283 = vadd.f32 %v7113, %v7282
        %v7284 = vpop.f32.mrb[0].mxu0
        %7285 = vmatprep.mubr.f32.mxu0 0.0
        %7286 = vmatmul.mubr.f32.gmra.mrb[0].mxu0 %v7122
        %v7287 = vpop.f32.mrb[0].mxu0
        %v7288 = vadd.f32 %v7113, %v7287
        %v7289 = vpop.f32.mrb[0].mxu0
        %7290 = vmatprep.mubr.f32.mxu0 0.0
        %7291 = vmatmul.mubr.f32.gmra.mrb[0].mxu0 %v7125
        %v7292 = vpop.f32.mrb[0].mxu0
        %v7293 = vadd.f32 %v7113, %v7292
        %v7294 = vpop.f32.mrb[0].mxu0
        %7295 = vmatprep.mubr.f32.mxu0 0.0
        %7296 = vmatmul.mubr.f32.gmra.mrb[0].mxu0 %v7128
        %v7297 = vpop.f32.mrb[0].mxu0
        %v7298 = vadd.f32 %v7113, %v7297
        %v7299 = vpop.f32.mrb[0].mxu0
        %7300 = vmatprep.mubr.f32.mxu0 0.0
        %7301 = vmatmul.mubr.f32.gmra.mrb[0].mxu0 %v7131
        %v7302 = vpop.f32.mrb[0].mxu0
        %v7303 = vadd.f32 %v7113, %v7302
        %v7304 = vpop.f32.mrb[0].mxu0
        %7305 = vmatprep.mubr.f32.mxu0 0.0
        %7306 = vmatmul.mubr.f32.gmra.mrb[0].mxu0 %v7134
        %v7307 = vpop.f32.mrb[0].mxu0
        %v7308 = vadd.f32 %v7113, %v7307
        %v7309 = vpop.f32.mrb[0].mxu0
        %7310 = vmatprep.mubr.f32.mxu0 0.0
        %7311 = vmatmul.mubr.f32.gmra.mrb[0].mxu0 %v7137
        %v7312 = vpop.f32.mrb[0].mxu0
        %v7313 = vadd.f32 %v7113, %v7312
        %v7314 = vpop.f32.mrb[0].mxu0
        %7315 = vmatprep.mubr.f32.mxu0 0.0
        %7316 = vmatmul.mubr.f32.gmra.mrb[0].mxu0 %v7140
        %v7317 = vpop.f32.mrb[0].mxu0
        %v7318 = vadd.f32 %v7113, %v7317
        %v7319 = vpop.f32.mrb[0].mxu0
        %7320 = vmatprep.mubr.f32.mxu0 0.0
        %7321 = vmatmul.mubr.f32.gmra.mrb[0].mxu0 %v7143
        %v7322 = vpop.f32.mrb[0].mxu0
        %v7323 = vadd.f32 %v7113, %v7322
        %v7324 = vpop.f32.mrb[0].mxu0
        %7325 = vmatprep.mubr.f32.mxu0 0.0
        %7326 = vmatmul.mubr.f32.gmra.mrb[0].mxu0 %v7146
        %v7327 = vpop.f32.mrb[0].mxu0
        %v7328 = vadd.f32 %v7113, %v7327
        %v7329 = vpop.f32.mrb[0].mxu0
        %7330 = vmatprep.mubr.f32.mxu0 0.0
        %7331 = vmatmul.mubr.f32.gmra.mrb[0].mxu0 %v7149
        %v7332 = vpop.f32.mrb[0].mxu0
        %v7333 = vadd.f32 %v7113, %v7332
        %v7334 = vpop.f32.mrb[0].mxu0
        %7335 = vmatprep.mubr.f32.mxu0 0.0
        %7336 = vmatmul.mubr.f32.gmra.mrb[0].mxu0 %v7152
        %v7337 = vpop.f32.mrb[0].mxu0
        %v7338 = vadd.f32 %v7113, %v7337
        %v7339 = vpop.f32.mrb[0].mxu0
        %7340 = vmatprep.mubr.f32.mxu0 0.0
        %7341 = vmatmul.mubr.f32.gmra.mrb[0].mxu0 %v7155
        %v7342 = vpop.f32.mrb[0].mxu0
        %v7343 = vadd.f32 %v7113, %v7342
        %v7344 = vpop.f32.mrb[0].mxu0
        %7345 = vmatprep.mubr.f32.mxu0 0.0
        %7346 = vmatmul.mubr.f32.gmra.mrb[0].mxu0 %v7158
        %v7347 = vpop.f32.mrb[0].mxu0
        %v7348 = vadd.f32 %v7113, %v7347
        %v7349 = vpop.f32.mrb[0].mxu0
        %7350 = vmatprep.mubr.f32.mxu0 0.0
        %7351 = vmatmul.mubr.f32.gmra.mrb[0].mxu0 %v7161
        %v7352 = vpop.f32.mrb[0].mxu0
        %v7353 = vadd.f32 %v7113, %v7352
        %v7354 = vpop.f32.mrb[0].mxu0
        %7355 = vmatprep.mubr.f32.mxu0 0.0
        %7356 = vmatmul.mubr.f32.gmra.mrb[0].mxu0 %v7164
        %v7357 = vpop.f32.mrb[0].mxu0
        %v7358 = vadd.f32 %v7113, %v7357
        %v7359 = vpop.f32.mrb[0].mxu0
        %7360 = vmatprep.mubr.f32.mxu0 0.0
        %7361 = vmatmul.mubr.f32.gmra.mrb[0].mxu0 %v7167
        %v7362 = vpop.f32.mrb[0].mxu0
        %v7363 = vadd.f32 %v7113, %v7362
        %v7364 = vpop.f32.mrb[0].mxu0
        %7365 = vmatprep.mubr.f32.mxu0 0.0
        %7366 = vmatmul.mubr.f32.gmra.mrb[0].mxu0 %v7170
        %v7367 = vpop.f32.mrb[0].mxu0
        %v7368 = vadd.f32 %v7113, %v7367
        %v7369 = vpop.f32.mrb[0].mxu0
        %7370 = vmatprep.mubr.f32.mxu0 0.0
        %7371 = vmatmul.mubr.f32.gmra.mrb[0].mxu0 %v7173
        %v7372 = vpop.f32.mrb[0].mxu0
        %v7373 = vadd.f32 %v7113, %v7372
        %v7374 = vpop.f32.mrb[0].mxu0
        %7375 = vmatprep.mubr.f32.mxu0 0.0
        %7376 = vmatmul.mubr.f32.gmra.mrb[0].mxu0 %v7176
        %v7377 = vpop.f32.mrb[0].mxu0
        %v7378 = vadd.f32 %v7113, %v7377
        %v7379 = vpop.f32.mrb[0].mxu0
        %7380 = vmatprep.mubr.f32.mxu0 0.0
        %7381 = vmatmul.mubr.f32.gmra.mrb[0].mxu0 %v7179
        %v7382 = vpop.f32.mrb[0].mxu0
        %v7383 = vadd.f32 %v7113, %v7382
        %v7384 = vpop.f32.mrb[0].mxu0
        %7385 = vmatprep.mubr.f32.mxu0 0.0
        %7386 = vmatmul.mubr.f32.gmra.mrb[0].mxu0 %v7182
        %v7387 = vpop.f32.mrb[0].mxu0
        %v7388 = vadd.f32 %v7113, %v7387
        %v7389 = vpop.f32.mrb[0].mxu0
        %7390 = vmatprep.mubr.f32.mxu0 0.0
        %7391 = vmatmul.mubr.f32.gmra.mrb[0].mxu0 %v7185
        %v7392 = vpop.f32.mrb[0].mxu0
        %v7393 = vadd.f32 %v7113, %v7392
        %v7394 = vpop.f32.mrb[0].mxu0
        %7395 = vmatprep.mubr.f32.mxu0 0.0
        %7396 = vmatmul.mubr.f32.gmra.mrb[0].mxu0 %v7188
        %v7397 = vpop.f32.mrb[0].mxu0
        %v7398 = vadd.f32 %v7113, %v7397
        %v7399 = vpop.f32.mrb[0].mxu0
        %7400 = vmatprep.mubr.f32.mxu0 0.0
        %7401 = vmatmul.mubr.f32.gmra.mrb[0].mxu0 %v7191
        %v7402 = vpop.f32.mrb[0].mxu0
        %v7403 = vadd.f32 %v7113, %v7402
        %v7404 = vpop.f32.mrb[0].mxu0
        %7405 = vmatprep.mubr.f32.mxu0 0.0
        %7406 = vmatmul.mubr.f32.gmra.mrb[0].mxu0 %v7194
        %v7407 = vpop.f32.mrb[0].mxu0
        %v7408 = vadd.f32 %v7113, %v7407
        %v7409 = vpop.f32.mrb[0].mxu0
        %7410 = vmatprep.mubr.f32.mxu0 0.0
        %7411 = vmatmul.mubr.f32.gmra.mrb[0].mxu0 %v7197
        %v7412 = vpop.f32.mrb[0].mxu0
        %v7413 = vadd.f32 %v7113, %v7412
        %v7414 = vpop.f32.mrb[0].mxu0
        %7415 = vmatprep.mubr.f32.mxu0 0.0
        %7416 = vmatmul.mubr.f32.gmra.mrb[0].mxu0 %v7200
        %v7417 = vpop.f32.mrb[0].mxu0
        %v7418 = vadd.f32 %v7113, %v7417
        %v7419 = vpop.f32.mrb[0].mxu0
        %7420 = vmatprep.mubr.f32.mxu0 0.0
        %7421 = vmatmul.mubr.f32.gmra.mrb[0].mxu0 %v7203
        %v7422 = vpop.f32.mrb[0].mxu0
        %v7423 = vadd.f32 %v7113, %v7422
        %v7424 = vpop.f32.mrb[0].mxu0
        %7425 = vmatprep.mubr.f32.mxu0 0.0
        %7426 = vmatmul.mubr.f32.gmra.mrb[0].mxu0 %v7206
        %v7427 = vpop.f32.mrb[0].mxu0
        %v7428 = vadd.f32 %v7113, %v7427
        %v7429 = vpop.f32.mrb[0].mxu0
        %7430 = vmatprep.mubr.f32.mxu0 0.0
        %7431 = vmatmul.mubr.f32.gmra.mrb[0].mxu0 %v7209
        %v7432 = vpop.f32.mrb[0].mxu0
        %v7433 = vadd.f32 %v7113, %v7432
        %v7434 = vpop.f32.mrb[0].mxu0
        %7435 = vdwg.mxu0
        %v7436 = vlaneseq
        %v7437 = vshrl.u32 %v7436, 7
        %v7438 = vadd.s32 %v7437, 8
        %v7439 = vadd.s32 %v7437, 16
        %v7440 = vadd.s32 %v7437, 24
        %v7441 = vadd.s32 %v7437, 32
        %v7442 = vadd.s32 %v7437, 40
        %v7443 = vadd.s32 %v7437, 48
        %v7444 = vadd.s32 %v7437, 56
        %v7445 = vadd.s32 %v7437, 64
        %v7446 = vadd.s32 %v7437, 72
        %v7447 = vadd.s32 %v7437, 80
        %v7448 = vadd.s32 %v7437, 88
        %v7449 = vadd.s32 %v7437, 96
        %v7450 = vadd.s32 %v7437, 104
        %v7451 = vadd.s32 %v7437, 112
        %v7452 = vadd.s32 %v7437, 120
        %v7453 = vadd.s32 %v7437, 128
        %v7454 = vadd.s32 %v7437, 136
        %v7455 = vadd.s32 %v7437, 144
        %v7456 = vadd.s32 %v7437, 152
        %v7457 = vadd.s32 %v7437, 160
        %v7458 = vadd.s32 %v7437, 168
        %v7459 = vadd.s32 %v7437, 176
        %v7460 = vadd.s32 %v7437, 184
        %v7461 = vadd.s32 %v7437, 192
        %v7462 = vadd.s32 %v7437, 200
        %v7463 = vadd.s32 %v7437, 208
        %v7464 = vadd.s32 %v7437, 216
        %v7465 = vadd.s32 %v7437, 224
        %v7466 = vadd.s32 %v7437, 232
        %v7467 = vadd.s32 %v7437, 240
        %v7468 = vadd.s32 %v7437, 248
        %v7469 = vcvt.s32.f32 %v7437
        %v7470 = vcvt.s32.f32 %v7438
        %v7471 = vcvt.s32.f32 %v7439
        %v7472 = vcvt.s32.f32 %v7440
        %v7473 = vcvt.s32.f32 %v7441
        %v7474 = vcvt.s32.f32 %v7442
        %v7475 = vcvt.s32.f32 %v7443
        %v7476 = vcvt.s32.f32 %v7444
        %v7477 = vcvt.s32.f32 %v7445
        %v7478 = vcvt.s32.f32 %v7446
        %v7479 = vcvt.s32.f32 %v7447
        %v7480 = vcvt.s32.f32 %v7448
        %v7481 = vcvt.s32.f32 %v7449
        %v7482 = vcvt.s32.f32 %v7450
        %v7483 = vcvt.s32.f32 %v7451
        %v7484 = vcvt.s32.f32 %v7452
        %v7485 = vcvt.s32.f32 %v7453
        %v7486 = vcvt.s32.f32 %v7454
        %v7487 = vcvt.s32.f32 %v7455
        %v7488 = vcvt.s32.f32 %v7456
        %v7489 = vcvt.s32.f32 %v7457
        %v7490 = vcvt.s32.f32 %v7458
        %v7491 = vcvt.s32.f32 %v7459
        %v7492 = vcvt.s32.f32 %v7460
        %v7493 = vcvt.s32.f32 %v7461
        %v7494 = vcvt.s32.f32 %v7462
        %v7495 = vcvt.s32.f32 %v7463
        %v7496 = vcvt.s32.f32 %v7464
        %v7497 = vcvt.s32.f32 %v7465
        %v7498 = vcvt.s32.f32 %v7466
        %v7499 = vcvt.s32.f32 %v7467
        %v7500 = vcvt.s32.f32 %v7468
        %vm7501 = vcmask 39968
        %v7502 = vsel %vm7501, %v7278, -inf
        %v7503 = vsel %vm7501, %v7283, -inf
        %v7504 = vsel %vm7501, %v7288, -inf
        %v7505 = vsel %vm7501, %v7293, -inf
        %v7506 = vsel %vm7501, %v7298, -inf
        %v7507 = vmax.f32 %v7502, %v7506
        %v7508 = vsel %vm7501, %v7303, -inf
        %v7509 = vmax.f32 %v7503, %v7508
        %v7510 = vsel %vm7501, %v7308, -inf
        %v7511 = vmax.f32 %v7504, %v7510
        %v7512 = vsel %vm7501, %v7313, -inf
        %v7513 = vmax.f32 %v7505, %v7512
        %v7514 = vsel %vm7501, %v7318, -inf
        %v7515 = vmax.f32 %v7507, %v7514
        %v7516 = vsel %vm7501, %v7323, -inf
        %v7517 = vmax.f32 %v7509, %v7516
        %v7518 = vsel %vm7501, %v7328, -inf
        %v7519 = vmax.f32 %v7511, %v7518
        %v7520 = vsel %vm7501, %v7333, -inf
        %v7521 = vmax.f32 %v7513, %v7520
        %v7522 = vsel %vm7501, %v7338, -inf
        %v7523 = vmax.f32 %v7515, %v7522
        %v7524 = vsel %vm7501, %v7343, -inf
        %v7525 = vmax.f32 %v7517, %v7524
        %v7526 = vsel %vm7501, %v7348, -inf
        %v7527 = vmax.f32 %v7519, %v7526
        %v7528 = vsel %vm7501, %v7353, -inf
        %v7529 = vmax.f32 %v7521, %v7528
        %v7530 = vsel %vm7501, %v7358, -inf
        %v7531 = vmax.f32 %v7523, %v7530
        %v7532 = vsel %vm7501, %v7363, -inf
        %v7533 = vmax.f32 %v7525, %v7532
        %v7534 = vsel %vm7501, %v7368, -inf
        %v7535 = vmax.f32 %v7527, %v7534
        %v7536 = vsel %vm7501, %v7373, -inf
        %v7537 = vmax.f32 %v7529, %v7536
        %v7538 = vsel %vm7501, %v7378, -inf
        %v7539 = vmax.f32 %v7531, %v7538
        %v7540 = vsel %vm7501, %v7383, -inf
        %v7541 = vmax.f32 %v7533, %v7540
        %v7542 = vsel %vm7501, %v7388, -inf
        %v7543 = vmax.f32 %v7535, %v7542
        %v7544 = vsel %vm7501, %v7393, -inf
        %v7545 = vmax.f32 %v7537, %v7544
        %v7546 = vsel %vm7501, %v7398, -inf
        %v7547 = vmax.f32 %v7539, %v7546
        %v7548 = vsel %vm7501, %v7403, -inf
        %v7549 = vmax.f32 %v7541, %v7548
        %v7550 = vsel %vm7501, %v7408, -inf
        %v7551 = vmax.f32 %v7543, %v7550
        %v7552 = vsel %vm7501, %v7413, -inf
        %v7553 = vmax.f32 %v7545, %v7552
        %v7554 = vsel %vm7501, %v7418, -inf
        %v7555 = vmax.f32 %v7547, %v7554
        %v7556 = vsel %vm7501, %v7423, -inf
        %v7557 = vmax.f32 %v7549, %v7556
        %v7558 = vsel %vm7501, %v7428, -inf
        %v7559 = vmax.f32 %v7551, %v7558
        %v7560 = vsel %vm7501, %v7433, -inf
        %v7561 = vmax.f32 %v7553, %v7560
        %v7562 = vmax.f32 %v7555, %v7557
        %v7563 = vmax.f32 %v7559, %v7561
        %v7564 = vmax.f32 %v7562, %v7563
        %v7565 = vrot.slane %v7564, 4
        %v7566 = vmax.f32 %v7564, %v7565
        %v7567 = vrot.slane %v7566, 2
        %v7568 = vmax.f32 %v7566, %v7567
        %v7569 = vrot.slane %v7568, 1
        %v7570 = vmax.f32 %v7568, %v7569
        %vm7571 = vcmp.eq.f32.partialorder %v7278, %v7570
        %vm7572 = vcmp.eq.f32.partialorder %v7283, %v7570
        %vm7573 = vcmp.eq.f32.partialorder %v7288, %v7570
        %vm7574 = vcmp.eq.f32.partialorder %v7293, %v7570
        %vm7575 = vcmp.eq.f32.partialorder %v7298, %v7570
        %vm7576 = vcmp.eq.f32.partialorder %v7303, %v7570
        %vm7577 = vcmp.eq.f32.partialorder %v7308, %v7570
        %vm7578 = vcmp.eq.f32.partialorder %v7313, %v7570
        %vm7579 = vcmp.eq.f32.partialorder %v7318, %v7570
        %vm7580 = vcmp.eq.f32.partialorder %v7323, %v7570
        %vm7581 = vcmp.eq.f32.partialorder %v7328, %v7570
        %vm7582 = vcmp.eq.f32.partialorder %v7333, %v7570
        %vm7583 = vcmp.eq.f32.partialorder %v7338, %v7570
        %vm7584 = vcmp.eq.f32.partialorder %v7343, %v7570
        %vm7585 = vcmp.eq.f32.partialorder %v7348, %v7570
        %vm7586 = vcmp.eq.f32.partialorder %v7353, %v7570
        %vm7587 = vcmp.eq.f32.partialorder %v7358, %v7570
        %vm7588 = vcmp.eq.f32.partialorder %v7363, %v7570
        %vm7589 = vcmp.eq.f32.partialorder %v7368, %v7570
        %vm7590 = vcmp.eq.f32.partialorder %v7373, %v7570
        %vm7591 = vcmp.eq.f32.partialorder %v7378, %v7570
        %vm7592 = vcmp.eq.f32.partialorder %v7383, %v7570
        %vm7593 = vcmp.eq.f32.partialorder %v7388, %v7570
        %vm7594 = vcmp.eq.f32.partialorder %v7393, %v7570
        %vm7595 = vcmp.eq.f32.partialorder %v7398, %v7570
        %vm7596 = vcmp.eq.f32.partialorder %v7403, %v7570
        %vm7597 = vcmp.eq.f32.partialorder %v7408, %v7570
        %vm7598 = vcmp.eq.f32.partialorder %v7413, %v7570
        %vm7599 = vcmp.eq.f32.partialorder %v7418, %v7570
        %vm7600 = vcmp.eq.f32.partialorder %v7423, %v7570
        %vm7601 = vcmp.eq.f32.partialorder %v7428, %v7570
        %vm7602 = vcmp.eq.f32.partialorder %v7433, %v7570
        %v7603 = vsel %vm7571, %v7469, 256.0
        %v7604 = vsel %vm7572, %v7470, 256.0
        %v7605 = vsel %vm7573, %v7471, 256.0
        %v7606 = vsel %vm7574, %v7472, 256.0
        %v7607 = vsel %vm7575, %v7473, 256.0
        %v7608 = vsel %vm7576, %v7474, 256.0
        %v7609 = vsel %vm7577, %v7475, 256.0
        %v7610 = vsel %vm7578, %v7476, 256.0
        %v7611 = vsel %vm7579, %v7477, 256.0
        %v7612 = vsel %vm7580, %v7478, 256.0
        %v7613 = vsel %vm7581, %v7479, 256.0
        %v7614 = vsel %vm7582, %v7480, 256.0
        %v7615 = vsel %vm7583, %v7481, 256.0
        %v7616 = vsel %vm7584, %v7482, 256.0
        %v7617 = vsel %vm7585, %v7483, 256.0
        %v7618 = vsel %vm7586, %v7484, 256.0
        %v7619 = vsel %vm7587, %v7485, 256.0
        %v7620 = vsel %vm7588, %v7486, 256.0
        %v7621 = vsel %vm7589, %v7487, 256.0
        %v7622 = vsel %vm7590, %v7488, 256.0
        %v7623 = vsel %vm7591, %v7489, 256.0
        %v7624 = vsel %vm7592, %v7490, 256.0
        %v7625 = vsel %vm7593, %v7491, 256.0
        %v7626 = vsel %vm7594, %v7492, 256.0
        %v7627 = vsel %vm7595, %v7493, 256.0
        %v7628 = vsel %vm7596, %v7494, 256.0
        %v7629 = vsel %vm7597, %v7495, 256.0
        %v7630 = vsel %vm7598, %v7496, 256.0
        %v7631 = vsel %vm7599, %v7497, 256.0
        %v7632 = vsel %vm7600, %v7498, 256.0
        %v7633 = vsel %vm7601, %v7499, 256.0
        %v7634 = vsel %vm7602, %v7500, 256.0
        %v7635 = vsel %vm7501, %v7603, inf
        %v7636 = vsel %vm7501, %v7604, inf
        %v7637 = vsel %vm7501, %v7605, inf
        %v7638 = vsel %vm7501, %v7606, inf
        %v7639 = vsel %vm7501, %v7607, inf
        %v7640 = vmin.f32 %v7635, %v7639
        %v7641 = vsel %vm7501, %v7608, inf
        %v7642 = vmin.f32 %v7636, %v7641
        %v7643 = vsel %vm7501, %v7609, inf
        %v7644 = vmin.f32 %v7637, %v7643
        %v7645 = vsel %vm7501, %v7610, inf
        %v7646 = vmin.f32 %v7638, %v7645
        %v7647 = vsel %vm7501, %v7611, inf
        %v7648 = vmin.f32 %v7640, %v7647
        %v7649 = vsel %vm7501, %v7612, inf
        %v7650 = vmin.f32 %v7642, %v7649
        %v7651 = vsel %vm7501, %v7613, inf
        %v7652 = vmin.f32 %v7644, %v7651
        %v7653 = vsel %vm7501, %v7614, inf
        %v7654 = vmin.f32 %v7646, %v7653
        %v7655 = vsel %vm7501, %v7615, inf
        %v7656 = vmin.f32 %v7648, %v7655
        %v7657 = vsel %vm7501, %v7616, inf
        %v7658 = vmin.f32 %v7650, %v7657
        %v7659 = vsel %vm7501, %v7617, inf
        %v7660 = vmin.f32 %v7652, %v7659
        %v7661 = vsel %vm7501, %v7618, inf
        %v7662 = vmin.f32 %v7654, %v7661
        %v7663 = vsel %vm7501, %v7619, inf
        %v7664 = vmin.f32 %v7656, %v7663
        %v7665 = vsel %vm7501, %v7620, inf
        %v7666 = vmin.f32 %v7658, %v7665
        %v7667 = vsel %vm7501, %v7621, inf
        %v7668 = vmin.f32 %v7660, %v7667
        %v7669 = vsel %vm7501, %v7622, inf
        %v7670 = vmin.f32 %v7662, %v7669
        %v7671 = vsel %vm7501, %v7623, inf
        %v7672 = vmin.f32 %v7664, %v7671
        %v7673 = vsel %vm7501, %v7624, inf
        %v7674 = vmin.f32 %v7666, %v7673
        %v7675 = vsel %vm7501, %v7625, inf
        %v7676 = vmin.f32 %v7668, %v7675
        %v7677 = vsel %vm7501, %v7626, inf
        %v7678 = vmin.f32 %v7670, %v7677
        %v7679 = vsel %vm7501, %v7627, inf
        %v7680 = vmin.f32 %v7672, %v7679
        %v7681 = vsel %vm7501, %v7628, inf
        %v7682 = vmin.f32 %v7674, %v7681
        %v7683 = vsel %vm7501, %v7629, inf
        %v7684 = vmin.f32 %v7676, %v7683
        %v7685 = vsel %vm7501, %v7630, inf
        %v7686 = vmin.f32 %v7678, %v7685
        %v7687 = vsel %vm7501, %v7631, inf
        %v7688 = vmin.f32 %v7680, %v7687
        %v7689 = vsel %vm7501, %v7632, inf
        %v7690 = vmin.f32 %v7682, %v7689
        %v7691 = vsel %vm7501, %v7633, inf
        %v7692 = vmin.f32 %v7684, %v7691
        %v7693 = vsel %vm7501, %v7634, inf
        %v7694 = vmin.f32 %v7686, %v7693
        %v7695 = vmin.f32 %v7688, %v7690
        %v7696 = vmin.f32 %v7692, %v7694
        %v7697 = vmin.f32 %v7695, %v7696
        %v7698 = vrot.slane %v7697, 4
        %v7699 = vmin.f32 %v7697, %v7698
        %v7700 = vrot.slane %v7699, 2
        %v7701 = vmin.f32 %v7699, %v7700
        %v7702 = vrot.slane %v7701, 1
        %v7703 = vmin.f32 %v7701, %v7702
        %vm7704 = vcmp.eq.f32.partialorder %v7469, %v7703
        %vm7705 = vcmp.eq.f32.partialorder %v7470, %v7703
        %vm7706 = vcmp.eq.f32.partialorder %v7471, %v7703
        %vm7707 = vcmp.eq.f32.partialorder %v7472, %v7703
        %vm7708 = vcmp.eq.f32.partialorder %v7473, %v7703
        %vm7709 = vcmp.eq.f32.partialorder %v7474, %v7703
        %vm7710 = vcmp.eq.f32.partialorder %v7475, %v7703
        %vm7711 = vcmp.eq.f32.partialorder %v7476, %v7703
        %vm7712 = vcmp.eq.f32.partialorder %v7477, %v7703
        %vm7713 = vcmp.eq.f32.partialorder %v7478, %v7703
        %vm7714 = vcmp.eq.f32.partialorder %v7479, %v7703
        %vm7715 = vcmp.eq.f32.partialorder %v7480, %v7703
        %vm7716 = vcmp.eq.f32.partialorder %v7481, %v7703
        %vm7717 = vcmp.eq.f32.partialorder %v7482, %v7703
        %vm7718 = vcmp.eq.f32.partialorder %v7483, %v7703
        %vm7719 = vcmp.eq.f32.partialorder %v7484, %v7703
        %vm7720 = vcmp.eq.f32.partialorder %v7485, %v7703
        %vm7721 = vcmp.eq.f32.partialorder %v7486, %v7703
        %vm7722 = vcmp.eq.f32.partialorder %v7487, %v7703
        %vm7723 = vcmp.eq.f32.partialorder %v7488, %v7703
        %vm7724 = vcmp.eq.f32.partialorder %v7489, %v7703
        %vm7725 = vcmp.eq.f32.partialorder %v7490, %v7703
        %vm7726 = vcmp.eq.f32.partialorder %v7491, %v7703
        %vm7727 = vcmp.eq.f32.partialorder %v7492, %v7703
        %vm7728 = vcmp.eq.f32.partialorder %v7493, %v7703
        %vm7729 = vcmp.eq.f32.partialorder %v7494, %v7703
        %vm7730 = vcmp.eq.f32.partialorder %v7495, %v7703
        %vm7731 = vcmp.eq.f32.partialorder %v7496, %v7703
        %vm7732 = vcmp.eq.f32.partialorder %v7497, %v7703
        %vm7733 = vcmp.eq.f32.partialorder %v7498, %v7703
        %vm7734 = vcmp.eq.f32.partialorder %v7499, %v7703
        %vm7735 = vcmp.eq.f32.partialorder %v7500, %v7703
        %v7736 = vsel %vm7704, 1, 0
        %v7737 = vsel %vm7705, 1, 0
        %v7738 = vsel %vm7706, 1, 0
        %v7739 = vsel %vm7707, 1, 0
        %v7740 = vsel %vm7708, 1, 0
        %v7741 = vsel %vm7709, 1, 0
        %v7742 = vsel %vm7710, 1, 0
        %v7743 = vsel %vm7711, 1, 0
        %v7744 = vsel %vm7712, 1, 0
        %v7745 = vsel %vm7713, 1, 0
        %v7746 = vsel %vm7714, 1, 0
        %v7747 = vsel %vm7715, 1, 0
        %v7748 = vsel %vm7716, 1, 0
        %v7749 = vsel %vm7717, 1, 0
        %v7750 = vsel %vm7718, 1, 0
        %v7751 = vsel %vm7719, 1, 0
        %v7752 = vsel %vm7720, 1, 0
        %v7753 = vsel %vm7721, 1, 0
        %v7754 = vsel %vm7722, 1, 0
        %v7755 = vsel %vm7723, 1, 0
        %v7756 = vsel %vm7724, 1, 0
        %v7757 = vsel %vm7725, 1, 0
        %v7758 = vsel %vm7726, 1, 0
        %v7759 = vsel %vm7727, 1, 0
        %v7760 = vsel %vm7728, 1, 0
        %v7761 = vsel %vm7729, 1, 0
        %v7762 = vsel %vm7730, 1, 0
        %v7763 = vsel %vm7731, 1, 0
        %v7764 = vsel %vm7732, 1, 0
        %v7765 = vsel %vm7733, 1, 0
        %v7766 = vsel %vm7734, 1, 0
        %v7767 = vsel %vm7735, 1, 0
        %v7768 = vcvt.s32.f32 %v7736
        %v7769 = vcvt.s32.f32 %v7737
        %v7770 = vcvt.s32.f32 %v7738
        %v7771 = vcvt.s32.f32 %v7739
        %v7772 = vcvt.s32.f32 %v7740
        %v7773 = vcvt.s32.f32 %v7741
        %v7774 = vcvt.s32.f32 %v7742
        %v7775 = vcvt.s32.f32 %v7743
        %v7776 = vcvt.s32.f32 %v7744
        %v7777 = vcvt.s32.f32 %v7745
        %v7778 = vcvt.s32.f32 %v7746
        %v7779 = vcvt.s32.f32 %v7747
        %v7780 = vcvt.s32.f32 %v7748
        %v7781 = vcvt.s32.f32 %v7749
        %v7782 = vcvt.s32.f32 %v7750
        %v7783 = vcvt.s32.f32 %v7751
        %v7784 = vcvt.s32.f32 %v7752
        %v7785 = vcvt.s32.f32 %v7753
        %v7786 = vcvt.s32.f32 %v7754
        %v7787 = vcvt.s32.f32 %v7755
        %v7788 = vcvt.s32.f32 %v7756
        %v7789 = vcvt.s32.f32 %v7757
        %v7790 = vcvt.s32.f32 %v7758
        %v7791 = vcvt.s32.f32 %v7759
        %v7792 = vcvt.s32.f32 %v7760
        %v7793 = vcvt.s32.f32 %v7761
        %v7794 = vcvt.s32.f32 %v7762
        %v7795 = vcvt.s32.f32 %v7763
        %v7796 = vcvt.s32.f32 %v7764
        %v7797 = vcvt.s32.f32 %v7765
        %v7798 = vcvt.s32.f32 %v7766
        %v7799 = vcvt.s32.f32 %v7767
        %7801 = vset.pattern.permute.xlu0 4
        %7802 = vperm.xlu0 %7801, %v7768
        %v7803 = vpop.permute.xlu0 %7802
        %7806 = vset.pattern.permute.xlu0 4
        %7807 = vperm.xlu0 %7806, %v7769
        %v7808 = vpop.permute.xlu0 %7807
        %7811 = vset.pattern.permute.xlu0 4
        %7812 = vperm.xlu0 %7811, %v7770
        %v7813 = vpop.permute.xlu0 %7812
        %7816 = vset.pattern.permute.xlu0 4
        %7817 = vperm.xlu0 %7816, %v7771
        %v7818 = vpop.permute.xlu0 %7817
        %7821 = vset.pattern.permute.xlu0 4
        %7822 = vperm.xlu0 %7821, %v7772
        %v7823 = vpop.permute.xlu0 %7822
        %7826 = vset.pattern.permute.xlu0 4
        %7827 = vperm.xlu0 %7826, %v7773
        %v7828 = vpop.permute.xlu0 %7827
        %7831 = vset.pattern.permute.xlu0 4
        %7832 = vperm.xlu0 %7831, %v7774
        %v7833 = vpop.permute.xlu0 %7832
        %7836 = vset.pattern.permute.xlu0 4
        %7837 = vperm.xlu0 %7836, %v7775
        %v7838 = vpop.permute.xlu0 %7837
        %7841 = vset.pattern.permute.xlu0 4
        %7842 = vperm.xlu0 %7841, %v7776
        %v7843 = vpop.permute.xlu0 %7842
        %7846 = vset.pattern.permute.xlu0 4
        %7847 = vperm.xlu0 %7846, %v7777
        %v7848 = vpop.permute.xlu0 %7847
        %7851 = vset.pattern.permute.xlu0 4
        %7852 = vperm.xlu0 %7851, %v7778
        %v7853 = vpop.permute.xlu0 %7852
        %7856 = vset.pattern.permute.xlu0 4
        %7857 = vperm.xlu0 %7856, %v7779
        %v7858 = vpop.permute.xlu0 %7857
        %7861 = vset.pattern.permute.xlu0 4
        %7862 = vperm.xlu0 %7861, %v7780
        %v7863 = vpop.permute.xlu0 %7862
        %7866 = vset.pattern.permute.xlu0 4
        %7867 = vperm.xlu0 %7866, %v7781
        %v7868 = vpop.permute.xlu0 %7867
        %7871 = vset.pattern.permute.xlu0 4
        %7872 = vperm.xlu0 %7871, %v7782
        %v7873 = vpop.permute.xlu0 %7872
        %7876 = vset.pattern.permute.xlu0 4
        %7877 = vperm.xlu0 %7876, %v7783
        %v7878 = vpop.permute.xlu0 %7877
        %7881 = vset.pattern.permute.xlu0 4
        %7882 = vperm.xlu0 %7881, %v7784
        %v7883 = vpop.permute.xlu0 %7882
        %7886 = vset.pattern.permute.xlu0 4
        %7887 = vperm.xlu0 %7886, %v7785
        %v7888 = vpop.permute.xlu0 %7887
        %7891 = vset.pattern.permute.xlu0 4
        %7892 = vperm.xlu0 %7891, %v7786
        %v7893 = vpop.permute.xlu0 %7892
        %7896 = vset.pattern.permute.xlu0 4
        %7897 = vperm.xlu0 %7896, %v7787
        %v7898 = vpop.permute.xlu0 %7897
        %7901 = vset.pattern.permute.xlu0 4
        %7902 = vperm.xlu0 %7901, %v7788
        %v7903 = vpop.permute.xlu0 %7902
        %7906 = vset.pattern.permute.xlu0 4
        %7907 = vperm.xlu0 %7906, %v7789
        %v7908 = vpop.permute.xlu0 %7907
        %7911 = vset.pattern.permute.xlu0 4
        %7912 = vperm.xlu0 %7911, %v7790
        %v7913 = vpop.permute.xlu0 %7912
        %7916 = vset.pattern.permute.xlu0 4
        %7917 = vperm.xlu0 %7916, %v7791
        %v7918 = vpop.permute.xlu0 %7917
        %7921 = vset.pattern.permute.xlu0 4
        %7922 = vperm.xlu0 %7921, %v7792
        %v7923 = vpop.permute.xlu0 %7922
        %7926 = vset.pattern.permute.xlu0 4
        %7927 = vperm.xlu0 %7926, %v7793
        %v7928 = vpop.permute.xlu0 %7927
        %7931 = vset.pattern.permute.xlu0 4
        %7932 = vperm.xlu0 %7931, %v7794
        %v7933 = vpop.permute.xlu0 %7932
        %7936 = vset.pattern.permute.xlu0 4
        %7937 = vperm.xlu0 %7936, %v7795
        %v7938 = vpop.permute.xlu0 %7937
        %7941 = vset.pattern.permute.xlu0 4
        %7942 = vperm.xlu0 %7941, %v7796
        %v7943 = vpop.permute.xlu0 %7942
        %7946 = vset.pattern.permute.xlu0 4
        %7947 = vperm.xlu0 %7946, %v7797
        %v7948 = vpop.permute.xlu0 %7947
        %7951 = vset.pattern.permute.xlu0 4
        %7952 = vperm.xlu0 %7951, %v7798
        %v7953 = vpop.permute.xlu0 %7952
        %7956 = vset.pattern.permute.xlu0 4
        %7957 = vperm.xlu0 %7956, %v7799
        %v7958 = vpop.permute.xlu0 %7957
        %v7960 = vmul.f32 %v7278, %v7803
        %v7961 = vmul.f32 %v7283, %v7808
        %v7962 = vmul.f32 %v7288, %v7813
        %v7963 = vmul.f32 %v7293, %v7818
        %v7964 = vmul.f32 %v7298, %v7823
        %v7965 = vmul.f32 %v7303, %v7828
        %v7966 = vmul.f32 %v7308, %v7833
        %v7967 = vmul.f32 %v7313, %v7838
        %v7968 = vmul.f32 %v7318, %v7843
        %v7969 = vmul.f32 %v7323, %v7848
        %v7970 = vmul.f32 %v7328, %v7853
        %v7971 = vmul.f32 %v7333, %v7858
        %v7972 = vmul.f32 %v7338, %v7863
        %v7973 = vmul.f32 %v7343, %v7868
        %v7974 = vmul.f32 %v7348, %v7873
        %v7975 = vmul.f32 %v7353, %v7878
        %v7976 = vmul.f32 %v7358, %v7883
        %v7977 = vmul.f32 %v7363, %v7888
        %v7978 = vmul.f32 %v7368, %v7893
        %v7979 = vmul.f32 %v7373, %v7898
        %v7980 = vmul.f32 %v7378, %v7903
        %v7981 = vmul.f32 %v7383, %v7908
        %v7982 = vmul.f32 %v7388, %v7913
        %v7983 = vmul.f32 %v7393, %v7918
        %v7984 = vmul.f32 %v7398, %v7923
        %v7985 = vmul.f32 %v7403, %v7928
        %v7986 = vmul.f32 %v7408, %v7933
        %v7987 = vmul.f32 %v7413, %v7938
        %v7988 = vmul.f32 %v7418, %v7943
        %v7989 = vmul.f32 %v7423, %v7948
        %v7990 = vmul.f32 %v7428, %v7953
        %v7991 = vmul.f32 %v7433, %v7958
        %v7992 = vsel %vm1534, %v7960, 0.0
        %v7993 = vsel %vm1534, %v7961, 0.0
        %v7994 = vadd.f32 %v7992, %v7993
        %v7995 = vsel %vm1534, %v7962, 0.0
        %v7996 = vadd.f32 %v7994, %v7995
        %v7997 = vsel %vm1534, %v7963, 0.0
        %v7998 = vadd.f32 %v7996, %v7997
        %v7999 = vsel %vm1534, %v7964, 0.0
        %v8000 = vadd.f32 %v7998, %v7999
        %v8001 = vsel %vm1534, %v7965, 0.0
        %v8002 = vadd.f32 %v8000, %v8001
        %v8003 = vsel %vm1534, %v7966, 0.0
        %v8004 = vadd.f32 %v8002, %v8003
        %v8005 = vsel %vm1534, %v7967, 0.0
        %v8006 = vadd.f32 %v8004, %v8005
        %v8007 = vsel %vm1534, %v7968, 0.0
        %v8008 = vadd.f32 %v8006, %v8007
        %v8009 = vsel %vm1534, %v7969, 0.0
        %v8010 = vadd.f32 %v8008, %v8009
        %v8011 = vsel %vm1534, %v7970, 0.0
        %v8012 = vadd.f32 %v8010, %v8011
        %v8013 = vsel %vm1534, %v7971, 0.0
        %v8014 = vadd.f32 %v8012, %v8013
        %v8015 = vsel %vm1534, %v7972, 0.0
        %v8016 = vadd.f32 %v8014, %v8015
        %v8017 = vsel %vm1534, %v7973, 0.0
        %v8018 = vadd.f32 %v8016, %v8017
        %v8019 = vsel %vm1534, %v7974, 0.0
        %v8020 = vadd.f32 %v8018, %v8019
        %v8021 = vsel %vm1534, %v7975, 0.0
        %v8022 = vadd.f32 %v8020, %v8021
        %v8023 = vsel %vm1534, %v7976, 0.0
        %v8024 = vadd.f32 %v8022, %v8023
        %v8025 = vsel %vm1534, %v7977, 0.0
        %v8026 = vadd.f32 %v8024, %v8025
        %v8027 = vsel %vm1534, %v7978, 0.0
        %v8028 = vadd.f32 %v8026, %v8027
        %v8029 = vsel %vm1534, %v7979, 0.0
        %v8030 = vadd.f32 %v8028, %v8029
        %v8031 = vsel %vm1534, %v7980, 0.0
        %v8032 = vadd.f32 %v8030, %v8031
        %v8033 = vsel %vm1534, %v7981, 0.0
        %v8034 = vadd.f32 %v8032, %v8033
        %v8035 = vsel %vm1534, %v7982, 0.0
        %v8036 = vadd.f32 %v8034, %v8035
        %v8037 = vsel %vm1534, %v7983, 0.0
        %v8038 = vadd.f32 %v8036, %v8037
        %v8039 = vsel %vm1534, %v7984, 0.0
        %v8040 = vadd.f32 %v8038, %v8039
        %v8041 = vsel %vm1534, %v7985, 0.0
        %v8042 = vadd.f32 %v8040, %v8041
        %v8043 = vsel %vm1534, %v7986, 0.0
        %v8044 = vadd.f32 %v8042, %v8043
        %v8045 = vsel %vm1534, %v7987, 0.0
        %v8046 = vadd.f32 %v8044, %v8045
        %v8047 = vsel %vm1534, %v7988, 0.0
        %v8048 = vadd.f32 %v8046, %v8047
        %v8049 = vsel %vm1534, %v7989, 0.0
        %v8050 = vadd.f32 %v8048, %v8049
        %v8051 = vsel %vm1534, %v7990, 0.0
        %v8052 = vadd.f32 %v8050, %v8051
        %v8053 = vsel %vm1534, %v7991, 0.0
        %v8054 = vadd.f32 %v8052, %v8053
        %v8055 = vrot.slane %v8054, 4
        %v8056 = vadd.f32 %v8054, %v8055
        %v8057 = vrot.slane %v8056, 2
        %v8058 = vadd.f32 %v8056, %v8057
        %v8059 = vrot.slane %v8058, 1
        %v8060 = vadd.f32 %v8058, %v8059
        %v8061 = vmul.f32 %v7469, 0.0625
        %v8062 = vmul.f32 %v7470, 0.0625
        %v8063 = vmul.f32 %v7471, 0.0625
        %v8064 = vmul.f32 %v7472, 0.0625
        %v8065 = vmul.f32 %v7473, 0.0625
        %v8066 = vmul.f32 %v7474, 0.0625
        %v8067 = vmul.f32 %v7475, 0.0625
        %v8068 = vmul.f32 %v7476, 0.0625
        %v8069 = vmul.f32 %v7477, 0.0625
        %v8070 = vmul.f32 %v7478, 0.0625
        %v8071 = vmul.f32 %v7479, 0.0625
        %v8072 = vmul.f32 %v7480, 0.0625
        %v8073 = vmul.f32 %v7481, 0.0625
        %v8074 = vmul.f32 %v7482, 0.0625
        %v8075 = vmul.f32 %v7483, 0.0625
        %v8076 = vmul.f32 %v7484, 0.0625
        %v8077 = vmul.f32 %v7485, 0.0625
        %v8078 = vmul.f32 %v7486, 0.0625
        %v8079 = vmul.f32 %v7487, 0.0625
        %v8080 = vmul.f32 %v7488, 0.0625
        %v8081 = vmul.f32 %v7489, 0.0625
        %v8082 = vmul.f32 %v7490, 0.0625
        %v8083 = vmul.f32 %v7491, 0.0625
        %v8084 = vmul.f32 %v7492, 0.0625
        %v8085 = vmul.f32 %v7493, 0.0625
        %v8086 = vmul.f32 %v7494, 0.0625
        %v8087 = vmul.f32 %v7495, 0.0625
        %v8088 = vmul.f32 %v7496, 0.0625
        %v8089 = vmul.f32 %v7497, 0.0625
        %v8090 = vmul.f32 %v7498, 0.0625
        %v8091 = vmul.f32 %v7499, 0.0625
        %v8092 = vmul.f32 %v7500, 0.0625
        %v8093 = vfloor.f32 %v8061
        %v8094 = vfloor.f32 %v8062
        %v8095 = vfloor.f32 %v8063
        %v8096 = vfloor.f32 %v8064
        %v8097 = vfloor.f32 %v8065
        %v8098 = vfloor.f32 %v8066
        %v8099 = vfloor.f32 %v8067
        %v8100 = vfloor.f32 %v8068
        %v8101 = vfloor.f32 %v8069
        %v8102 = vfloor.f32 %v8070
        %v8103 = vfloor.f32 %v8071
        %v8104 = vfloor.f32 %v8072
        %v8105 = vfloor.f32 %v8073
        %v8106 = vfloor.f32 %v8074
        %v8107 = vfloor.f32 %v8075
        %v8108 = vfloor.f32 %v8076
        %v8109 = vfloor.f32 %v8077
        %v8110 = vfloor.f32 %v8078
        %v8111 = vfloor.f32 %v8079
        %v8112 = vfloor.f32 %v8080
        %v8113 = vfloor.f32 %v8081
        %v8114 = vfloor.f32 %v8082
        %v8115 = vfloor.f32 %v8083
        %v8116 = vfloor.f32 %v8084
        %v8117 = vfloor.f32 %v8085
        %v8118 = vfloor.f32 %v8086
        %v8119 = vfloor.f32 %v8087
        %v8120 = vfloor.f32 %v8088
        %v8121 = vfloor.f32 %v8089
        %v8122 = vfloor.f32 %v8090
        %v8123 = vfloor.f32 %v8091
        %v8124 = vfloor.f32 %v8092
        %v8125 = vmul.f32 %v8093, 16.0
        %v8126 = vmul.f32 %v8094, 16.0
        %v8127 = vmul.f32 %v8095, 16.0
        %v8128 = vmul.f32 %v8096, 16.0
        %v8129 = vmul.f32 %v8097, 16.0
        %v8130 = vmul.f32 %v8098, 16.0
        %v8131 = vmul.f32 %v8099, 16.0
        %v8132 = vmul.f32 %v8100, 16.0
        %v8133 = vmul.f32 %v8101, 16.0
        %v8134 = vmul.f32 %v8102, 16.0
        %v8135 = vmul.f32 %v8103, 16.0
        %v8136 = vmul.f32 %v8104, 16.0
        %v8137 = vmul.f32 %v8105, 16.0
        %v8138 = vmul.f32 %v8106, 16.0
        %v8139 = vmul.f32 %v8107, 16.0
        %v8140 = vmul.f32 %v8108, 16.0
        %v8141 = vmul.f32 %v8109, 16.0
        %v8142 = vmul.f32 %v8110, 16.0
        %v8143 = vmul.f32 %v8111, 16.0
        %v8144 = vmul.f32 %v8112, 16.0
        %v8145 = vmul.f32 %v8113, 16.0
        %v8146 = vmul.f32 %v8114, 16.0
        %v8147 = vmul.f32 %v8115, 16.0
        %v8148 = vmul.f32 %v8116, 16.0
        %v8149 = vmul.f32 %v8117, 16.0
        %v8150 = vmul.f32 %v8118, 16.0
        %v8151 = vmul.f32 %v8119, 16.0
        %v8152 = vmul.f32 %v8120, 16.0
        %v8153 = vmul.f32 %v8121, 16.0
        %v8154 = vmul.f32 %v8122, 16.0
        %v8155 = vmul.f32 %v8123, 16.0
        %v8156 = vmul.f32 %v8124, 16.0
        %v8157 = vsub.f32 %v7469, %v8125
        %v8158 = vsub.f32 %v7470, %v8126
        %v8159 = vsub.f32 %v7471, %v8127
        %v8160 = vsub.f32 %v7472, %v8128
        %v8161 = vsub.f32 %v7473, %v8129
        %v8162 = vsub.f32 %v7474, %v8130
        %v8163 = vsub.f32 %v7475, %v8131
        %v8164 = vsub.f32 %v7476, %v8132
        %v8165 = vsub.f32 %v7477, %v8133
        %v8166 = vsub.f32 %v7478, %v8134
        %v8167 = vsub.f32 %v7479, %v8135
        %v8168 = vsub.f32 %v7480, %v8136
        %v8169 = vsub.f32 %v7481, %v8137
        %v8170 = vsub.f32 %v7482, %v8138
        %v8171 = vsub.f32 %v7483, %v8139
        %v8172 = vsub.f32 %v7484, %v8140
        %v8173 = vsub.f32 %v7485, %v8141
        %v8174 = vsub.f32 %v7486, %v8142
        %v8175 = vsub.f32 %v7487, %v8143
        %v8176 = vsub.f32 %v7488, %v8144
        %v8177 = vsub.f32 %v7489, %v8145
        %v8178 = vsub.f32 %v7490, %v8146
        %v8179 = vsub.f32 %v7491, %v8147
        %v8180 = vsub.f32 %v7492, %v8148
        %v8181 = vsub.f32 %v7493, %v8149
        %v8182 = vsub.f32 %v7494, %v8150
        %v8183 = vsub.f32 %v7495, %v8151
        %v8184 = vsub.f32 %v7496, %v8152
        %v8185 = vsub.f32 %v7497, %v8153
        %v8186 = vsub.f32 %v7498, %v8154
        %v8187 = vsub.f32 %v7499, %v8155
        %v8188 = vsub.f32 %v7500, %v8156
        %v8189 = vmul.f32 %v8157, 16.0
        %v8190 = vmul.f32 %v8158, 16.0
        %v8191 = vmul.f32 %v8159, 16.0
        %v8192 = vmul.f32 %v8160, 16.0
        %v8193 = vmul.f32 %v8161, 16.0
        %v8194 = vmul.f32 %v8162, 16.0
        %v8195 = vmul.f32 %v8163, 16.0
        %v8196 = vmul.f32 %v8164, 16.0
        %v8197 = vmul.f32 %v8165, 16.0
        %v8198 = vmul.f32 %v8166, 16.0
        %v8199 = vmul.f32 %v8167, 16.0
        %v8200 = vmul.f32 %v8168, 16.0
        %v8201 = vmul.f32 %v8169, 16.0
        %v8202 = vmul.f32 %v8170, 16.0
        %v8203 = vmul.f32 %v8171, 16.0
        %v8204 = vmul.f32 %v8172, 16.0
        %v8205 = vmul.f32 %v8173, 16.0
        %v8206 = vmul.f32 %v8174, 16.0
        %v8207 = vmul.f32 %v8175, 16.0
        %v8208 = vmul.f32 %v8176, 16.0
        %v8209 = vmul.f32 %v8177, 16.0
        %v8210 = vmul.f32 %v8178, 16.0
        %v8211 = vmul.f32 %v8179, 16.0
        %v8212 = vmul.f32 %v8180, 16.0
        %v8213 = vmul.f32 %v8181, 16.0
        %v8214 = vmul.f32 %v8182, 16.0
        %v8215 = vmul.f32 %v8183, 16.0
        %v8216 = vmul.f32 %v8184, 16.0
        %v8217 = vmul.f32 %v8185, 16.0
        %v8218 = vmul.f32 %v8186, 16.0
        %v8219 = vmul.f32 %v8187, 16.0
        %v8220 = vmul.f32 %v8188, 16.0
        %v8221 = vmul.f32 %v8189, %v7768
        %v8222 = vmul.f32 %v8190, %v7769
        %v8223 = vmul.f32 %v8191, %v7770
        %v8224 = vmul.f32 %v8192, %v7771
        %v8225 = vmul.f32 %v8193, %v7772
        %v8226 = vmul.f32 %v8194, %v7773
        %v8227 = vmul.f32 %v8195, %v7774
        %v8228 = vmul.f32 %v8196, %v7775
        %v8229 = vmul.f32 %v8197, %v7776
        %v8230 = vmul.f32 %v8198, %v7777
        %v8231 = vmul.f32 %v8199, %v7778
        %v8232 = vmul.f32 %v8200, %v7779
        %v8233 = vmul.f32 %v8201, %v7780
        %v8234 = vmul.f32 %v8202, %v7781
        %v8235 = vmul.f32 %v8203, %v7782
        %v8236 = vmul.f32 %v8204, %v7783
        %v8237 = vmul.f32 %v8205, %v7784
        %v8238 = vmul.f32 %v8206, %v7785
        %v8239 = vmul.f32 %v8207, %v7786
        %v8240 = vmul.f32 %v8208, %v7787
        %v8241 = vmul.f32 %v8209, %v7788
        %v8242 = vmul.f32 %v8210, %v7789
        %v8243 = vmul.f32 %v8211, %v7790
        %v8244 = vmul.f32 %v8212, %v7791
        %v8245 = vmul.f32 %v8213, %v7792
        %v8246 = vmul.f32 %v8214, %v7793
        %v8247 = vmul.f32 %v8215, %v7794
        %v8248 = vmul.f32 %v8216, %v7795
        %v8249 = vmul.f32 %v8217, %v7796
        %v8250 = vmul.f32 %v8218, %v7797
        %v8251 = vmul.f32 %v8219, %v7798
        %v8252 = vmul.f32 %v8220, %v7799
        %v8253 = vsel %vm7501, %v8221, 0.0
        %v8254 = vsel %vm7501, %v8222, 0.0
        %v8255 = vadd.f32 %v8253, %v8254
        %v8256 = vsel %vm7501, %v8223, 0.0
        %v8257 = vadd.f32 %v8255, %v8256
        %v8258 = vsel %vm7501, %v8224, 0.0
        %v8259 = vadd.f32 %v8257, %v8258
        %v8260 = vsel %vm7501, %v8225, 0.0
        %v8261 = vadd.f32 %v8259, %v8260
        %v8262 = vsel %vm7501, %v8226, 0.0
        %v8263 = vadd.f32 %v8261, %v8262
        %v8264 = vsel %vm7501, %v8227, 0.0
        %v8265 = vadd.f32 %v8263, %v8264
        %v8266 = vsel %vm7501, %v8228, 0.0
        %v8267 = vadd.f32 %v8265, %v8266
        %v8268 = vsel %vm7501, %v8229, 0.0
        %v8269 = vadd.f32 %v8267, %v8268
        %v8270 = vsel %vm7501, %v8230, 0.0
        %v8271 = vadd.f32 %v8269, %v8270
        %v8272 = vsel %vm7501, %v8231, 0.0
        %v8273 = vadd.f32 %v8271, %v8272
        %v8274 = vsel %vm7501, %v8232, 0.0
        %v8275 = vadd.f32 %v8273, %v8274
        %v8276 = vsel %vm7501, %v8233, 0.0
        %v8277 = vadd.f32 %v8275, %v8276
        %v8278 = vsel %vm7501, %v8234, 0.0
        %v8279 = vadd.f32 %v8277, %v8278
        %v8280 = vsel %vm7501, %v8235, 0.0
        %v8281 = vadd.f32 %v8279, %v8280
        %v8282 = vsel %vm7501, %v8236, 0.0
        %v8283 = vadd.f32 %v8281, %v8282
        %v8284 = vsel %vm7501, %v8237, 0.0
        %v8285 = vadd.f32 %v8283, %v8284
        %v8286 = vsel %vm7501, %v8238, 0.0
        %v8287 = vadd.f32 %v8285, %v8286
        %v8288 = vsel %vm7501, %v8239, 0.0
        %v8289 = vadd.f32 %v8287, %v8288
        %v8290 = vsel %vm7501, %v8240, 0.0
        %v8291 = vadd.f32 %v8289, %v8290
        %v8292 = vsel %vm7501, %v8241, 0.0
        %v8293 = vadd.f32 %v8291, %v8292
        %v8294 = vsel %vm7501, %v8242, 0.0
        %v8295 = vadd.f32 %v8293, %v8294
        %v8296 = vsel %vm7501, %v8243, 0.0
        %v8297 = vadd.f32 %v8295, %v8296
        %v8298 = vsel %vm7501, %v8244, 0.0
        %v8299 = vadd.f32 %v8297, %v8298
        %v8300 = vsel %vm7501, %v8245, 0.0
        %v8301 = vadd.f32 %v8299, %v8300
        %v8302 = vsel %vm7501, %v8246, 0.0
        %v8303 = vadd.f32 %v8301, %v8302
        %v8304 = vsel %vm7501, %v8247, 0.0
        %v8305 = vadd.f32 %v8303, %v8304
        %v8306 = vsel %vm7501, %v8248, 0.0
        %v8307 = vadd.f32 %v8305, %v8306
        %v8308 = vsel %vm7501, %v8249, 0.0
        %v8309 = vadd.f32 %v8307, %v8308
        %v8310 = vsel %vm7501, %v8250, 0.0
        %v8311 = vadd.f32 %v8309, %v8310
        %v8312 = vsel %vm7501, %v8251, 0.0
        %v8313 = vadd.f32 %v8311, %v8312
        %v8314 = vsel %vm7501, %v8252, 0.0
        %v8315 = vadd.f32 %v8313, %v8314
        %v8316 = vrot.slane %v8315, 4
        %v8317 = vadd.f32 %v8315, %v8316
        %v8318 = vrot.slane %v8317, 2
        %v8319 = vadd.f32 %v8317, %v8318
        %v8320 = vrot.slane %v8319, 1
        %v8321 = vadd.f32 %v8319, %v8320
        %v8322 = vmul.f32 %v8125, %v7768
        %v8323 = vmul.f32 %v8126, %v7769
        %v8324 = vmul.f32 %v8127, %v7770
        %v8325 = vmul.f32 %v8128, %v7771
        %v8326 = vmul.f32 %v8129, %v7772
        %v8327 = vmul.f32 %v8130, %v7773
        %v8328 = vmul.f32 %v8131, %v7774
        %v8329 = vmul.f32 %v8132, %v7775
        %v8330 = vmul.f32 %v8133, %v7776
        %v8331 = vmul.f32 %v8134, %v7777
        %v8332 = vmul.f32 %v8135, %v7778
        %v8333 = vmul.f32 %v8136, %v7779
        %v8334 = vmul.f32 %v8137, %v7780
        %v8335 = vmul.f32 %v8138, %v7781
        %v8336 = vmul.f32 %v8139, %v7782
        %v8337 = vmul.f32 %v8140, %v7783
        %v8338 = vmul.f32 %v8141, %v7784
        %v8339 = vmul.f32 %v8142, %v7785
        %v8340 = vmul.f32 %v8143, %v7786
        %v8341 = vmul.f32 %v8144, %v7787
        %v8342 = vmul.f32 %v8145, %v7788
        %v8343 = vmul.f32 %v8146, %v7789
        %v8344 = vmul.f32 %v8147, %v7790
        %v8345 = vmul.f32 %v8148, %v7791
        %v8346 = vmul.f32 %v8149, %v7792
        %v8347 = vmul.f32 %v8150, %v7793
        %v8348 = vmul.f32 %v8151, %v7794
        %v8349 = vmul.f32 %v8152, %v7795
        %v8350 = vmul.f32 %v8153, %v7796
        %v8351 = vmul.f32 %v8154, %v7797
        %v8352 = vmul.f32 %v8155, %v7798
        %v8353 = vmul.f32 %v8156, %v7799
        %v8354 = vsel %vm7501, %v8322, 0.0
        %v8355 = vsel %vm7501, %v8323, 0.0
        %v8356 = vadd.f32 %v8354, %v8355
        %v8357 = vsel %vm7501, %v8324, 0.0
        %v8358 = vadd.f32 %v8356, %v8357
        %v8359 = vsel %vm7501, %v8325, 0.0
        %v8360 = vadd.f32 %v8358, %v8359
        %v8361 = vsel %vm7501, %v8326, 0.0
        %v8362 = vadd.f32 %v8360, %v8361
        %v8363 = vsel %vm7501, %v8327, 0.0
        %v8364 = vadd.f32 %v8362, %v8363
        %v8365 = vsel %vm7501, %v8328, 0.0
        %v8366 = vadd.f32 %v8364, %v8365
        %v8367 = vsel %vm7501, %v8329, 0.0
        %v8368 = vadd.f32 %v8366, %v8367
        %v8369 = vsel %vm7501, %v8330, 0.0
        %v8370 = vadd.f32 %v8368, %v8369
        %v8371 = vsel %vm7501, %v8331, 0.0
        %v8372 = vadd.f32 %v8370, %v8371
        %v8373 = vsel %vm7501, %v8332, 0.0
        %v8374 = vadd.f32 %v8372, %v8373
        %v8375 = vsel %vm7501, %v8333, 0.0
        %v8376 = vadd.f32 %v8374, %v8375
        %v8377 = vsel %vm7501, %v8334, 0.0
        %v8378 = vadd.f32 %v8376, %v8377
        %v8379 = vsel %vm7501, %v8335, 0.0
        %v8380 = vadd.f32 %v8378, %v8379
        %v8381 = vsel %vm7501, %v8336, 0.0
        %v8382 = vadd.f32 %v8380, %v8381
        %v8383 = vsel %vm7501, %v8337, 0.0
        %v8384 = vadd.f32 %v8382, %v8383
        %v8385 = vsel %vm7501, %v8338, 0.0
        %v8386 = vadd.f32 %v8384, %v8385
        %v8387 = vsel %vm7501, %v8339, 0.0
        %v8388 = vadd.f32 %v8386, %v8387
        %v8389 = vsel %vm7501, %v8340, 0.0
        %v8390 = vadd.f32 %v8388, %v8389
        %v8391 = vsel %vm7501, %v8341, 0.0
        %v8392 = vadd.f32 %v8390, %v8391
        %v8393 = vsel %vm7501, %v8342, 0.0
        %v8394 = vadd.f32 %v8392, %v8393
        %v8395 = vsel %vm7501, %v8343, 0.0
        %v8396 = vadd.f32 %v8394, %v8395
        %v8397 = vsel %vm7501, %v8344, 0.0
        %v8398 = vadd.f32 %v8396, %v8397
        %v8399 = vsel %vm7501, %v8345, 0.0
        %v8400 = vadd.f32 %v8398, %v8399
        %v8401 = vsel %vm7501, %v8346, 0.0
        %v8402 = vadd.f32 %v8400, %v8401
        %v8403 = vsel %vm7501, %v8347, 0.0
        %v8404 = vadd.f32 %v8402, %v8403
        %v8405 = vsel %vm7501, %v8348, 0.0
        %v8406 = vadd.f32 %v8404, %v8405
        %v8407 = vsel %vm7501, %v8349, 0.0
        %v8408 = vadd.f32 %v8406, %v8407
        %v8409 = vsel %vm7501, %v8350, 0.0
        %v8410 = vadd.f32 %v8408, %v8409
        %v8411 = vsel %vm7501, %v8351, 0.0
        %v8412 = vadd.f32 %v8410, %v8411
        %v8413 = vsel %vm7501, %v8352, 0.0
        %v8414 = vadd.f32 %v8412, %v8413
        %v8415 = vsel %vm7501, %v8353, 0.0
        %v8416 = vadd.f32 %v8414, %v8415
        %v8417 = vrot.slane %v8416, 4
        %v8418 = vadd.f32 %v8416, %v8417
        %v8419 = vrot.slane %v8418, 2
        %v8420 = vadd.f32 %v8418, %v8419
        %v8421 = vrot.slane %v8420, 1
        %v8422 = vadd.f32 %v8420, %v8421
        %8424 = vrot.lane.b32.xlu0 %v8321, 124
        %v8425 = vpop.permute.xlu0 %8424
        %v8427 = vadd.f32 %v8060, %v8425
        %8429 = vrot.lane.b32.xlu0 %v8422, 126
        %v8430 = vpop.permute.xlu0 %8429
        %v8432 = vadd.f32 %v8060, %v8430
        %8433 = vrot.lane.b32.xlu0 %v8321, 125
        %v8434 = vpop.permute.xlu0 %8433
        %v8436 = vadd.f32 %v8060, %v8434
        %8437 = vrot.lane.b32.xlu0 %v8422, 127
        %v8438 = vpop.permute.xlu0 %8437
        %v8440 = vadd.f32 %v8060, %v8438
        %8442 = vrot.lane.b32.xlu0 %v8432, 127
        %v8443 = vpop.permute.xlu0 %8442
        %8446 = vrot.lane.b32.xlu0 %v8436, 1
        %v8447 = vpop.permute.xlu0 %8446
        %vm8449 = vcmask 7168
        %v8450 = vsel %vm8449, %v8427, %v8443
        %vm8451 = vcmask 15360
        %v8452 = vsel %vm8451, %v8450, %v8447
        %vm8453 = vcmask 23552
        %v8454 = vsel %vm8453, %v8452, %v8440
        %vm8455 = vcmask 24576
        %8456 = vst.msk [vmem:[%s378] sm:$0x1] %vm8455, %v8454
        %s8457 = sand.u32 %s269, 1
        %s8458 = scalar_lea.sflag [#allocation3], %s8457
        %s8459 = sand.u32 %s269, 1
        %s8460 = scalar_lea.vmem [#allocation2], %s8459
        // Predicated region
        $region65: #{rpn_head_forward.1} parent=63 // pred_check
          %p8461 = pneg %p279
        $region66: #{rpn_head_forward.1} parent=63 // pred_check_branch
          %8463 = sbr.rel (%p8461) target = $region68
        $region67: #{rpn_head_forward.1} parent=63 // pred_region
          %s8465 = ssub.s32 16, 16
          %8466 = vsyncadd %s8458, %s8465
          %s8467 = smul.addr %s25, 16
          %s8468 = scalar_lea.hbm %s11, %s8467
          %s8470 = sshll.u32 %s8460, 4
          %s8471 = int_to_ptr.vmem [resolvable:$true] %s8470
          %8473 = dma.vmem_to_hbm [thread:$0]  %s8471, 16, %s8468, %s8458
        $region68: #{rpn_head_forward.1} parent=63 // pred_fallthru
          _
      $region64: #{rpn_head_forward.1} parent=5 // pred_fallthru
        _
      %p8474 = scmp.le.s32.totalorder 2, %s20
      // Predicated region
      $region69: #{rpn_head_forward.1} parent=5 // pred_check
        %p8475 = pneg %p8474
      $region70: #{rpn_head_forward.1} parent=5 // pred_check_branch
        %8477 = sbr.rel (%p8475) target = $region72
      $region71: #{rpn_head_forward.1} parent=5 // pred_region
        %s8478 = ssub.s32 %s20, 2
        // Predicated region
        $region73: #{rpn_head_forward.1} parent=71 // pred_check
          %p8479 = pneg %p285
        $region74: #{rpn_head_forward.1} parent=71 // pred_check_branch
          %8481 = sbr.rel (%p8479) target = $region76
        $region75: #{rpn_head_forward.1} parent=71 // pred_region
          %s8482 = sand.u32 %s270, 1
          %s8483 = scalar_lea.sflag [#allocation3], %s8482
          %s8484 = sand.u32 %s270, 1
          %s8485 = scalar_lea.vmem [#allocation2], %s8484
          %8486 = dma.done %s8483, 16
        $region76: #{rpn_head_forward.1} parent=71 // pred_fallthru
          _
      $region72: #{rpn_head_forward.1} parent=5 // pred_fallthru
        _
    $region6: #{rpn_head_forward.1} parent=1 // loop_footer
      %s24 = sadd.s32 1, %s20
    $region7: #{rpn_head_forward.1} parent=1 // loop_footer_branch
      %19 = sbr.rel target = $region3
    $region8: #{rpn_head_forward.1} parent=1 // loop_exit
      _
    %8487 = vsyncpa [#allocation3], 1
    %s8488 = scalar_lea.sflag [#allocation3], 1
    %8489 = vsyncpa %s8488, 1

</llo_original>
